<compile_context>
chip_gen: v7x
topology: tpu7x:2x2x1
jax: 0.10.0
libtpu: 0.0.40
codegen_flags: <defaults>
</compile_context>

<pallas_src>
import functools
import math

import jax
import jax.numpy as jnp
from jax.experimental import pallas as pl
from jax.experimental.pallas import tpu as pltpu


_VMEM_LIMIT = 32 * 1024 * 1024   # explicit: v5e default scoped is 16 MiB, v7x physical 64 MiB


def _cparams():
    return pltpu.CompilerParams(dimension_semantics=("parallel",),
                                vmem_limit_bytes=_VMEM_LIMIT)


# ---------------------------------------------------------------------------
# In-kernel helpers
# ---------------------------------------------------------------------------

def _gelu_exact(x):
    """Exact (erf-based) GELU.  erf via Abramowitz-Stegun 7.1.26 (|err|<=1.5e-7),
    built only from ops with guaranteed Mosaic lowerings (exp/div/mul/select)."""
    z = x * 0.7071067811865476
    az = jnp.abs(z)
    t = 1.0 / (1.0 + 0.3275911 * az)
    poly = t * (0.254829592 + t * (-0.284496736 + t * (1.421413741
                + t * (-1.453152027 + t * 1.061405429))))
    erf_abs = 1.0 - poly * jnp.exp(-az * az)
    erf = jnp.where(z < 0.0, -erf_abs, erf_abs)
    return 0.5 * x * (1.0 + erf)


def _conv3x3_taps(src_ref, H, W):
    """Gather the 9 shifted (L, C) windows of a flat padded (Hp*Wp, C) slab and
    concatenate along lanes -> in-VMEM im2col patch (L, 9C), never touching HBM.

    The computed "wide" span covers padded rows [Wp+1, Wp+1+L) with L = H*Wp-2;
    tap (di, dj) then starts at flat row di*Wp + dj (always in-bounds)."""
    Wp = W + 2
    L = H * Wp - 2
    return jnp.concatenate(
        [src_ref[di * Wp + dj: di * Wp + dj + L, :]
         for di in range(3) for dj in range(3)], axis=1)


# ---------------------------------------------------------------------------
# Pallas kernels (grid = (batch,), one padded image per step)
# ---------------------------------------------------------------------------

def _bn_stats_kernel(x_ref, s_ref):
    """Per-batch partial BatchNorm stats: s_ref = [[sum_c]; [sum_sq_c]] (2, C).
    (Review: no (8,C) zero pad / concat filler; zero-pad rows contribute 0.)"""
    x = x_ref[...].astype(jnp.float32)                       # (Hp*Wp, C)
    s = jnp.sum(x, axis=0, keepdims=True)
    ss = jnp.sum(x * x, axis=0, keepdims=True)
    s_ref[...] = jnp.concatenate([s, ss], axis=0)


def _conv1_gelu_kernel(x_ref, w_ref, b_ref, o_ref, *, H, W):
    """o = zero-padded( gelu( conv3x3_{BN-folded}(x) ) )  -> conv2's bf16 input."""
    C = o_ref.shape[-1]
    Wp = W + 2
    NP = (H + 2) * Wp
    L = H * Wp - 2
    R0 = Wp + 1
    patch = _conv3x3_taps(x_ref, H, W)                                   # (L, 9C) bf16
    z = jnp.dot(patch, w_ref[...], preferred_element_type=jnp.float32) + b_ref[...]
    z = _gelu_exact(z)
    # Zero the wrap-around rows (= left/right padding columns of the padded layout)
    # so the stored slab is exactly conv2's zero-padded input.
    i = jax.lax.broadcasted_iota(jnp.int32, (L, 1), 0)
    z = jnp.where((i % Wp) < (Wp - 2), z, 0.0)
    full = jnp.concatenate(
        [jnp.zeros((R0, C), jnp.float32), z,
         jnp.zeros((NP - R0 - L, C), jnp.float32)], axis=0)
    o_ref[...] = full.astype(o_ref.dtype)                                # single full store


def _conv2_gate_res_kernel(h_ref, w_ref, b_ref, wg_ref, bg_ref, x_ref, o_ref, *, H, W):
    """o = identity + sigmoid(identity @ Wg + bg) * (conv3x3(h) + b2)   (f32)."""
    Wp = W + 2
    L = H * Wp - 2
    R0 = Wp + 1
    patch = _conv3x3_taps(h_ref, H, W)                                   # (L, 9C) bf16
    z = jnp.dot(patch, w_ref[...], preferred_element_type=jnp.float32) + b_ref[...]
    idn = x_ref[R0:R0 + L, :]                                            # identity rows (bf16)
    g = jax.nn.sigmoid(
        jnp.dot(idn, wg_ref[...], preferred_element_type=jnp.float32) + bg_ref[...])
    o_ref[...] = idn.astype(jnp.float32) + g * z


# ---------------------------------------------------------------------------
# Pallas wrappers
# ---------------------------------------------------------------------------

def pallas_bn_stats(xp):
    B, NP, C = xp.shape
    return pl.pallas_call(
        _bn_stats_kernel,
        out_shape=jax.ShapeDtypeStruct((B, 2, C), jnp.float32),
        grid_spec=pltpu.PrefetchScalarGridSpec(
            num_scalar_prefetch=0,
            grid=(B,),
            in_specs=[pl.BlockSpec((None, NP, C), lambda b: (b, 0, 0))],
            out_specs=pl.BlockSpec((None, 2, C), lambda b: (b, 0, 0))),
        compiler_params=_cparams(),
    )(xp)


def pallas_conv1_gelu(xp, w1f, b1f, H, W):
    B, NP, C = xp.shape
    return pl.pallas_call(
        functools.partial(_conv1_gelu_kernel, H=H, W=W),
        out_shape=jax.ShapeDtypeStruct((B, NP, C), jnp.bfloat16),
        grid_spec=pltpu.PrefetchScalarGridSpec(
            num_scalar_prefetch=0,
            grid=(B,),
            in_specs=[pl.BlockSpec((None, NP, C), lambda b: (b, 0, 0)),
                      pl.BlockSpec((9 * C, C), lambda b: (0, 0)),
                      pl.BlockSpec((1, C), lambda b: (0, 0))],
            out_specs=pl.BlockSpec((None, NP, C), lambda b: (b, 0, 0))),
        compiler_params=_cparams(),
    )(xp, w1f.astype(jnp.bfloat16), b1f.reshape(1, C).astype(jnp.float32))


def pallas_conv2_gate_residual(h_pad, w2, b2, wg, bg, xp, H, W):
    B, NP, C = xp.shape
    L = H * (W + 2) - 2
    return pl.pallas_call(
        functools.partial(_conv2_gate_res_kernel, H=H, W=W),
        out_shape=jax.ShapeDtypeStruct((B, L, C), jnp.float32),
        grid_spec=pltpu.PrefetchScalarGridSpec(
            num_scalar_prefetch=0,
            grid=(B,),
            in_specs=[pl.BlockSpec((None, NP, C), lambda b: (b, 0, 0)),
                      pl.BlockSpec((9 * C, C), lambda b: (0, 0)),
                      pl.BlockSpec((1, C), lambda b: (0, 0)),
                      pl.BlockSpec((C, C), lambda b: (0, 0)),
                      pl.BlockSpec((1, C), lambda b: (0, 0)),
                      pl.BlockSpec((None, NP, C), lambda b: (b, 0, 0))],
            out_specs=pl.BlockSpec((None, L, C), lambda b: (b, 0, 0))),
        compiler_params=_cparams(),
    )(h_pad, w2.astype(jnp.bfloat16), b2.reshape(1, C).astype(jnp.float32),
      wg.astype(jnp.bfloat16), bg.reshape(1, C).astype(jnp.float32), xp)


# ---------------------------------------------------------------------------
# ConvBasinBlock forward (train-mode BatchNorm, exact GELU, sigmoid gate)
# ---------------------------------------------------------------------------

def conv_basin_block(x_nchw, p, eps=1e-5):
    B, C, H, W = x_nchw.shape
    Hp, Wp = H + 2, W + 2
    NP = Hp * Wp
    L = H * Wp - 2

    # NCHW -> NHWC -> spatial zero-pad -> flat rows -> bf16 (one fused XLA producer).
    x_nhwc = jnp.transpose(x_nchw, (0, 2, 3, 1))
    xp = jnp.pad(x_nhwc, ((0, 0), (1, 1), (1, 1), (0, 0)))
    xp = xp.reshape(B, NP, C).astype(jnp.bfloat16)

    # BatchNorm batch statistics (train mode, biased variance) from Pallas partials.
    stats = pallas_bn_stats(xp).sum(axis=0)                  # (2, C)
    n = float(B * H * W)                                     # pad rows are zeros
    mean = stats[0] / n
    var = jnp.maximum(stats[1] / n - mean * mean, 0.0)
    scale = p["bn_g"] * jax.lax.rsqrt(var + eps)
    shift = p["bn_b"] - mean * scale

    # Fold the BN affine into conv1's weights/bias (tiny O(9*C^2) op; no slab pass).
    w1_f32 = p["w1"].astype(jnp.float32)                     # (9C, C), tap-major rows
    w1f = w1_f32 * jnp.tile(scale, 9)[:, None]
    b1f = p["b1"] + jnp.tile(shift, 9) @ w1_f32

    # conv1 + exact GELU, emitting conv2's zero-padded bf16 input directly.
    h_pad = pallas_conv1_gelu(xp, w1f, b1f, H, W)

    # conv2 + fused 1x1 sigmoid gate + gated residual (f32, "wide" row layout).
    out_span = pallas_conv2_gate_residual(h_pad, p["w2"], p["b2"],
                                          p["gate_w"], p["gate_b"], xp, H, W)

    # Drop padding columns and return NCHW (fuses into one XLA slice+transpose copy).
    out = jnp.pad(out_span, ((0, 0), (0, H * Wp - L), (0, 0))).reshape(B, H, Wp, C)
    return jnp.transpose(out[:, :, :W, :], (0, 3, 1, 2))


# ---------------------------------------------------------------------------
# Parameters (PyTorch-style uniform init; conv weights pre-reshaped ONCE to the
# tap-major (kh*kw*Cin, Cout) matmul layout and pre-cast to bf16)
# ---------------------------------------------------------------------------

def init_params(key, channels):
    ks = jax.random.split(key, 6)

    def conv_param(kw_key, kb_key, cin, cout, ksz):
        fan_in = cin * ksz * ksz
        bound = 1.0 / math.sqrt(fan_in)
        w = jax.random.uniform(kw_key, (cout, cin, ksz, ksz), jnp.float32, -bound, bound)
        b = jax.random.uniform(kb_key, (cout,), jnp.float32, -bound, bound)
        wm = jnp.transpose(w, (2, 3, 1, 0)).reshape(ksz * ksz * cin, cout)
        return wm.astype(jnp.bfloat16), b

    w1, b1 = conv_param(ks[0], ks[1], channels, channels, 3)
    w2, b2 = conv_param(ks[2], ks[3], channels, channels, 3)
    gw, gb = conv_param(ks[4], ks[5], channels, channels, 1)
    return {
        "bn_g": jnp.ones((channels,), jnp.float32),
        "bn_b": jnp.zeros((channels,), jnp.float32),
        "w1": w1, "b1": b1, "w2": w2, "b2": b2,
        "gate_w": gw, "gate_b": gb,
    }


# ---------------------------------------------------------------------------
# Pure-JAX reference (f32, HIGHEST precision) for a relaxed-tolerance check
# ---------------------------------------------------------------------------

def reference_block(x_nchw, p, eps=1e-5):
    x = jnp.transpose(x_nchw, (0, 2, 3, 1))                  # NHWC
    C = x.shape[-1]
    mean = jnp.mean(x, axis=(0, 1, 2))
    var = jnp.mean((x - mean) ** 2, axis=(0, 1, 2))
    xn = (x - mean) * jax.lax.rsqrt(var + eps) * p["bn_g"] + p["bn_b"]

    def conv(inp, wmat, bias, ksz):
        w = wmat.astype(jnp.float32).reshape(ksz, ksz, C, C)  # HWIO
        out = jax.lax.conv_general_dilated(
            inp, w, window_strides=(1, 1),
            padding="SAME" if ksz == 3 else "VALID",
            dimension_numbers=("NHWC", "HWIO", "NHWC"),
            precision=jax.lax.Precision.HIGHEST)
        return out + bias

    h = jax.nn.gelu(conv(xn, p["w1"], p["b1"], 3), approximate=False)
    h = conv(h, p["w2"], p["b2"], 3)
    gate = jax.nn.sigmoid(conv(x, p["gate_w"], p["gate_b"], 1))
    return jnp.transpose(x + gate * h, (0, 3, 1, 2))


if __name__ == "__main__":
    root = jax.random.PRNGKey(0)
    k_p, k_x = jax.random.split(root)
    B, C, H, W = 2, 128, 16, 16                              # lane-dense channels
    params = init_params(k_p, C)
    x = jax.random.normal(k_x, (B, C, H, W), jnp.float32)

    out = jax.jit(conv_basin_block)(x, params)
    jax.block_until_ready(out)

    assert out.shape == (B, C, H, W) and out.dtype == jnp.float32

    ref = jax.jit(reference_block)(x, params)
    err = float(jnp.max(jnp.abs(out - ref)))
    assert err < 0.1, f"max abs err vs reference: {err}"
    print("KERNEL_OK")
</pallas_src>

<mosaic_0001>
module attributes {stable_mosaic.version = 11 : i64} {
  func.func @_bn_stats_kernel(%arg0: i32, %arg1: memref<1x324x128xbf16, #tpu.memory_space<vmem>>, %arg2: memref<1x2x128xf32, #tpu.memory_space<vmem>>) attributes {dimension_semantics = [#tpu.dimension_semantics<parallel>], iteration_bounds = array<i64: 2>, scalar_prefetch = 0 : i64, scratch_operands = 0 : i64, tpu.core_type = #tpu.core_type<tc>, window_params = [{transform_indices = @transform_0, window_bounds = array<i64: 1, 324, 128>}, {transform_indices = @transform_1, window_bounds = array<i64: 1, 2, 128>}]} {
    %c0 = arith.constant 0 : index
    %c0_0 = arith.constant 0 : index
    %c0_1 = arith.constant 0 : index
    %0 = vector.load %arg1[%c0, %c0_0, %c0_1] : memref<1x324x128xbf16, #tpu.memory_space<vmem>>, vector<1x324x128xbf16>
    %1 = vector.shape_cast %0 : vector<1x324x128xbf16> to vector<324x128xbf16>
    %2 = arith.extf %1 : vector<324x128xbf16> to vector<324x128xf32>
    %cst = arith.constant dense<0.000000e+00> : vector<128xf32>
    %3 = vector.multi_reduction <add>, %2, %cst [0] : vector<324x128xf32> to vector<128xf32>
    %4 = vector.shape_cast %3 : vector<128xf32> to vector<1x128xf32>
    %5 = arith.mulf %2, %2 : vector<324x128xf32>
    %cst_2 = arith.constant dense<0.000000e+00> : vector<128xf32>
    %6 = vector.multi_reduction <add>, %5, %cst_2 [0] : vector<324x128xf32> to vector<128xf32>
    %7 = vector.shape_cast %6 : vector<128xf32> to vector<1x128xf32>
    %8 = tpu.concatenate %4, %7 in 0 : vector<1x128xf32>, vector<1x128xf32> -> vector<2x128xf32>
    %c0_3 = arith.constant 0 : index
    %c0_4 = arith.constant 0 : index
    %c0_5 = arith.constant 0 : index
    %9 = vector.load %arg2[%c0_3, %c0_4, %c0_5] : memref<1x2x128xf32, #tpu.memory_space<vmem>>, vector<1x2x128xf32>
    %10 = vector.shape_cast %9 : vector<1x2x128xf32> to vector<2x128xf32>
    %11 = vector.shape_cast %8 : vector<2x128xf32> to vector<1x2x128xf32>
    tpu.vector_store %arg2[%c0_3, %c0_4, %c0_5], %11 {strides = array<i32>} : memref<1x2x128xf32, #tpu.memory_space<vmem>>, vector<1x2x128xf32>,
    return
  }
  func.func @transform_0(%arg0: i32) -> (i32, i32, i32) {
    %c0_i32 = arith.constant 0 : i32
    %c0_i32_0 = arith.constant 0 : i32
    %c0_i32_1 = arith.constant 0 : i32
    return %arg0, %c0_i32, %c0_i32_0 : i32, i32, i32
  }
  func.func @transform_1(%arg0: i32) -> (i32, i32, i32) {
    %c0_i32 = arith.constant 0 : i32
    %c0_i32_0 = arith.constant 0 : i32
    %c0_i32_1 = arith.constant 0 : i32
    return %arg0, %c0_i32, %c0_i32_0 : i32, i32, i32
  }
}

module attributes {stable_mosaic.version = 11 : i64} {
  func.func @_conv2_gate_res_kernel(%arg0: i32, %arg1: memref<1x324x128xbf16, #tpu.memory_space<vmem>>, %arg2: memref<1152x128xbf16, #tpu.memory_space<vmem>>, %arg3: memref<1x128xf32, #tpu.memory_space<vmem>>, %arg4: memref<128x128xbf16, #tpu.memory_space<vmem>>, %arg5: memref<1x128xf32, #tpu.memory_space<vmem>>, %arg6: memref<1x324x128xbf16, #tpu.memory_space<vmem>>, %arg7: memref<1x286x128xf32, #tpu.memory_space<vmem>>) attributes {dimension_semantics = [#tpu.dimension_semantics<parallel>], iteration_bounds = array<i64: 2>, scalar_prefetch = 0 : i64, scratch_operands = 0 : i64, tpu.core_type = #tpu.core_type<tc>, window_params = [{transform_indices = @transform_0, window_bounds = array<i64: 1, 324, 128>}, {pipeline_mode = #tpu.pipeline_mode<synchronous>, transform_indices = @transform_1, window_bounds = array<i64: 1152, 128>}, {pipeline_mode = #tpu.pipeline_mode<synchronous>, transform_indices = @transform_2, window_bounds = array<i64: 1, 128>}, {pipeline_mode = #tpu.pipeline_mode<synchronous>, transform_indices = @transform_3, window_bounds = array<i64: 128, 128>}, {pipeline_mode = #tpu.pipeline_mode<synchronous>, transform_indices = @transform_4, window_bounds = array<i64: 1, 128>}, {transform_indices = @transform_5, window_bounds = array<i64: 1, 324, 128>}, {transform_indices = @transform_6, window_bounds = array<i64: 1, 286, 128>}]} {
    %c0 = arith.constant 0 : index
    %c0_0 = arith.constant 0 : index
    %c0_1 = arith.constant 0 : index
    %0 = vector.load %arg1[%c0, %c0_0, %c0_1] : memref<1x324x128xbf16, #tpu.memory_space<vmem>>, vector<1x286x128xbf16>
    %1 = vector.shape_cast %0 : vector<1x286x128xbf16> to vector<286x128xbf16>
    %c0_2 = arith.constant 0 : index
    %c1 = arith.constant 1 : index
    %c0_3 = arith.constant 0 : index
    %2 = vector.load %arg1[%c0_2, %c1, %c0_3] : memref<1x324x128xbf16, #tpu.memory_space<vmem>>, vector<1x286x128xbf16>
    %3 = vector.shape_cast %2 : vector<1x286x128xbf16> to vector<286x128xbf16>
    %c0_4 = arith.constant 0 : index
    %c2 = arith.constant 2 : index
    %c0_5 = arith.constant 0 : index
    %4 = vector.load %arg1[%c0_4, %c2, %c0_5] : memref<1x324x128xbf16, #tpu.memory_space<vmem>>, vector<1x286x128xbf16>
    %5 = vector.shape_cast %4 : vector<1x286x128xbf16> to vector<286x128xbf16>
    %c0_6 = arith.constant 0 : index
    %c18 = arith.constant 18 : index
    %c0_7 = arith.constant 0 : index
    %6 = vector.load %arg1[%c0_6, %c18, %c0_7] : memref<1x324x128xbf16, #tpu.memory_space<vmem>>, vector<1x286x128xbf16>
    %7 = vector.shape_cast %6 : vector<1x286x128xbf16> to vector<286x128xbf16>
    %c0_8 = arith.constant 0 : index
    %c19 = arith.constant 19 : index
    %c0_9 = arith.constant 0 : index
    %8 = vector.load %arg1[%c0_8, %c19, %c0_9] : memref<1x324x128xbf16, #tpu.memory_space<vmem>>, vector<1x286x128xbf16>
    %9 = vector.shape_cast %8 : vector<1x286x128xbf16> to vector<286x128xbf16>
    %c0_10 = arith.constant 0 : index
    %c20 = arith.constant 20 : index
    %c0_11 = arith.constant 0 : index
    %10 = vector.load %arg1[%c0_10, %c20, %c0_11] : memref<1x324x128xbf16, #tpu.memory_space<vmem>>, vector<1x286x128xbf16>
    %11 = vector.shape_cast %10 : vector<1x286x128xbf16> to vector<286x128xbf16>
    %c0_12 = arith.constant 0 : index
    %c36 = arith.constant 36 : index
    %c0_13 = arith.constant 0 : index
    %12 = vector.load %arg1[%c0_12, %c36, %c0_13] : memref<1x324x128xbf16, #tpu.memory_space<vmem>>, vector<1x286x128xbf16>
    %13 = vector.shape_cast %12 : vector<1x286x128xbf16> to vector<286x128xbf16>
    %c0_14 = arith.constant 0 : index
    %c37 = arith.constant 37 : index
    %c0_15 = arith.constant 0 : index
    %14 = vector.load %arg1[%c0_14, %c37, %c0_15] : memref<1x324x128xbf16, #tpu.memory_space<vmem>>, vector<1x286x128xbf16>
    %15 = vector.shape_cast %14 : vector<1x286x128xbf16> to vector<286x128xbf16>
    %c0_16 = arith.constant 0 : index
    %c38 = arith.constant 38 : index
    %c0_17 = arith.constant 0 : index
    %16 = vector.load %arg1[%c0_16, %c38, %c0_17] : memref<1x324x128xbf16, #tpu.memory_space<vmem>>, vector<1x286x128xbf16>
    %17 = vector.shape_cast %16 : vector<1x286x128xbf16> to vector<286x128xbf16>
    %18 = tpu.concatenate %1, %3, %5, %7, %9, %11, %13, %15, %17 in 1 : vector<286x128xbf16>, vector<286x128xbf16>, vector<286x128xbf16>, vector<286x128xbf16>, vector<286x128xbf16>, vector<286x128xbf16>, vector<286x128xbf16>, vector<286x128xbf16>, vector<286x128xbf16> -> vector<286x1152xbf16>
    %c0_18 = arith.constant 0 : index
    %c0_19 = arith.constant 0 : index
    %19 = vector.load %arg2[%c0_18, %c0_19] : memref<1152x128xbf16, #tpu.memory_space<vmem>>, vector<1152x128xbf16>
    %cst = arith.constant dense<0.000000e+00> : vector<286x128xf32>
    %20 = tpu.matmul %18, %19, %cst {dimension_numbers = #tpu.dot_dimension_numbers<[1], [0], [0], [1], [0, 0, 1, 1], [], []>} : vector<286x1152xbf16>, vector<1152x128xbf16>, vector<286x128xf32> -> vector<286x128xf32>
    %c0_20 = arith.constant 0 : index
    %c0_21 = arith.constant 0 : index
    %21 = vector.load %arg3[%c0_20, %c0_21] : memref<1x128xf32, #tpu.memory_space<vmem>>, vector<1x128xf32>
    %22 = vector.broadcast %21 : vector<1x128xf32> to vector<286x128xf32>
    %23 = arith.addf %20, %22 : vector<286x128xf32>
    %c0_22 = arith.constant 0 : index
    %c19_23 = arith.constant 19 : index
    %c0_24 = arith.constant 0 : index
    %24 = vector.load %arg6[%c0_22, %c19_23, %c0_24] : memref<1x324x128xbf16, #tpu.memory_space<vmem>>, vector<1x286x128xbf16>
    %25 = vector.shape_cast %24 : vector<1x286x128xbf16> to vector<286x128xbf16>
    %c0_25 = arith.constant 0 : index
    %c0_26 = arith.constant 0 : index
    %26 = vector.load %arg4[%c0_25, %c0_26] : memref<128x128xbf16, #tpu.memory_space<vmem>>, vector<128x128xbf16>
    %cst_27 = arith.constant dense<0.000000e+00> : vector<286x128xf32>
    %27 = tpu.matmul %25, %26, %cst_27 {dimension_numbers = #tpu.dot_dimension_numbers<[1], [0], [0], [1], [0, 0, 1, 1], [], []>} : vector<286x128xbf16>, vector<128x128xbf16>, vector<286x128xf32> -> vector<286x128xf32>
    %c0_28 = arith.constant 0 : index
    %c0_29 = arith.constant 0 : index
    %28 = vector.load %arg5[%c0_28, %c0_29] : memref<1x128xf32, #tpu.memory_space<vmem>>, vector<1x128xf32>
    %29 = vector.broadcast %28 : vector<1x128xf32> to vector<286x128xf32>
    %30 = arith.addf %27, %29 : vector<286x128xf32>
    %31 = arith.negf %30 : vector<286x128xf32>
    %32 = math.exp %31 : vector<286x128xf32>
    %cst_30 = arith.constant 1.000000e+00 : f32
    %33 = vector.broadcast %cst_30 : f32 to vector<286x128xf32>
    %34 = arith.addf %33, %32 : vector<286x128xf32>
    %35 = arith.divf %33, %34 : vector<286x128xf32>
    %36 = arith.extf %25 : vector<286x128xbf16> to vector<286x128xf32>
    %37 = arith.mulf %35, %23 : vector<286x128xf32>
    %38 = arith.addf %36, %37 : vector<286x128xf32>
    %c0_31 = arith.constant 0 : index
    %c0_32 = arith.constant 0 : index
    %c0_33 = arith.constant 0 : index
    %39 = vector.load %arg7[%c0_31, %c0_32, %c0_33] : memref<1x286x128xf32, #tpu.memory_space<vmem>>, vector<1x286x128xf32>
    %40 = vector.shape_cast %39 : vector<1x286x128xf32> to vector<286x128xf32>
    %41 = vector.shape_cast %38 : vector<286x128xf32> to vector<1x286x128xf32>
    tpu.vector_store %arg7[%c0_31, %c0_32, %c0_33], %41 {strides = array<i32>} : memref<1x286x128xf32, #tpu.memory_space<vmem>>, vector<1x286x128xf32>,
    return
  }
  func.func @transform_0(%arg0: i32) -> (i32, i32, i32) {
    %c0_i32 = arith.constant 0 : i32
    %c0_i32_0 = arith.constant 0 : i32
    %c0_i32_1 = arith.constant 0 : i32
    return %arg0, %c0_i32, %c0_i32_0 : i32, i32, i32
  }
  func.func @transform_1(%arg0: i32) -> (i32, i32) {
    %c0_i32 = arith.constant 0 : i32
    %c0_i32_0 = arith.constant 0 : i32
    %c0_i32_1 = arith.constant 0 : i32
    return %c0_i32, %c0_i32_0 : i32, i32
  }
  func.func @transform_2(%arg0: i32) -> (i32, i32) {
    %c0_i32 = arith.constant 0 : i32
    %c0_i32_0 = arith.constant 0 : i32
    %c0_i32_1 = arith.constant 0 : i32
    return %c0_i32, %c0_i32_0 : i32, i32
  }
  func.func @transform_3(%arg0: i32) -> (i32, i32) {
    %c0_i32 = arith.constant 0 : i32
    %c0_i32_0 = arith.constant 0 : i32
    %c0_i32_1 = arith.constant 0 : i32
    return %c0_i32, %c0_i32_0 : i32, i32
  }
  func.func @transform_4(%arg0: i32) -> (i32, i32) {
    %c0_i32 = arith.constant 0 : i32
    %c0_i32_0 = arith.constant 0 : i32
    %c0_i32_1 = arith.constant 0 : i32
    return %c0_i32, %c0_i32_0 : i32, i32
  }
  func.func @transform_5(%arg0: i32) -> (i32, i32, i32) {
    %c0_i32 = arith.constant 0 : i32
    %c0_i32_0 = arith.constant 0 : i32
    %c0_i32_1 = arith.constant 0 : i32
    return %arg0, %c0_i32, %c0_i32_0 : i32, i32, i32
  }
  func.func @transform_6(%arg0: i32) -> (i32, i32, i32) {
    %c0_i32 = arith.constant 0 : i32
    %c0_i32_0 = arith.constant 0 : i32
    %c0_i32_1 = arith.constant 0 : i32
    return %arg0, %c0_i32, %c0_i32_0 : i32, i32, i32
  }
}

module attributes {stable_mosaic.version = 11 : i64} {
  func.func @_conv1_gelu_kernel(%arg0: i32, %arg1: memref<1x324x128xbf16, #tpu.memory_space<vmem>>, %arg2: memref<1152x128xbf16, #tpu.memory_space<vmem>>, %arg3: memref<1x128xf32, #tpu.memory_space<vmem>>, %arg4: memref<1x324x128xbf16, #tpu.memory_space<vmem>>) attributes {dimension_semantics = [#tpu.dimension_semantics<parallel>], iteration_bounds = array<i64: 2>, scalar_prefetch = 0 : i64, scratch_operands = 0 : i64, tpu.core_type = #tpu.core_type<tc>, window_params = [{transform_indices = @transform_0, window_bounds = array<i64: 1, 324, 128>}, {pipeline_mode = #tpu.pipeline_mode<synchronous>, transform_indices = @transform_1, window_bounds = array<i64: 1152, 128>}, {pipeline_mode = #tpu.pipeline_mode<synchronous>, transform_indices = @transform_2, window_bounds = array<i64: 1, 128>}, {transform_indices = @transform_3, window_bounds = array<i64: 1, 324, 128>}]} {
    %c0 = arith.constant 0 : index
    %c0_0 = arith.constant 0 : index
    %c0_1 = arith.constant 0 : index
    %0 = vector.load %arg1[%c0, %c0_0, %c0_1] : memref<1x324x128xbf16, #tpu.memory_space<vmem>>, vector<1x286x128xbf16>
    %1 = vector.shape_cast %0 : vector<1x286x128xbf16> to vector<286x128xbf16>
    %c0_2 = arith.constant 0 : index
    %c1 = arith.constant 1 : index
    %c0_3 = arith.constant 0 : index
    %2 = vector.load %arg1[%c0_2, %c1, %c0_3] : memref<1x324x128xbf16, #tpu.memory_space<vmem>>, vector<1x286x128xbf16>
    %3 = vector.shape_cast %2 : vector<1x286x128xbf16> to vector<286x128xbf16>
    %c0_4 = arith.constant 0 : index
    %c2 = arith.constant 2 : index
    %c0_5 = arith.constant 0 : index
    %4 = vector.load %arg1[%c0_4, %c2, %c0_5] : memref<1x324x128xbf16, #tpu.memory_space<vmem>>, vector<1x286x128xbf16>
    %5 = vector.shape_cast %4 : vector<1x286x128xbf16> to vector<286x128xbf16>
    %c0_6 = arith.constant 0 : index
    %c18 = arith.constant 18 : index
    %c0_7 = arith.constant 0 : index
    %6 = vector.load %arg1[%c0_6, %c18, %c0_7] : memref<1x324x128xbf16, #tpu.memory_space<vmem>>, vector<1x286x128xbf16>
    %7 = vector.shape_cast %6 : vector<1x286x128xbf16> to vector<286x128xbf16>
    %c0_8 = arith.constant 0 : index
    %c19 = arith.constant 19 : index
    %c0_9 = arith.constant 0 : index
    %8 = vector.load %arg1[%c0_8, %c19, %c0_9] : memref<1x324x128xbf16, #tpu.memory_space<vmem>>, vector<1x286x128xbf16>
    %9 = vector.shape_cast %8 : vector<1x286x128xbf16> to vector<286x128xbf16>
    %c0_10 = arith.constant 0 : index
    %c20 = arith.constant 20 : index
    %c0_11 = arith.constant 0 : index
    %10 = vector.load %arg1[%c0_10, %c20, %c0_11] : memref<1x324x128xbf16, #tpu.memory_space<vmem>>, vector<1x286x128xbf16>
    %11 = vector.shape_cast %10 : vector<1x286x128xbf16> to vector<286x128xbf16>
    %c0_12 = arith.constant 0 : index
    %c36 = arith.constant 36 : index
    %c0_13 = arith.constant 0 : index
    %12 = vector.load %arg1[%c0_12, %c36, %c0_13] : memref<1x324x128xbf16, #tpu.memory_space<vmem>>, vector<1x286x128xbf16>
    %13 = vector.shape_cast %12 : vector<1x286x128xbf16> to vector<286x128xbf16>
    %c0_14 = arith.constant 0 : index
    %c37 = arith.constant 37 : index
    %c0_15 = arith.constant 0 : index
    %14 = vector.load %arg1[%c0_14, %c37, %c0_15] : memref<1x324x128xbf16, #tpu.memory_space<vmem>>, vector<1x286x128xbf16>
    %15 = vector.shape_cast %14 : vector<1x286x128xbf16> to vector<286x128xbf16>
    %c0_16 = arith.constant 0 : index
    %c38 = arith.constant 38 : index
    %c0_17 = arith.constant 0 : index
    %16 = vector.load %arg1[%c0_16, %c38, %c0_17] : memref<1x324x128xbf16, #tpu.memory_space<vmem>>, vector<1x286x128xbf16>
    %17 = vector.shape_cast %16 : vector<1x286x128xbf16> to vector<286x128xbf16>
    %18 = tpu.concatenate %1, %3, %5, %7, %9, %11, %13, %15, %17 in 1 : vector<286x128xbf16>, vector<286x128xbf16>, vector<286x128xbf16>, vector<286x128xbf16>, vector<286x128xbf16>, vector<286x128xbf16>, vector<286x128xbf16>, vector<286x128xbf16>, vector<286x128xbf16> -> vector<286x1152xbf16>
    %c0_18 = arith.constant 0 : index
    %c0_19 = arith.constant 0 : index
    %19 = vector.load %arg2[%c0_18, %c0_19] : memref<1152x128xbf16, #tpu.memory_space<vmem>>, vector<1152x128xbf16>
    %cst = arith.constant dense<0.000000e+00> : vector<286x128xf32>
    %20 = tpu.matmul %18, %19, %cst {dimension_numbers = #tpu.dot_dimension_numbers<[1], [0], [0], [1], [0, 0, 1, 1], [], []>} : vector<286x1152xbf16>, vector<1152x128xbf16>, vector<286x128xf32> -> vector<286x128xf32>
    %c0_20 = arith.constant 0 : index
    %c0_21 = arith.constant 0 : index
    %21 = vector.load %arg3[%c0_20, %c0_21] : memref<1x128xf32, #tpu.memory_space<vmem>>, vector<1x128xf32>
    %22 = vector.broadcast %21 : vector<1x128xf32> to vector<286x128xf32>
    %23 = arith.addf %20, %22 : vector<286x128xf32>
    %cst_22 = arith.constant 0.707106769 : f32
    %24 = vector.broadcast %cst_22 : f32 to vector<286x128xf32>
    %25 = arith.mulf %23, %24 : vector<286x128xf32>
    %26 = math.absf %25 : vector<286x128xf32>
    %cst_23 = arith.constant 0.327591091 : f32
    %27 = vector.broadcast %cst_23 : f32 to vector<286x128xf32>
    %28 = arith.mulf %27, %26 : vector<286x128xf32>
    %cst_24 = arith.constant 1.000000e+00 : f32
    %29 = vector.broadcast %cst_24 : f32 to vector<286x128xf32>
    %30 = arith.addf %29, %28 : vector<286x128xf32>
    %cst_25 = arith.constant 1.000000e+00 : f32
    %31 = vector.broadcast %cst_25 : f32 to vector<286x128xf32>
    %32 = arith.divf %31, %30 : vector<286x128xf32>
    %cst_26 = arith.constant 1.06140542 : f32
    %33 = vector.broadcast %cst_26 : f32 to vector<286x128xf32>
    %34 = arith.mulf %32, %33 : vector<286x128xf32>
    %cst_27 = arith.constant -1.45315206 : f32
    %35 = vector.broadcast %cst_27 : f32 to vector<286x128xf32>
    %36 = arith.addf %35, %34 : vector<286x128xf32>
    %37 = arith.mulf %32, %36 : vector<286x128xf32>
    %cst_28 = arith.constant 1.42141378 : f32
    %38 = vector.broadcast %cst_28 : f32 to vector<286x128xf32>
    %39 = arith.addf %38, %37 : vector<286x128xf32>
    %40 = arith.mulf %32, %39 : vector<286x128xf32>
    %cst_29 = arith.constant -0.284496725 : f32
    %41 = vector.broadcast %cst_29 : f32 to vector<286x128xf32>
    %42 = arith.addf %41, %40 : vector<286x128xf32>
    %43 = arith.mulf %32, %42 : vector<286x128xf32>
    %cst_30 = arith.constant 0.254829586 : f32
    %44 = vector.broadcast %cst_30 : f32 to vector<286x128xf32>
    %45 = arith.addf %44, %43 : vector<286x128xf32>
    %46 = arith.mulf %32, %45 : vector<286x128xf32>
    %cst_31 = arith.constant 0.000000e+00 : f32
    %47 = vector.broadcast %cst_31 : f32 to vector<286x128xf32>
    %48 = arith.subf %47, %26 : vector<286x128xf32>
    %49 = arith.mulf %48, %26 : vector<286x128xf32>
    %50 = math.exp %49 : vector<286x128xf32>
    %51 = arith.mulf %46, %50 : vector<286x128xf32>
    %cst_32 = arith.constant 1.000000e+00 : f32
    %52 = vector.broadcast %cst_32 : f32 to vector<286x128xf32>
    %53 = arith.subf %52, %51 : vector<286x128xf32>
    %cst_33 = arith.constant 0.000000e+00 : f32
    %54 = vector.broadcast %cst_33 : f32 to vector<286x128xf32>
    %55 = arith.cmpf olt, %25, %54 : vector<286x128xf32>
    %cst_34 = arith.constant 0.000000e+00 : f32
    %56 = vector.broadcast %cst_34 : f32 to vector<286x128xf32>
    %57 = arith.subf %56, %53 : vector<286x128xf32>
    %58 = arith.select %55, %57, %53 : vector<286x128xi1>, vector<286x128xf32>
    %cst_35 = arith.constant 5.000000e-01 : f32
    %59 = vector.broadcast %cst_35 : f32 to vector<286x128xf32>
    %60 = arith.mulf %59, %23 : vector<286x128xf32>
    %cst_36 = arith.constant 1.000000e+00 : f32
    %61 = vector.broadcast %cst_36 : f32 to vector<286x128xf32>
    %62 = arith.addf %61, %58 : vector<286x128xf32>
    %63 = arith.mulf %60, %62 : vector<286x128xf32>
    %64 = tpu.iota {dimensions = array<i32: 0>} : vector<286x1xi32>
    %c18_i32 = arith.constant 18 : i32
    %c0_i32 = arith.constant 0 : i32
    %65 = arith.cmpi eq, %c18_i32, %c0_i32 : i32
    %c1_i32 = arith.constant 1 : i32
    %66 = arith.select %65, %c1_i32, %c18_i32 : i32
    %67 = vector.broadcast %66 : i32 to vector<286x1xi32>
    %68 = arith.remsi %64, %67 : vector<286x1xi32>
    %c0_i32_37 = arith.constant 0 : i32
    %69 = vector.broadcast %c0_i32_37 : i32 to vector<286x1xi32>
    %70 = arith.cmpi ne, %68, %69 : vector<286x1xi32>
    %c0_i32_38 = arith.constant 0 : i32
    %71 = vector.broadcast %c0_i32_38 : i32 to vector<286x1xi32>
    %72 = arith.cmpi slt, %68, %71 : vector<286x1xi32>
    %c0_i32_39 = arith.constant 0 : i32
    %73 = arith.cmpi slt, %66, %c0_i32_39 : i32
    %74 = vector.broadcast %73 : i1 to vector<286x1xi1>
    %75 = vector.broadcast %74 : vector<286x1xi1> to vector<286x1xi1>
    %76 = arith.xori %72, %75 : vector<286x1xi1>
    %77 = arith.andi %76, %70 : vector<286x1xi1>
    %78 = vector.broadcast %66 : i32 to vector<286x1xi32>
    %79 = arith.addi %68, %78 : vector<286x1xi32>
    %80 = arith.select %77, %79, %68 : vector<286x1xi1>, vector<286x1xi32>
    %c16_i32 = arith.constant 16 : i32
    %81 = vector.broadcast %c16_i32 : i32 to vector<286x1xi32>
    %82 = arith.cmpi slt, %80, %81 : vector<286x1xi32>
    %cst_40 = arith.constant 0.000000e+00 : f32
    %83 = vector.shape_cast %82 : vector<286x1xi1> to vector<286x1xi1>
    %84 = vector.broadcast %83 : vector<286x1xi1> to vector<286x128xi1>
    %85 = vector.broadcast %cst_40 : f32 to vector<286x128xf32>
    %86 = arith.select %84, %63, %85 : vector<286x128xi1>, vector<286x128xf32>
    %cst_41 = arith.constant 0.000000e+00 : f32
    %87 = vector.broadcast %cst_41 : f32 to vector<19x128xf32>
    %cst_42 = arith.constant 0.000000e+00 : f32
    %88 = vector.broadcast %cst_42 : f32 to vector<19x128xf32>
    %89 = tpu.concatenate %87, %86, %88 in 0 : vector<19x128xf32>, vector<286x128xf32>, vector<19x128xf32> -> vector<324x128xf32>
    %90 = arith.truncf %89 : vector<324x128xf32> to vector<324x128xbf16>
    %c0_43 = arith.constant 0 : index
    %c0_44 = arith.constant 0 : index
    %c0_45 = arith.constant 0 : index
    %91 = vector.load %arg4[%c0_43, %c0_44, %c0_45] : memref<1x324x128xbf16, #tpu.memory_space<vmem>>, vector<1x324x128xbf16>
    %92 = vector.shape_cast %91 : vector<1x324x128xbf16> to vector<324x128xbf16>
    %93 = vector.shape_cast %90 : vector<324x128xbf16> to vector<1x324x128xbf16>
    tpu.vector_store %arg4[%c0_43, %c0_44, %c0_45], %93 {strides = array<i32>} : memref<1x324x128xbf16, #tpu.memory_space<vmem>>, vector<1x324x128xbf16>,
    return
  }
  func.func @transform_0(%arg0: i32) -> (i32, i32, i32) {
    %c0_i32 = arith.constant 0 : i32
    %c0_i32_0 = arith.constant 0 : i32
    %c0_i32_1 = arith.constant 0 : i32
    return %arg0, %c0_i32, %c0_i32_0 : i32, i32, i32
  }
  func.func @transform_1(%arg0: i32) -> (i32, i32) {
    %c0_i32 = arith.constant 0 : i32
    %c0_i32_0 = arith.constant 0 : i32
    %c0_i32_1 = arith.constant 0 : i32
    return %c0_i32, %c0_i32_0 : i32, i32
  }
  func.func @transform_2(%arg0: i32) -> (i32, i32) {
    %c0_i32 = arith.constant 0 : i32
    %c0_i32_0 = arith.constant 0 : i32
    %c0_i32_1 = arith.constant 0 : i32
    return %c0_i32, %c0_i32_0 : i32, i32
  }
  func.func @transform_3(%arg0: i32) -> (i32, i32, i32) {
    %c0_i32 = arith.constant 0 : i32
    %c0_i32_0 = arith.constant 0 : i32
    %c0_i32_1 = arith.constant 0 : i32
    return %arg0, %c0_i32, %c0_i32_0 : i32, i32, i32
  }
}

</mosaic_0001>

<llo_original>
// kernel: conv_basin_block.3
$region0: #{conv_basin_block.3}
  #allocation0 [shape = 'u32[]', space=smem, size = 0x4, offset = 0x4, fixed_abs, tag = 'smem constant byte address 0x4 - core index']
  #allocation1 [shape = 'u32[144,128]{1,0:T(1,128)}', space=vmem, size = 0x12000, scoped, tag = 'internal scratch']
  %s0 = inlined_call_operand.vmem [shape: bf16[2,324,128], index: 0, kind: input, shape index: {}]
  %s1 = inlined_call_operand.vmem [shape: f32[2,2,128], index: 1, kind: output, shape index: {}]
  %s2 = sld [smem:[#allocation0]]
  $region37: #{conv_basin_block.3} parent=0
    _
  %s4 = ssub.s32 1, %s2
  %s5 = scalar_select 0, %s4, %s2
  loop: start=0, step=1, limit=4
  $region2: #{conv_basin_block.3} parent=0 // loop_pre_header
    _
  $region3: #{conv_basin_block.3} parent=0 // loop_header
    %s7 = sphi 0, %s11
    %p8 = scmp.ge.s32.totalorder %s7, 4
    %s17 = sphi 0, %s19
    %s20 = sphi 0, %s17
    %s21 = sphi 0, %s20
    %s37 = sphi 0, %s21
    %s43 = sphi 0, %s45
    %s46 = sphi 0, %s43
    %s47 = sphi 0, %s46
    %s63 = sphi 0, %s47
  $region4: #{conv_basin_block.3} parent=0 // loop_header_branch
    %10 = sbr.rel (%p8) target = $region8
  $region5: #{conv_basin_block.3} parent=0 // loop_body
    %s12 = ssub.s32 %s7, 1
    %s13 = ssub.s32 %s7, 2
    %s14 = sadd.s32 %s7, 1
    %s15 = ssub.s32 %s7, %s14
    %p16 = scmp.eq.s32.totalorder %s15, 0
    %s18 = sadd.s32 %s17, 1
    %s19 = scalar_select %p16, %s17, %s18
    %p22 = pneg %p16
    %p23 = scmp.eq.s32.totalorder %s7, 1
    %p24 = por %p22, %p23
    %p25 = scmp.ne.s32.totalorder %s17, %s20
    %p26 = scmp.eq.s32.totalorder %s7, 0
    %p27 = por %p25, %p26
    %p28 = scmp.ne.s32.totalorder %s17, %s20
    %p29 = scmp.eq.s32.totalorder %s12, 1
    %p30 = por %p28, %p29
    %p31 = scmp.ne.s32.totalorder %s20, %s21
    %p32 = scmp.eq.s32.totalorder %s12, 0
    %p33 = por %p31, %p32
    %p34 = scmp.ne.s32.totalorder %s20, %s21
    %p35 = scmp.eq.s32.totalorder %s13, 1
    %p36 = por %p34, %p35
    %p38 = scmp.ne.s32.totalorder %s21, %s37
    %p39 = scmp.eq.s32.totalorder %s13, 0
    %p40 = por %p38, %p39
    %s41 = ssub.s32 %s7, %s14
    %p42 = scmp.eq.s32.totalorder %s41, 0
    %s44 = sadd.s32 %s43, 1
    %s45 = scalar_select %p42, %s43, %s44
    %p48 = pneg %p42
    %p49 = scmp.eq.s32.totalorder %s7, 1
    %p50 = por %p48, %p49
    %p51 = scmp.ne.s32.totalorder %s43, %s46
    %p52 = scmp.eq.s32.totalorder %s7, 0
    %p53 = por %p51, %p52
    %p54 = scmp.ne.s32.totalorder %s43, %s46
    %p55 = scmp.eq.s32.totalorder %s12, 1
    %p56 = por %p54, %p55
    %p57 = scmp.ne.s32.totalorder %s46, %s47
    %p58 = scmp.eq.s32.totalorder %s12, 0
    %p59 = por %p57, %p58
    %p60 = scmp.ne.s32.totalorder %s46, %s47
    %p61 = scmp.eq.s32.totalorder %s13, 1
    %p62 = por %p60, %p61
    %p64 = scmp.ne.s32.totalorder %s47, %s63
    %p65 = scmp.eq.s32.totalorder %s13, 0
    %p66 = por %p64, %p65
    %p67 = scmp.le.s32.totalorder 1, %s7
    %p68 = scmp.lt.s32.totalorder %s7, 3
    %p69 = pnand %p67, %p68
    %p70 = pneg %p69
    // Predicated region
    $region9: #{conv_basin_block.3} parent=5 // pred_check
      _
    $region10: #{conv_basin_block.3} parent=5 // pred_check_branch
      %72 = sbr.rel (%p69) target = $region12
    $region11: #{conv_basin_block.3} parent=5 // pred_region
      %s73 = ssub.s32 %s7, 1
    $region12: #{conv_basin_block.3} parent=5 // pred_fallthru
      _
    %p74 = scmp.lt.s32.totalorder %s7, 2
    // Predicated region
    $region13: #{conv_basin_block.3} parent=5 // pred_check
      %p75 = pneg %p74
    $region14: #{conv_basin_block.3} parent=5 // pred_check_branch
      %77 = sbr.rel (%p75) target = $region16
    $region15: #{conv_basin_block.3} parent=5 // pred_region
      // Predicated region
      $region17: #{conv_basin_block.3} parent=15 // pred_check
        %p78 = pneg %p27
      $region18: #{conv_basin_block.3} parent=15 // pred_check_branch
        %80 = sbr.rel (%p78) target = $region20
      $region19: #{conv_basin_block.3} parent=15 // pred_region
        %p81 = scmp.lt.s32.totalorder %s7, 1
        %s82 = scalar_select %p81, %s7, 1
        %s83 = smul.addr %s82, 41
        %s84 = smul.addr %s83, 4
        %s85 = scalar_lea.vmem %s0, %s84
      $region20: #{conv_basin_block.3} parent=15 // pred_fallthru
        _
    $region16: #{conv_basin_block.3} parent=5 // pred_fallthru
      _
    %p86 = scmp.le.s32.totalorder 1, %s7
    %p87 = scmp.lt.s32.totalorder %s7, 3
    %p88 = pnand %p86, %p87
    %p89 = pneg %p88
    // Predicated region
    $region21: #{conv_basin_block.3} parent=5 // pred_check
      _
    $region22: #{conv_basin_block.3} parent=5 // pred_check_branch
      %91 = sbr.rel (%p88) target = $region24
    $region23: #{conv_basin_block.3} parent=5 // pred_region
      %s92 = ssub.s32 %s7, 1
      %p93 = scmp.lt.s32.totalorder %s12, 1
      %s94 = scalar_select %p93, %s12, 1
      %s95 = smul.addr %s94, 41
      %s96 = smul.addr %s95, 4
      %s97 = scalar_lea.vmem %s0, %s96
      %p98 = pneg %p33
      %p99 = pneg %p30
      %p100 = pneg %p59
      %p101 = pneg %p56
      %p102 = scmp.lt.s32.totalorder %s12, 1
      %s103 = scalar_select %p102, %s12, 1
      %s104 = smul.addr %s103, 2
      %s105 = scalar_lea.vmem %s1, %s104
      %p106 = scmp.lt.s32.totalorder %s12, 1
      %s107 = scalar_select %p106, %s12, 1
      %s108 = smul.addr %s107, 41
      %s109 = smul.addr %s108, 4
      %s110 = scalar_lea.vmem %s0, %s109
      %p111 = scmp.lt.s32.totalorder %s12, 1
      %s112 = scalar_select %p111, %s12, 1
      %s113 = smul.addr %s112, 2
      %s114 = scalar_lea.vmem %s1, %s113
      %v115 = vld [vmem:[%s110] sm:$0xf]
      %v116 = vld [vmem:[%s110 + $0x4] sm:$0xf]
      %v117 = vld [vmem:[%s110 + $0x8] sm:$0xf]
      %v118 = vld [vmem:[%s110 + $0xc] sm:$0xf]
      %v119 = vld [vmem:[%s110 + $0x10] sm:$0xf]
      %v120 = vld [vmem:[%s110 + $0x14] sm:$0xf]
      %v121 = vld [vmem:[%s110 + $0x18] sm:$0xf]
      %v122 = vld [vmem:[%s110 + $0x1c] sm:$0xf]
      %v123 = vld [vmem:[%s110 + $0x20] sm:$0xf]
      %v124 = vld [vmem:[%s110 + $0x24] sm:$0xf]
      %v125 = vld [vmem:[%s110 + $0x28] sm:$0xf]
      %v126 = vld [vmem:[%s110 + $0x2c] sm:$0xf]
      %v127 = vld [vmem:[%s110 + $0x30] sm:$0xf]
      %v128 = vld [vmem:[%s110 + $0x34] sm:$0xf]
      %v129 = vld [vmem:[%s110 + $0x38] sm:$0xf]
      %v130 = vld [vmem:[%s110 + $0x3c] sm:$0xf]
      %v131 = vld [vmem:[%s110 + $0x40] sm:$0xf]
      %v132 = vld [vmem:[%s110 + $0x44] sm:$0xf]
      %v133 = vld [vmem:[%s110 + $0x48] sm:$0xf]
      %v134 = vld [vmem:[%s110 + $0x4c] sm:$0xf]
      %v135 = vld [vmem:[%s110 + $0x50] sm:$0xf]
      %v136 = vld [vmem:[%s110 + $0x54] sm:$0xf]
      %v137 = vld [vmem:[%s110 + $0x58] sm:$0xf]
      %v138 = vld [vmem:[%s110 + $0x5c] sm:$0xf]
      %v139 = vld [vmem:[%s110 + $0x60] sm:$0xf]
      %v140 = vld [vmem:[%s110 + $0x64] sm:$0xf]
      %v141 = vld [vmem:[%s110 + $0x68] sm:$0xf]
      %v142 = vld [vmem:[%s110 + $0x6c] sm:$0xf]
      %v143 = vld [vmem:[%s110 + $0x70] sm:$0xf]
      %v144 = vld [vmem:[%s110 + $0x74] sm:$0xf]
      %v145 = vld [vmem:[%s110 + $0x78] sm:$0xf]
      %v146 = vld [vmem:[%s110 + $0x7c] sm:$0xf]
      %v147 = vld [vmem:[%s110 + $0x80] sm:$0xf]
      %v148 = vld [vmem:[%s110 + $0x84] sm:$0xf]
      %v149 = vld [vmem:[%s110 + $0x88] sm:$0xf]
      %v150 = vld [vmem:[%s110 + $0x8c] sm:$0xf]
      %v151 = vld [vmem:[%s110 + $0x90] sm:$0xf]
      %v152 = vld [vmem:[%s110 + $0x94] sm:$0xf]
      %v153 = vld [vmem:[%s110 + $0x98] sm:$0xf]
      %v154 = vld [vmem:[%s110 + $0x9c] sm:$0xf]
      %v155 = vld [vmem:[%s110 + $0xa0] sm:$0x3]
      %v156 = vunpack.c.l.bf16 %v115
      %v157 = vunpack.c.l.bf16 %v116
      %v158 = vunpack.c.l.bf16 %v117
      %v159 = vunpack.c.l.bf16 %v118
      %v160 = vunpack.c.l.bf16 %v119
      %v161 = vunpack.c.l.bf16 %v120
      %v162 = vunpack.c.l.bf16 %v121
      %v163 = vunpack.c.l.bf16 %v122
      %v164 = vunpack.c.l.bf16 %v123
      %v165 = vunpack.c.l.bf16 %v124
      %v166 = vunpack.c.l.bf16 %v125
      %v167 = vunpack.c.l.bf16 %v126
      %v168 = vunpack.c.l.bf16 %v127
      %v169 = vunpack.c.l.bf16 %v128
      %v170 = vunpack.c.l.bf16 %v129
      %v171 = vunpack.c.l.bf16 %v130
      %v172 = vunpack.c.l.bf16 %v131
      %v173 = vunpack.c.l.bf16 %v132
      %v174 = vunpack.c.l.bf16 %v133
      %v175 = vunpack.c.l.bf16 %v134
      %v176 = vunpack.c.l.bf16 %v135
      %v177 = vunpack.c.l.bf16 %v136
      %v178 = vunpack.c.l.bf16 %v137
      %v179 = vunpack.c.l.bf16 %v138
      %v180 = vunpack.c.l.bf16 %v139
      %v181 = vunpack.c.l.bf16 %v140
      %v182 = vunpack.c.l.bf16 %v141
      %v183 = vunpack.c.l.bf16 %v142
      %v184 = vunpack.c.l.bf16 %v143
      %v185 = vunpack.c.l.bf16 %v144
      %v186 = vunpack.c.l.bf16 %v145
      %v187 = vunpack.c.l.bf16 %v146
      %v188 = vunpack.c.l.bf16 %v147
      %v189 = vunpack.c.l.bf16 %v148
      %v190 = vunpack.c.l.bf16 %v149
      %v191 = vunpack.c.l.bf16 %v150
      %v192 = vunpack.c.l.bf16 %v151
      %v193 = vunpack.c.l.bf16 %v152
      %v194 = vunpack.c.l.bf16 %v153
      %v195 = vunpack.c.l.bf16 %v154
      %v196 = vunpack.c.l.bf16 %v155
      %v197 = vadd.f32 %v156, %v157
      %v198 = vadd.f32 %v197, %v158
      %v199 = vadd.f32 %v198, %v159
      %v200 = vadd.f32 %v199, %v160
      %v201 = vadd.f32 %v200, %v161
      %v202 = vadd.f32 %v201, %v162
      %v203 = vadd.f32 %v202, %v163
      %v204 = vadd.f32 %v203, %v164
      %v205 = vadd.f32 %v204, %v165
      %v206 = vadd.f32 %v205, %v166
      %v207 = vadd.f32 %v206, %v167
      %v208 = vadd.f32 %v207, %v168
      %v209 = vadd.f32 %v208, %v169
      %v210 = vadd.f32 %v209, %v170
      %v211 = vadd.f32 %v210, %v171
      %v212 = vadd.f32 %v211, %v172
      %v213 = vadd.f32 %v212, %v173
      %v214 = vadd.f32 %v213, %v174
      %v215 = vadd.f32 %v214, %v175
      %v216 = vadd.f32 %v215, %v176
      %v217 = vadd.f32 %v216, %v177
      %v218 = vadd.f32 %v217, %v178
      %v219 = vadd.f32 %v218, %v179
      %v220 = vadd.f32 %v219, %v180
      %v221 = vadd.f32 %v220, %v181
      %v222 = vadd.f32 %v221, %v182
      %v223 = vadd.f32 %v222, %v183
      %v224 = vadd.f32 %v223, %v184
      %v225 = vadd.f32 %v224, %v185
      %v226 = vadd.f32 %v225, %v186
      %v227 = vadd.f32 %v226, %v187
      %v228 = vadd.f32 %v227, %v188
      %v229 = vadd.f32 %v228, %v189
      %v230 = vadd.f32 %v229, %v190
      %v231 = vadd.f32 %v230, %v191
      %v232 = vadd.f32 %v231, %v192
      %v233 = vadd.f32 %v232, %v193
      %v234 = vadd.f32 %v233, %v194
      %v235 = vadd.f32 %v234, %v195
      %vm236 = vcmask 1043456
      %v237 = vsel %vm236, %v196, 0.0
      %v238 = vadd.f32 %v235, %v237
      %v239 = vrot.slane %v238, 4
      %v240 = vadd.f32 %v238, %v239
      %v241 = vrot.slane %v240, 2
      %v242 = vadd.f32 %v240, %v241
      %v243 = vrot.slane %v242, 1
      %v244 = vadd.f32 %v242, %v243
      %v245 = vmul.f32 %v156, %v156
      %v246 = vmul.f32 %v157, %v157
      %v247 = vmul.f32 %v158, %v158
      %v248 = vmul.f32 %v159, %v159
      %v249 = vmul.f32 %v160, %v160
      %v250 = vmul.f32 %v161, %v161
      %v251 = vmul.f32 %v162, %v162
      %v252 = vmul.f32 %v163, %v163
      %v253 = vmul.f32 %v164, %v164
      %v254 = vmul.f32 %v165, %v165
      %v255 = vmul.f32 %v166, %v166
      %v256 = vmul.f32 %v167, %v167
      %v257 = vmul.f32 %v168, %v168
      %v258 = vmul.f32 %v169, %v169
      %v259 = vmul.f32 %v170, %v170
      %v260 = vmul.f32 %v171, %v171
      %v261 = vmul.f32 %v172, %v172
      %v262 = vmul.f32 %v173, %v173
      %v263 = vmul.f32 %v174, %v174
      %v264 = vmul.f32 %v175, %v175
      %v265 = vmul.f32 %v176, %v176
      %v266 = vmul.f32 %v177, %v177
      %v267 = vmul.f32 %v178, %v178
      %v268 = vmul.f32 %v179, %v179
      %v269 = vmul.f32 %v180, %v180
      %v270 = vmul.f32 %v181, %v181
      %v271 = vmul.f32 %v182, %v182
      %v272 = vmul.f32 %v183, %v183
      %v273 = vmul.f32 %v184, %v184
      %v274 = vmul.f32 %v185, %v185
      %v275 = vmul.f32 %v186, %v186
      %v276 = vmul.f32 %v187, %v187
      %v277 = vmul.f32 %v188, %v188
      %v278 = vmul.f32 %v189, %v189
      %v279 = vmul.f32 %v190, %v190
      %v280 = vmul.f32 %v191, %v191
      %v281 = vmul.f32 %v192, %v192
      %v282 = vmul.f32 %v193, %v193
      %v283 = vmul.f32 %v194, %v194
      %v284 = vmul.f32 %v195, %v195
      %v285 = vmul.f32 %v196, %v196
      %v286 = vadd.f32 %v245, %v246
      %v287 = vadd.f32 %v286, %v247
      %v288 = vadd.f32 %v287, %v248
      %v289 = vadd.f32 %v288, %v249
      %v290 = vadd.f32 %v289, %v250
      %v291 = vadd.f32 %v290, %v251
      %v292 = vadd.f32 %v291, %v252
      %v293 = vadd.f32 %v292, %v253
      %v294 = vadd.f32 %v293, %v254
      %v295 = vadd.f32 %v294, %v255
      %v296 = vadd.f32 %v295, %v256
      %v297 = vadd.f32 %v296, %v257
      %v298 = vadd.f32 %v297, %v258
      %v299 = vadd.f32 %v298, %v259
      %v300 = vadd.f32 %v299, %v260
      %v301 = vadd.f32 %v300, %v261
      %v302 = vadd.f32 %v301, %v262
      %v303 = vadd.f32 %v302, %v263
      %v304 = vadd.f32 %v303, %v264
      %v305 = vadd.f32 %v304, %v265
      %v306 = vadd.f32 %v305, %v266
      %v307 = vadd.f32 %v306, %v267
      %v308 = vadd.f32 %v307, %v268
      %v309 = vadd.f32 %v308, %v269
      %v310 = vadd.f32 %v309, %v270
      %v311 = vadd.f32 %v310, %v271
      %v312 = vadd.f32 %v311, %v272
      %v313 = vadd.f32 %v312, %v273
      %v314 = vadd.f32 %v313, %v274
      %v315 = vadd.f32 %v314, %v275
      %v316 = vadd.f32 %v315, %v276
      %v317 = vadd.f32 %v316, %v277
      %v318 = vadd.f32 %v317, %v278
      %v319 = vadd.f32 %v318, %v279
      %v320 = vadd.f32 %v319, %v280
      %v321 = vadd.f32 %v320, %v281
      %v322 = vadd.f32 %v321, %v282
      %v323 = vadd.f32 %v322, %v283
      %v324 = vadd.f32 %v323, %v284
      %v325 = vsel %vm236, %v285, 0.0
      %v326 = vadd.f32 %v324, %v325
      %v327 = vrot.slane %v326, 4
      %v328 = vadd.f32 %v326, %v327
      %v329 = vrot.slane %v328, 2
      %v330 = vadd.f32 %v328, %v329
      %v331 = vrot.slane %v330, 1
      %v332 = vadd.f32 %v330, %v331
      %vm333 = vcmask 1040384
      %v334 = vsel %vm333, %v244, %v332
      %335 = vst [vmem:[%s114] sm:$0x3] %v334
      %p336 = scmp.lt.s32.totalorder %s12, 1
      %s337 = scalar_select %p336, %s12, 1
      %s338 = smul.addr %s337, 2
      %s339 = scalar_lea.vmem %s1, %s338
      // Predicated region
      $region25: #{conv_basin_block.3} parent=23 // pred_check
        %p340 = pneg %p56
      $region26: #{conv_basin_block.3} parent=23 // pred_check_branch
        %342 = sbr.rel (%p340) target = $region28
      $region27: #{conv_basin_block.3} parent=23 // pred_region
        _
      $region28: #{conv_basin_block.3} parent=23 // pred_fallthru
        _
    $region24: #{conv_basin_block.3} parent=5 // pred_fallthru
      _
    %p343 = scmp.le.s32.totalorder 2, %s7
    // Predicated region
    $region29: #{conv_basin_block.3} parent=5 // pred_check
      %p344 = pneg %p343
    $region30: #{conv_basin_block.3} parent=5 // pred_check_branch
      %346 = sbr.rel (%p344) target = $region32
    $region31: #{conv_basin_block.3} parent=5 // pred_region
      %s347 = ssub.s32 %s7, 2
      // Predicated region
      $region33: #{conv_basin_block.3} parent=31 // pred_check
        %p348 = pneg %p62
      $region34: #{conv_basin_block.3} parent=31 // pred_check_branch
        %350 = sbr.rel (%p348) target = $region36
      $region35: #{conv_basin_block.3} parent=31 // pred_region
        %p351 = scmp.lt.s32.totalorder %s13, 1
        %s352 = scalar_select %p351, %s13, 1
        %s353 = smul.addr %s352, 2
        %s354 = scalar_lea.vmem %s1, %s353
      $region36: #{conv_basin_block.3} parent=31 // pred_fallthru
        _
    $region32: #{conv_basin_block.3} parent=5 // pred_fallthru
      _
  $region6: #{conv_basin_block.3} parent=0 // loop_footer
    %s11 = sadd.s32 1, %s7
  $region7: #{conv_basin_block.3} parent=0 // loop_footer_branch
    %6 = sbr.rel target = $region3
  $region8: #{conv_basin_block.3} parent=0 // loop_exit
    _

// kernel: conv_basin_block.5
$region0: #{conv_basin_block.5}
  #allocation0 [shape = 'u32[]', space=smem, size = 0x4, offset = 0x4, fixed_abs, tag = 'smem constant byte address 0x4 - core index']
  #allocation1 [shape = 'u32[144,128]{1,0:T(1,128)}', space=vmem, size = 0x12000, scoped, tag = 'internal scratch']
  %s0 = inlined_call_operand.vmem [shape: bf16[2,324,128], index: 0, kind: input, shape index: {}]
  %s1 = inlined_call_operand.vmem [shape: bf16[1152,128], index: 1, kind: input, shape index: {}]
  %s2 = inlined_call_operand.vmem [shape: f32[1,128], index: 2, kind: input, shape index: {}]
  %s3 = inlined_call_operand.vmem [shape: bf16[128,128], index: 3, kind: input, shape index: {}]
  %s4 = inlined_call_operand.vmem [shape: f32[1,128], index: 4, kind: input, shape index: {}]
  %s5 = inlined_call_operand.vmem [shape: bf16[2,324,128], index: 5, kind: input, shape index: {}]
  %s6 = inlined_call_operand.vmem [shape: f32[2,286,128], index: 6, kind: output, shape index: {}]
  %s7 = sld [smem:[#allocation0]]
  $region57: #{conv_basin_block.5} parent=0
    _
  %s9 = ssub.s32 1, %s7
  %s10 = scalar_select 0, %s9, %s7
  loop: start=0, step=1, limit=4
  $region2: #{conv_basin_block.5} parent=0 // loop_pre_header
    _
  $region3: #{conv_basin_block.5} parent=0 // loop_header
    %s12 = sphi 0, %s16
    %p13 = scmp.ge.s32.totalorder %s12, 4
    %s22 = sphi 0, %s24
    %s25 = sphi 0, %s22
    %s26 = sphi 0, %s25
    %s42 = sphi 0, %s26
    %s46 = sphi 0, %s46
    %s48 = sphi 0, %s46
    %s49 = sphi 0, %s48
    %s63 = sphi 0, %s49
    %s67 = sphi 0, %s67
    %s69 = sphi 0, %s67
    %s70 = sphi 0, %s69
    %s84 = sphi 0, %s70
    %s88 = sphi 0, %s88
    %s90 = sphi 0, %s88
    %s91 = sphi 0, %s90
    %s105 = sphi 0, %s91
    %s109 = sphi 0, %s109
    %s111 = sphi 0, %s109
    %s112 = sphi 0, %s111
    %s126 = sphi 0, %s112
    %s132 = sphi 0, %s134
    %s135 = sphi 0, %s132
    %s136 = sphi 0, %s135
    %s152 = sphi 0, %s136
    %s158 = sphi 0, %s160
    %s161 = sphi 0, %s158
    %s162 = sphi 0, %s161
    %s178 = sphi 0, %s162
  $region4: #{conv_basin_block.5} parent=0 // loop_header_branch
    %15 = sbr.rel (%p13) target = $region8
  $region5: #{conv_basin_block.5} parent=0 // loop_body
    %s17 = ssub.s32 %s12, 1
    %s18 = ssub.s32 %s12, 2
    %s19 = sadd.s32 %s12, 1
    %s20 = ssub.s32 %s12, %s19
    %p21 = scmp.eq.s32.totalorder %s20, 0
    %s23 = sadd.s32 %s22, 1
    %s24 = scalar_select %p21, %s22, %s23
    %p27 = pneg %p21
    %p28 = scmp.eq.s32.totalorder %s12, 1
    %p29 = por %p27, %p28
    %p30 = scmp.ne.s32.totalorder %s22, %s25
    %p31 = scmp.eq.s32.totalorder %s12, 0
    %p32 = por %p30, %p31
    %p33 = scmp.ne.s32.totalorder %s22, %s25
    %p34 = scmp.eq.s32.totalorder %s17, 1
    %p35 = por %p33, %p34
    %p36 = scmp.ne.s32.totalorder %s25, %s26
    %p37 = scmp.eq.s32.totalorder %s17, 0
    %p38 = por %p36, %p37
    %p39 = scmp.ne.s32.totalorder %s25, %s26
    %p40 = scmp.eq.s32.totalorder %s18, 1
    %p41 = por %p39, %p40
    %p43 = scmp.ne.s32.totalorder %s26, %s42
    %p44 = scmp.eq.s32.totalorder %s18, 0
    %p45 = por %p43, %p44
    %s47 = sadd.s32 %s46, 1
    %p50 = scmp.eq.s32.totalorder %s12, 1
    %p51 = scmp.ne.s32.totalorder %s46, %s48
    %p52 = scmp.eq.s32.totalorder %s12, 0
    %p53 = por %p51, %p52
    %p54 = scmp.ne.s32.totalorder %s46, %s48
    %p55 = scmp.eq.s32.totalorder %s17, 1
    %p56 = por %p54, %p55
    %p57 = scmp.ne.s32.totalorder %s48, %s49
    %p58 = scmp.eq.s32.totalorder %s17, 0
    %p59 = por %p57, %p58
    %p60 = scmp.ne.s32.totalorder %s48, %s49
    %p61 = scmp.eq.s32.totalorder %s18, 1
    %p62 = por %p60, %p61
    %p64 = scmp.ne.s32.totalorder %s49, %s63
    %p65 = scmp.eq.s32.totalorder %s18, 0
    %p66 = por %p64, %p65
    %s68 = sadd.s32 %s67, 1
    %p71 = scmp.eq.s32.totalorder %s12, 1
    %p72 = scmp.ne.s32.totalorder %s67, %s69
    %p73 = scmp.eq.s32.totalorder %s12, 0
    %p74 = por %p72, %p73
    %p75 = scmp.ne.s32.totalorder %s67, %s69
    %p76 = scmp.eq.s32.totalorder %s17, 1
    %p77 = por %p75, %p76
    %p78 = scmp.ne.s32.totalorder %s69, %s70
    %p79 = scmp.eq.s32.totalorder %s17, 0
    %p80 = por %p78, %p79
    %p81 = scmp.ne.s32.totalorder %s69, %s70
    %p82 = scmp.eq.s32.totalorder %s18, 1
    %p83 = por %p81, %p82
    %p85 = scmp.ne.s32.totalorder %s70, %s84
    %p86 = scmp.eq.s32.totalorder %s18, 0
    %p87 = por %p85, %p86
    %s89 = sadd.s32 %s88, 1
    %p92 = scmp.eq.s32.totalorder %s12, 1
    %p93 = scmp.ne.s32.totalorder %s88, %s90
    %p94 = scmp.eq.s32.totalorder %s12, 0
    %p95 = por %p93, %p94
    %p96 = scmp.ne.s32.totalorder %s88, %s90
    %p97 = scmp.eq.s32.totalorder %s17, 1
    %p98 = por %p96, %p97
    %p99 = scmp.ne.s32.totalorder %s90, %s91
    %p100 = scmp.eq.s32.totalorder %s17, 0
    %p101 = por %p99, %p100
    %p102 = scmp.ne.s32.totalorder %s90, %s91
    %p103 = scmp.eq.s32.totalorder %s18, 1
    %p104 = por %p102, %p103
    %p106 = scmp.ne.s32.totalorder %s91, %s105
    %p107 = scmp.eq.s32.totalorder %s18, 0
    %p108 = por %p106, %p107
    %s110 = sadd.s32 %s109, 1
    %p113 = scmp.eq.s32.totalorder %s12, 1
    %p114 = scmp.ne.s32.totalorder %s109, %s111
    %p115 = scmp.eq.s32.totalorder %s12, 0
    %p116 = por %p114, %p115
    %p117 = scmp.ne.s32.totalorder %s109, %s111
    %p118 = scmp.eq.s32.totalorder %s17, 1
    %p119 = por %p117, %p118
    %p120 = scmp.ne.s32.totalorder %s111, %s112
    %p121 = scmp.eq.s32.totalorder %s17, 0
    %p122 = por %p120, %p121
    %p123 = scmp.ne.s32.totalorder %s111, %s112
    %p124 = scmp.eq.s32.totalorder %s18, 1
    %p125 = por %p123, %p124
    %p127 = scmp.ne.s32.totalorder %s112, %s126
    %p128 = scmp.eq.s32.totalorder %s18, 0
    %p129 = por %p127, %p128
    %s130 = ssub.s32 %s12, %s19
    %p131 = scmp.eq.s32.totalorder %s130, 0
    %s133 = sadd.s32 %s132, 1
    %s134 = scalar_select %p131, %s132, %s133
    %p137 = pneg %p131
    %p138 = scmp.eq.s32.totalorder %s12, 1
    %p139 = por %p137, %p138
    %p140 = scmp.ne.s32.totalorder %s132, %s135
    %p141 = scmp.eq.s32.totalorder %s12, 0
    %p142 = por %p140, %p141
    %p143 = scmp.ne.s32.totalorder %s132, %s135
    %p144 = scmp.eq.s32.totalorder %s17, 1
    %p145 = por %p143, %p144
    %p146 = scmp.ne.s32.totalorder %s135, %s136
    %p147 = scmp.eq.s32.totalorder %s17, 0
    %p148 = por %p146, %p147
    %p149 = scmp.ne.s32.totalorder %s135, %s136
    %p150 = scmp.eq.s32.totalorder %s18, 1
    %p151 = por %p149, %p150
    %p153 = scmp.ne.s32.totalorder %s136, %s152
    %p154 = scmp.eq.s32.totalorder %s18, 0
    %p155 = por %p153, %p154
    %s156 = ssub.s32 %s12, %s19
    %p157 = scmp.eq.s32.totalorder %s156, 0
    %s159 = sadd.s32 %s158, 1
    %s160 = scalar_select %p157, %s158, %s159
    %p163 = pneg %p157
    %p164 = scmp.eq.s32.totalorder %s12, 1
    %p165 = por %p163, %p164
    %p166 = scmp.ne.s32.totalorder %s158, %s161
    %p167 = scmp.eq.s32.totalorder %s12, 0
    %p168 = por %p166, %p167
    %p169 = scmp.ne.s32.totalorder %s158, %s161
    %p170 = scmp.eq.s32.totalorder %s17, 1
    %p171 = por %p169, %p170
    %p172 = scmp.ne.s32.totalorder %s161, %s162
    %p173 = scmp.eq.s32.totalorder %s17, 0
    %p174 = por %p172, %p173
    %p175 = scmp.ne.s32.totalorder %s161, %s162
    %p176 = scmp.eq.s32.totalorder %s18, 1
    %p177 = por %p175, %p176
    %p179 = scmp.ne.s32.totalorder %s162, %s178
    %p180 = scmp.eq.s32.totalorder %s18, 0
    %p181 = por %p179, %p180
    %p182 = scmp.le.s32.totalorder 1, %s12
    %p183 = scmp.lt.s32.totalorder %s12, 3
    %p184 = pnand %p182, %p183
    %p185 = pneg %p184
    // Predicated region
    $region9: #{conv_basin_block.5} parent=5 // pred_check
      _
    $region10: #{conv_basin_block.5} parent=5 // pred_check_branch
      %187 = sbr.rel (%p184) target = $region12
    $region11: #{conv_basin_block.5} parent=5 // pred_region
      %s188 = ssub.s32 %s12, 1
      // Predicated region
      $region13: #{conv_basin_block.5} parent=11 // pred_check
        %p189 = pneg %p59
      $region14: #{conv_basin_block.5} parent=11 // pred_check_branch
        %191 = sbr.rel (%p189) target = $region16
      $region15: #{conv_basin_block.5} parent=11 // pred_region
        _
      $region16: #{conv_basin_block.5} parent=11 // pred_fallthru
        _
      // Predicated region
      $region17: #{conv_basin_block.5} parent=11 // pred_check
        %p192 = pneg %p80
      $region18: #{conv_basin_block.5} parent=11 // pred_check_branch
        %194 = sbr.rel (%p192) target = $region20
      $region19: #{conv_basin_block.5} parent=11 // pred_region
        _
      $region20: #{conv_basin_block.5} parent=11 // pred_fallthru
        _
      // Predicated region
      $region21: #{conv_basin_block.5} parent=11 // pred_check
        %p195 = pneg %p101
      $region22: #{conv_basin_block.5} parent=11 // pred_check_branch
        %197 = sbr.rel (%p195) target = $region24
      $region23: #{conv_basin_block.5} parent=11 // pred_region
        _
      $region24: #{conv_basin_block.5} parent=11 // pred_fallthru
        _
      // Predicated region
      $region25: #{conv_basin_block.5} parent=11 // pred_check
        %p198 = pneg %p122
      $region26: #{conv_basin_block.5} parent=11 // pred_check_branch
        %200 = sbr.rel (%p198) target = $region28
      $region27: #{conv_basin_block.5} parent=11 // pred_region
        _
      $region28: #{conv_basin_block.5} parent=11 // pred_fallthru
        _
    $region12: #{conv_basin_block.5} parent=5 // pred_fallthru
      _
    %p201 = scmp.lt.s32.totalorder %s12, 2
    // Predicated region
    $region29: #{conv_basin_block.5} parent=5 // pred_check
      %p202 = pneg %p201
    $region30: #{conv_basin_block.5} parent=5 // pred_check_branch
      %204 = sbr.rel (%p202) target = $region32
    $region31: #{conv_basin_block.5} parent=5 // pred_region
      // Predicated region
      $region33: #{conv_basin_block.5} parent=31 // pred_check
        %p205 = pneg %p32
      $region34: #{conv_basin_block.5} parent=31 // pred_check_branch
        %207 = sbr.rel (%p205) target = $region36
      $region35: #{conv_basin_block.5} parent=31 // pred_region
        %p208 = scmp.lt.s32.totalorder %s12, 1
        %s209 = scalar_select %p208, %s12, 1
        %s210 = smul.addr %s209, 41
        %s211 = smul.addr %s210, 4
        %s212 = scalar_lea.vmem %s0, %s211
      $region36: #{conv_basin_block.5} parent=31 // pred_fallthru
        _
      // Predicated region
      $region37: #{conv_basin_block.5} parent=31 // pred_check
        %p213 = pneg %p142
      $region38: #{conv_basin_block.5} parent=31 // pred_check_branch
        %215 = sbr.rel (%p213) target = $region40
      $region39: #{conv_basin_block.5} parent=31 // pred_region
        %p216 = scmp.lt.s32.totalorder %s12, 1
        %s217 = scalar_select %p216, %s12, 1
        %s218 = smul.addr %s217, 41
        %s219 = smul.addr %s218, 4
        %s220 = scalar_lea.vmem %s5, %s219
      $region40: #{conv_basin_block.5} parent=31 // pred_fallthru
        _
    $region32: #{conv_basin_block.5} parent=5 // pred_fallthru
      _
    %p221 = scmp.le.s32.totalorder 1, %s12
    %p222 = scmp.lt.s32.totalorder %s12, 3
    %p223 = pnand %p221, %p222
    %p224 = pneg %p223
    // Predicated region
    $region41: #{conv_basin_block.5} parent=5 // pred_check
      _
    $region42: #{conv_basin_block.5} parent=5 // pred_check_branch
      %226 = sbr.rel (%p223) target = $region44
    $region43: #{conv_basin_block.5} parent=5 // pred_region
      %s227 = ssub.s32 %s12, 1
      %p228 = scmp.lt.s32.totalorder %s17, 1
      %s229 = scalar_select %p228, %s17, 1
      %s230 = smul.addr %s229, 41
      %s231 = smul.addr %s230, 4
      %s232 = scalar_lea.vmem %s0, %s231
      %p233 = pneg %p38
      %p234 = pneg %p35
      %p235 = pneg %p59
      %p236 = pneg %p56
      %p237 = pneg %p80
      %p238 = pneg %p77
      %p239 = pneg %p101
      %p240 = pneg %p98
      %p241 = pneg %p122
      %p242 = pneg %p119
      %p243 = scmp.lt.s32.totalorder %s17, 1
      %s244 = scalar_select %p243, %s17, 1
      %s245 = smul.addr %s244, 41
      %s246 = smul.addr %s245, 4
      %s247 = scalar_lea.vmem %s5, %s246
      %p248 = pneg %p148
      %p249 = pneg %p145
      %p250 = pneg %p174
      %p251 = pneg %p171
      %p252 = scmp.lt.s32.totalorder %s17, 1
      %s253 = scalar_select %p252, %s17, 1
      %s254 = smul.addr %s253, 36
      %s255 = smul.addr %s254, 8
      %s256 = scalar_lea.vmem %s6, %s255
      %p257 = scmp.lt.s32.totalorder %s17, 1
      %s258 = scalar_select %p257, %s17, 1
      %s259 = smul.addr %s258, 41
      %s260 = smul.addr %s259, 4
      %s261 = scalar_lea.vmem %s0, %s260
      %p262 = scmp.lt.s32.totalorder %s17, 1
      %s263 = scalar_select %p262, %s17, 1
      %s264 = smul.addr %s263, 41
      %s265 = smul.addr %s264, 4
      %s266 = scalar_lea.vmem %s5, %s265
      %p267 = scmp.lt.s32.totalorder %s17, 1
      %s268 = scalar_select %p267, %s17, 1
      %s269 = smul.addr %s268, 36
      %s270 = smul.addr %s269, 8
      %s271 = scalar_lea.vmem %s6, %s270
      %v273 = vld [vmem:[%s261] sm:$0xf]
      %v274 = vld [vmem:[%s261 + $0x4] sm:$0xf]
      %v275 = vld [vmem:[%s261 + $0x8] sm:$0xf]
      %v276 = vld [vmem:[%s261 + $0xc] sm:$0xf]
      %v277 = vld [vmem:[%s261 + $0x10] sm:$0xf]
      %v278 = vld [vmem:[%s261 + $0x14] sm:$0xf]
      %v279 = vld [vmem:[%s261 + $0x18] sm:$0xf]
      %v280 = vld [vmem:[%s261 + $0x1c] sm:$0xf]
      %v281 = vld [vmem:[%s261 + $0x20] sm:$0xf]
      %v282 = vld [vmem:[%s261 + $0x24] sm:$0xf]
      %v283 = vld [vmem:[%s261 + $0x28] sm:$0xf]
      %v284 = vld [vmem:[%s261 + $0x2c] sm:$0xf]
      %v285 = vld [vmem:[%s261 + $0x30] sm:$0xf]
      %v286 = vld [vmem:[%s261 + $0x34] sm:$0xf]
      %v287 = vld [vmem:[%s261 + $0x38] sm:$0xf]
      %v288 = vld [vmem:[%s261 + $0x3c] sm:$0xf]
      %v289 = vld [vmem:[%s261 + $0x40] sm:$0xf]
      %v290 = vld [vmem:[%s261 + $0x44] sm:$0xf]
      %v291 = vld [vmem:[%s261 + $0x48] sm:$0xf]
      %v292 = vld [vmem:[%s261 + $0x4c] sm:$0xf]
      %v293 = vld [vmem:[%s261 + $0x50] sm:$0xf]
      %v294 = vld [vmem:[%s261 + $0x54] sm:$0xf]
      %v295 = vld [vmem:[%s261 + $0x58] sm:$0xf]
      %v296 = vld [vmem:[%s261 + $0x5c] sm:$0xf]
      %v297 = vld [vmem:[%s261 + $0x60] sm:$0xf]
      %v298 = vld [vmem:[%s261 + $0x64] sm:$0xf]
      %v299 = vld [vmem:[%s261 + $0x68] sm:$0xf]
      %v300 = vld [vmem:[%s261 + $0x6c] sm:$0xf]
      %v301 = vld [vmem:[%s261 + $0x70] sm:$0xf]
      %v302 = vld [vmem:[%s261 + $0x74] sm:$0xf]
      %v303 = vld [vmem:[%s261 + $0x78] sm:$0xf]
      %v304 = vld [vmem:[%s261 + $0x7c] sm:$0xf]
      %v305 = vld [vmem:[%s261 + $0x80] sm:$0xf]
      %v306 = vld [vmem:[%s261 + $0x84] sm:$0xf]
      %v307 = vld [vmem:[%s261 + $0x88] sm:$0xf]
      %v308 = vld [vmem:[%s261 + $0x8c] sm:$0x7]
      %v309 = vld [vmem:[%s261 + $0x8c] sm:$0xf]
      %v310 = vld [vmem:[%s261] sm:$0xe]
      %v311 = vld [vmem:[%s261 + $0x8] sm:$0xe]
      %v312 = vld [vmem:[%s261 + $0x90] sm:$0xf]
      %v313 = vld [vmem:[%s261 + $0x94] sm:$0xf]
      %v314 = vld [vmem:[%s261 + $0x98] sm:$0x1]
      %v315 = vld [vmem:[%s261 + $0x8] sm:$0xc]
      %v316 = vld [vmem:[%s261 + $0x10] sm:$0xc]
      %v317 = vld [vmem:[%s261 + $0x98] sm:$0xf]
      %v318 = vld [vmem:[%s261 + $0x9c] sm:$0xf]
      %v319 = vld [vmem:[%s261 + $0xa0] sm:$0x1]
      %v320 = vld [vmem:[%s261 + $0xa0] sm:$0x3]
      %v321 = vld [vmem:[%s261 + $0x10] sm:$0x8]
      %v358 = vunpack.c.l.b16 %v273
      %v359 = vunpack.c.l.b16 %v274
      %v360 = vunpack.c.l.b16 %v275
      %v361 = vunpack.c.l.b16 %v276
      %v362 = vunpack.c.l.b16 %v277
      %v363 = vunpack.c.l.b16 %v278
      %v364 = vunpack.c.l.b16 %v279
      %v365 = vunpack.c.l.b16 %v280
      %v366 = vunpack.c.l.b16 %v281
      %v367 = vunpack.c.l.b16 %v282
      %v368 = vunpack.c.l.b16 %v283
      %v369 = vunpack.c.l.b16 %v284
      %v370 = vunpack.c.l.b16 %v285
      %v371 = vunpack.c.l.b16 %v286
      %v372 = vunpack.c.l.b16 %v287
      %v373 = vunpack.c.l.b16 %v288
      %v374 = vunpack.c.l.b16 %v289
      %v375 = vunpack.c.l.b16 %v290
      %v376 = vunpack.c.l.b16 %v291
      %v377 = vunpack.c.l.b16 %v292
      %v378 = vunpack.c.l.b16 %v293
      %v379 = vunpack.c.l.b16 %v294
      %v380 = vunpack.c.l.b16 %v295
      %v381 = vunpack.c.l.b16 %v296
      %v382 = vunpack.c.l.b16 %v297
      %v383 = vunpack.c.l.b16 %v298
      %v384 = vunpack.c.l.b16 %v299
      %v385 = vunpack.c.l.b16 %v300
      %v386 = vunpack.c.l.b16 %v301
      %v387 = vunpack.c.l.b16 %v302
      %v388 = vunpack.c.l.b16 %v303
      %v389 = vunpack.c.l.b16 %v304
      %v390 = vunpack.c.l.b16 %v305
      %v391 = vunpack.c.l.b16 %v306
      %v392 = vunpack.c.l.b16 %v307
      %v393 = vunpack.c.l.b16 %v308
      %v394 = vpack.c.b16 %v359, %v358
      %v395 = vpack.c.b16 %v361, %v360
      %v396 = vpack.c.b16 %v363, %v362
      %v397 = vpack.c.b16 %v365, %v364
      %v398 = vpack.c.b16 %v367, %v366
      %v399 = vpack.c.b16 %v369, %v368
      %v400 = vpack.c.b16 %v371, %v370
      %v401 = vpack.c.b16 %v373, %v372
      %v402 = vpack.c.b16 %v375, %v374
      %v403 = vpack.c.b16 %v377, %v376
      %v404 = vpack.c.b16 %v379, %v378
      %v405 = vpack.c.b16 %v381, %v380
      %v406 = vpack.c.b16 %v383, %v382
      %v407 = vpack.c.b16 %v385, %v384
      %v408 = vpack.c.b16 %v387, %v386
      %v409 = vpack.c.b16 %v389, %v388
      %v410 = vpack.c.b16 %v391, %v390
      %v411 = vpack.c.b16 %v393, %v392
      %v431 = vunpack.c.l.b16 %v309
      %v432 = vpack.c.b16 %v431, %v392
      %vm433 = vsmask.f32 7424
      %v435 = vshrl.u32 %v394, 16
      %v437 = vshll.u32 %v394, 16
      %v439 = vrot.slane %v437, 1
      %v440 = vor.u32 %v435, %v439
      %v442 = vshll.u32 %v395, 16
      %v444 = vrot.slane %v442, 1
      %v445 = vsel %vm433, %v440, %v444
      %v446 = vshrl.u32 %v395, 16
      %v448 = vor.u32 %v446, %v444
      %v450 = vshll.u32 %v396, 16
      %v452 = vrot.slane %v450, 1
      %v453 = vsel %vm433, %v448, %v452
      %v454 = vshrl.u32 %v396, 16
      %v456 = vor.u32 %v454, %v452
      %v458 = vshll.u32 %v397, 16
      %v460 = vrot.slane %v458, 1
      %v461 = vsel %vm433, %v456, %v460
      %v462 = vshrl.u32 %v397, 16
      %v464 = vor.u32 %v462, %v460
      %v466 = vshll.u32 %v398, 16
      %v468 = vrot.slane %v466, 1
      %v469 = vsel %vm433, %v464, %v468
      %v470 = vshrl.u32 %v398, 16
      %v472 = vor.u32 %v470, %v468
      %v474 = vshll.u32 %v399, 16
      %v476 = vrot.slane %v474, 1
      %v477 = vsel %vm433, %v472, %v476
      %v478 = vshrl.u32 %v399, 16
      %v480 = vor.u32 %v478, %v476
      %v482 = vshll.u32 %v400, 16
      %v484 = vrot.slane %v482, 1
      %v485 = vsel %vm433, %v480, %v484
      %v486 = vshrl.u32 %v400, 16
      %v488 = vor.u32 %v486, %v484
      %v490 = vshll.u32 %v401, 16
      %v492 = vrot.slane %v490, 1
      %v493 = vsel %vm433, %v488, %v492
      %v494 = vshrl.u32 %v401, 16
      %v496 = vor.u32 %v494, %v492
      %v498 = vshll.u32 %v402, 16
      %v500 = vrot.slane %v498, 1
      %v501 = vsel %vm433, %v496, %v500
      %v502 = vshrl.u32 %v402, 16
      %v504 = vor.u32 %v502, %v500
      %v506 = vshll.u32 %v403, 16
      %v508 = vrot.slane %v506, 1
      %v509 = vsel %vm433, %v504, %v508
      %v510 = vshrl.u32 %v403, 16
      %v512 = vor.u32 %v510, %v508
      %v514 = vshll.u32 %v404, 16
      %v516 = vrot.slane %v514, 1
      %v517 = vsel %vm433, %v512, %v516
      %v518 = vshrl.u32 %v404, 16
      %v520 = vor.u32 %v518, %v516
      %v522 = vshll.u32 %v405, 16
      %v524 = vrot.slane %v522, 1
      %v525 = vsel %vm433, %v520, %v524
      %v526 = vshrl.u32 %v405, 16
      %v528 = vor.u32 %v526, %v524
      %v530 = vshll.u32 %v406, 16
      %v532 = vrot.slane %v530, 1
      %v533 = vsel %vm433, %v528, %v532
      %v534 = vshrl.u32 %v406, 16
      %v536 = vor.u32 %v534, %v532
      %v538 = vshll.u32 %v407, 16
      %v540 = vrot.slane %v538, 1
      %v541 = vsel %vm433, %v536, %v540
      %v542 = vshrl.u32 %v407, 16
      %v544 = vor.u32 %v542, %v540
      %v546 = vshll.u32 %v408, 16
      %v548 = vrot.slane %v546, 1
      %v549 = vsel %vm433, %v544, %v548
      %v550 = vshrl.u32 %v408, 16
      %v552 = vor.u32 %v550, %v548
      %v554 = vshll.u32 %v409, 16
      %v556 = vrot.slane %v554, 1
      %v557 = vsel %vm433, %v552, %v556
      %v558 = vshrl.u32 %v409, 16
      %v560 = vor.u32 %v558, %v556
      %v562 = vshll.u32 %v410, 16
      %v564 = vrot.slane %v562, 1
      %v565 = vsel %vm433, %v560, %v564
      %v566 = vshrl.u32 %v410, 16
      %v568 = vor.u32 %v566, %v564
      %v570 = vshll.u32 %v432, 16
      %v572 = vrot.slane %v570, 1
      %v573 = vsel %vm433, %v568, %v572
      %v574 = vshrl.u32 %v432, 16
      %v576 = vor.u32 %v574, %v572
      %v596 = vunpack.c.l.b16 %v310
      %v597 = vpack.c.b16 %v359, %v596
      %vm598 = vcmask 1046528
      %v599 = vrot.slane %v597, 1
      %v600 = vrot.slane %v395, 1
      %v601 = vsel %vm598, %v599, %v600
      %v602 = vrot.slane %v396, 1
      %v603 = vsel %vm598, %v600, %v602
      %v604 = vrot.slane %v397, 1
      %v605 = vsel %vm598, %v602, %v604
      %v606 = vrot.slane %v398, 1
      %v607 = vsel %vm598, %v604, %v606
      %v608 = vrot.slane %v399, 1
      %v609 = vsel %vm598, %v606, %v608
      %v610 = vrot.slane %v400, 1
      %v611 = vsel %vm598, %v608, %v610
      %v612 = vrot.slane %v401, 1
      %v613 = vsel %vm598, %v610, %v612
      %v614 = vrot.slane %v402, 1
      %v615 = vsel %vm598, %v612, %v614
      %v616 = vrot.slane %v403, 1
      %v617 = vsel %vm598, %v614, %v616
      %v618 = vrot.slane %v404, 1
      %v619 = vsel %vm598, %v616, %v618
      %v620 = vrot.slane %v405, 1
      %v621 = vsel %vm598, %v618, %v620
      %v622 = vrot.slane %v406, 1
      %v623 = vsel %vm598, %v620, %v622
      %v624 = vrot.slane %v407, 1
      %v625 = vsel %vm598, %v622, %v624
      %v626 = vrot.slane %v408, 1
      %v627 = vsel %vm598, %v624, %v626
      %v628 = vrot.slane %v409, 1
      %v629 = vsel %vm598, %v626, %v628
      %v630 = vrot.slane %v410, 1
      %v631 = vsel %vm598, %v628, %v630
      %v632 = vrot.slane %v432, 1
      %v633 = vsel %vm598, %v630, %v632
      %v655 = vunpack.c.l.b16 %v311
      %v656 = vunpack.c.l.b16 %v312
      %v657 = vunpack.c.l.b16 %v313
      %v658 = vpack.c.b16 %v361, %v655
      %v659 = vpack.c.b16 %v657, %v656
      %v660 = vrot.slane %v658, 1
      %v661 = vsel %vm598, %v660, %v602
      %v662 = vrot.slane %v659, 1
      %v663 = vsel %vm598, %v632, %v662
      %v668 = vunpack.c.l.b16 %v314
      %v669 = vpack.c.b16 %v668, %v668
      %vm670 = vsmask.f32 6400
      %v672 = vshrl.u32 %v658, 16
      %v674 = vrot.slane %v672, 1
      %v675 = vshll.u32 %v658, 16
      %v677 = vrot.slane %v675, 2
      %v678 = vor.u32 %v674, %v677
      %v679 = vrot.slane %v454, 1
      %v680 = vrot.slane %v450, 2
      %v681 = vor.u32 %v679, %v680
      %v682 = vsel %vm670, %v678, %v681
      %v683 = vrot.slane %v462, 1
      %v684 = vrot.slane %v458, 2
      %v685 = vor.u32 %v683, %v684
      %v686 = vsel %vm670, %v681, %v685
      %v687 = vrot.slane %v470, 1
      %v688 = vrot.slane %v466, 2
      %v689 = vor.u32 %v687, %v688
      %v690 = vsel %vm670, %v685, %v689
      %v691 = vrot.slane %v478, 1
      %v692 = vrot.slane %v474, 2
      %v693 = vor.u32 %v691, %v692
      %v694 = vsel %vm670, %v689, %v693
      %v695 = vrot.slane %v486, 1
      %v696 = vrot.slane %v482, 2
      %v697 = vor.u32 %v695, %v696
      %v698 = vsel %vm670, %v693, %v697
      %v699 = vrot.slane %v494, 1
      %v700 = vrot.slane %v490, 2
      %v701 = vor.u32 %v699, %v700
      %v702 = vsel %vm670, %v697, %v701
      %v703 = vrot.slane %v502, 1
      %v704 = vrot.slane %v498, 2
      %v705 = vor.u32 %v703, %v704
      %v706 = vsel %vm670, %v701, %v705
      %v707 = vrot.slane %v510, 1
      %v708 = vrot.slane %v506, 2
      %v709 = vor.u32 %v707, %v708
      %v710 = vsel %vm670, %v705, %v709
      %v711 = vrot.slane %v518, 1
      %v712 = vrot.slane %v514, 2
      %v713 = vor.u32 %v711, %v712
      %v714 = vsel %vm670, %v709, %v713
      %v715 = vrot.slane %v526, 1
      %v716 = vrot.slane %v522, 2
      %v717 = vor.u32 %v715, %v716
      %v718 = vsel %vm670, %v713, %v717
      %v719 = vrot.slane %v534, 1
      %v720 = vrot.slane %v530, 2
      %v721 = vor.u32 %v719, %v720
      %v722 = vsel %vm670, %v717, %v721
      %v723 = vrot.slane %v542, 1
      %v724 = vrot.slane %v538, 2
      %v725 = vor.u32 %v723, %v724
      %v726 = vsel %vm670, %v721, %v725
      %v727 = vrot.slane %v550, 1
      %v728 = vrot.slane %v546, 2
      %v729 = vor.u32 %v727, %v728
      %v730 = vsel %vm670, %v725, %v729
      %v731 = vrot.slane %v558, 1
      %v732 = vrot.slane %v554, 2
      %v733 = vor.u32 %v731, %v732
      %v734 = vsel %vm670, %v729, %v733
      %v735 = vrot.slane %v566, 1
      %v736 = vrot.slane %v562, 2
      %v737 = vor.u32 %v735, %v736
      %v738 = vsel %vm670, %v733, %v737
      %v739 = vrot.slane %v574, 1
      %v740 = vrot.slane %v570, 2
      %v741 = vor.u32 %v739, %v740
      %v742 = vsel %vm670, %v737, %v741
      %v744 = vshrl.u32 %v659, 16
      %v746 = vrot.slane %v744, 1
      %v747 = vshll.u32 %v659, 16
      %v749 = vrot.slane %v747, 2
      %v750 = vor.u32 %v746, %v749
      %v751 = vsel %vm670, %v741, %v750
      %v753 = vshll.u32 %v669, 16
      %v755 = vrot.slane %v753, 2
      %v756 = vsel %vm670, %v750, %v755
      %v776 = vunpack.c.l.b16 %v315
      %v777 = vpack.c.b16 %v361, %v776
      %vm778 = vcmask 1045504
      %v779 = vrot.slane %v777, 2
      %v780 = vrot.slane %v396, 2
      %v781 = vsel %vm778, %v779, %v780
      %v782 = vrot.slane %v397, 2
      %v783 = vsel %vm778, %v780, %v782
      %v784 = vrot.slane %v398, 2
      %v785 = vsel %vm778, %v782, %v784
      %v786 = vrot.slane %v399, 2
      %v787 = vsel %vm778, %v784, %v786
      %v788 = vrot.slane %v400, 2
      %v789 = vsel %vm778, %v786, %v788
      %v790 = vrot.slane %v401, 2
      %v791 = vsel %vm778, %v788, %v790
      %v792 = vrot.slane %v402, 2
      %v793 = vsel %vm778, %v790, %v792
      %v794 = vrot.slane %v403, 2
      %v795 = vsel %vm778, %v792, %v794
      %v796 = vrot.slane %v404, 2
      %v797 = vsel %vm778, %v794, %v796
      %v798 = vrot.slane %v405, 2
      %v799 = vsel %vm778, %v796, %v798
      %v800 = vrot.slane %v406, 2
      %v801 = vsel %vm778, %v798, %v800
      %v802 = vrot.slane %v407, 2
      %v803 = vsel %vm778, %v800, %v802
      %v804 = vrot.slane %v408, 2
      %v805 = vsel %vm778, %v802, %v804
      %v806 = vrot.slane %v409, 2
      %v807 = vsel %vm778, %v804, %v806
      %v808 = vrot.slane %v410, 2
      %v809 = vsel %vm778, %v806, %v808
      %v810 = vrot.slane %v432, 2
      %v811 = vsel %vm778, %v808, %v810
      %v812 = vrot.slane %v659, 2
      %v813 = vsel %vm778, %v810, %v812
      %v814 = vrot.slane %v669, 2
      %v815 = vsel %vm778, %v812, %v814
      %v838 = vunpack.c.l.b16 %v316
      %v839 = vunpack.c.l.b16 %v317
      %v840 = vunpack.c.l.b16 %v318
      %v841 = vunpack.c.l.b16 %v319
      %v842 = vpack.c.b16 %v363, %v838
      %v843 = vpack.c.b16 %v840, %v839
      %v844 = vpack.c.b16 %v841, %v841
      %v845 = vrot.slane %v842, 2
      %v846 = vsel %vm778, %v845, %v782
      %v847 = vrot.slane %v843, 2
      %v848 = vsel %vm778, %v812, %v847
      %v849 = vrot.slane %v844, 2
      %v850 = vsel %vm778, %v847, %v849
      %v855 = vunpack.c.l.b16 %v320
      %v856 = vpack.c.b16 %v855, %v855
      %vm857 = vsmask.f32 5376
      %v859 = vshrl.u32 %v842, 16
      %v861 = vrot.slane %v859, 2
      %v862 = vshll.u32 %v842, 16
      %v864 = vrot.slane %v862, 3
      %v865 = vor.u32 %v861, %v864
      %v866 = vrot.slane %v462, 2
      %v867 = vrot.slane %v458, 3
      %v868 = vor.u32 %v866, %v867
      %v869 = vsel %vm857, %v865, %v868
      %v870 = vrot.slane %v470, 2
      %v871 = vrot.slane %v466, 3
      %v872 = vor.u32 %v870, %v871
      %v873 = vsel %vm857, %v868, %v872
      %v874 = vrot.slane %v478, 2
      %v875 = vrot.slane %v474, 3
      %v876 = vor.u32 %v874, %v875
      %v877 = vsel %vm857, %v872, %v876
      %v878 = vrot.slane %v486, 2
      %v879 = vrot.slane %v482, 3
      %v880 = vor.u32 %v878, %v879
      %v881 = vsel %vm857, %v876, %v880
      %v882 = vrot.slane %v494, 2
      %v883 = vrot.slane %v490, 3
      %v884 = vor.u32 %v882, %v883
      %v885 = vsel %vm857, %v880, %v884
      %v886 = vrot.slane %v502, 2
      %v887 = vrot.slane %v498, 3
      %v888 = vor.u32 %v886, %v887
      %v889 = vsel %vm857, %v884, %v888
      %v890 = vrot.slane %v510, 2
      %v891 = vrot.slane %v506, 3
      %v892 = vor.u32 %v890, %v891
      %v893 = vsel %vm857, %v888, %v892
      %v894 = vrot.slane %v518, 2
      %v895 = vrot.slane %v514, 3
      %v896 = vor.u32 %v894, %v895
      %v897 = vsel %vm857, %v892, %v896
      %v898 = vrot.slane %v526, 2
      %v899 = vrot.slane %v522, 3
      %v900 = vor.u32 %v898, %v899
      %v901 = vsel %vm857, %v896, %v900
      %v902 = vrot.slane %v534, 2
      %v903 = vrot.slane %v530, 3
      %v904 = vor.u32 %v902, %v903
      %v905 = vsel %vm857, %v900, %v904
      %v906 = vrot.slane %v542, 2
      %v907 = vrot.slane %v538, 3
      %v908 = vor.u32 %v906, %v907
      %v909 = vsel %vm857, %v904, %v908
      %v910 = vrot.slane %v550, 2
      %v911 = vrot.slane %v546, 3
      %v912 = vor.u32 %v910, %v911
      %v913 = vsel %vm857, %v908, %v912
      %v914 = vrot.slane %v558, 2
      %v915 = vrot.slane %v554, 3
      %v916 = vor.u32 %v914, %v915
      %v917 = vsel %vm857, %v912, %v916
      %v918 = vrot.slane %v566, 2
      %v919 = vrot.slane %v562, 3
      %v920 = vor.u32 %v918, %v919
      %v921 = vsel %vm857, %v916, %v920
      %v922 = vrot.slane %v574, 2
      %v923 = vrot.slane %v570, 3
      %v924 = vor.u32 %v922, %v923
      %v925 = vsel %vm857, %v920, %v924
      %v926 = vrot.slane %v744, 2
      %v927 = vrot.slane %v747, 3
      %v928 = vor.u32 %v926, %v927
      %v929 = vsel %vm857, %v924, %v928
      %v931 = vshrl.u32 %v843, 16
      %v933 = vrot.slane %v931, 2
      %v934 = vshll.u32 %v843, 16
      %v936 = vrot.slane %v934, 3
      %v937 = vor.u32 %v933, %v936
      %v938 = vsel %vm857, %v928, %v937
      %v940 = vshrl.u32 %v856, 16
      %v942 = vrot.slane %v940, 2
      %v943 = vshll.u32 %v856, 16
      %v945 = vrot.slane %v943, 3
      %v946 = vor.u32 %v942, %v945
      %v947 = vsel %vm857, %v937, %v946
      %v967 = vunpack.c.l.b16 %v321
      %v968 = vpack.c.b16 %v363, %v967
      %vm969 = vcmask 1044480
      %v970 = vrot.slane %v968, 3
      %v971 = vrot.slane %v397, 3
      %v972 = vsel %vm969, %v970, %v971
      %v973 = vrot.slane %v398, 3
      %v974 = vsel %vm969, %v971, %v973
      %v975 = vrot.slane %v399, 3
      %v976 = vsel %vm969, %v973, %v975
      %v977 = vrot.slane %v400, 3
      %v978 = vsel %vm969, %v975, %v977
      %v979 = vrot.slane %v401, 3
      %v980 = vsel %vm969, %v977, %v979
      %v981 = vrot.slane %v402, 3
      %v982 = vsel %vm969, %v979, %v981
      %v983 = vrot.slane %v403, 3
      %v984 = vsel %vm969, %v981, %v983
      %v985 = vrot.slane %v404, 3
      %v986 = vsel %vm969, %v983, %v985
      %v987 = vrot.slane %v405, 3
      %v988 = vsel %vm969, %v985, %v987
      %v989 = vrot.slane %v406, 3
      %v990 = vsel %vm969, %v987, %v989
      %v991 = vrot.slane %v407, 3
      %v992 = vsel %vm969, %v989, %v991
      %v993 = vrot.slane %v408, 3
      %v994 = vsel %vm969, %v991, %v993
      %v995 = vrot.slane %v409, 3
      %v996 = vsel %vm969, %v993, %v995
      %v997 = vrot.slane %v410, 3
      %v998 = vsel %vm969, %v995, %v997
      %v999 = vrot.slane %v432, 3
      %v1000 = vsel %vm969, %v997, %v999
      %v1001 = vrot.slane %v659, 3
      %v1002 = vsel %vm969, %v999, %v1001
      %v1003 = vrot.slane %v843, 3
      %v1004 = vsel %vm969, %v1001, %v1003
      %v1005 = vrot.slane %v856, 3
      %v1006 = vsel %vm969, %v1003, %v1005
      %v1025 = vld [vmem:[%s1] sm:$0xf]
      %v1026 = vld [vmem:[%s1 + $0x4] sm:$0xf]
      %v1027 = vld [vmem:[%s1 + $0x8] sm:$0xf]
      %v1028 = vld [vmem:[%s1 + $0xc] sm:$0xf]
      %v1029 = vld [vmem:[%s1 + $0x10] sm:$0xf]
      %v1030 = vld [vmem:[%s1 + $0x14] sm:$0xf]
      %v1031 = vld [vmem:[%s1 + $0x18] sm:$0xf]
      %v1032 = vld [vmem:[%s1 + $0x1c] sm:$0xf]
      %v1033 = vld [vmem:[%s1 + $0x20] sm:$0xf]
      %v1034 = vld [vmem:[%s1 + $0x24] sm:$0xf]
      %v1035 = vld [vmem:[%s1 + $0x28] sm:$0xf]
      %v1036 = vld [vmem:[%s1 + $0x2c] sm:$0xf]
      %v1037 = vld [vmem:[%s1 + $0x30] sm:$0xf]
      %v1038 = vld [vmem:[%s1 + $0x34] sm:$0xf]
      %v1039 = vld [vmem:[%s1 + $0x38] sm:$0xf]
      %v1040 = vld [vmem:[%s1 + $0x3c] sm:$0xf]
      %v1041 = vld [vmem:[%s1 + $0x40] sm:$0xf]
      %v1042 = vld [vmem:[%s1 + $0x44] sm:$0xf]
      %v1043 = vld [vmem:[%s1 + $0x48] sm:$0xf]
      %v1044 = vld [vmem:[%s1 + $0x4c] sm:$0xf]
      %v1045 = vld [vmem:[%s1 + $0x50] sm:$0xf]
      %v1046 = vld [vmem:[%s1 + $0x54] sm:$0xf]
      %v1047 = vld [vmem:[%s1 + $0x58] sm:$0xf]
      %v1048 = vld [vmem:[%s1 + $0x5c] sm:$0xf]
      %v1049 = vld [vmem:[%s1 + $0x60] sm:$0xf]
      %v1050 = vld [vmem:[%s1 + $0x64] sm:$0xf]
      %v1051 = vld [vmem:[%s1 + $0x68] sm:$0xf]
      %v1052 = vld [vmem:[%s1 + $0x6c] sm:$0xf]
      %v1053 = vld [vmem:[%s1 + $0x70] sm:$0xf]
      %v1054 = vld [vmem:[%s1 + $0x74] sm:$0xf]
      %v1055 = vld [vmem:[%s1 + $0x78] sm:$0xf]
      %v1056 = vld [vmem:[%s1 + $0x7c] sm:$0xf]
      %v1057 = vld [vmem:[%s1 + $0x80] sm:$0xf]
      %v1058 = vld [vmem:[%s1 + $0x84] sm:$0xf]
      %v1059 = vld [vmem:[%s1 + $0x88] sm:$0xf]
      %v1060 = vld [vmem:[%s1 + $0x8c] sm:$0xf]
      %v1061 = vld [vmem:[%s1 + $0x90] sm:$0xf]
      %v1062 = vld [vmem:[%s1 + $0x94] sm:$0xf]
      %v1063 = vld [vmem:[%s1 + $0x98] sm:$0xf]
      %v1064 = vld [vmem:[%s1 + $0x9c] sm:$0xf]
      %v1065 = vld [vmem:[%s1 + $0xa0] sm:$0xf]
      %v1066 = vld [vmem:[%s1 + $0xa4] sm:$0xf]
      %v1067 = vld [vmem:[%s1 + $0xa8] sm:$0xf]
      %v1068 = vld [vmem:[%s1 + $0xac] sm:$0xf]
      %v1069 = vld [vmem:[%s1 + $0xb0] sm:$0xf]
      %v1070 = vld [vmem:[%s1 + $0xb4] sm:$0xf]
      %v1071 = vld [vmem:[%s1 + $0xb8] sm:$0xf]
      %v1072 = vld [vmem:[%s1 + $0xbc] sm:$0xf]
      %v1073 = vld [vmem:[%s1 + $0xc0] sm:$0xf]
      %v1074 = vld [vmem:[%s1 + $0xc4] sm:$0xf]
      %v1075 = vld [vmem:[%s1 + $0xc8] sm:$0xf]
      %v1076 = vld [vmem:[%s1 + $0xcc] sm:$0xf]
      %v1077 = vld [vmem:[%s1 + $0xd0] sm:$0xf]
      %v1078 = vld [vmem:[%s1 + $0xd4] sm:$0xf]
      %v1079 = vld [vmem:[%s1 + $0xd8] sm:$0xf]
      %v1080 = vld [vmem:[%s1 + $0xdc] sm:$0xf]
      %v1081 = vld [vmem:[%s1 + $0xe0] sm:$0xf]
      %v1082 = vld [vmem:[%s1 + $0xe4] sm:$0xf]
      %v1083 = vld [vmem:[%s1 + $0xe8] sm:$0xf]
      %v1084 = vld [vmem:[%s1 + $0xec] sm:$0xf]
      %v1085 = vld [vmem:[%s1 + $0xf0] sm:$0xf]
      %v1086 = vld [vmem:[%s1 + $0xf4] sm:$0xf]
      %v1087 = vld [vmem:[%s1 + $0xf8] sm:$0xf]
      %v1088 = vld [vmem:[%s1 + $0xfc] sm:$0xf]
      %v1089 = vld [vmem:[%s1 + $0x100] sm:$0xf]
      %v1090 = vld [vmem:[%s1 + $0x104] sm:$0xf]
      %v1091 = vld [vmem:[%s1 + $0x108] sm:$0xf]
      %v1092 = vld [vmem:[%s1 + $0x10c] sm:$0xf]
      %v1093 = vld [vmem:[%s1 + $0x110] sm:$0xf]
      %v1094 = vld [vmem:[%s1 + $0x114] sm:$0xf]
      %v1095 = vld [vmem:[%s1 + $0x118] sm:$0xf]
      %v1096 = vld [vmem:[%s1 + $0x11c] sm:$0xf]
      %v1097 = vld [vmem:[%s1 + $0x120] sm:$0xf]
      %v1098 = vld [vmem:[%s1 + $0x124] sm:$0xf]
      %v1099 = vld [vmem:[%s1 + $0x128] sm:$0xf]
      %v1100 = vld [vmem:[%s1 + $0x12c] sm:$0xf]
      %v1101 = vld [vmem:[%s1 + $0x130] sm:$0xf]
      %v1102 = vld [vmem:[%s1 + $0x134] sm:$0xf]
      %v1103 = vld [vmem:[%s1 + $0x138] sm:$0xf]
      %v1104 = vld [vmem:[%s1 + $0x13c] sm:$0xf]
      %v1105 = vld [vmem:[%s1 + $0x140] sm:$0xf]
      %v1106 = vld [vmem:[%s1 + $0x144] sm:$0xf]
      %v1107 = vld [vmem:[%s1 + $0x148] sm:$0xf]
      %v1108 = vld [vmem:[%s1 + $0x14c] sm:$0xf]
      %v1109 = vld [vmem:[%s1 + $0x150] sm:$0xf]
      %v1110 = vld [vmem:[%s1 + $0x154] sm:$0xf]
      %v1111 = vld [vmem:[%s1 + $0x158] sm:$0xf]
      %v1112 = vld [vmem:[%s1 + $0x15c] sm:$0xf]
      %v1113 = vld [vmem:[%s1 + $0x160] sm:$0xf]
      %v1114 = vld [vmem:[%s1 + $0x164] sm:$0xf]
      %v1115 = vld [vmem:[%s1 + $0x168] sm:$0xf]
      %v1116 = vld [vmem:[%s1 + $0x16c] sm:$0xf]
      %v1117 = vld [vmem:[%s1 + $0x170] sm:$0xf]
      %v1118 = vld [vmem:[%s1 + $0x174] sm:$0xf]
      %v1119 = vld [vmem:[%s1 + $0x178] sm:$0xf]
      %v1120 = vld [vmem:[%s1 + $0x17c] sm:$0xf]
      %v1121 = vld [vmem:[%s1 + $0x180] sm:$0xf]
      %v1122 = vld [vmem:[%s1 + $0x184] sm:$0xf]
      %v1123 = vld [vmem:[%s1 + $0x188] sm:$0xf]
      %v1124 = vld [vmem:[%s1 + $0x18c] sm:$0xf]
      %v1125 = vld [vmem:[%s1 + $0x190] sm:$0xf]
      %v1126 = vld [vmem:[%s1 + $0x194] sm:$0xf]
      %v1127 = vld [vmem:[%s1 + $0x198] sm:$0xf]
      %v1128 = vld [vmem:[%s1 + $0x19c] sm:$0xf]
      %v1129 = vld [vmem:[%s1 + $0x1a0] sm:$0xf]
      %v1130 = vld [vmem:[%s1 + $0x1a4] sm:$0xf]
      %v1131 = vld [vmem:[%s1 + $0x1a8] sm:$0xf]
      %v1132 = vld [vmem:[%s1 + $0x1ac] sm:$0xf]
      %v1133 = vld [vmem:[%s1 + $0x1b0] sm:$0xf]
      %v1134 = vld [vmem:[%s1 + $0x1b4] sm:$0xf]
      %v1135 = vld [vmem:[%s1 + $0x1b8] sm:$0xf]
      %v1136 = vld [vmem:[%s1 + $0x1bc] sm:$0xf]
      %v1137 = vld [vmem:[%s1 + $0x1c0] sm:$0xf]
      %v1138 = vld [vmem:[%s1 + $0x1c4] sm:$0xf]
      %v1139 = vld [vmem:[%s1 + $0x1c8] sm:$0xf]
      %v1140 = vld [vmem:[%s1 + $0x1cc] sm:$0xf]
      %v1141 = vld [vmem:[%s1 + $0x1d0] sm:$0xf]
      %v1142 = vld [vmem:[%s1 + $0x1d4] sm:$0xf]
      %v1143 = vld [vmem:[%s1 + $0x1d8] sm:$0xf]
      %v1144 = vld [vmem:[%s1 + $0x1dc] sm:$0xf]
      %v1145 = vld [vmem:[%s1 + $0x1e0] sm:$0xf]
      %v1146 = vld [vmem:[%s1 + $0x1e4] sm:$0xf]
      %v1147 = vld [vmem:[%s1 + $0x1e8] sm:$0xf]
      %v1148 = vld [vmem:[%s1 + $0x1ec] sm:$0xf]
      %v1149 = vld [vmem:[%s1 + $0x1f0] sm:$0xf]
      %v1150 = vld [vmem:[%s1 + $0x1f4] sm:$0xf]
      %v1151 = vld [vmem:[%s1 + $0x1f8] sm:$0xf]
      %v1152 = vld [vmem:[%s1 + $0x1fc] sm:$0xf]
      %v1153 = vld [vmem:[%s1 + $0x200] sm:$0xf]
      %v1154 = vld [vmem:[%s1 + $0x204] sm:$0xf]
      %v1155 = vld [vmem:[%s1 + $0x208] sm:$0xf]
      %v1156 = vld [vmem:[%s1 + $0x20c] sm:$0xf]
      %v1157 = vld [vmem:[%s1 + $0x210] sm:$0xf]
      %v1158 = vld [vmem:[%s1 + $0x214] sm:$0xf]
      %v1159 = vld [vmem:[%s1 + $0x218] sm:$0xf]
      %v1160 = vld [vmem:[%s1 + $0x21c] sm:$0xf]
      %v1161 = vld [vmem:[%s1 + $0x220] sm:$0xf]
      %v1162 = vld [vmem:[%s1 + $0x224] sm:$0xf]
      %v1163 = vld [vmem:[%s1 + $0x228] sm:$0xf]
      %v1164 = vld [vmem:[%s1 + $0x22c] sm:$0xf]
      %v1165 = vld [vmem:[%s1 + $0x230] sm:$0xf]
      %v1166 = vld [vmem:[%s1 + $0x234] sm:$0xf]
      %v1167 = vld [vmem:[%s1 + $0x238] sm:$0xf]
      %v1168 = vld [vmem:[%s1 + $0x23c] sm:$0xf]
      %v1169 = vld [vmem:[%s2] sm:$0x1]
      %v1171 = vlaneseq
      %v1172 = vshrl.u32 %v1171, 7
      %v1173 = vsub.s32 0, %v1172
      %v1174 = vrot.slane %v1169, %v1173
      %v1320 = vunpack.c.l.b16 %v1025
      %v1321 = vunpack.c.l.b16 %v1026
      %v1322 = vunpack.c.l.b16 %v1027
      %v1323 = vunpack.c.l.b16 %v1028
      %v1324 = vunpack.c.l.b16 %v1029
      %v1325 = vunpack.c.l.b16 %v1030
      %v1326 = vunpack.c.l.b16 %v1031
      %v1327 = vunpack.c.l.b16 %v1032
      %v1328 = vunpack.c.l.b16 %v1033
      %v1329 = vunpack.c.l.b16 %v1034
      %v1330 = vunpack.c.l.b16 %v1035
      %v1331 = vunpack.c.l.b16 %v1036
      %v1332 = vunpack.c.l.b16 %v1037
      %v1333 = vunpack.c.l.b16 %v1038
      %v1334 = vunpack.c.l.b16 %v1039
      %v1335 = vunpack.c.l.b16 %v1040
      %v1336 = vunpack.c.l.b16 %v1041
      %v1337 = vunpack.c.l.b16 %v1042
      %v1338 = vunpack.c.l.b16 %v1043
      %v1339 = vunpack.c.l.b16 %v1044
      %v1340 = vunpack.c.l.b16 %v1045
      %v1341 = vunpack.c.l.b16 %v1046
      %v1342 = vunpack.c.l.b16 %v1047
      %v1343 = vunpack.c.l.b16 %v1048
      %v1344 = vunpack.c.l.b16 %v1049
      %v1345 = vunpack.c.l.b16 %v1050
      %v1346 = vunpack.c.l.b16 %v1051
      %v1347 = vunpack.c.l.b16 %v1052
      %v1348 = vunpack.c.l.b16 %v1053
      %v1349 = vunpack.c.l.b16 %v1054
      %v1350 = vunpack.c.l.b16 %v1055
      %v1351 = vunpack.c.l.b16 %v1056
      %v1352 = vunpack.c.l.b16 %v1057
      %v1353 = vunpack.c.l.b16 %v1058
      %v1354 = vunpack.c.l.b16 %v1059
      %v1355 = vunpack.c.l.b16 %v1060
      %v1356 = vunpack.c.l.b16 %v1061
      %v1357 = vunpack.c.l.b16 %v1062
      %v1358 = vunpack.c.l.b16 %v1063
      %v1359 = vunpack.c.l.b16 %v1064
      %v1360 = vunpack.c.l.b16 %v1065
      %v1361 = vunpack.c.l.b16 %v1066
      %v1362 = vunpack.c.l.b16 %v1067
      %v1363 = vunpack.c.l.b16 %v1068
      %v1364 = vunpack.c.l.b16 %v1069
      %v1365 = vunpack.c.l.b16 %v1070
      %v1366 = vunpack.c.l.b16 %v1071
      %v1367 = vunpack.c.l.b16 %v1072
      %v1368 = vunpack.c.l.b16 %v1073
      %v1369 = vunpack.c.l.b16 %v1074
      %v1370 = vunpack.c.l.b16 %v1075
      %v1371 = vunpack.c.l.b16 %v1076
      %v1372 = vunpack.c.l.b16 %v1077
      %v1373 = vunpack.c.l.b16 %v1078
      %v1374 = vunpack.c.l.b16 %v1079
      %v1375 = vunpack.c.l.b16 %v1080
      %v1376 = vunpack.c.l.b16 %v1081
      %v1377 = vunpack.c.l.b16 %v1082
      %v1378 = vunpack.c.l.b16 %v1083
      %v1379 = vunpack.c.l.b16 %v1084
      %v1380 = vunpack.c.l.b16 %v1085
      %v1381 = vunpack.c.l.b16 %v1086
      %v1382 = vunpack.c.l.b16 %v1087
      %v1383 = vunpack.c.l.b16 %v1088
      %v1384 = vunpack.c.l.b16 %v1089
      %v1385 = vunpack.c.l.b16 %v1090
      %v1386 = vunpack.c.l.b16 %v1091
      %v1387 = vunpack.c.l.b16 %v1092
      %v1388 = vunpack.c.l.b16 %v1093
      %v1389 = vunpack.c.l.b16 %v1094
      %v1390 = vunpack.c.l.b16 %v1095
      %v1391 = vunpack.c.l.b16 %v1096
      %v1392 = vunpack.c.l.b16 %v1097
      %v1393 = vunpack.c.l.b16 %v1098
      %v1394 = vunpack.c.l.b16 %v1099
      %v1395 = vunpack.c.l.b16 %v1100
      %v1396 = vunpack.c.l.b16 %v1101
      %v1397 = vunpack.c.l.b16 %v1102
      %v1398 = vunpack.c.l.b16 %v1103
      %v1399 = vunpack.c.l.b16 %v1104
      %v1400 = vunpack.c.l.b16 %v1105
      %v1401 = vunpack.c.l.b16 %v1106
      %v1402 = vunpack.c.l.b16 %v1107
      %v1403 = vunpack.c.l.b16 %v1108
      %v1404 = vunpack.c.l.b16 %v1109
      %v1405 = vunpack.c.l.b16 %v1110
      %v1406 = vunpack.c.l.b16 %v1111
      %v1407 = vunpack.c.l.b16 %v1112
      %v1408 = vunpack.c.l.b16 %v1113
      %v1409 = vunpack.c.l.b16 %v1114
      %v1410 = vunpack.c.l.b16 %v1115
      %v1411 = vunpack.c.l.b16 %v1116
      %v1412 = vunpack.c.l.b16 %v1117
      %v1413 = vunpack.c.l.b16 %v1118
      %v1414 = vunpack.c.l.b16 %v1119
      %v1415 = vunpack.c.l.b16 %v1120
      %v1416 = vunpack.c.l.b16 %v1121
      %v1417 = vunpack.c.l.b16 %v1122
      %v1418 = vunpack.c.l.b16 %v1123
      %v1419 = vunpack.c.l.b16 %v1124
      %v1420 = vunpack.c.l.b16 %v1125
      %v1421 = vunpack.c.l.b16 %v1126
      %v1422 = vunpack.c.l.b16 %v1127
      %v1423 = vunpack.c.l.b16 %v1128
      %v1424 = vunpack.c.l.b16 %v1129
      %v1425 = vunpack.c.l.b16 %v1130
      %v1426 = vunpack.c.l.b16 %v1131
      %v1427 = vunpack.c.l.b16 %v1132
      %v1428 = vunpack.c.l.b16 %v1133
      %v1429 = vunpack.c.l.b16 %v1134
      %v1430 = vunpack.c.l.b16 %v1135
      %v1431 = vunpack.c.l.b16 %v1136
      %v1432 = vunpack.c.l.b16 %v1137
      %v1433 = vunpack.c.l.b16 %v1138
      %v1434 = vunpack.c.l.b16 %v1139
      %v1435 = vunpack.c.l.b16 %v1140
      %v1436 = vunpack.c.l.b16 %v1141
      %v1437 = vunpack.c.l.b16 %v1142
      %v1438 = vunpack.c.l.b16 %v1143
      %v1439 = vunpack.c.l.b16 %v1144
      %v1440 = vunpack.c.l.b16 %v1145
      %v1441 = vunpack.c.l.b16 %v1146
      %v1442 = vunpack.c.l.b16 %v1147
      %v1443 = vunpack.c.l.b16 %v1148
      %v1444 = vunpack.c.l.b16 %v1149
      %v1445 = vunpack.c.l.b16 %v1150
      %v1446 = vunpack.c.l.b16 %v1151
      %v1447 = vunpack.c.l.b16 %v1152
      %v1448 = vunpack.c.l.b16 %v1153
      %v1449 = vunpack.c.l.b16 %v1154
      %v1450 = vunpack.c.l.b16 %v1155
      %v1451 = vunpack.c.l.b16 %v1156
      %v1452 = vunpack.c.l.b16 %v1157
      %v1453 = vunpack.c.l.b16 %v1158
      %v1454 = vunpack.c.l.b16 %v1159
      %v1455 = vunpack.c.l.b16 %v1160
      %v1456 = vunpack.c.l.b16 %v1161
      %v1457 = vunpack.c.l.b16 %v1162
      %v1458 = vunpack.c.l.b16 %v1163
      %v1459 = vunpack.c.l.b16 %v1164
      %v1460 = vunpack.c.l.b16 %v1165
      %v1461 = vunpack.c.l.b16 %v1166
      %v1462 = vunpack.c.l.b16 %v1167
      %v1463 = vunpack.c.l.b16 %v1168
      %v1464 = vpack.c.b16 %v1321, %v1320
      %v1465 = vpack.c.b16 %v1323, %v1322
      %v1466 = vpack.c.b16 %v1325, %v1324
      %v1467 = vpack.c.b16 %v1327, %v1326
      %v1468 = vpack.c.b16 %v1329, %v1328
      %v1469 = vpack.c.b16 %v1331, %v1330
      %v1470 = vpack.c.b16 %v1333, %v1332
      %v1471 = vpack.c.b16 %v1335, %v1334
      %v1472 = vpack.c.b16 %v1337, %v1336
      %v1473 = vpack.c.b16 %v1339, %v1338
      %v1474 = vpack.c.b16 %v1341, %v1340
      %v1475 = vpack.c.b16 %v1343, %v1342
      %v1476 = vpack.c.b16 %v1345, %v1344
      %v1477 = vpack.c.b16 %v1347, %v1346
      %v1478 = vpack.c.b16 %v1349, %v1348
      %v1479 = vpack.c.b16 %v1351, %v1350
      %v1480 = vpack.c.b16 %v1353, %v1352
      %v1481 = vpack.c.b16 %v1355, %v1354
      %v1482 = vpack.c.b16 %v1357, %v1356
      %v1483 = vpack.c.b16 %v1359, %v1358
      %v1484 = vpack.c.b16 %v1361, %v1360
      %v1485 = vpack.c.b16 %v1363, %v1362
      %v1486 = vpack.c.b16 %v1365, %v1364
      %v1487 = vpack.c.b16 %v1367, %v1366
      %v1488 = vpack.c.b16 %v1369, %v1368
      %v1489 = vpack.c.b16 %v1371, %v1370
      %v1490 = vpack.c.b16 %v1373, %v1372
      %v1491 = vpack.c.b16 %v1375, %v1374
      %v1492 = vpack.c.b16 %v1377, %v1376
      %v1493 = vpack.c.b16 %v1379, %v1378
      %v1494 = vpack.c.b16 %v1381, %v1380
      %v1495 = vpack.c.b16 %v1383, %v1382
      %v1496 = vpack.c.b16 %v1385, %v1384
      %v1497 = vpack.c.b16 %v1387, %v1386
      %v1498 = vpack.c.b16 %v1389, %v1388
      %v1499 = vpack.c.b16 %v1391, %v1390
      %v1500 = vpack.c.b16 %v1393, %v1392
      %v1501 = vpack.c.b16 %v1395, %v1394
      %v1502 = vpack.c.b16 %v1397, %v1396
      %v1503 = vpack.c.b16 %v1399, %v1398
      %v1504 = vpack.c.b16 %v1401, %v1400
      %v1505 = vpack.c.b16 %v1403, %v1402
      %v1506 = vpack.c.b16 %v1405, %v1404
      %v1507 = vpack.c.b16 %v1407, %v1406
      %v1508 = vpack.c.b16 %v1409, %v1408
      %v1509 = vpack.c.b16 %v1411, %v1410
      %v1510 = vpack.c.b16 %v1413, %v1412
      %v1511 = vpack.c.b16 %v1415, %v1414
      %v1512 = vpack.c.b16 %v1417, %v1416
      %v1513 = vpack.c.b16 %v1419, %v1418
      %v1514 = vpack.c.b16 %v1421, %v1420
      %v1515 = vpack.c.b16 %v1423, %v1422
      %v1516 = vpack.c.b16 %v1425, %v1424
      %v1517 = vpack.c.b16 %v1427, %v1426
      %v1518 = vpack.c.b16 %v1429, %v1428
      %v1519 = vpack.c.b16 %v1431, %v1430
      %v1520 = vpack.c.b16 %v1433, %v1432
      %v1521 = vpack.c.b16 %v1435, %v1434
      %v1522 = vpack.c.b16 %v1437, %v1436
      %v1523 = vpack.c.b16 %v1439, %v1438
      %v1524 = vpack.c.b16 %v1441, %v1440
      %v1525 = vpack.c.b16 %v1443, %v1442
      %v1526 = vpack.c.b16 %v1445, %v1444
      %v1527 = vpack.c.b16 %v1447, %v1446
      %v1528 = vpack.c.b16 %v1449, %v1448
      %v1529 = vpack.c.b16 %v1451, %v1450
      %v1530 = vpack.c.b16 %v1453, %v1452
      %v1531 = vpack.c.b16 %v1455, %v1454
      %v1532 = vpack.c.b16 %v1457, %v1456
      %v1533 = vpack.c.b16 %v1459, %v1458
      %v1534 = vpack.c.b16 %v1461, %v1460
      %v1535 = vpack.c.b16 %v1463, %v1462
      %1608 = vmatprep.subr.bf16.mxu0 0
      %1609 = vmatpush1.bf16.msra.mxu0 %v1464
      %1610 = vmatprep.subr.bf16.mxu0 0
      %1611 = vmatpush1.bf16.msra.mxu0 %v1465
      %1612 = vmatprep.subr.bf16.mxu0 0
      %1613 = vmatpush1.bf16.msra.mxu0 %v1466
      %1614 = vmatprep.subr.bf16.mxu0 0
      %1615 = vmatpush1.bf16.msra.mxu0 %v1467
      %1616 = vmatprep.subr.bf16.mxu0 0
      %1617 = vmatpush1.bf16.msra.mxu0 %v1468
      %1618 = vmatprep.subr.bf16.mxu0 0
      %1619 = vmatpush1.bf16.msra.mxu0 %v1469
      %1620 = vmatprep.subr.bf16.mxu0 0
      %1621 = vmatpush1.bf16.msra.mxu0 %v1470
      %1622 = vmatprep.subr.bf16.mxu0 0
      %1623 = vmatpush1.bf16.msra.mxu0 %v1471
      %1624 = vmatprep.subr.bf16.mxu0 0
      %1625 = vmatpush1.bf16.msra.mxu0 %v1472
      %1626 = vmatprep.subr.bf16.mxu0 0
      %1627 = vmatpush1.bf16.msra.mxu0 %v1473
      %1628 = vmatprep.subr.bf16.mxu0 0
      %1629 = vmatpush1.bf16.msra.mxu0 %v1474
      %1630 = vmatprep.subr.bf16.mxu0 0
      %1631 = vmatpush1.bf16.msra.mxu0 %v1475
      %1632 = vmatprep.subr.bf16.mxu0 0
      %1633 = vmatpush1.bf16.msra.mxu0 %v1476
      %1634 = vmatprep.subr.bf16.mxu0 0
      %1635 = vmatpush1.bf16.msra.mxu0 %v1477
      %1636 = vmatprep.subr.bf16.mxu0 0
      %1637 = vmatpush1.bf16.msra.mxu0 %v1478
      %1638 = vmatprep.subr.bf16.mxu0 0
      %1639 = vmatpush1.bf16.msra.mxu0 %v1479
      %1640 = vmatprep.mubr.bf16.mxu0 %v445
      %1641 = vmatmul.mubr.bf16.gmra.mrb[0].mxu0 %v394
      %v1642 = vpop.f32.mrb[0].mxu0
      %v1643 = vadd.f32 %v1174, %v1642
      %v1644 = vpop.f32.mrb[0].mxu0
      %v1645 = vpop.f32.mrb[0].mxu0
      %v1646 = vadd.f32 %v1174, %v1645
      %v1647 = vpop.f32.mrb[0].mxu0
      %1648 = vmatprep.mubr.bf16.mxu0 %v453
      %1649 = vmatmul.mubr.bf16.gmra.mrb[0].mxu0 %v395
      %v1650 = vpop.f32.mrb[0].mxu0
      %v1651 = vadd.f32 %v1174, %v1650
      %v1652 = vpop.f32.mrb[0].mxu0
      %v1653 = vpop.f32.mrb[0].mxu0
      %v1654 = vadd.f32 %v1174, %v1653
      %v1655 = vpop.f32.mrb[0].mxu0
      %1656 = vmatprep.mubr.bf16.mxu0 %v461
      %1657 = vmatmul.mubr.bf16.gmra.mrb[0].mxu0 %v396
      %v1658 = vpop.f32.mrb[0].mxu0
      %v1659 = vadd.f32 %v1174, %v1658
      %v1660 = vpop.f32.mrb[0].mxu0
      %v1661 = vpop.f32.mrb[0].mxu0
      %v1662 = vadd.f32 %v1174, %v1661
      %v1663 = vpop.f32.mrb[0].mxu0
      %1664 = vmatprep.mubr.bf16.mxu0 %v469
      %1665 = vmatmul.mubr.bf16.gmra.mrb[0].mxu0 %v397
      %v1666 = vpop.f32.mrb[0].mxu0
      %v1667 = vadd.f32 %v1174, %v1666
      %v1668 = vpop.f32.mrb[0].mxu0
      %v1669 = vpop.f32.mrb[0].mxu0
      %v1670 = vadd.f32 %v1174, %v1669
      %v1671 = vpop.f32.mrb[0].mxu0
      %1672 = vmatprep.mubr.bf16.mxu0 %v477
      %1673 = vmatmul.mubr.bf16.gmra.mrb[0].mxu0 %v398
      %v1674 = vpop.f32.mrb[0].mxu0
      %v1675 = vadd.f32 %v1174, %v1674
      %v1676 = vpop.f32.mrb[0].mxu0
      %v1677 = vpop.f32.mrb[0].mxu0
      %v1678 = vadd.f32 %v1174, %v1677
      %v1679 = vpop.f32.mrb[0].mxu0
      %1680 = vmatprep.mubr.bf16.mxu0 %v485
      %1681 = vmatmul.mubr.bf16.gmra.mrb[0].mxu0 %v399
      %v1682 = vpop.f32.mrb[0].mxu0
      %v1683 = vadd.f32 %v1174, %v1682
      %v1684 = vpop.f32.mrb[0].mxu0
      %v1685 = vpop.f32.mrb[0].mxu0
      %v1686 = vadd.f32 %v1174, %v1685
      %v1687 = vpop.f32.mrb[0].mxu0
      %1688 = vmatprep.mubr.bf16.mxu0 %v493
      %1689 = vmatmul.mubr.bf16.gmra.mrb[0].mxu0 %v400
      %v1690 = vpop.f32.mrb[0].mxu0
      %v1691 = vadd.f32 %v1174, %v1690
      %v1692 = vpop.f32.mrb[0].mxu0
      %v1693 = vpop.f32.mrb[0].mxu0
      %v1694 = vadd.f32 %v1174, %v1693
      %v1695 = vpop.f32.mrb[0].mxu0
      %1696 = vmatprep.mubr.bf16.mxu0 %v501
      %1697 = vmatmul.mubr.bf16.gmra.mrb[0].mxu0 %v401
      %v1698 = vpop.f32.mrb[0].mxu0
      %v1699 = vadd.f32 %v1174, %v1698
      %v1700 = vpop.f32.mrb[0].mxu0
      %v1701 = vpop.f32.mrb[0].mxu0
      %v1702 = vadd.f32 %v1174, %v1701
      %v1703 = vpop.f32.mrb[0].mxu0
      %1704 = vmatprep.mubr.bf16.mxu0 %v509
      %1705 = vmatmul.mubr.bf16.gmra.mrb[0].mxu0 %v402
      %v1706 = vpop.f32.mrb[0].mxu0
      %v1707 = vadd.f32 %v1174, %v1706
      %v1708 = vpop.f32.mrb[0].mxu0
      %v1709 = vpop.f32.mrb[0].mxu0
      %v1710 = vadd.f32 %v1174, %v1709
      %v1711 = vpop.f32.mrb[0].mxu0
      %1712 = vmatprep.mubr.bf16.mxu0 %v517
      %1713 = vmatmul.mubr.bf16.gmra.mrb[0].mxu0 %v403
      %v1714 = vpop.f32.mrb[0].mxu0
      %v1715 = vadd.f32 %v1174, %v1714
      %v1716 = vpop.f32.mrb[0].mxu0
      %v1717 = vpop.f32.mrb[0].mxu0
      %v1718 = vadd.f32 %v1174, %v1717
      %v1719 = vpop.f32.mrb[0].mxu0
      %1720 = vmatprep.mubr.bf16.mxu0 %v525
      %1721 = vmatmul.mubr.bf16.gmra.mrb[0].mxu0 %v404
      %v1722 = vpop.f32.mrb[0].mxu0
      %v1723 = vadd.f32 %v1174, %v1722
      %v1724 = vpop.f32.mrb[0].mxu0
      %v1725 = vpop.f32.mrb[0].mxu0
      %v1726 = vadd.f32 %v1174, %v1725
      %v1727 = vpop.f32.mrb[0].mxu0
      %1728 = vmatprep.mubr.bf16.mxu0 %v533
      %1729 = vmatmul.mubr.bf16.gmra.mrb[0].mxu0 %v405
      %v1730 = vpop.f32.mrb[0].mxu0
      %v1731 = vadd.f32 %v1174, %v1730
      %v1732 = vpop.f32.mrb[0].mxu0
      %v1733 = vpop.f32.mrb[0].mxu0
      %v1734 = vadd.f32 %v1174, %v1733
      %v1735 = vpop.f32.mrb[0].mxu0
      %1736 = vmatprep.mubr.bf16.mxu0 %v541
      %1737 = vmatmul.mubr.bf16.gmra.mrb[0].mxu0 %v406
      %v1738 = vpop.f32.mrb[0].mxu0
      %v1739 = vadd.f32 %v1174, %v1738
      %v1740 = vpop.f32.mrb[0].mxu0
      %v1741 = vpop.f32.mrb[0].mxu0
      %v1742 = vadd.f32 %v1174, %v1741
      %v1743 = vpop.f32.mrb[0].mxu0
      %1744 = vmatprep.mubr.bf16.mxu0 %v549
      %1745 = vmatmul.mubr.bf16.gmra.mrb[0].mxu0 %v407
      %v1746 = vpop.f32.mrb[0].mxu0
      %v1747 = vadd.f32 %v1174, %v1746
      %v1748 = vpop.f32.mrb[0].mxu0
      %v1749 = vpop.f32.mrb[0].mxu0
      %v1750 = vadd.f32 %v1174, %v1749
      %v1751 = vpop.f32.mrb[0].mxu0
      %1752 = vmatprep.mubr.bf16.mxu0 %v557
      %1753 = vmatmul.mubr.bf16.gmra.mrb[0].mxu0 %v408
      %v1754 = vpop.f32.mrb[0].mxu0
      %v1755 = vadd.f32 %v1174, %v1754
      %v1756 = vpop.f32.mrb[0].mxu0
      %v1757 = vpop.f32.mrb[0].mxu0
      %v1758 = vadd.f32 %v1174, %v1757
      %v1759 = vpop.f32.mrb[0].mxu0
      %1760 = vmatprep.mubr.bf16.mxu0 %v565
      %1761 = vmatmul.mubr.bf16.gmra.mrb[0].mxu0 %v409
      %v1762 = vpop.f32.mrb[0].mxu0
      %v1763 = vadd.f32 %v1174, %v1762
      %v1764 = vpop.f32.mrb[0].mxu0
      %v1765 = vpop.f32.mrb[0].mxu0
      %v1766 = vadd.f32 %v1174, %v1765
      %v1767 = vpop.f32.mrb[0].mxu0
      %1768 = vmatprep.mubr.bf16.mxu0 %v573
      %1769 = vmatmul.mubr.bf16.gmra.mrb[0].mxu0 %v410
      %v1770 = vpop.f32.mrb[0].mxu0
      %v1771 = vadd.f32 %v1174, %v1770
      %v1772 = vpop.f32.mrb[0].mxu0
      %v1773 = vpop.f32.mrb[0].mxu0
      %v1774 = vadd.f32 %v1174, %v1773
      %v1775 = vpop.f32.mrb[0].mxu0
      %1776 = vmatprep.mubr.bf16.mxu0 %v576
      %1777 = vmatmul.mubr.bf16.gmra.mrb[0].mxu0 %v411
      %v1778 = vpop.f32.mrb[0].mxu0
      %v1779 = vadd.f32 %v1174, %v1778
      %v1780 = vpop.f32.mrb[0].mxu0
      %v1781 = vpop.f32.mrb[0].mxu0
      %v1782 = vadd.f32 %v1174, %v1781
      %v1783 = vpop.f32.mrb[0].mxu0
      %1784 = vdwg.mxu0
      %1785 = vmatprep.subr.bf16.mxu0 0
      %1786 = vmatpush1.bf16.msra.mxu0 %v1480
      %1787 = vmatprep.subr.bf16.mxu0 0
      %1788 = vmatpush1.bf16.msra.mxu0 %v1481
      %1789 = vmatprep.subr.bf16.mxu0 0
      %1790 = vmatpush1.bf16.msra.mxu0 %v1482
      %1791 = vmatprep.subr.bf16.mxu0 0
      %1792 = vmatpush1.bf16.msra.mxu0 %v1483
      %1793 = vmatprep.subr.bf16.mxu0 0
      %1794 = vmatpush1.bf16.msra.mxu0 %v1484
      %1795 = vmatprep.subr.bf16.mxu0 0
      %1796 = vmatpush1.bf16.msra.mxu0 %v1485
      %1797 = vmatprep.subr.bf16.mxu0 0
      %1798 = vmatpush1.bf16.msra.mxu0 %v1486
      %1799 = vmatprep.subr.bf16.mxu0 0
      %1800 = vmatpush1.bf16.msra.mxu0 %v1487
      %1801 = vmatprep.subr.bf16.mxu0 0
      %1802 = vmatpush1.bf16.msra.mxu0 %v1488
      %1803 = vmatprep.subr.bf16.mxu0 0
      %1804 = vmatpush1.bf16.msra.mxu0 %v1489
      %1805 = vmatprep.subr.bf16.mxu0 0
      %1806 = vmatpush1.bf16.msra.mxu0 %v1490
      %1807 = vmatprep.subr.bf16.mxu0 0
      %1808 = vmatpush1.bf16.msra.mxu0 %v1491
      %1809 = vmatprep.subr.bf16.mxu0 0
      %1810 = vmatpush1.bf16.msra.mxu0 %v1492
      %1811 = vmatprep.subr.bf16.mxu0 0
      %1812 = vmatpush1.bf16.msra.mxu0 %v1493
      %1813 = vmatprep.subr.bf16.mxu0 0
      %1814 = vmatpush1.bf16.msra.mxu0 %v1494
      %1815 = vmatprep.subr.bf16.mxu0 0
      %1816 = vmatpush1.bf16.msra.mxu0 %v1495
      %1817 = vmatprep.mubr.bf16.mxu0 %v661
      %1818 = vmatmul.mubr.bf16.gmra.mrb[0].mxu0 %v601
      %v1819 = vpop.f32.mrb[0].mxu0
      %v1820 = vadd.f32 %v1643, %v1819
      %v1821 = vpop.f32.mrb[0].mxu0
      %v1822 = vpop.f32.mrb[0].mxu0
      %v1823 = vadd.f32 %v1646, %v1822
      %v1824 = vpop.f32.mrb[0].mxu0
      %1825 = vmatprep.mubr.bf16.mxu0 %v605
      %1826 = vmatmul.mubr.bf16.gmra.mrb[0].mxu0 %v603
      %v1827 = vpop.f32.mrb[0].mxu0
      %v1828 = vadd.f32 %v1651, %v1827
      %v1829 = vpop.f32.mrb[0].mxu0
      %v1830 = vpop.f32.mrb[0].mxu0
      %v1831 = vadd.f32 %v1654, %v1830
      %v1832 = vpop.f32.mrb[0].mxu0
      %1833 = vmatprep.mubr.bf16.mxu0 %v607
      %1834 = vmatmul.mubr.bf16.gmra.mrb[0].mxu0 %v605
      %v1835 = vpop.f32.mrb[0].mxu0
      %v1836 = vadd.f32 %v1659, %v1835
      %v1837 = vpop.f32.mrb[0].mxu0
      %v1838 = vpop.f32.mrb[0].mxu0
      %v1839 = vadd.f32 %v1662, %v1838
      %v1840 = vpop.f32.mrb[0].mxu0
      %1841 = vmatprep.mubr.bf16.mxu0 %v609
      %1842 = vmatmul.mubr.bf16.gmra.mrb[0].mxu0 %v607
      %v1843 = vpop.f32.mrb[0].mxu0
      %v1844 = vadd.f32 %v1667, %v1843
      %v1845 = vpop.f32.mrb[0].mxu0
      %v1846 = vpop.f32.mrb[0].mxu0
      %v1847 = vadd.f32 %v1670, %v1846
      %v1848 = vpop.f32.mrb[0].mxu0
      %1849 = vmatprep.mubr.bf16.mxu0 %v611
      %1850 = vmatmul.mubr.bf16.gmra.mrb[0].mxu0 %v609
      %v1851 = vpop.f32.mrb[0].mxu0
      %v1852 = vadd.f32 %v1675, %v1851
      %v1853 = vpop.f32.mrb[0].mxu0
      %v1854 = vpop.f32.mrb[0].mxu0
      %v1855 = vadd.f32 %v1678, %v1854
      %v1856 = vpop.f32.mrb[0].mxu0
      %1857 = vmatprep.mubr.bf16.mxu0 %v613
      %1858 = vmatmul.mubr.bf16.gmra.mrb[0].mxu0 %v611
      %v1859 = vpop.f32.mrb[0].mxu0
      %v1860 = vadd.f32 %v1683, %v1859
      %v1861 = vpop.f32.mrb[0].mxu0
      %v1862 = vpop.f32.mrb[0].mxu0
      %v1863 = vadd.f32 %v1686, %v1862
      %v1864 = vpop.f32.mrb[0].mxu0
      %1865 = vmatprep.mubr.bf16.mxu0 %v615
      %1866 = vmatmul.mubr.bf16.gmra.mrb[0].mxu0 %v613
      %v1867 = vpop.f32.mrb[0].mxu0
      %v1868 = vadd.f32 %v1691, %v1867
      %v1869 = vpop.f32.mrb[0].mxu0
      %v1870 = vpop.f32.mrb[0].mxu0
      %v1871 = vadd.f32 %v1694, %v1870
      %v1872 = vpop.f32.mrb[0].mxu0
      %1873 = vmatprep.mubr.bf16.mxu0 %v617
      %1874 = vmatmul.mubr.bf16.gmra.mrb[0].mxu0 %v615
      %v1875 = vpop.f32.mrb[0].mxu0
      %v1876 = vadd.f32 %v1699, %v1875
      %v1877 = vpop.f32.mrb[0].mxu0
      %v1878 = vpop.f32.mrb[0].mxu0
      %v1879 = vadd.f32 %v1702, %v1878
      %v1880 = vpop.f32.mrb[0].mxu0
      %1881 = vmatprep.mubr.bf16.mxu0 %v619
      %1882 = vmatmul.mubr.bf16.gmra.mrb[0].mxu0 %v617
      %v1883 = vpop.f32.mrb[0].mxu0
      %v1884 = vadd.f32 %v1707, %v1883
      %v1885 = vpop.f32.mrb[0].mxu0
      %v1886 = vpop.f32.mrb[0].mxu0
      %v1887 = vadd.f32 %v1710, %v1886
      %v1888 = vpop.f32.mrb[0].mxu0
      %1889 = vmatprep.mubr.bf16.mxu0 %v621
      %1890 = vmatmul.mubr.bf16.gmra.mrb[0].mxu0 %v619
      %v1891 = vpop.f32.mrb[0].mxu0
      %v1892 = vadd.f32 %v1715, %v1891
      %v1893 = vpop.f32.mrb[0].mxu0
      %v1894 = vpop.f32.mrb[0].mxu0
      %v1895 = vadd.f32 %v1718, %v1894
      %v1896 = vpop.f32.mrb[0].mxu0
      %1897 = vmatprep.mubr.bf16.mxu0 %v623
      %1898 = vmatmul.mubr.bf16.gmra.mrb[0].mxu0 %v621
      %v1899 = vpop.f32.mrb[0].mxu0
      %v1900 = vadd.f32 %v1723, %v1899
      %v1901 = vpop.f32.mrb[0].mxu0
      %v1902 = vpop.f32.mrb[0].mxu0
      %v1903 = vadd.f32 %v1726, %v1902
      %v1904 = vpop.f32.mrb[0].mxu0
      %1905 = vmatprep.mubr.bf16.mxu0 %v625
      %1906 = vmatmul.mubr.bf16.gmra.mrb[0].mxu0 %v623
      %v1907 = vpop.f32.mrb[0].mxu0
      %v1908 = vadd.f32 %v1731, %v1907
      %v1909 = vpop.f32.mrb[0].mxu0
      %v1910 = vpop.f32.mrb[0].mxu0
      %v1911 = vadd.f32 %v1734, %v1910
      %v1912 = vpop.f32.mrb[0].mxu0
      %1913 = vmatprep.mubr.bf16.mxu0 %v627
      %1914 = vmatmul.mubr.bf16.gmra.mrb[0].mxu0 %v625
      %v1915 = vpop.f32.mrb[0].mxu0
      %v1916 = vadd.f32 %v1739, %v1915
      %v1917 = vpop.f32.mrb[0].mxu0
      %v1918 = vpop.f32.mrb[0].mxu0
      %v1919 = vadd.f32 %v1742, %v1918
      %v1920 = vpop.f32.mrb[0].mxu0
      %1921 = vmatprep.mubr.bf16.mxu0 %v629
      %1922 = vmatmul.mubr.bf16.gmra.mrb[0].mxu0 %v627
      %v1923 = vpop.f32.mrb[0].mxu0
      %v1924 = vadd.f32 %v1747, %v1923
      %v1925 = vpop.f32.mrb[0].mxu0
      %v1926 = vpop.f32.mrb[0].mxu0
      %v1927 = vadd.f32 %v1750, %v1926
      %v1928 = vpop.f32.mrb[0].mxu0
      %1929 = vmatprep.mubr.bf16.mxu0 %v631
      %1930 = vmatmul.mubr.bf16.gmra.mrb[0].mxu0 %v629
      %v1931 = vpop.f32.mrb[0].mxu0
      %v1932 = vadd.f32 %v1755, %v1931
      %v1933 = vpop.f32.mrb[0].mxu0
      %v1934 = vpop.f32.mrb[0].mxu0
      %v1935 = vadd.f32 %v1758, %v1934
      %v1936 = vpop.f32.mrb[0].mxu0
      %1937 = vmatprep.mubr.bf16.mxu0 %v633
      %1938 = vmatmul.mubr.bf16.gmra.mrb[0].mxu0 %v631
      %v1939 = vpop.f32.mrb[0].mxu0
      %v1940 = vadd.f32 %v1763, %v1939
      %v1941 = vpop.f32.mrb[0].mxu0
      %v1942 = vpop.f32.mrb[0].mxu0
      %v1943 = vadd.f32 %v1766, %v1942
      %v1944 = vpop.f32.mrb[0].mxu0
      %1945 = vmatprep.mubr.bf16.mxu0 %v663
      %1946 = vmatmul.mubr.bf16.gmra.mrb[0].mxu0 %v633
      %v1947 = vpop.f32.mrb[0].mxu0
      %v1948 = vadd.f32 %v1771, %v1947
      %v1949 = vpop.f32.mrb[0].mxu0
      %v1950 = vpop.f32.mrb[0].mxu0
      %v1951 = vadd.f32 %v1774, %v1950
      %v1952 = vpop.f32.mrb[0].mxu0
      %1953 = vmatprep.mubr.bf16.mxu0 %v662
      %1954 = vmatmul.mubr.bf16.gmra.mrb[0].mxu0 %v632
      %v1955 = vpop.f32.mrb[0].mxu0
      %v1956 = vadd.f32 %v1779, %v1955
      %v1957 = vpop.f32.mrb[0].mxu0
      %v1958 = vpop.f32.mrb[0].mxu0
      %v1959 = vadd.f32 %v1782, %v1958
      %v1960 = vpop.f32.mrb[0].mxu0
      %1961 = vdwg.mxu0
      %1962 = vmatprep.subr.bf16.mxu0 0
      %1963 = vmatpush1.bf16.msra.mxu0 %v1496
      %1964 = vmatprep.subr.bf16.mxu0 0
      %1965 = vmatpush1.bf16.msra.mxu0 %v1497
      %1966 = vmatprep.subr.bf16.mxu0 0
      %1967 = vmatpush1.bf16.msra.mxu0 %v1498
      %1968 = vmatprep.subr.bf16.mxu0 0
      %1969 = vmatpush1.bf16.msra.mxu0 %v1499
      %1970 = vmatprep.subr.bf16.mxu0 0
      %1971 = vmatpush1.bf16.msra.mxu0 %v1500
      %1972 = vmatprep.subr.bf16.mxu0 0
      %1973 = vmatpush1.bf16.msra.mxu0 %v1501
      %1974 = vmatprep.subr.bf16.mxu0 0
      %1975 = vmatpush1.bf16.msra.mxu0 %v1502
      %1976 = vmatprep.subr.bf16.mxu0 0
      %1977 = vmatpush1.bf16.msra.mxu0 %v1503
      %1978 = vmatprep.subr.bf16.mxu0 0
      %1979 = vmatpush1.bf16.msra.mxu0 %v1504
      %1980 = vmatprep.subr.bf16.mxu0 0
      %1981 = vmatpush1.bf16.msra.mxu0 %v1505
      %1982 = vmatprep.subr.bf16.mxu0 0
      %1983 = vmatpush1.bf16.msra.mxu0 %v1506
      %1984 = vmatprep.subr.bf16.mxu0 0
      %1985 = vmatpush1.bf16.msra.mxu0 %v1507
      %1986 = vmatprep.subr.bf16.mxu0 0
      %1987 = vmatpush1.bf16.msra.mxu0 %v1508
      %1988 = vmatprep.subr.bf16.mxu0 0
      %1989 = vmatpush1.bf16.msra.mxu0 %v1509
      %1990 = vmatprep.subr.bf16.mxu0 0
      %1991 = vmatpush1.bf16.msra.mxu0 %v1510
      %1992 = vmatprep.subr.bf16.mxu0 0
      %1993 = vmatpush1.bf16.msra.mxu0 %v1511
      %1994 = vmatprep.mubr.bf16.mxu0 %v781
      %1995 = vmatmul.mubr.bf16.gmra.mrb[0].mxu0 %v682
      %v1996 = vpop.f32.mrb[0].mxu0
      %v1997 = vadd.f32 %v1820, %v1996
      %v1998 = vpop.f32.mrb[0].mxu0
      %v1999 = vpop.f32.mrb[0].mxu0
      %v2000 = vadd.f32 %v1823, %v1999
      %v2001 = vpop.f32.mrb[0].mxu0
      %2002 = vmatprep.mubr.bf16.mxu0 %v783
      %2003 = vmatmul.mubr.bf16.gmra.mrb[0].mxu0 %v686
      %v2004 = vpop.f32.mrb[0].mxu0
      %v2005 = vadd.f32 %v1828, %v2004
      %v2006 = vpop.f32.mrb[0].mxu0
      %v2007 = vpop.f32.mrb[0].mxu0
      %v2008 = vadd.f32 %v1831, %v2007
      %v2009 = vpop.f32.mrb[0].mxu0
      %2010 = vmatprep.mubr.bf16.mxu0 %v785
      %2011 = vmatmul.mubr.bf16.gmra.mrb[0].mxu0 %v690
      %v2012 = vpop.f32.mrb[0].mxu0
      %v2013 = vadd.f32 %v1836, %v2012
      %v2014 = vpop.f32.mrb[0].mxu0
      %v2015 = vpop.f32.mrb[0].mxu0
      %v2016 = vadd.f32 %v1839, %v2015
      %v2017 = vpop.f32.mrb[0].mxu0
      %2018 = vmatprep.mubr.bf16.mxu0 %v787
      %2019 = vmatmul.mubr.bf16.gmra.mrb[0].mxu0 %v694
      %v2020 = vpop.f32.mrb[0].mxu0
      %v2021 = vadd.f32 %v1844, %v2020
      %v2022 = vpop.f32.mrb[0].mxu0
      %v2023 = vpop.f32.mrb[0].mxu0
      %v2024 = vadd.f32 %v1847, %v2023
      %v2025 = vpop.f32.mrb[0].mxu0
      %2026 = vmatprep.mubr.bf16.mxu0 %v789
      %2027 = vmatmul.mubr.bf16.gmra.mrb[0].mxu0 %v698
      %v2028 = vpop.f32.mrb[0].mxu0
      %v2029 = vadd.f32 %v1852, %v2028
      %v2030 = vpop.f32.mrb[0].mxu0
      %v2031 = vpop.f32.mrb[0].mxu0
      %v2032 = vadd.f32 %v1855, %v2031
      %v2033 = vpop.f32.mrb[0].mxu0
      %2034 = vmatprep.mubr.bf16.mxu0 %v791
      %2035 = vmatmul.mubr.bf16.gmra.mrb[0].mxu0 %v702
      %v2036 = vpop.f32.mrb[0].mxu0
      %v2037 = vadd.f32 %v1860, %v2036
      %v2038 = vpop.f32.mrb[0].mxu0
      %v2039 = vpop.f32.mrb[0].mxu0
      %v2040 = vadd.f32 %v1863, %v2039
      %v2041 = vpop.f32.mrb[0].mxu0
      %2042 = vmatprep.mubr.bf16.mxu0 %v793
      %2043 = vmatmul.mubr.bf16.gmra.mrb[0].mxu0 %v706
      %v2044 = vpop.f32.mrb[0].mxu0
      %v2045 = vadd.f32 %v1868, %v2044
      %v2046 = vpop.f32.mrb[0].mxu0
      %v2047 = vpop.f32.mrb[0].mxu0
      %v2048 = vadd.f32 %v1871, %v2047
      %v2049 = vpop.f32.mrb[0].mxu0
      %2050 = vmatprep.mubr.bf16.mxu0 %v795
      %2051 = vmatmul.mubr.bf16.gmra.mrb[0].mxu0 %v710
      %v2052 = vpop.f32.mrb[0].mxu0
      %v2053 = vadd.f32 %v1876, %v2052
      %v2054 = vpop.f32.mrb[0].mxu0
      %v2055 = vpop.f32.mrb[0].mxu0
      %v2056 = vadd.f32 %v1879, %v2055
      %v2057 = vpop.f32.mrb[0].mxu0
      %2058 = vmatprep.mubr.bf16.mxu0 %v797
      %2059 = vmatmul.mubr.bf16.gmra.mrb[0].mxu0 %v714
      %v2060 = vpop.f32.mrb[0].mxu0
      %v2061 = vadd.f32 %v1884, %v2060
      %v2062 = vpop.f32.mrb[0].mxu0
      %v2063 = vpop.f32.mrb[0].mxu0
      %v2064 = vadd.f32 %v1887, %v2063
      %v2065 = vpop.f32.mrb[0].mxu0
      %2066 = vmatprep.mubr.bf16.mxu0 %v799
      %2067 = vmatmul.mubr.bf16.gmra.mrb[0].mxu0 %v718
      %v2068 = vpop.f32.mrb[0].mxu0
      %v2069 = vadd.f32 %v1892, %v2068
      %v2070 = vpop.f32.mrb[0].mxu0
      %v2071 = vpop.f32.mrb[0].mxu0
      %v2072 = vadd.f32 %v1895, %v2071
      %v2073 = vpop.f32.mrb[0].mxu0
      %2074 = vmatprep.mubr.bf16.mxu0 %v801
      %2075 = vmatmul.mubr.bf16.gmra.mrb[0].mxu0 %v722
      %v2076 = vpop.f32.mrb[0].mxu0
      %v2077 = vadd.f32 %v1900, %v2076
      %v2078 = vpop.f32.mrb[0].mxu0
      %v2079 = vpop.f32.mrb[0].mxu0
      %v2080 = vadd.f32 %v1903, %v2079
      %v2081 = vpop.f32.mrb[0].mxu0
      %2082 = vmatprep.mubr.bf16.mxu0 %v803
      %2083 = vmatmul.mubr.bf16.gmra.mrb[0].mxu0 %v726
      %v2084 = vpop.f32.mrb[0].mxu0
      %v2085 = vadd.f32 %v1908, %v2084
      %v2086 = vpop.f32.mrb[0].mxu0
      %v2087 = vpop.f32.mrb[0].mxu0
      %v2088 = vadd.f32 %v1911, %v2087
      %v2089 = vpop.f32.mrb[0].mxu0
      %2090 = vmatprep.mubr.bf16.mxu0 %v805
      %2091 = vmatmul.mubr.bf16.gmra.mrb[0].mxu0 %v730
      %v2092 = vpop.f32.mrb[0].mxu0
      %v2093 = vadd.f32 %v1916, %v2092
      %v2094 = vpop.f32.mrb[0].mxu0
      %v2095 = vpop.f32.mrb[0].mxu0
      %v2096 = vadd.f32 %v1919, %v2095
      %v2097 = vpop.f32.mrb[0].mxu0
      %2098 = vmatprep.mubr.bf16.mxu0 %v807
      %2099 = vmatmul.mubr.bf16.gmra.mrb[0].mxu0 %v734
      %v2100 = vpop.f32.mrb[0].mxu0
      %v2101 = vadd.f32 %v1924, %v2100
      %v2102 = vpop.f32.mrb[0].mxu0
      %v2103 = vpop.f32.mrb[0].mxu0
      %v2104 = vadd.f32 %v1927, %v2103
      %v2105 = vpop.f32.mrb[0].mxu0
      %2106 = vmatprep.mubr.bf16.mxu0 %v809
      %2107 = vmatmul.mubr.bf16.gmra.mrb[0].mxu0 %v738
      %v2108 = vpop.f32.mrb[0].mxu0
      %v2109 = vadd.f32 %v1932, %v2108
      %v2110 = vpop.f32.mrb[0].mxu0
      %v2111 = vpop.f32.mrb[0].mxu0
      %v2112 = vadd.f32 %v1935, %v2111
      %v2113 = vpop.f32.mrb[0].mxu0
      %2114 = vmatprep.mubr.bf16.mxu0 %v811
      %2115 = vmatmul.mubr.bf16.gmra.mrb[0].mxu0 %v742
      %v2116 = vpop.f32.mrb[0].mxu0
      %v2117 = vadd.f32 %v1940, %v2116
      %v2118 = vpop.f32.mrb[0].mxu0
      %v2119 = vpop.f32.mrb[0].mxu0
      %v2120 = vadd.f32 %v1943, %v2119
      %v2121 = vpop.f32.mrb[0].mxu0
      %2122 = vmatprep.mubr.bf16.mxu0 %v813
      %2123 = vmatmul.mubr.bf16.gmra.mrb[0].mxu0 %v751
      %v2124 = vpop.f32.mrb[0].mxu0
      %v2125 = vadd.f32 %v1948, %v2124
      %v2126 = vpop.f32.mrb[0].mxu0
      %v2127 = vpop.f32.mrb[0].mxu0
      %v2128 = vadd.f32 %v1951, %v2127
      %v2129 = vpop.f32.mrb[0].mxu0
      %2130 = vmatprep.mubr.bf16.mxu0 %v815
      %2131 = vmatmul.mubr.bf16.gmra.mrb[0].mxu0 %v756
      %v2132 = vpop.f32.mrb[0].mxu0
      %v2133 = vadd.f32 %v1956, %v2132
      %v2134 = vpop.f32.mrb[0].mxu0
      %v2135 = vpop.f32.mrb[0].mxu0
      %v2136 = vadd.f32 %v1959, %v2135
      %v2137 = vpop.f32.mrb[0].mxu0
      %2138 = vdwg.mxu0
      %2139 = vmatprep.subr.bf16.mxu0 0
      %2140 = vmatpush1.bf16.msra.mxu0 %v1512
      %2141 = vmatprep.subr.bf16.mxu0 0
      %2142 = vmatpush1.bf16.msra.mxu0 %v1513
      %2143 = vmatprep.subr.bf16.mxu0 0
      %2144 = vmatpush1.bf16.msra.mxu0 %v1514
      %2145 = vmatprep.subr.bf16.mxu0 0
      %2146 = vmatpush1.bf16.msra.mxu0 %v1515
      %2147 = vmatprep.subr.bf16.mxu0 0
      %2148 = vmatpush1.bf16.msra.mxu0 %v1516
      %2149 = vmatprep.subr.bf16.mxu0 0
      %2150 = vmatpush1.bf16.msra.mxu0 %v1517
      %2151 = vmatprep.subr.bf16.mxu0 0
      %2152 = vmatpush1.bf16.msra.mxu0 %v1518
      %2153 = vmatprep.subr.bf16.mxu0 0
      %2154 = vmatpush1.bf16.msra.mxu0 %v1519
      %2155 = vmatprep.subr.bf16.mxu0 0
      %2156 = vmatpush1.bf16.msra.mxu0 %v1520
      %2157 = vmatprep.subr.bf16.mxu0 0
      %2158 = vmatpush1.bf16.msra.mxu0 %v1521
      %2159 = vmatprep.subr.bf16.mxu0 0
      %2160 = vmatpush1.bf16.msra.mxu0 %v1522
      %2161 = vmatprep.subr.bf16.mxu0 0
      %2162 = vmatpush1.bf16.msra.mxu0 %v1523
      %2163 = vmatprep.subr.bf16.mxu0 0
      %2164 = vmatpush1.bf16.msra.mxu0 %v1524
      %2165 = vmatprep.subr.bf16.mxu0 0
      %2166 = vmatpush1.bf16.msra.mxu0 %v1525
      %2167 = vmatprep.subr.bf16.mxu0 0
      %2168 = vmatpush1.bf16.msra.mxu0 %v1526
      %2169 = vmatprep.subr.bf16.mxu0 0
      %2170 = vmatpush1.bf16.msra.mxu0 %v1527
      %2171 = vmatprep.mubr.bf16.mxu0 %v869
      %2172 = vmatmul.mubr.bf16.gmra.mrb[0].mxu0 %v846
      %v2173 = vpop.f32.mrb[0].mxu0
      %v2174 = vadd.f32 %v1997, %v2173
      %v2175 = vpop.f32.mrb[0].mxu0
      %v2176 = vpop.f32.mrb[0].mxu0
      %v2177 = vadd.f32 %v2000, %v2176
      %v2178 = vpop.f32.mrb[0].mxu0
      %2179 = vmatprep.mubr.bf16.mxu0 %v873
      %2180 = vmatmul.mubr.bf16.gmra.mrb[0].mxu0 %v785
      %v2181 = vpop.f32.mrb[0].mxu0
      %v2182 = vadd.f32 %v2005, %v2181
      %v2183 = vpop.f32.mrb[0].mxu0
      %v2184 = vpop.f32.mrb[0].mxu0
      %v2185 = vadd.f32 %v2008, %v2184
      %v2186 = vpop.f32.mrb[0].mxu0
      %2187 = vmatprep.mubr.bf16.mxu0 %v877
      %2188 = vmatmul.mubr.bf16.gmra.mrb[0].mxu0 %v787
      %v2189 = vpop.f32.mrb[0].mxu0
      %v2190 = vadd.f32 %v2013, %v2189
      %v2191 = vpop.f32.mrb[0].mxu0
      %v2192 = vpop.f32.mrb[0].mxu0
      %v2193 = vadd.f32 %v2016, %v2192
      %v2194 = vpop.f32.mrb[0].mxu0
      %2195 = vmatprep.mubr.bf16.mxu0 %v881
      %2196 = vmatmul.mubr.bf16.gmra.mrb[0].mxu0 %v789
      %v2197 = vpop.f32.mrb[0].mxu0
      %v2198 = vadd.f32 %v2021, %v2197
      %v2199 = vpop.f32.mrb[0].mxu0
      %v2200 = vpop.f32.mrb[0].mxu0
      %v2201 = vadd.f32 %v2024, %v2200
      %v2202 = vpop.f32.mrb[0].mxu0
      %2203 = vmatprep.mubr.bf16.mxu0 %v885
      %2204 = vmatmul.mubr.bf16.gmra.mrb[0].mxu0 %v791
      %v2205 = vpop.f32.mrb[0].mxu0
      %v2206 = vadd.f32 %v2029, %v2205
      %v2207 = vpop.f32.mrb[0].mxu0
      %v2208 = vpop.f32.mrb[0].mxu0
      %v2209 = vadd.f32 %v2032, %v2208
      %v2210 = vpop.f32.mrb[0].mxu0
      %2211 = vmatprep.mubr.bf16.mxu0 %v889
      %2212 = vmatmul.mubr.bf16.gmra.mrb[0].mxu0 %v793
      %v2213 = vpop.f32.mrb[0].mxu0
      %v2214 = vadd.f32 %v2037, %v2213
      %v2215 = vpop.f32.mrb[0].mxu0
      %v2216 = vpop.f32.mrb[0].mxu0
      %v2217 = vadd.f32 %v2040, %v2216
      %v2218 = vpop.f32.mrb[0].mxu0
      %2219 = vmatprep.mubr.bf16.mxu0 %v893
      %2220 = vmatmul.mubr.bf16.gmra.mrb[0].mxu0 %v795
      %v2221 = vpop.f32.mrb[0].mxu0
      %v2222 = vadd.f32 %v2045, %v2221
      %v2223 = vpop.f32.mrb[0].mxu0
      %v2224 = vpop.f32.mrb[0].mxu0
      %v2225 = vadd.f32 %v2048, %v2224
      %v2226 = vpop.f32.mrb[0].mxu0
      %2227 = vmatprep.mubr.bf16.mxu0 %v897
      %2228 = vmatmul.mubr.bf16.gmra.mrb[0].mxu0 %v797
      %v2229 = vpop.f32.mrb[0].mxu0
      %v2230 = vadd.f32 %v2053, %v2229
      %v2231 = vpop.f32.mrb[0].mxu0
      %v2232 = vpop.f32.mrb[0].mxu0
      %v2233 = vadd.f32 %v2056, %v2232
      %v2234 = vpop.f32.mrb[0].mxu0
      %2235 = vmatprep.mubr.bf16.mxu0 %v901
      %2236 = vmatmul.mubr.bf16.gmra.mrb[0].mxu0 %v799
      %v2237 = vpop.f32.mrb[0].mxu0
      %v2238 = vadd.f32 %v2061, %v2237
      %v2239 = vpop.f32.mrb[0].mxu0
      %v2240 = vpop.f32.mrb[0].mxu0
      %v2241 = vadd.f32 %v2064, %v2240
      %v2242 = vpop.f32.mrb[0].mxu0
      %2243 = vmatprep.mubr.bf16.mxu0 %v905
      %2244 = vmatmul.mubr.bf16.gmra.mrb[0].mxu0 %v801
      %v2245 = vpop.f32.mrb[0].mxu0
      %v2246 = vadd.f32 %v2069, %v2245
      %v2247 = vpop.f32.mrb[0].mxu0
      %v2248 = vpop.f32.mrb[0].mxu0
      %v2249 = vadd.f32 %v2072, %v2248
      %v2250 = vpop.f32.mrb[0].mxu0
      %2251 = vmatprep.mubr.bf16.mxu0 %v909
      %2252 = vmatmul.mubr.bf16.gmra.mrb[0].mxu0 %v803
      %v2253 = vpop.f32.mrb[0].mxu0
      %v2254 = vadd.f32 %v2077, %v2253
      %v2255 = vpop.f32.mrb[0].mxu0
      %v2256 = vpop.f32.mrb[0].mxu0
      %v2257 = vadd.f32 %v2080, %v2256
      %v2258 = vpop.f32.mrb[0].mxu0
      %2259 = vmatprep.mubr.bf16.mxu0 %v913
      %2260 = vmatmul.mubr.bf16.gmra.mrb[0].mxu0 %v805
      %v2261 = vpop.f32.mrb[0].mxu0
      %v2262 = vadd.f32 %v2085, %v2261
      %v2263 = vpop.f32.mrb[0].mxu0
      %v2264 = vpop.f32.mrb[0].mxu0
      %v2265 = vadd.f32 %v2088, %v2264
      %v2266 = vpop.f32.mrb[0].mxu0
      %2267 = vmatprep.mubr.bf16.mxu0 %v917
      %2268 = vmatmul.mubr.bf16.gmra.mrb[0].mxu0 %v807
      %v2269 = vpop.f32.mrb[0].mxu0
      %v2270 = vadd.f32 %v2093, %v2269
      %v2271 = vpop.f32.mrb[0].mxu0
      %v2272 = vpop.f32.mrb[0].mxu0
      %v2273 = vadd.f32 %v2096, %v2272
      %v2274 = vpop.f32.mrb[0].mxu0
      %2275 = vmatprep.mubr.bf16.mxu0 %v921
      %2276 = vmatmul.mubr.bf16.gmra.mrb[0].mxu0 %v809
      %v2277 = vpop.f32.mrb[0].mxu0
      %v2278 = vadd.f32 %v2101, %v2277
      %v2279 = vpop.f32.mrb[0].mxu0
      %v2280 = vpop.f32.mrb[0].mxu0
      %v2281 = vadd.f32 %v2104, %v2280
      %v2282 = vpop.f32.mrb[0].mxu0
      %2283 = vmatprep.mubr.bf16.mxu0 %v925
      %2284 = vmatmul.mubr.bf16.gmra.mrb[0].mxu0 %v811
      %v2285 = vpop.f32.mrb[0].mxu0
      %v2286 = vadd.f32 %v2109, %v2285
      %v2287 = vpop.f32.mrb[0].mxu0
      %v2288 = vpop.f32.mrb[0].mxu0
      %v2289 = vadd.f32 %v2112, %v2288
      %v2290 = vpop.f32.mrb[0].mxu0
      %2291 = vmatprep.mubr.bf16.mxu0 %v929
      %2292 = vmatmul.mubr.bf16.gmra.mrb[0].mxu0 %v813
      %v2293 = vpop.f32.mrb[0].mxu0
      %v2294 = vadd.f32 %v2117, %v2293
      %v2295 = vpop.f32.mrb[0].mxu0
      %v2296 = vpop.f32.mrb[0].mxu0
      %v2297 = vadd.f32 %v2120, %v2296
      %v2298 = vpop.f32.mrb[0].mxu0
      %2299 = vmatprep.mubr.bf16.mxu0 %v938
      %2300 = vmatmul.mubr.bf16.gmra.mrb[0].mxu0 %v848
      %v2301 = vpop.f32.mrb[0].mxu0
      %v2302 = vadd.f32 %v2125, %v2301
      %v2303 = vpop.f32.mrb[0].mxu0
      %v2304 = vpop.f32.mrb[0].mxu0
      %v2305 = vadd.f32 %v2128, %v2304
      %v2306 = vpop.f32.mrb[0].mxu0
      %2307 = vmatprep.mubr.bf16.mxu0 %v947
      %2308 = vmatmul.mubr.bf16.gmra.mrb[0].mxu0 %v850
      %v2309 = vpop.f32.mrb[0].mxu0
      %v2310 = vadd.f32 %v2133, %v2309
      %v2311 = vpop.f32.mrb[0].mxu0
      %v2312 = vpop.f32.mrb[0].mxu0
      %v2313 = vadd.f32 %v2136, %v2312
      %v2314 = vpop.f32.mrb[0].mxu0
      %2315 = vdwg.mxu0
      %2316 = vmatprep.subr.bf16.mxu0 0
      %2317 = vmatpush1.bf16.msra.mxu0 %v1528
      %2318 = vmatprep.subr.bf16.mxu0 0
      %2319 = vmatpush1.bf16.msra.mxu0 %v1529
      %2320 = vmatprep.subr.bf16.mxu0 0
      %2321 = vmatpush1.bf16.msra.mxu0 %v1530
      %2322 = vmatprep.subr.bf16.mxu0 0
      %2323 = vmatpush1.bf16.msra.mxu0 %v1531
      %2324 = vmatprep.subr.bf16.mxu0 0
      %2325 = vmatpush1.bf16.msra.mxu0 %v1532
      %2326 = vmatprep.subr.bf16.mxu0 0
      %2327 = vmatpush1.bf16.msra.mxu0 %v1533
      %2328 = vmatprep.subr.bf16.mxu0 0
      %2329 = vmatpush1.bf16.msra.mxu0 %v1534
      %2330 = vmatprep.subr.bf16.mxu0 0
      %2331 = vmatpush1.bf16.msra.mxu0 %v1535
      %2332 = vmatprep.subr.bf16.mxu0 0
      %2333 = vmatpush1.bf16.msra.mxu0 0
      %2334 = vmatprep.subr.bf16.mxu0 0
      %2335 = vmatpush1.bf16.msra.mxu0 0
      %2336 = vmatprep.subr.bf16.mxu0 0
      %2337 = vmatpush1.bf16.msra.mxu0 0
      %2338 = vmatprep.subr.bf16.mxu0 0
      %2339 = vmatpush1.bf16.msra.mxu0 0
      %2340 = vmatprep.subr.bf16.mxu0 0
      %2341 = vmatpush1.bf16.msra.mxu0 0
      %2342 = vmatprep.subr.bf16.mxu0 0
      %2343 = vmatpush1.bf16.msra.mxu0 0
      %2344 = vmatprep.subr.bf16.mxu0 0
      %2345 = vmatpush1.bf16.msra.mxu0 0
      %2346 = vmatprep.subr.bf16.mxu0 0
      %2347 = vmatpush1.bf16.msra.mxu0 0
      %2348 = vmatprep.mubr.bf16.mxu0 0
      %2349 = vmatmul.mubr.bf16.gmra.mrb[0].mxu0 %v972
      %v2350 = vpop.f32.mrb[0].mxu0
      %v2351 = vadd.f32 %v2174, %v2350
      %v2352 = vpop.f32.mrb[0].mxu0
      %v2353 = vpop.f32.mrb[0].mxu0
      %v2354 = vadd.f32 %v2177, %v2353
      %v2355 = vpop.f32.mrb[0].mxu0
      %2356 = vmatprep.mubr.bf16.mxu0 0
      %2357 = vmatmul.mubr.bf16.gmra.mrb[0].mxu0 %v974
      %v2358 = vpop.f32.mrb[0].mxu0
      %v2359 = vadd.f32 %v2182, %v2358
      %v2360 = vpop.f32.mrb[0].mxu0
      %v2361 = vpop.f32.mrb[0].mxu0
      %v2362 = vadd.f32 %v2185, %v2361
      %v2363 = vpop.f32.mrb[0].mxu0
      %2364 = vmatprep.mubr.bf16.mxu0 0
      %2365 = vmatmul.mubr.bf16.gmra.mrb[0].mxu0 %v976
      %v2366 = vpop.f32.mrb[0].mxu0
      %v2367 = vadd.f32 %v2190, %v2366
      %v2368 = vpop.f32.mrb[0].mxu0
      %v2369 = vpop.f32.mrb[0].mxu0
      %v2370 = vadd.f32 %v2193, %v2369
      %v2371 = vpop.f32.mrb[0].mxu0
      %2372 = vmatprep.mubr.bf16.mxu0 0
      %2373 = vmatmul.mubr.bf16.gmra.mrb[0].mxu0 %v978
      %v2374 = vpop.f32.mrb[0].mxu0
      %v2375 = vadd.f32 %v2198, %v2374
      %v2376 = vpop.f32.mrb[0].mxu0
      %v2377 = vpop.f32.mrb[0].mxu0
      %v2378 = vadd.f32 %v2201, %v2377
      %v2379 = vpop.f32.mrb[0].mxu0
      %2380 = vmatprep.mubr.bf16.mxu0 0
      %2381 = vmatmul.mubr.bf16.gmra.mrb[0].mxu0 %v980
      %v2382 = vpop.f32.mrb[0].mxu0
      %v2383 = vadd.f32 %v2206, %v2382
      %v2384 = vpop.f32.mrb[0].mxu0
      %v2385 = vpop.f32.mrb[0].mxu0
      %v2386 = vadd.f32 %v2209, %v2385
      %v2387 = vpop.f32.mrb[0].mxu0
      %2388 = vmatprep.mubr.bf16.mxu0 0
      %2389 = vmatmul.mubr.bf16.gmra.mrb[0].mxu0 %v982
      %v2390 = vpop.f32.mrb[0].mxu0
      %v2391 = vadd.f32 %v2214, %v2390
      %v2392 = vpop.f32.mrb[0].mxu0
      %v2393 = vpop.f32.mrb[0].mxu0
      %v2394 = vadd.f32 %v2217, %v2393
      %v2395 = vpop.f32.mrb[0].mxu0
      %2396 = vmatprep.mubr.bf16.mxu0 0
      %2397 = vmatmul.mubr.bf16.gmra.mrb[0].mxu0 %v984
      %v2398 = vpop.f32.mrb[0].mxu0
      %v2399 = vadd.f32 %v2222, %v2398
      %v2400 = vpop.f32.mrb[0].mxu0
      %v2401 = vpop.f32.mrb[0].mxu0
      %v2402 = vadd.f32 %v2225, %v2401
      %v2403 = vpop.f32.mrb[0].mxu0
      %2404 = vmatprep.mubr.bf16.mxu0 0
      %2405 = vmatmul.mubr.bf16.gmra.mrb[0].mxu0 %v986
      %v2406 = vpop.f32.mrb[0].mxu0
      %v2407 = vadd.f32 %v2230, %v2406
      %v2408 = vpop.f32.mrb[0].mxu0
      %v2409 = vpop.f32.mrb[0].mxu0
      %v2410 = vadd.f32 %v2233, %v2409
      %v2411 = vpop.f32.mrb[0].mxu0
      %2412 = vmatprep.mubr.bf16.mxu0 0
      %2413 = vmatmul.mubr.bf16.gmra.mrb[0].mxu0 %v988
      %v2414 = vpop.f32.mrb[0].mxu0
      %v2415 = vadd.f32 %v2238, %v2414
      %v2416 = vpop.f32.mrb[0].mxu0
      %v2417 = vpop.f32.mrb[0].mxu0
      %v2418 = vadd.f32 %v2241, %v2417
      %v2419 = vpop.f32.mrb[0].mxu0
      %2420 = vmatprep.mubr.bf16.mxu0 0
      %2421 = vmatmul.mubr.bf16.gmra.mrb[0].mxu0 %v990
      %v2422 = vpop.f32.mrb[0].mxu0
      %v2423 = vadd.f32 %v2246, %v2422
      %v2424 = vpop.f32.mrb[0].mxu0
      %v2425 = vpop.f32.mrb[0].mxu0
      %v2426 = vadd.f32 %v2249, %v2425
      %v2427 = vpop.f32.mrb[0].mxu0
      %2428 = vmatprep.mubr.bf16.mxu0 0
      %2429 = vmatmul.mubr.bf16.gmra.mrb[0].mxu0 %v992
      %v2430 = vpop.f32.mrb[0].mxu0
      %v2431 = vadd.f32 %v2254, %v2430
      %v2432 = vpop.f32.mrb[0].mxu0
      %v2433 = vpop.f32.mrb[0].mxu0
      %v2434 = vadd.f32 %v2257, %v2433
      %v2435 = vpop.f32.mrb[0].mxu0
      %2436 = vmatprep.mubr.bf16.mxu0 0
      %2437 = vmatmul.mubr.bf16.gmra.mrb[0].mxu0 %v994
      %v2438 = vpop.f32.mrb[0].mxu0
      %v2439 = vadd.f32 %v2262, %v2438
      %v2440 = vpop.f32.mrb[0].mxu0
      %v2441 = vpop.f32.mrb[0].mxu0
      %v2442 = vadd.f32 %v2265, %v2441
      %v2443 = vpop.f32.mrb[0].mxu0
      %2444 = vmatprep.mubr.bf16.mxu0 0
      %2445 = vmatmul.mubr.bf16.gmra.mrb[0].mxu0 %v996
      %v2446 = vpop.f32.mrb[0].mxu0
      %v2447 = vadd.f32 %v2270, %v2446
      %v2448 = vpop.f32.mrb[0].mxu0
      %v2449 = vpop.f32.mrb[0].mxu0
      %v2450 = vadd.f32 %v2273, %v2449
      %v2451 = vpop.f32.mrb[0].mxu0
      %2452 = vmatprep.mubr.bf16.mxu0 0
      %2453 = vmatmul.mubr.bf16.gmra.mrb[0].mxu0 %v998
      %v2454 = vpop.f32.mrb[0].mxu0
      %v2455 = vadd.f32 %v2278, %v2454
      %v2456 = vpop.f32.mrb[0].mxu0
      %v2457 = vpop.f32.mrb[0].mxu0
      %v2458 = vadd.f32 %v2281, %v2457
      %v2459 = vpop.f32.mrb[0].mxu0
      %2460 = vmatprep.mubr.bf16.mxu0 0
      %2461 = vmatmul.mubr.bf16.gmra.mrb[0].mxu0 %v1000
      %v2462 = vpop.f32.mrb[0].mxu0
      %v2463 = vadd.f32 %v2286, %v2462
      %v2464 = vpop.f32.mrb[0].mxu0
      %v2465 = vpop.f32.mrb[0].mxu0
      %v2466 = vadd.f32 %v2289, %v2465
      %v2467 = vpop.f32.mrb[0].mxu0
      %2468 = vmatprep.mubr.bf16.mxu0 0
      %2469 = vmatmul.mubr.bf16.gmra.mrb[0].mxu0 %v1002
      %v2470 = vpop.f32.mrb[0].mxu0
      %v2471 = vadd.f32 %v2294, %v2470
      %v2472 = vpop.f32.mrb[0].mxu0
      %v2473 = vpop.f32.mrb[0].mxu0
      %v2474 = vadd.f32 %v2297, %v2473
      %v2475 = vpop.f32.mrb[0].mxu0
      %2476 = vmatprep.mubr.bf16.mxu0 0
      %2477 = vmatmul.mubr.bf16.gmra.mrb[0].mxu0 %v1004
      %v2478 = vpop.f32.mrb[0].mxu0
      %v2479 = vadd.f32 %v2302, %v2478
      %v2480 = vpop.f32.mrb[0].mxu0
      %v2481 = vpop.f32.mrb[0].mxu0
      %v2482 = vadd.f32 %v2305, %v2481
      %v2483 = vpop.f32.mrb[0].mxu0
      %2484 = vmatprep.mubr.bf16.mxu0 0
      %2485 = vmatmul.mubr.bf16.gmra.mrb[0].mxu0 %v1006
      %v2486 = vpop.f32.mrb[0].mxu0
      %v2487 = vadd.f32 %v2310, %v2486
      %v2488 = vpop.f32.mrb[0].mxu0
      %v2489 = vpop.f32.mrb[0].mxu0
      %v2490 = vadd.f32 %v2313, %v2489
      %v2491 = vpop.f32.mrb[0].mxu0
      %2492 = vdwg.mxu0
      %v2493 = vld [vmem:[%s266 + $0x8] sm:$0xe]
      %v2494 = vld [vmem:[%s266 + $0xc] sm:$0xf]
      %v2495 = vld [vmem:[%s266 + $0x10] sm:$0xf]
      %v2496 = vld [vmem:[%s266 + $0x14] sm:$0xf]
      %v2497 = vld [vmem:[%s266 + $0x18] sm:$0xf]
      %v2498 = vld [vmem:[%s266 + $0x1c] sm:$0xf]
      %v2499 = vld [vmem:[%s266 + $0x20] sm:$0xf]
      %v2500 = vld [vmem:[%s266 + $0x24] sm:$0xf]
      %v2501 = vld [vmem:[%s266 + $0x28] sm:$0xf]
      %v2502 = vld [vmem:[%s266 + $0x2c] sm:$0xf]
      %v2503 = vld [vmem:[%s266 + $0x30] sm:$0xf]
      %v2504 = vld [vmem:[%s266 + $0x34] sm:$0xf]
      %v2505 = vld [vmem:[%s266 + $0x38] sm:$0xf]
      %v2506 = vld [vmem:[%s266 + $0x3c] sm:$0xf]
      %v2507 = vld [vmem:[%s266 + $0x40] sm:$0xf]
      %v2508 = vld [vmem:[%s266 + $0x44] sm:$0xf]
      %v2509 = vld [vmem:[%s266 + $0x48] sm:$0xf]
      %v2510 = vld [vmem:[%s266 + $0x4c] sm:$0xf]
      %v2511 = vld [vmem:[%s266 + $0x50] sm:$0xf]
      %v2512 = vld [vmem:[%s266 + $0x54] sm:$0xf]
      %v2513 = vld [vmem:[%s266 + $0x58] sm:$0xf]
      %v2514 = vld [vmem:[%s266 + $0x5c] sm:$0xf]
      %v2515 = vld [vmem:[%s266 + $0x60] sm:$0xf]
      %v2516 = vld [vmem:[%s266 + $0x64] sm:$0xf]
      %v2517 = vld [vmem:[%s266 + $0x68] sm:$0xf]
      %v2518 = vld [vmem:[%s266 + $0x6c] sm:$0xf]
      %v2519 = vld [vmem:[%s266 + $0x70] sm:$0xf]
      %v2520 = vld [vmem:[%s266 + $0x74] sm:$0xf]
      %v2521 = vld [vmem:[%s266 + $0x78] sm:$0xf]
      %v2522 = vld [vmem:[%s266 + $0x7c] sm:$0xf]
      %v2523 = vld [vmem:[%s266 + $0x80] sm:$0xf]
      %v2524 = vld [vmem:[%s266 + $0x84] sm:$0xf]
      %v2525 = vld [vmem:[%s266 + $0x88] sm:$0xf]
      %v2526 = vld [vmem:[%s266 + $0x8c] sm:$0xf]
      %v2527 = vld [vmem:[%s266 + $0x90] sm:$0xf]
      %v2528 = vld [vmem:[%s266 + $0x94] sm:$0xf]
      %v2529 = vld [vmem:[%s266 + $0x98] sm:$0x1]
      %v2530 = vld [vmem:[%s3] sm:$0xf]
      %v2531 = vld [vmem:[%s3 + $0x4] sm:$0xf]
      %v2532 = vld [vmem:[%s3 + $0x8] sm:$0xf]
      %v2533 = vld [vmem:[%s3 + $0xc] sm:$0xf]
      %v2534 = vld [vmem:[%s3 + $0x10] sm:$0xf]
      %v2535 = vld [vmem:[%s3 + $0x14] sm:$0xf]
      %v2536 = vld [vmem:[%s3 + $0x18] sm:$0xf]
      %v2537 = vld [vmem:[%s3 + $0x1c] sm:$0xf]
      %v2538 = vld [vmem:[%s3 + $0x20] sm:$0xf]
      %v2539 = vld [vmem:[%s3 + $0x24] sm:$0xf]
      %v2540 = vld [vmem:[%s3 + $0x28] sm:$0xf]
      %v2541 = vld [vmem:[%s3 + $0x2c] sm:$0xf]
      %v2542 = vld [vmem:[%s3 + $0x30] sm:$0xf]
      %v2543 = vld [vmem:[%s3 + $0x34] sm:$0xf]
      %v2544 = vld [vmem:[%s3 + $0x38] sm:$0xf]
      %v2545 = vld [vmem:[%s3 + $0x3c] sm:$0xf]
      %v2546 = vld [vmem:[%s4] sm:$0x1]
      %v2548 = vlaneseq
      %v2549 = vshrl.u32 %v2548, 7
      %v2550 = vsub.s32 0, %v2549
      %v2551 = vrot.slane %v2546, %v2550
      %v2590 = vunpack.c.l.b16 %v2493
      %v2591 = vunpack.c.l.b16 %v2494
      %v2592 = vunpack.c.l.b16 %v2495
      %v2593 = vunpack.c.l.b16 %v2496
      %v2594 = vunpack.c.l.b16 %v2497
      %v2595 = vunpack.c.l.b16 %v2498
      %v2596 = vunpack.c.l.b16 %v2499
      %v2597 = vunpack.c.l.b16 %v2500
      %v2598 = vunpack.c.l.b16 %v2501
      %v2599 = vunpack.c.l.b16 %v2502
      %v2600 = vunpack.c.l.b16 %v2503
      %v2601 = vunpack.c.l.b16 %v2504
      %v2602 = vunpack.c.l.b16 %v2505
      %v2603 = vunpack.c.l.b16 %v2506
      %v2604 = vunpack.c.l.b16 %v2507
      %v2605 = vunpack.c.l.b16 %v2508
      %v2606 = vunpack.c.l.b16 %v2509
      %v2607 = vunpack.c.l.b16 %v2510
      %v2608 = vunpack.c.l.b16 %v2511
      %v2609 = vunpack.c.l.b16 %v2512
      %v2610 = vunpack.c.l.b16 %v2513
      %v2611 = vunpack.c.l.b16 %v2514
      %v2612 = vunpack.c.l.b16 %v2515
      %v2613 = vunpack.c.l.b16 %v2516
      %v2614 = vunpack.c.l.b16 %v2517
      %v2615 = vunpack.c.l.b16 %v2518
      %v2616 = vunpack.c.l.b16 %v2519
      %v2617 = vunpack.c.l.b16 %v2520
      %v2618 = vunpack.c.l.b16 %v2521
      %v2619 = vunpack.c.l.b16 %v2522
      %v2620 = vunpack.c.l.b16 %v2523
      %v2621 = vunpack.c.l.b16 %v2524
      %v2622 = vunpack.c.l.b16 %v2525
      %v2623 = vunpack.c.l.b16 %v2526
      %v2624 = vunpack.c.l.b16 %v2527
      %v2625 = vunpack.c.l.b16 %v2528
      %v2626 = vunpack.c.l.b16 %v2529
      %v2627 = vpack.c.b16 %v2591, %v2590
      %v2628 = vpack.c.b16 %v2593, %v2592
      %v2629 = vpack.c.b16 %v2595, %v2594
      %v2630 = vpack.c.b16 %v2597, %v2596
      %v2631 = vpack.c.b16 %v2599, %v2598
      %v2632 = vpack.c.b16 %v2601, %v2600
      %v2633 = vpack.c.b16 %v2603, %v2602
      %v2634 = vpack.c.b16 %v2605, %v2604
      %v2635 = vpack.c.b16 %v2607, %v2606
      %v2636 = vpack.c.b16 %v2609, %v2608
      %v2637 = vpack.c.b16 %v2611, %v2610
      %v2638 = vpack.c.b16 %v2613, %v2612
      %v2639 = vpack.c.b16 %v2615, %v2614
      %v2640 = vpack.c.b16 %v2617, %v2616
      %v2641 = vpack.c.b16 %v2619, %v2618
      %v2642 = vpack.c.b16 %v2621, %v2620
      %v2643 = vpack.c.b16 %v2623, %v2622
      %v2644 = vpack.c.b16 %v2625, %v2624
      %v2645 = vpack.c.b16 %v2626, %v2626
      %v2647 = vshrl.u32 %v2627, 16
      %v2649 = vrot.slane %v2647, 1
      %v2650 = vshll.u32 %v2627, 16
      %v2652 = vrot.slane %v2650, 2
      %v2653 = vor.u32 %v2649, %v2652
      %v2655 = vshrl.u32 %v2628, 16
      %v2657 = vrot.slane %v2655, 1
      %v2658 = vshll.u32 %v2628, 16
      %v2660 = vrot.slane %v2658, 2
      %v2661 = vor.u32 %v2657, %v2660
      %v2662 = vsel %vm670, %v2653, %v2661
      %v2664 = vshrl.u32 %v2629, 16
      %v2666 = vrot.slane %v2664, 1
      %v2667 = vshll.u32 %v2629, 16
      %v2669 = vrot.slane %v2667, 2
      %v2670 = vor.u32 %v2666, %v2669
      %v2671 = vsel %vm670, %v2661, %v2670
      %v2673 = vshrl.u32 %v2630, 16
      %v2675 = vrot.slane %v2673, 1
      %v2676 = vshll.u32 %v2630, 16
      %v2678 = vrot.slane %v2676, 2
      %v2679 = vor.u32 %v2675, %v2678
      %v2680 = vsel %vm670, %v2670, %v2679
      %v2682 = vshrl.u32 %v2631, 16
      %v2684 = vrot.slane %v2682, 1
      %v2685 = vshll.u32 %v2631, 16
      %v2687 = vrot.slane %v2685, 2
      %v2688 = vor.u32 %v2684, %v2687
      %v2689 = vsel %vm670, %v2679, %v2688
      %v2691 = vshrl.u32 %v2632, 16
      %v2693 = vrot.slane %v2691, 1
      %v2694 = vshll.u32 %v2632, 16
      %v2696 = vrot.slane %v2694, 2
      %v2697 = vor.u32 %v2693, %v2696
      %v2698 = vsel %vm670, %v2688, %v2697
      %v2700 = vshrl.u32 %v2633, 16
      %v2702 = vrot.slane %v2700, 1
      %v2703 = vshll.u32 %v2633, 16
      %v2705 = vrot.slane %v2703, 2
      %v2706 = vor.u32 %v2702, %v2705
      %v2707 = vsel %vm670, %v2697, %v2706
      %v2709 = vshrl.u32 %v2634, 16
      %v2711 = vrot.slane %v2709, 1
      %v2712 = vshll.u32 %v2634, 16
      %v2714 = vrot.slane %v2712, 2
      %v2715 = vor.u32 %v2711, %v2714
      %v2716 = vsel %vm670, %v2706, %v2715
      %v2718 = vshrl.u32 %v2635, 16
      %v2720 = vrot.slane %v2718, 1
      %v2721 = vshll.u32 %v2635, 16
      %v2723 = vrot.slane %v2721, 2
      %v2724 = vor.u32 %v2720, %v2723
      %v2725 = vsel %vm670, %v2715, %v2724
      %v2727 = vshrl.u32 %v2636, 16
      %v2729 = vrot.slane %v2727, 1
      %v2730 = vshll.u32 %v2636, 16
      %v2732 = vrot.slane %v2730, 2
      %v2733 = vor.u32 %v2729, %v2732
      %v2734 = vsel %vm670, %v2724, %v2733
      %v2736 = vshrl.u32 %v2637, 16
      %v2738 = vrot.slane %v2736, 1
      %v2739 = vshll.u32 %v2637, 16
      %v2741 = vrot.slane %v2739, 2
      %v2742 = vor.u32 %v2738, %v2741
      %v2743 = vsel %vm670, %v2733, %v2742
      %v2745 = vshrl.u32 %v2638, 16
      %v2747 = vrot.slane %v2745, 1
      %v2748 = vshll.u32 %v2638, 16
      %v2750 = vrot.slane %v2748, 2
      %v2751 = vor.u32 %v2747, %v2750
      %v2752 = vsel %vm670, %v2742, %v2751
      %v2754 = vshrl.u32 %v2639, 16
      %v2756 = vrot.slane %v2754, 1
      %v2757 = vshll.u32 %v2639, 16
      %v2759 = vrot.slane %v2757, 2
      %v2760 = vor.u32 %v2756, %v2759
      %v2761 = vsel %vm670, %v2751, %v2760
      %v2763 = vshrl.u32 %v2640, 16
      %v2765 = vrot.slane %v2763, 1
      %v2766 = vshll.u32 %v2640, 16
      %v2768 = vrot.slane %v2766, 2
      %v2769 = vor.u32 %v2765, %v2768
      %v2770 = vsel %vm670, %v2760, %v2769
      %v2772 = vshrl.u32 %v2641, 16
      %v2774 = vrot.slane %v2772, 1
      %v2775 = vshll.u32 %v2641, 16
      %v2777 = vrot.slane %v2775, 2
      %v2778 = vor.u32 %v2774, %v2777
      %v2779 = vsel %vm670, %v2769, %v2778
      %v2781 = vshrl.u32 %v2642, 16
      %v2783 = vrot.slane %v2781, 1
      %v2784 = vshll.u32 %v2642, 16
      %v2786 = vrot.slane %v2784, 2
      %v2787 = vor.u32 %v2783, %v2786
      %v2788 = vsel %vm670, %v2778, %v2787
      %v2790 = vshrl.u32 %v2643, 16
      %v2792 = vrot.slane %v2790, 1
      %v2793 = vshll.u32 %v2643, 16
      %v2795 = vrot.slane %v2793, 2
      %v2796 = vor.u32 %v2792, %v2795
      %v2797 = vsel %vm670, %v2787, %v2796
      %v2799 = vshrl.u32 %v2644, 16
      %v2801 = vrot.slane %v2799, 1
      %v2802 = vshll.u32 %v2644, 16
      %v2804 = vrot.slane %v2802, 2
      %v2805 = vor.u32 %v2801, %v2804
      %v2806 = vsel %vm670, %v2796, %v2805
      %v2808 = vshll.u32 %v2645, 16
      %v2810 = vrot.slane %v2808, 2
      %v2811 = vsel %vm670, %v2805, %v2810
      %v2846 = vunpack.c.l.b16 %v2530
      %v2847 = vunpack.c.l.b16 %v2531
      %v2848 = vunpack.c.l.b16 %v2532
      %v2849 = vunpack.c.l.b16 %v2533
      %v2850 = vunpack.c.l.b16 %v2534
      %v2851 = vunpack.c.l.b16 %v2535
      %v2852 = vunpack.c.l.b16 %v2536
      %v2853 = vunpack.c.l.b16 %v2537
      %v2854 = vunpack.c.l.b16 %v2538
      %v2855 = vunpack.c.l.b16 %v2539
      %v2856 = vunpack.c.l.b16 %v2540
      %v2857 = vunpack.c.l.b16 %v2541
      %v2858 = vunpack.c.l.b16 %v2542
      %v2859 = vunpack.c.l.b16 %v2543
      %v2860 = vunpack.c.l.b16 %v2544
      %v2861 = vunpack.c.l.b16 %v2545
      %v2862 = vpack.c.b16 %v2847, %v2846
      %v2863 = vpack.c.b16 %v2849, %v2848
      %v2864 = vpack.c.b16 %v2851, %v2850
      %v2865 = vpack.c.b16 %v2853, %v2852
      %v2866 = vpack.c.b16 %v2855, %v2854
      %v2867 = vpack.c.b16 %v2857, %v2856
      %v2868 = vpack.c.b16 %v2859, %v2858
      %v2869 = vpack.c.b16 %v2861, %v2860
      %2878 = vmatprep.subr.bf16.mxu0 0
      %2879 = vmatpush1.bf16.msra.mxu0 %v2862
      %2880 = vmatprep.subr.bf16.mxu0 0
      %2881 = vmatpush1.bf16.msra.mxu0 %v2863
      %2882 = vmatprep.subr.bf16.mxu0 0
      %2883 = vmatpush1.bf16.msra.mxu0 %v2864
      %2884 = vmatprep.subr.bf16.mxu0 0
      %2885 = vmatpush1.bf16.msra.mxu0 %v2865
      %2886 = vmatprep.subr.bf16.mxu0 0
      %2887 = vmatpush1.bf16.msra.mxu0 %v2866
      %2888 = vmatprep.subr.bf16.mxu0 0
      %2889 = vmatpush1.bf16.msra.mxu0 %v2867
      %2890 = vmatprep.subr.bf16.mxu0 0
      %2891 = vmatpush1.bf16.msra.mxu0 %v2868
      %2892 = vmatprep.subr.bf16.mxu0 0
      %2893 = vmatpush1.bf16.msra.mxu0 %v2869
      %2894 = vmatprep.subr.bf16.mxu0 0
      %2895 = vmatpush1.bf16.msra.mxu0 0
      %2896 = vmatprep.subr.bf16.mxu0 0
      %2897 = vmatpush1.bf16.msra.mxu0 0
      %2898 = vmatprep.subr.bf16.mxu0 0
      %2899 = vmatpush1.bf16.msra.mxu0 0
      %2900 = vmatprep.subr.bf16.mxu0 0
      %2901 = vmatpush1.bf16.msra.mxu0 0
      %2902 = vmatprep.subr.bf16.mxu0 0
      %2903 = vmatpush1.bf16.msra.mxu0 0
      %2904 = vmatprep.subr.bf16.mxu0 0
      %2905 = vmatpush1.bf16.msra.mxu0 0
      %2906 = vmatprep.subr.bf16.mxu0 0
      %2907 = vmatpush1.bf16.msra.mxu0 0
      %2908 = vmatprep.subr.bf16.mxu0 0
      %2909 = vmatpush1.bf16.msra.mxu0 0
      %2910 = vmatprep.mubr.bf16.mxu0 0
      %2911 = vmatmul.mubr.bf16.gmra.mrb[0].mxu0 %v2662
      %v2912 = vpop.f32.mrb[0].mxu0
      %v2913 = vadd.f32 %v2551, %v2912
      %v2914 = vpop.f32.mrb[0].mxu0
      %v2915 = vpop.f32.mrb[0].mxu0
      %v2916 = vadd.f32 %v2551, %v2915
      %v2917 = vpop.f32.mrb[0].mxu0
      %2918 = vmatprep.mubr.bf16.mxu0 0
      %2919 = vmatmul.mubr.bf16.gmra.mrb[0].mxu0 %v2671
      %v2920 = vpop.f32.mrb[0].mxu0
      %v2921 = vadd.f32 %v2551, %v2920
      %v2922 = vpop.f32.mrb[0].mxu0
      %v2923 = vpop.f32.mrb[0].mxu0
      %v2924 = vadd.f32 %v2551, %v2923
      %v2925 = vpop.f32.mrb[0].mxu0
      %2926 = vmatprep.mubr.bf16.mxu0 0
      %2927 = vmatmul.mubr.bf16.gmra.mrb[0].mxu0 %v2680
      %v2928 = vpop.f32.mrb[0].mxu0
      %v2929 = vadd.f32 %v2551, %v2928
      %v2930 = vpop.f32.mrb[0].mxu0
      %v2931 = vpop.f32.mrb[0].mxu0
      %v2932 = vadd.f32 %v2551, %v2931
      %v2933 = vpop.f32.mrb[0].mxu0
      %2934 = vmatprep.mubr.bf16.mxu0 0
      %2935 = vmatmul.mubr.bf16.gmra.mrb[0].mxu0 %v2689
      %v2936 = vpop.f32.mrb[0].mxu0
      %v2937 = vadd.f32 %v2551, %v2936
      %v2938 = vpop.f32.mrb[0].mxu0
      %v2939 = vpop.f32.mrb[0].mxu0
      %v2940 = vadd.f32 %v2551, %v2939
      %v2941 = vpop.f32.mrb[0].mxu0
      %2942 = vmatprep.mubr.bf16.mxu0 0
      %2943 = vmatmul.mubr.bf16.gmra.mrb[0].mxu0 %v2698
      %v2944 = vpop.f32.mrb[0].mxu0
      %v2945 = vadd.f32 %v2551, %v2944
      %v2946 = vpop.f32.mrb[0].mxu0
      %v2947 = vpop.f32.mrb[0].mxu0
      %v2948 = vadd.f32 %v2551, %v2947
      %v2949 = vpop.f32.mrb[0].mxu0
      %2950 = vmatprep.mubr.bf16.mxu0 0
      %2951 = vmatmul.mubr.bf16.gmra.mrb[0].mxu0 %v2707
      %v2952 = vpop.f32.mrb[0].mxu0
      %v2953 = vadd.f32 %v2551, %v2952
      %v2954 = vpop.f32.mrb[0].mxu0
      %v2955 = vpop.f32.mrb[0].mxu0
      %v2956 = vadd.f32 %v2551, %v2955
      %v2957 = vpop.f32.mrb[0].mxu0
      %2958 = vmatprep.mubr.bf16.mxu0 0
      %2959 = vmatmul.mubr.bf16.gmra.mrb[0].mxu0 %v2716
      %v2960 = vpop.f32.mrb[0].mxu0
      %v2961 = vadd.f32 %v2551, %v2960
      %v2962 = vpop.f32.mrb[0].mxu0
      %v2963 = vpop.f32.mrb[0].mxu0
      %v2964 = vadd.f32 %v2551, %v2963
      %v2965 = vpop.f32.mrb[0].mxu0
      %2966 = vmatprep.mubr.bf16.mxu0 0
      %2967 = vmatmul.mubr.bf16.gmra.mrb[0].mxu0 %v2725
      %v2968 = vpop.f32.mrb[0].mxu0
      %v2969 = vadd.f32 %v2551, %v2968
      %v2970 = vpop.f32.mrb[0].mxu0
      %v2971 = vpop.f32.mrb[0].mxu0
      %v2972 = vadd.f32 %v2551, %v2971
      %v2973 = vpop.f32.mrb[0].mxu0
      %2974 = vmatprep.mubr.bf16.mxu0 0
      %2975 = vmatmul.mubr.bf16.gmra.mrb[0].mxu0 %v2734
      %v2976 = vpop.f32.mrb[0].mxu0
      %v2977 = vadd.f32 %v2551, %v2976
      %v2978 = vpop.f32.mrb[0].mxu0
      %v2979 = vpop.f32.mrb[0].mxu0
      %v2980 = vadd.f32 %v2551, %v2979
      %v2981 = vpop.f32.mrb[0].mxu0
      %2982 = vmatprep.mubr.bf16.mxu0 0
      %2983 = vmatmul.mubr.bf16.gmra.mrb[0].mxu0 %v2743
      %v2984 = vpop.f32.mrb[0].mxu0
      %v2985 = vadd.f32 %v2551, %v2984
      %v2986 = vpop.f32.mrb[0].mxu0
      %v2987 = vpop.f32.mrb[0].mxu0
      %v2988 = vadd.f32 %v2551, %v2987
      %v2989 = vpop.f32.mrb[0].mxu0
      %2990 = vmatprep.mubr.bf16.mxu0 0
      %2991 = vmatmul.mubr.bf16.gmra.mrb[0].mxu0 %v2752
      %v2992 = vpop.f32.mrb[0].mxu0
      %v2993 = vadd.f32 %v2551, %v2992
      %v2994 = vpop.f32.mrb[0].mxu0
      %v2995 = vpop.f32.mrb[0].mxu0
      %v2996 = vadd.f32 %v2551, %v2995
      %v2997 = vpop.f32.mrb[0].mxu0
      %2998 = vmatprep.mubr.bf16.mxu0 0
      %2999 = vmatmul.mubr.bf16.gmra.mrb[0].mxu0 %v2761
      %v3000 = vpop.f32.mrb[0].mxu0
      %v3001 = vadd.f32 %v2551, %v3000
      %v3002 = vpop.f32.mrb[0].mxu0
      %v3003 = vpop.f32.mrb[0].mxu0
      %v3004 = vadd.f32 %v2551, %v3003
      %v3005 = vpop.f32.mrb[0].mxu0
      %3006 = vmatprep.mubr.bf16.mxu0 0
      %3007 = vmatmul.mubr.bf16.gmra.mrb[0].mxu0 %v2770
      %v3008 = vpop.f32.mrb[0].mxu0
      %v3009 = vadd.f32 %v2551, %v3008
      %v3010 = vpop.f32.mrb[0].mxu0
      %v3011 = vpop.f32.mrb[0].mxu0
      %v3012 = vadd.f32 %v2551, %v3011
      %v3013 = vpop.f32.mrb[0].mxu0
      %3014 = vmatprep.mubr.bf16.mxu0 0
      %3015 = vmatmul.mubr.bf16.gmra.mrb[0].mxu0 %v2779
      %v3016 = vpop.f32.mrb[0].mxu0
      %v3017 = vadd.f32 %v2551, %v3016
      %v3018 = vpop.f32.mrb[0].mxu0
      %v3019 = vpop.f32.mrb[0].mxu0
      %v3020 = vadd.f32 %v2551, %v3019
      %v3021 = vpop.f32.mrb[0].mxu0
      %3022 = vmatprep.mubr.bf16.mxu0 0
      %3023 = vmatmul.mubr.bf16.gmra.mrb[0].mxu0 %v2788
      %v3024 = vpop.f32.mrb[0].mxu0
      %v3025 = vadd.f32 %v2551, %v3024
      %v3026 = vpop.f32.mrb[0].mxu0
      %v3027 = vpop.f32.mrb[0].mxu0
      %v3028 = vadd.f32 %v2551, %v3027
      %v3029 = vpop.f32.mrb[0].mxu0
      %3030 = vmatprep.mubr.bf16.mxu0 0
      %3031 = vmatmul.mubr.bf16.gmra.mrb[0].mxu0 %v2797
      %v3032 = vpop.f32.mrb[0].mxu0
      %v3033 = vadd.f32 %v2551, %v3032
      %v3034 = vpop.f32.mrb[0].mxu0
      %v3035 = vpop.f32.mrb[0].mxu0
      %v3036 = vadd.f32 %v2551, %v3035
      %v3037 = vpop.f32.mrb[0].mxu0
      %3038 = vmatprep.mubr.bf16.mxu0 0
      %3039 = vmatmul.mubr.bf16.gmra.mrb[0].mxu0 %v2806
      %v3040 = vpop.f32.mrb[0].mxu0
      %v3041 = vadd.f32 %v2551, %v3040
      %v3042 = vpop.f32.mrb[0].mxu0
      %v3043 = vpop.f32.mrb[0].mxu0
      %v3044 = vadd.f32 %v2551, %v3043
      %v3045 = vpop.f32.mrb[0].mxu0
      %3046 = vmatprep.mubr.bf16.mxu0 0
      %3047 = vmatmul.mubr.bf16.gmra.mrb[0].mxu0 %v2811
      %v3048 = vpop.f32.mrb[0].mxu0
      %v3049 = vadd.f32 %v2551, %v3048
      %v3050 = vpop.f32.mrb[0].mxu0
      %v3051 = vpop.f32.mrb[0].mxu0
      %v3052 = vadd.f32 %v2551, %v3051
      %v3053 = vpop.f32.mrb[0].mxu0
      %3054 = vdwg.mxu0
      %v3055 = vxor.u32 %v2913, 2147483648
      %v3056 = vxor.u32 %v2916, 2147483648
      %v3057 = vxor.u32 %v2921, 2147483648
      %v3058 = vxor.u32 %v2924, 2147483648
      %v3059 = vxor.u32 %v2929, 2147483648
      %v3060 = vxor.u32 %v2932, 2147483648
      %v3061 = vxor.u32 %v2937, 2147483648
      %v3062 = vxor.u32 %v2940, 2147483648
      %v3063 = vxor.u32 %v2945, 2147483648
      %v3064 = vxor.u32 %v2948, 2147483648
      %v3065 = vxor.u32 %v2953, 2147483648
      %v3066 = vxor.u32 %v2956, 2147483648
      %v3067 = vxor.u32 %v2961, 2147483648
      %v3068 = vxor.u32 %v2964, 2147483648
      %v3069 = vxor.u32 %v2969, 2147483648
      %v3070 = vxor.u32 %v2972, 2147483648
      %v3071 = vxor.u32 %v2977, 2147483648
      %v3072 = vxor.u32 %v2980, 2147483648
      %v3073 = vxor.u32 %v2985, 2147483648
      %v3074 = vxor.u32 %v2988, 2147483648
      %v3075 = vxor.u32 %v2993, 2147483648
      %v3076 = vxor.u32 %v2996, 2147483648
      %v3077 = vxor.u32 %v3001, 2147483648
      %v3078 = vxor.u32 %v3004, 2147483648
      %v3079 = vxor.u32 %v3009, 2147483648
      %v3080 = vxor.u32 %v3012, 2147483648
      %v3081 = vxor.u32 %v3017, 2147483648
      %v3082 = vxor.u32 %v3020, 2147483648
      %v3083 = vxor.u32 %v3025, 2147483648
      %v3084 = vxor.u32 %v3028, 2147483648
      %v3085 = vxor.u32 %v3033, 2147483648
      %v3086 = vxor.u32 %v3036, 2147483648
      %v3087 = vxor.u32 %v3041, 2147483648
      %v3088 = vxor.u32 %v3044, 2147483648
      %v3089 = vxor.u32 %v3049, 2147483648
      %v3090 = vxor.u32 %v3052, 2147483648
      %v3091 = vmul.f32 %v3055, 1.442695
      %v3092 = vpow.pop %v3091
      %v3093 = vmul.f32 %v3056, 1.442695
      %v3094 = vpow.pop %v3093
      %v3095 = vmul.f32 %v3057, 1.442695
      %v3096 = vpow.pop %v3095
      %v3097 = vmul.f32 %v3058, 1.442695
      %v3098 = vpow.pop %v3097
      %v3099 = vmul.f32 %v3059, 1.442695
      %v3100 = vpow.pop %v3099
      %v3101 = vmul.f32 %v3060, 1.442695
      %v3102 = vpow.pop %v3101
      %v3103 = vmul.f32 %v3061, 1.442695
      %v3104 = vpow.pop %v3103
      %v3105 = vmul.f32 %v3062, 1.442695
      %v3106 = vpow.pop %v3105
      %v3107 = vmul.f32 %v3063, 1.442695
      %v3108 = vpow.pop %v3107
      %v3109 = vmul.f32 %v3064, 1.442695
      %v3110 = vpow.pop %v3109
      %v3111 = vmul.f32 %v3065, 1.442695
      %v3112 = vpow.pop %v3111
      %v3113 = vmul.f32 %v3066, 1.442695
      %v3114 = vpow.pop %v3113
      %v3115 = vmul.f32 %v3067, 1.442695
      %v3116 = vpow.pop %v3115
      %v3117 = vmul.f32 %v3068, 1.442695
      %v3118 = vpow.pop %v3117
      %v3119 = vmul.f32 %v3069, 1.442695
      %v3120 = vpow.pop %v3119
      %v3121 = vmul.f32 %v3070, 1.442695
      %v3122 = vpow.pop %v3121
      %v3123 = vmul.f32 %v3071, 1.442695
      %v3124 = vpow.pop %v3123
      %v3125 = vmul.f32 %v3072, 1.442695
      %v3126 = vpow.pop %v3125
      %v3127 = vmul.f32 %v3073, 1.442695
      %v3128 = vpow.pop %v3127
      %v3129 = vmul.f32 %v3074, 1.442695
      %v3130 = vpow.pop %v3129
      %v3131 = vmul.f32 %v3075, 1.442695
      %v3132 = vpow.pop %v3131
      %v3133 = vmul.f32 %v3076, 1.442695
      %v3134 = vpow.pop %v3133
      %v3135 = vmul.f32 %v3077, 1.442695
      %v3136 = vpow.pop %v3135
      %v3137 = vmul.f32 %v3078, 1.442695
      %v3138 = vpow.pop %v3137
      %v3139 = vmul.f32 %v3079, 1.442695
      %v3140 = vpow.pop %v3139
      %v3141 = vmul.f32 %v3080, 1.442695
      %v3142 = vpow.pop %v3141
      %v3143 = vmul.f32 %v3081, 1.442695
      %v3144 = vpow.pop %v3143
      %v3145 = vmul.f32 %v3082, 1.442695
      %v3146 = vpow.pop %v3145
      %v3147 = vmul.f32 %v3083, 1.442695
      %v3148 = vpow.pop %v3147
      %v3149 = vmul.f32 %v3084, 1.442695
      %v3150 = vpow.pop %v3149
      %v3151 = vmul.f32 %v3085, 1.442695
      %v3152 = vpow.pop %v3151
      %v3153 = vmul.f32 %v3086, 1.442695
      %v3154 = vpow.pop %v3153
      %v3155 = vmul.f32 %v3087, 1.442695
      %v3156 = vpow.pop %v3155
      %v3157 = vmul.f32 %v3088, 1.442695
      %v3158 = vpow.pop %v3157
      %v3159 = vmul.f32 %v3089, 1.442695
      %v3160 = vpow.pop %v3159
      %v3161 = vmul.f32 %v3090, 1.442695
      %v3162 = vpow.pop %v3161
      %v3163 = vadd.f32 %v3092, 1.0
      %v3164 = vadd.f32 %v3094, 1.0
      %v3165 = vadd.f32 %v3096, 1.0
      %v3166 = vadd.f32 %v3098, 1.0
      %v3167 = vadd.f32 %v3100, 1.0
      %v3168 = vadd.f32 %v3102, 1.0
      %v3169 = vadd.f32 %v3104, 1.0
      %v3170 = vadd.f32 %v3106, 1.0
      %v3171 = vadd.f32 %v3108, 1.0
      %v3172 = vadd.f32 %v3110, 1.0
      %v3173 = vadd.f32 %v3112, 1.0
      %v3174 = vadd.f32 %v3114, 1.0
      %v3175 = vadd.f32 %v3116, 1.0
      %v3176 = vadd.f32 %v3118, 1.0
      %v3177 = vadd.f32 %v3120, 1.0
      %v3178 = vadd.f32 %v3122, 1.0
      %v3179 = vadd.f32 %v3124, 1.0
      %v3180 = vadd.f32 %v3126, 1.0
      %v3181 = vadd.f32 %v3128, 1.0
      %v3182 = vadd.f32 %v3130, 1.0
      %v3183 = vadd.f32 %v3132, 1.0
      %v3184 = vadd.f32 %v3134, 1.0
      %v3185 = vadd.f32 %v3136, 1.0
      %v3186 = vadd.f32 %v3138, 1.0
      %v3187 = vadd.f32 %v3140, 1.0
      %v3188 = vadd.f32 %v3142, 1.0
      %v3189 = vadd.f32 %v3144, 1.0
      %v3190 = vadd.f32 %v3146, 1.0
      %v3191 = vadd.f32 %v3148, 1.0
      %v3192 = vadd.f32 %v3150, 1.0
      %v3193 = vadd.f32 %v3152, 1.0
      %v3194 = vadd.f32 %v3154, 1.0
      %v3195 = vadd.f32 %v3156, 1.0
      %v3196 = vadd.f32 %v3158, 1.0
      %v3197 = vadd.f32 %v3160, 1.0
      %v3198 = vadd.f32 %v3162, 1.0
      %v3199 = vrcp.pop %v3163
      %v3200 = vmul.f32 1.0, %v3199
      %v3201 = vrcp.pop %v3164
      %v3202 = vmul.f32 1.0, %v3201
      %v3203 = vrcp.pop %v3165
      %v3204 = vmul.f32 1.0, %v3203
      %v3205 = vrcp.pop %v3166
      %v3206 = vmul.f32 1.0, %v3205
      %v3207 = vrcp.pop %v3167
      %v3208 = vmul.f32 1.0, %v3207
      %v3209 = vrcp.pop %v3168
      %v3210 = vmul.f32 1.0, %v3209
      %v3211 = vrcp.pop %v3169
      %v3212 = vmul.f32 1.0, %v3211
      %v3213 = vrcp.pop %v3170
      %v3214 = vmul.f32 1.0, %v3213
      %v3215 = vrcp.pop %v3171
      %v3216 = vmul.f32 1.0, %v3215
      %v3217 = vrcp.pop %v3172
      %v3218 = vmul.f32 1.0, %v3217
      %v3219 = vrcp.pop %v3173
      %v3220 = vmul.f32 1.0, %v3219
      %v3221 = vrcp.pop %v3174
      %v3222 = vmul.f32 1.0, %v3221
      %v3223 = vrcp.pop %v3175
      %v3224 = vmul.f32 1.0, %v3223
      %v3225 = vrcp.pop %v3176
      %v3226 = vmul.f32 1.0, %v3225
      %v3227 = vrcp.pop %v3177
      %v3228 = vmul.f32 1.0, %v3227
      %v3229 = vrcp.pop %v3178
      %v3230 = vmul.f32 1.0, %v3229
      %v3231 = vrcp.pop %v3179
      %v3232 = vmul.f32 1.0, %v3231
      %v3233 = vrcp.pop %v3180
      %v3234 = vmul.f32 1.0, %v3233
      %v3235 = vrcp.pop %v3181
      %v3236 = vmul.f32 1.0, %v3235
      %v3237 = vrcp.pop %v3182
      %v3238 = vmul.f32 1.0, %v3237
      %v3239 = vrcp.pop %v3183
      %v3240 = vmul.f32 1.0, %v3239
      %v3241 = vrcp.pop %v3184
      %v3242 = vmul.f32 1.0, %v3241
      %v3243 = vrcp.pop %v3185
      %v3244 = vmul.f32 1.0, %v3243
      %v3245 = vrcp.pop %v3186
      %v3246 = vmul.f32 1.0, %v3245
      %v3247 = vrcp.pop %v3187
      %v3248 = vmul.f32 1.0, %v3247
      %v3249 = vrcp.pop %v3188
      %v3250 = vmul.f32 1.0, %v3249
      %v3251 = vrcp.pop %v3189
      %v3252 = vmul.f32 1.0, %v3251
      %v3253 = vrcp.pop %v3190
      %v3254 = vmul.f32 1.0, %v3253
      %v3255 = vrcp.pop %v3191
      %v3256 = vmul.f32 1.0, %v3255
      %v3257 = vrcp.pop %v3192
      %v3258 = vmul.f32 1.0, %v3257
      %v3259 = vrcp.pop %v3193
      %v3260 = vmul.f32 1.0, %v3259
      %v3261 = vrcp.pop %v3194
      %v3262 = vmul.f32 1.0, %v3261
      %v3263 = vrcp.pop %v3195
      %v3264 = vmul.f32 1.0, %v3263
      %v3265 = vrcp.pop %v3196
      %v3266 = vmul.f32 1.0, %v3265
      %v3267 = vrcp.pop %v3197
      %v3268 = vmul.f32 1.0, %v3267
      %v3269 = vrcp.pop %v3198
      %v3270 = vmul.f32 1.0, %v3269
      %v3271 = vunpack.c.l.bf16 %v2493
      %v3272 = vunpack.c.l.bf16 %v2494
      %v3273 = vunpack.c.l.bf16 %v2495
      %v3274 = vunpack.c.l.bf16 %v2496
      %v3275 = vunpack.c.l.bf16 %v2497
      %v3276 = vunpack.c.l.bf16 %v2498
      %v3277 = vunpack.c.l.bf16 %v2499
      %v3278 = vunpack.c.l.bf16 %v2500
      %v3279 = vunpack.c.l.bf16 %v2501
      %v3280 = vunpack.c.l.bf16 %v2502
      %v3281 = vunpack.c.l.bf16 %v2503
      %v3282 = vunpack.c.l.bf16 %v2504
      %v3283 = vunpack.c.l.bf16 %v2505
      %v3284 = vunpack.c.l.bf16 %v2506
      %v3285 = vunpack.c.l.bf16 %v2507
      %v3286 = vunpack.c.l.bf16 %v2508
      %v3287 = vunpack.c.l.bf16 %v2509
      %v3288 = vunpack.c.l.bf16 %v2510
      %v3289 = vunpack.c.l.bf16 %v2511
      %v3290 = vunpack.c.l.bf16 %v2512
      %v3291 = vunpack.c.l.bf16 %v2513
      %v3292 = vunpack.c.l.bf16 %v2514
      %v3293 = vunpack.c.l.bf16 %v2515
      %v3294 = vunpack.c.l.bf16 %v2516
      %v3295 = vunpack.c.l.bf16 %v2517
      %v3296 = vunpack.c.l.bf16 %v2518
      %v3297 = vunpack.c.l.bf16 %v2519
      %v3298 = vunpack.c.l.bf16 %v2520
      %v3299 = vunpack.c.l.bf16 %v2521
      %v3300 = vunpack.c.l.bf16 %v2522
      %v3301 = vunpack.c.l.bf16 %v2523
      %v3302 = vunpack.c.l.bf16 %v2524
      %v3303 = vunpack.c.l.bf16 %v2525
      %v3304 = vunpack.c.l.bf16 %v2526
      %v3305 = vunpack.c.l.bf16 %v2527
      %v3306 = vunpack.c.l.bf16 %v2528
      %v3307 = vunpack.c.l.bf16 %v2529
      %v3308 = vmul.f32 %v3200, %v2351
      %v3309 = vmul.f32 %v3202, %v2354
      %v3310 = vmul.f32 %v3204, %v2359
      %v3311 = vmul.f32 %v3206, %v2362
      %v3312 = vmul.f32 %v3208, %v2367
      %v3313 = vmul.f32 %v3210, %v2370
      %v3314 = vmul.f32 %v3212, %v2375
      %v3315 = vmul.f32 %v3214, %v2378
      %v3316 = vmul.f32 %v3216, %v2383
      %v3317 = vmul.f32 %v3218, %v2386
      %v3318 = vmul.f32 %v3220, %v2391
      %v3319 = vmul.f32 %v3222, %v2394
      %v3320 = vmul.f32 %v3224, %v2399
      %v3321 = vmul.f32 %v3226, %v2402
      %v3322 = vmul.f32 %v3228, %v2407
      %v3323 = vmul.f32 %v3230, %v2410
      %v3324 = vmul.f32 %v3232, %v2415
      %v3325 = vmul.f32 %v3234, %v2418
      %v3326 = vmul.f32 %v3236, %v2423
      %v3327 = vmul.f32 %v3238, %v2426
      %v3328 = vmul.f32 %v3240, %v2431
      %v3329 = vmul.f32 %v3242, %v2434
      %v3330 = vmul.f32 %v3244, %v2439
      %v3331 = vmul.f32 %v3246, %v2442
      %v3332 = vmul.f32 %v3248, %v2447
      %v3333 = vmul.f32 %v3250, %v2450
      %v3334 = vmul.f32 %v3252, %v2455
      %v3335 = vmul.f32 %v3254, %v2458
      %v3336 = vmul.f32 %v3256, %v2463
      %v3337 = vmul.f32 %v3258, %v2466
      %v3338 = vmul.f32 %v3260, %v2471
      %v3339 = vmul.f32 %v3262, %v2474
      %v3340 = vmul.f32 %v3264, %v2479
      %v3341 = vmul.f32 %v3266, %v2482
      %v3342 = vmul.f32 %v3268, %v2487
      %v3343 = vmul.f32 %v3270, %v2490
      %vm3380 = vcmask 1042432
      %v3381 = vrot.slane %v3308, 5
      %v3382 = vrot.slane %v3309, 5
      %v3383 = vsel %vm3380, %v3381, %v3382
      %v3384 = vrot.slane %v3310, 5
      %v3385 = vsel %vm3380, %v3382, %v3384
      %v3386 = vrot.slane %v3311, 5
      %v3387 = vsel %vm3380, %v3384, %v3386
      %v3388 = vrot.slane %v3312, 5
      %v3389 = vsel %vm3380, %v3386, %v3388
      %v3390 = vrot.slane %v3313, 5
      %v3391 = vsel %vm3380, %v3388, %v3390
      %v3392 = vrot.slane %v3314, 5
      %v3393 = vsel %vm3380, %v3390, %v3392
      %v3394 = vrot.slane %v3315, 5
      %v3395 = vsel %vm3380, %v3392, %v3394
      %v3396 = vrot.slane %v3316, 5
      %v3397 = vsel %vm3380, %v3394, %v3396
      %v3398 = vrot.slane %v3317, 5
      %v3399 = vsel %vm3380, %v3396, %v3398
      %v3400 = vrot.slane %v3318, 5
      %v3401 = vsel %vm3380, %v3398, %v3400
      %v3402 = vrot.slane %v3319, 5
      %v3403 = vsel %vm3380, %v3400, %v3402
      %v3404 = vrot.slane %v3320, 5
      %v3405 = vsel %vm3380, %v3402, %v3404
      %v3406 = vrot.slane %v3321, 5
      %v3407 = vsel %vm3380, %v3404, %v3406
      %v3408 = vrot.slane %v3322, 5
      %v3409 = vsel %vm3380, %v3406, %v3408
      %v3410 = vrot.slane %v3323, 5
      %v3411 = vsel %vm3380, %v3408, %v3410
      %v3412 = vrot.slane %v3324, 5
      %v3413 = vsel %vm3380, %v3410, %v3412
      %v3414 = vrot.slane %v3325, 5
      %v3415 = vsel %vm3380, %v3412, %v3414
      %v3416 = vrot.slane %v3326, 5
      %v3417 = vsel %vm3380, %v3414, %v3416
      %v3418 = vrot.slane %v3327, 5
      %v3419 = vsel %vm3380, %v3416, %v3418
      %v3420 = vrot.slane %v3328, 5
      %v3421 = vsel %vm3380, %v3418, %v3420
      %v3422 = vrot.slane %v3329, 5
      %v3423 = vsel %vm3380, %v3420, %v3422
      %v3424 = vrot.slane %v3330, 5
      %v3425 = vsel %vm3380, %v3422, %v3424
      %v3426 = vrot.slane %v3331, 5
      %v3427 = vsel %vm3380, %v3424, %v3426
      %v3428 = vrot.slane %v3332, 5
      %v3429 = vsel %vm3380, %v3426, %v3428
      %v3430 = vrot.slane %v3333, 5
      %v3431 = vsel %vm3380, %v3428, %v3430
      %v3432 = vrot.slane %v3334, 5
      %v3433 = vsel %vm3380, %v3430, %v3432
      %v3434 = vrot.slane %v3335, 5
      %v3435 = vsel %vm3380, %v3432, %v3434
      %v3436 = vrot.slane %v3336, 5
      %v3437 = vsel %vm3380, %v3434, %v3436
      %v3438 = vrot.slane %v3337, 5
      %v3439 = vsel %vm3380, %v3436, %v3438
      %v3440 = vrot.slane %v3338, 5
      %v3441 = vsel %vm3380, %v3438, %v3440
      %v3442 = vrot.slane %v3339, 5
      %v3443 = vsel %vm3380, %v3440, %v3442
      %v3444 = vrot.slane %v3340, 5
      %v3445 = vsel %vm3380, %v3442, %v3444
      %v3446 = vrot.slane %v3341, 5
      %v3447 = vsel %vm3380, %v3444, %v3446
      %v3448 = vrot.slane %v3342, 5
      %v3449 = vsel %vm3380, %v3446, %v3448
      %v3450 = vrot.slane %v3343, 5
      %v3451 = vsel %vm3380, %v3448, %v3450
      %v3489 = vadd.f32 %v3271, %v3381
      %v3490 = vadd.f32 %v3272, %v3383
      %v3491 = vadd.f32 %v3273, %v3385
      %v3492 = vadd.f32 %v3274, %v3387
      %v3493 = vadd.f32 %v3275, %v3389
      %v3494 = vadd.f32 %v3276, %v3391
      %v3495 = vadd.f32 %v3277, %v3393
      %v3496 = vadd.f32 %v3278, %v3395
      %v3497 = vadd.f32 %v3279, %v3397
      %v3498 = vadd.f32 %v3280, %v3399
      %v3499 = vadd.f32 %v3281, %v3401
      %v3500 = vadd.f32 %v3282, %v3403
      %v3501 = vadd.f32 %v3283, %v3405
      %v3502 = vadd.f32 %v3284, %v3407
      %v3503 = vadd.f32 %v3285, %v3409
      %v3504 = vadd.f32 %v3286, %v3411
      %v3505 = vadd.f32 %v3287, %v3413
      %v3506 = vadd.f32 %v3288, %v3415
      %v3507 = vadd.f32 %v3289, %v3417
      %v3508 = vadd.f32 %v3290, %v3419
      %v3509 = vadd.f32 %v3291, %v3421
      %v3510 = vadd.f32 %v3292, %v3423
      %v3511 = vadd.f32 %v3293, %v3425
      %v3512 = vadd.f32 %v3294, %v3427
      %v3513 = vadd.f32 %v3295, %v3429
      %v3514 = vadd.f32 %v3296, %v3431
      %v3515 = vadd.f32 %v3297, %v3433
      %v3516 = vadd.f32 %v3298, %v3435
      %v3517 = vadd.f32 %v3299, %v3437
      %v3518 = vadd.f32 %v3300, %v3439
      %v3519 = vadd.f32 %v3301, %v3441
      %v3520 = vadd.f32 %v3302, %v3443
      %v3521 = vadd.f32 %v3303, %v3445
      %v3522 = vadd.f32 %v3304, %v3447
      %v3523 = vadd.f32 %v3305, %v3449
      %v3524 = vadd.f32 %v3306, %v3451
      %v3525 = vadd.f32 %v3307, %v3450
      %3526 = vst [vmem:[%s271 - $0x3] sm:$0xf8] %v3489
      %3527 = vst [vmem:[%s271 + $0x5] sm:$0xff] %v3490
      %3528 = vst [vmem:[%s271 + $0xd] sm:$0xff] %v3491
      %3529 = vst [vmem:[%s271 + $0x15] sm:$0xff] %v3492
      %3530 = vst [vmem:[%s271 + $0x1d] sm:$0xff] %v3493
      %3531 = vst [vmem:[%s271 + $0x25] sm:$0xff] %v3494
      %3532 = vst [vmem:[%s271 + $0x2d] sm:$0xff] %v3495
      %3533 = vst [vmem:[%s271 + $0x35] sm:$0xff] %v3496
      %3534 = vst [vmem:[%s271 + $0x3d] sm:$0xff] %v3497
      %3535 = vst [vmem:[%s271 + $0x45] sm:$0xff] %v3498
      %3536 = vst [vmem:[%s271 + $0x4d] sm:$0xff] %v3499
      %3537 = vst [vmem:[%s271 + $0x55] sm:$0xff] %v3500
      %3538 = vst [vmem:[%s271 + $0x5d] sm:$0xff] %v3501
      %3539 = vst [vmem:[%s271 + $0x65] sm:$0xff] %v3502
      %3540 = vst [vmem:[%s271 + $0x6d] sm:$0xff] %v3503
      %3541 = vst [vmem:[%s271 + $0x75] sm:$0xff] %v3504
      %3542 = vst [vmem:[%s271 + $0x7d] sm:$0xff] %v3505
      %3543 = vst [vmem:[%s271 + $0x85] sm:$0xff] %v3506
      %3544 = vst [vmem:[%s271 + $0x8d] sm:$0xff] %v3507
      %3545 = vst [vmem:[%s271 + $0x95] sm:$0xff] %v3508
      %3546 = vst [vmem:[%s271 + $0x9d] sm:$0xff] %v3509
      %3547 = vst [vmem:[%s271 + $0xa5] sm:$0xff] %v3510
      %3548 = vst [vmem:[%s271 + $0xad] sm:$0xff] %v3511
      %3549 = vst [vmem:[%s271 + $0xb5] sm:$0xff] %v3512
      %3550 = vst [vmem:[%s271 + $0xbd] sm:$0xff] %v3513
      %3551 = vst [vmem:[%s271 + $0xc5] sm:$0xff] %v3514
      %3552 = vst [vmem:[%s271 + $0xcd] sm:$0xff] %v3515
      %3553 = vst [vmem:[%s271 + $0xd5] sm:$0xff] %v3516
      %3554 = vst [vmem:[%s271 + $0xdd] sm:$0xff] %v3517
      %3555 = vst [vmem:[%s271 + $0xe5] sm:$0xff] %v3518
      %3556 = vst [vmem:[%s271 + $0xed] sm:$0xff] %v3519
      %3557 = vst [vmem:[%s271 + $0xf5] sm:$0xff] %v3520
      %3558 = vst [vmem:[%s271 + $0xfd] sm:$0xff] %v3521
      %3559 = vst [vmem:[%s271 + $0x105] sm:$0xff] %v3522
      %3560 = vst [vmem:[%s271 + $0x10d] sm:$0xff] %v3523
      %3561 = vst [vmem:[%s271 + $0x115] sm:$0xff] %v3524
      %3562 = vst [vmem:[%s271 + $0x11d] sm:$0x1] %v3525
      %p3563 = scmp.lt.s32.totalorder %s17, 1
      %s3564 = scalar_select %p3563, %s17, 1
      %s3565 = smul.addr %s3564, 36
      %s3566 = smul.addr %s3565, 8
      %s3567 = scalar_lea.vmem %s6, %s3566
      // Predicated region
      $region45: #{conv_basin_block.5} parent=43 // pred_check
        %p3568 = pneg %p171
      $region46: #{conv_basin_block.5} parent=43 // pred_check_branch
        %3570 = sbr.rel (%p3568) target = $region48
      $region47: #{conv_basin_block.5} parent=43 // pred_region
        _
      $region48: #{conv_basin_block.5} parent=43 // pred_fallthru
        _
    $region44: #{conv_basin_block.5} parent=5 // pred_fallthru
      _
    %p3571 = scmp.le.s32.totalorder 2, %s12
    // Predicated region
    $region49: #{conv_basin_block.5} parent=5 // pred_check
      %p3572 = pneg %p3571
    $region50: #{conv_basin_block.5} parent=5 // pred_check_branch
      %3574 = sbr.rel (%p3572) target = $region52
    $region51: #{conv_basin_block.5} parent=5 // pred_region
      %s3575 = ssub.s32 %s12, 2
      // Predicated region
      $region53: #{conv_basin_block.5} parent=51 // pred_check
        %p3576 = pneg %p177
      $region54: #{conv_basin_block.5} parent=51 // pred_check_branch
        %3578 = sbr.rel (%p3576) target = $region56
      $region55: #{conv_basin_block.5} parent=51 // pred_region
        %p3579 = scmp.lt.s32.totalorder %s18, 1
        %s3580 = scalar_select %p3579, %s18, 1
        %s3581 = smul.addr %s3580, 36
        %s3582 = smul.addr %s3581, 8
        %s3583 = scalar_lea.vmem %s6, %s3582
      $region56: #{conv_basin_block.5} parent=51 // pred_fallthru
        _
    $region52: #{conv_basin_block.5} parent=5 // pred_fallthru
      _
  $region6: #{conv_basin_block.5} parent=0 // loop_footer
    %s16 = sadd.s32 1, %s12
  $region7: #{conv_basin_block.5} parent=0 // loop_footer_branch
    %11 = sbr.rel target = $region3
  $region8: #{conv_basin_block.5} parent=0 // loop_exit
    _

// kernel: conv_basin_block.4
$region0: #{conv_basin_block.4}
  #allocation0 [shape = 'u32[]', space=smem, size = 0x4, offset = 0x4, fixed_abs, tag = 'smem constant byte address 0x4 - core index']
  #allocation1 [shape = 'u32[144,128]{1,0:T(1,128)}', space=vmem, size = 0x12000, scoped, tag = 'internal scratch']
  %s0 = inlined_call_operand.vmem [shape: bf16[2,324,128], index: 0, kind: input, shape index: {}]
  %s1 = inlined_call_operand.vmem [shape: bf16[1152,128], index: 1, kind: input, shape index: {}]
  %s2 = inlined_call_operand.vmem [shape: f32[1,128], index: 2, kind: input, shape index: {}]
  %s3 = inlined_call_operand.vmem [shape: bf16[2,324,128], index: 3, kind: output, shape index: {}]
  %s4 = sld [smem:[#allocation0]]
  $region45: #{conv_basin_block.4} parent=0
    _
  %s6 = ssub.s32 1, %s4
  %s7 = scalar_select 0, %s6, %s4
  loop: start=0, step=1, limit=4
  $region2: #{conv_basin_block.4} parent=0 // loop_pre_header
    _
  $region3: #{conv_basin_block.4} parent=0 // loop_header
    %s9 = sphi 0, %s13
    %p10 = scmp.ge.s32.totalorder %s9, 4
    %s19 = sphi 0, %s21
    %s22 = sphi 0, %s19
    %s23 = sphi 0, %s22
    %s39 = sphi 0, %s23
    %s43 = sphi 0, %s43
    %s45 = sphi 0, %s43
    %s46 = sphi 0, %s45
    %s60 = sphi 0, %s46
    %s64 = sphi 0, %s64
    %s66 = sphi 0, %s64
    %s67 = sphi 0, %s66
    %s81 = sphi 0, %s67
    %s87 = sphi 0, %s89
    %s90 = sphi 0, %s87
    %s91 = sphi 0, %s90
    %s107 = sphi 0, %s91
  $region4: #{conv_basin_block.4} parent=0 // loop_header_branch
    %12 = sbr.rel (%p10) target = $region8
  $region5: #{conv_basin_block.4} parent=0 // loop_body
    %s14 = ssub.s32 %s9, 1
    %s15 = ssub.s32 %s9, 2
    %s16 = sadd.s32 %s9, 1
    %s17 = ssub.s32 %s9, %s16
    %p18 = scmp.eq.s32.totalorder %s17, 0
    %s20 = sadd.s32 %s19, 1
    %s21 = scalar_select %p18, %s19, %s20
    %p24 = pneg %p18
    %p25 = scmp.eq.s32.totalorder %s9, 1
    %p26 = por %p24, %p25
    %p27 = scmp.ne.s32.totalorder %s19, %s22
    %p28 = scmp.eq.s32.totalorder %s9, 0
    %p29 = por %p27, %p28
    %p30 = scmp.ne.s32.totalorder %s19, %s22
    %p31 = scmp.eq.s32.totalorder %s14, 1
    %p32 = por %p30, %p31
    %p33 = scmp.ne.s32.totalorder %s22, %s23
    %p34 = scmp.eq.s32.totalorder %s14, 0
    %p35 = por %p33, %p34
    %p36 = scmp.ne.s32.totalorder %s22, %s23
    %p37 = scmp.eq.s32.totalorder %s15, 1
    %p38 = por %p36, %p37
    %p40 = scmp.ne.s32.totalorder %s23, %s39
    %p41 = scmp.eq.s32.totalorder %s15, 0
    %p42 = por %p40, %p41
    %s44 = sadd.s32 %s43, 1
    %p47 = scmp.eq.s32.totalorder %s9, 1
    %p48 = scmp.ne.s32.totalorder %s43, %s45
    %p49 = scmp.eq.s32.totalorder %s9, 0
    %p50 = por %p48, %p49
    %p51 = scmp.ne.s32.totalorder %s43, %s45
    %p52 = scmp.eq.s32.totalorder %s14, 1
    %p53 = por %p51, %p52
    %p54 = scmp.ne.s32.totalorder %s45, %s46
    %p55 = scmp.eq.s32.totalorder %s14, 0
    %p56 = por %p54, %p55
    %p57 = scmp.ne.s32.totalorder %s45, %s46
    %p58 = scmp.eq.s32.totalorder %s15, 1
    %p59 = por %p57, %p58
    %p61 = scmp.ne.s32.totalorder %s46, %s60
    %p62 = scmp.eq.s32.totalorder %s15, 0
    %p63 = por %p61, %p62
    %s65 = sadd.s32 %s64, 1
    %p68 = scmp.eq.s32.totalorder %s9, 1
    %p69 = scmp.ne.s32.totalorder %s64, %s66
    %p70 = scmp.eq.s32.totalorder %s9, 0
    %p71 = por %p69, %p70
    %p72 = scmp.ne.s32.totalorder %s64, %s66
    %p73 = scmp.eq.s32.totalorder %s14, 1
    %p74 = por %p72, %p73
    %p75 = scmp.ne.s32.totalorder %s66, %s67
    %p76 = scmp.eq.s32.totalorder %s14, 0
    %p77 = por %p75, %p76
    %p78 = scmp.ne.s32.totalorder %s66, %s67
    %p79 = scmp.eq.s32.totalorder %s15, 1
    %p80 = por %p78, %p79
    %p82 = scmp.ne.s32.totalorder %s67, %s81
    %p83 = scmp.eq.s32.totalorder %s15, 0
    %p84 = por %p82, %p83
    %s85 = ssub.s32 %s9, %s16
    %p86 = scmp.eq.s32.totalorder %s85, 0
    %s88 = sadd.s32 %s87, 1
    %s89 = scalar_select %p86, %s87, %s88
    %p92 = pneg %p86
    %p93 = scmp.eq.s32.totalorder %s9, 1
    %p94 = por %p92, %p93
    %p95 = scmp.ne.s32.totalorder %s87, %s90
    %p96 = scmp.eq.s32.totalorder %s9, 0
    %p97 = por %p95, %p96
    %p98 = scmp.ne.s32.totalorder %s87, %s90
    %p99 = scmp.eq.s32.totalorder %s14, 1
    %p100 = por %p98, %p99
    %p101 = scmp.ne.s32.totalorder %s90, %s91
    %p102 = scmp.eq.s32.totalorder %s14, 0
    %p103 = por %p101, %p102
    %p104 = scmp.ne.s32.totalorder %s90, %s91
    %p105 = scmp.eq.s32.totalorder %s15, 1
    %p106 = por %p104, %p105
    %p108 = scmp.ne.s32.totalorder %s91, %s107
    %p109 = scmp.eq.s32.totalorder %s15, 0
    %p110 = por %p108, %p109
    %p111 = scmp.le.s32.totalorder 1, %s9
    %p112 = scmp.lt.s32.totalorder %s9, 3
    %p113 = pnand %p111, %p112
    %p114 = pneg %p113
    // Predicated region
    $region9: #{conv_basin_block.4} parent=5 // pred_check
      _
    $region10: #{conv_basin_block.4} parent=5 // pred_check_branch
      %116 = sbr.rel (%p113) target = $region12
    $region11: #{conv_basin_block.4} parent=5 // pred_region
      %s117 = ssub.s32 %s9, 1
      // Predicated region
      $region13: #{conv_basin_block.4} parent=11 // pred_check
        %p118 = pneg %p56
      $region14: #{conv_basin_block.4} parent=11 // pred_check_branch
        %120 = sbr.rel (%p118) target = $region16
      $region15: #{conv_basin_block.4} parent=11 // pred_region
        _
      $region16: #{conv_basin_block.4} parent=11 // pred_fallthru
        _
      // Predicated region
      $region17: #{conv_basin_block.4} parent=11 // pred_check
        %p121 = pneg %p77
      $region18: #{conv_basin_block.4} parent=11 // pred_check_branch
        %123 = sbr.rel (%p121) target = $region20
      $region19: #{conv_basin_block.4} parent=11 // pred_region
        _
      $region20: #{conv_basin_block.4} parent=11 // pred_fallthru
        _
    $region12: #{conv_basin_block.4} parent=5 // pred_fallthru
      _
    %p124 = scmp.lt.s32.totalorder %s9, 2
    // Predicated region
    $region21: #{conv_basin_block.4} parent=5 // pred_check
      %p125 = pneg %p124
    $region22: #{conv_basin_block.4} parent=5 // pred_check_branch
      %127 = sbr.rel (%p125) target = $region24
    $region23: #{conv_basin_block.4} parent=5 // pred_region
      // Predicated region
      $region25: #{conv_basin_block.4} parent=23 // pred_check
        %p128 = pneg %p29
      $region26: #{conv_basin_block.4} parent=23 // pred_check_branch
        %130 = sbr.rel (%p128) target = $region28
      $region27: #{conv_basin_block.4} parent=23 // pred_region
        %p131 = scmp.lt.s32.totalorder %s9, 1
        %s132 = scalar_select %p131, %s9, 1
        %s133 = smul.addr %s132, 41
        %s134 = smul.addr %s133, 4
        %s135 = scalar_lea.vmem %s0, %s134
      $region28: #{conv_basin_block.4} parent=23 // pred_fallthru
        _
    $region24: #{conv_basin_block.4} parent=5 // pred_fallthru
      _
    %p136 = scmp.le.s32.totalorder 1, %s9
    %p137 = scmp.lt.s32.totalorder %s9, 3
    %p138 = pnand %p136, %p137
    %p139 = pneg %p138
    // Predicated region
    $region29: #{conv_basin_block.4} parent=5 // pred_check
      _
    $region30: #{conv_basin_block.4} parent=5 // pred_check_branch
      %141 = sbr.rel (%p138) target = $region32
    $region31: #{conv_basin_block.4} parent=5 // pred_region
      %s142 = ssub.s32 %s9, 1
      %p143 = scmp.lt.s32.totalorder %s14, 1
      %s144 = scalar_select %p143, %s14, 1
      %s145 = smul.addr %s144, 41
      %s146 = smul.addr %s145, 4
      %s147 = scalar_lea.vmem %s0, %s146
      %p148 = pneg %p35
      %p149 = pneg %p32
      %p150 = pneg %p56
      %p151 = pneg %p53
      %p152 = pneg %p77
      %p153 = pneg %p74
      %p154 = pneg %p103
      %p155 = pneg %p100
      %p156 = scmp.lt.s32.totalorder %s14, 1
      %s157 = scalar_select %p156, %s14, 1
      %s158 = smul.addr %s157, 41
      %s159 = smul.addr %s158, 4
      %s160 = scalar_lea.vmem %s3, %s159
      %p161 = scmp.lt.s32.totalorder %s14, 1
      %s162 = scalar_select %p161, %s14, 1
      %s163 = smul.addr %s162, 41
      %s164 = smul.addr %s163, 4
      %s165 = scalar_lea.vmem %s0, %s164
      %p166 = scmp.lt.s32.totalorder %s14, 1
      %s167 = scalar_select %p166, %s14, 1
      %s168 = smul.addr %s167, 41
      %s169 = smul.addr %s168, 4
      %s170 = scalar_lea.vmem %s3, %s169
      %v172 = vld [vmem:[%s165] sm:$0xf]
      %v173 = vld [vmem:[%s165 + $0x4] sm:$0xf]
      %v174 = vld [vmem:[%s165 + $0x8] sm:$0xf]
      %v175 = vld [vmem:[%s165 + $0xc] sm:$0xf]
      %v176 = vld [vmem:[%s165 + $0x10] sm:$0xf]
      %v177 = vld [vmem:[%s165 + $0x14] sm:$0xf]
      %v178 = vld [vmem:[%s165 + $0x18] sm:$0xf]
      %v179 = vld [vmem:[%s165 + $0x1c] sm:$0xf]
      %v180 = vld [vmem:[%s165 + $0x20] sm:$0xf]
      %v181 = vld [vmem:[%s165 + $0x24] sm:$0xf]
      %v182 = vld [vmem:[%s165 + $0x28] sm:$0xf]
      %v183 = vld [vmem:[%s165 + $0x2c] sm:$0xf]
      %v184 = vld [vmem:[%s165 + $0x30] sm:$0xf]
      %v185 = vld [vmem:[%s165 + $0x34] sm:$0xf]
      %v186 = vld [vmem:[%s165 + $0x38] sm:$0xf]
      %v187 = vld [vmem:[%s165 + $0x3c] sm:$0xf]
      %v188 = vld [vmem:[%s165 + $0x40] sm:$0xf]
      %v189 = vld [vmem:[%s165 + $0x44] sm:$0xf]
      %v190 = vld [vmem:[%s165 + $0x48] sm:$0xf]
      %v191 = vld [vmem:[%s165 + $0x4c] sm:$0xf]
      %v192 = vld [vmem:[%s165 + $0x50] sm:$0xf]
      %v193 = vld [vmem:[%s165 + $0x54] sm:$0xf]
      %v194 = vld [vmem:[%s165 + $0x58] sm:$0xf]
      %v195 = vld [vmem:[%s165 + $0x5c] sm:$0xf]
      %v196 = vld [vmem:[%s165 + $0x60] sm:$0xf]
      %v197 = vld [vmem:[%s165 + $0x64] sm:$0xf]
      %v198 = vld [vmem:[%s165 + $0x68] sm:$0xf]
      %v199 = vld [vmem:[%s165 + $0x6c] sm:$0xf]
      %v200 = vld [vmem:[%s165 + $0x70] sm:$0xf]
      %v201 = vld [vmem:[%s165 + $0x74] sm:$0xf]
      %v202 = vld [vmem:[%s165 + $0x78] sm:$0xf]
      %v203 = vld [vmem:[%s165 + $0x7c] sm:$0xf]
      %v204 = vld [vmem:[%s165 + $0x80] sm:$0xf]
      %v205 = vld [vmem:[%s165 + $0x84] sm:$0xf]
      %v206 = vld [vmem:[%s165 + $0x88] sm:$0xf]
      %v207 = vld [vmem:[%s165 + $0x8c] sm:$0x7]
      %v208 = vld [vmem:[%s165 + $0x8c] sm:$0xf]
      %v209 = vld [vmem:[%s165] sm:$0xe]
      %v210 = vld [vmem:[%s165 + $0x8] sm:$0xe]
      %v211 = vld [vmem:[%s165 + $0x90] sm:$0xf]
      %v212 = vld [vmem:[%s165 + $0x94] sm:$0xf]
      %v213 = vld [vmem:[%s165 + $0x98] sm:$0x1]
      %v214 = vld [vmem:[%s165 + $0x8] sm:$0xc]
      %v215 = vld [vmem:[%s165 + $0x10] sm:$0xc]
      %v216 = vld [vmem:[%s165 + $0x98] sm:$0xf]
      %v217 = vld [vmem:[%s165 + $0x9c] sm:$0xf]
      %v218 = vld [vmem:[%s165 + $0xa0] sm:$0x1]
      %v219 = vld [vmem:[%s165 + $0xa0] sm:$0x3]
      %v220 = vld [vmem:[%s165 + $0x10] sm:$0x8]
      %v257 = vunpack.c.l.b16 %v172
      %v258 = vunpack.c.l.b16 %v173
      %v259 = vunpack.c.l.b16 %v174
      %v260 = vunpack.c.l.b16 %v175
      %v261 = vunpack.c.l.b16 %v176
      %v262 = vunpack.c.l.b16 %v177
      %v263 = vunpack.c.l.b16 %v178
      %v264 = vunpack.c.l.b16 %v179
      %v265 = vunpack.c.l.b16 %v180
      %v266 = vunpack.c.l.b16 %v181
      %v267 = vunpack.c.l.b16 %v182
      %v268 = vunpack.c.l.b16 %v183
      %v269 = vunpack.c.l.b16 %v184
      %v270 = vunpack.c.l.b16 %v185
      %v271 = vunpack.c.l.b16 %v186
      %v272 = vunpack.c.l.b16 %v187
      %v273 = vunpack.c.l.b16 %v188
      %v274 = vunpack.c.l.b16 %v189
      %v275 = vunpack.c.l.b16 %v190
      %v276 = vunpack.c.l.b16 %v191
      %v277 = vunpack.c.l.b16 %v192
      %v278 = vunpack.c.l.b16 %v193
      %v279 = vunpack.c.l.b16 %v194
      %v280 = vunpack.c.l.b16 %v195
      %v281 = vunpack.c.l.b16 %v196
      %v282 = vunpack.c.l.b16 %v197
      %v283 = vunpack.c.l.b16 %v198
      %v284 = vunpack.c.l.b16 %v199
      %v285 = vunpack.c.l.b16 %v200
      %v286 = vunpack.c.l.b16 %v201
      %v287 = vunpack.c.l.b16 %v202
      %v288 = vunpack.c.l.b16 %v203
      %v289 = vunpack.c.l.b16 %v204
      %v290 = vunpack.c.l.b16 %v205
      %v291 = vunpack.c.l.b16 %v206
      %v292 = vunpack.c.l.b16 %v207
      %v293 = vpack.c.b16 %v258, %v257
      %v294 = vpack.c.b16 %v260, %v259
      %v295 = vpack.c.b16 %v262, %v261
      %v296 = vpack.c.b16 %v264, %v263
      %v297 = vpack.c.b16 %v266, %v265
      %v298 = vpack.c.b16 %v268, %v267
      %v299 = vpack.c.b16 %v270, %v269
      %v300 = vpack.c.b16 %v272, %v271
      %v301 = vpack.c.b16 %v274, %v273
      %v302 = vpack.c.b16 %v276, %v275
      %v303 = vpack.c.b16 %v278, %v277
      %v304 = vpack.c.b16 %v280, %v279
      %v305 = vpack.c.b16 %v282, %v281
      %v306 = vpack.c.b16 %v284, %v283
      %v307 = vpack.c.b16 %v286, %v285
      %v308 = vpack.c.b16 %v288, %v287
      %v309 = vpack.c.b16 %v290, %v289
      %v310 = vpack.c.b16 %v292, %v291
      %v330 = vunpack.c.l.b16 %v208
      %v331 = vpack.c.b16 %v330, %v291
      %vm332 = vsmask.f32 7424
      %v334 = vshrl.u32 %v293, 16
      %v336 = vshll.u32 %v293, 16
      %v338 = vrot.slane %v336, 1
      %v339 = vor.u32 %v334, %v338
      %v341 = vshll.u32 %v294, 16
      %v343 = vrot.slane %v341, 1
      %v344 = vsel %vm332, %v339, %v343
      %v345 = vshrl.u32 %v294, 16
      %v347 = vor.u32 %v345, %v343
      %v349 = vshll.u32 %v295, 16
      %v351 = vrot.slane %v349, 1
      %v352 = vsel %vm332, %v347, %v351
      %v353 = vshrl.u32 %v295, 16
      %v355 = vor.u32 %v353, %v351
      %v357 = vshll.u32 %v296, 16
      %v359 = vrot.slane %v357, 1
      %v360 = vsel %vm332, %v355, %v359
      %v361 = vshrl.u32 %v296, 16
      %v363 = vor.u32 %v361, %v359
      %v365 = vshll.u32 %v297, 16
      %v367 = vrot.slane %v365, 1
      %v368 = vsel %vm332, %v363, %v367
      %v369 = vshrl.u32 %v297, 16
      %v371 = vor.u32 %v369, %v367
      %v373 = vshll.u32 %v298, 16
      %v375 = vrot.slane %v373, 1
      %v376 = vsel %vm332, %v371, %v375
      %v377 = vshrl.u32 %v298, 16
      %v379 = vor.u32 %v377, %v375
      %v381 = vshll.u32 %v299, 16
      %v383 = vrot.slane %v381, 1
      %v384 = vsel %vm332, %v379, %v383
      %v385 = vshrl.u32 %v299, 16
      %v387 = vor.u32 %v385, %v383
      %v389 = vshll.u32 %v300, 16
      %v391 = vrot.slane %v389, 1
      %v392 = vsel %vm332, %v387, %v391
      %v393 = vshrl.u32 %v300, 16
      %v395 = vor.u32 %v393, %v391
      %v397 = vshll.u32 %v301, 16
      %v399 = vrot.slane %v397, 1
      %v400 = vsel %vm332, %v395, %v399
      %v401 = vshrl.u32 %v301, 16
      %v403 = vor.u32 %v401, %v399
      %v405 = vshll.u32 %v302, 16
      %v407 = vrot.slane %v405, 1
      %v408 = vsel %vm332, %v403, %v407
      %v409 = vshrl.u32 %v302, 16
      %v411 = vor.u32 %v409, %v407
      %v413 = vshll.u32 %v303, 16
      %v415 = vrot.slane %v413, 1
      %v416 = vsel %vm332, %v411, %v415
      %v417 = vshrl.u32 %v303, 16
      %v419 = vor.u32 %v417, %v415
      %v421 = vshll.u32 %v304, 16
      %v423 = vrot.slane %v421, 1
      %v424 = vsel %vm332, %v419, %v423
      %v425 = vshrl.u32 %v304, 16
      %v427 = vor.u32 %v425, %v423
      %v429 = vshll.u32 %v305, 16
      %v431 = vrot.slane %v429, 1
      %v432 = vsel %vm332, %v427, %v431
      %v433 = vshrl.u32 %v305, 16
      %v435 = vor.u32 %v433, %v431
      %v437 = vshll.u32 %v306, 16
      %v439 = vrot.slane %v437, 1
      %v440 = vsel %vm332, %v435, %v439
      %v441 = vshrl.u32 %v306, 16
      %v443 = vor.u32 %v441, %v439
      %v445 = vshll.u32 %v307, 16
      %v447 = vrot.slane %v445, 1
      %v448 = vsel %vm332, %v443, %v447
      %v449 = vshrl.u32 %v307, 16
      %v451 = vor.u32 %v449, %v447
      %v453 = vshll.u32 %v308, 16
      %v455 = vrot.slane %v453, 1
      %v456 = vsel %vm332, %v451, %v455
      %v457 = vshrl.u32 %v308, 16
      %v459 = vor.u32 %v457, %v455
      %v461 = vshll.u32 %v309, 16
      %v463 = vrot.slane %v461, 1
      %v464 = vsel %vm332, %v459, %v463
      %v465 = vshrl.u32 %v309, 16
      %v467 = vor.u32 %v465, %v463
      %v469 = vshll.u32 %v331, 16
      %v471 = vrot.slane %v469, 1
      %v472 = vsel %vm332, %v467, %v471
      %v473 = vshrl.u32 %v331, 16
      %v475 = vor.u32 %v473, %v471
      %v495 = vunpack.c.l.b16 %v209
      %v496 = vpack.c.b16 %v258, %v495
      %vm497 = vcmask 1046528
      %v498 = vrot.slane %v496, 1
      %v499 = vrot.slane %v294, 1
      %v500 = vsel %vm497, %v498, %v499
      %v501 = vrot.slane %v295, 1
      %v502 = vsel %vm497, %v499, %v501
      %v503 = vrot.slane %v296, 1
      %v504 = vsel %vm497, %v501, %v503
      %v505 = vrot.slane %v297, 1
      %v506 = vsel %vm497, %v503, %v505
      %v507 = vrot.slane %v298, 1
      %v508 = vsel %vm497, %v505, %v507
      %v509 = vrot.slane %v299, 1
      %v510 = vsel %vm497, %v507, %v509
      %v511 = vrot.slane %v300, 1
      %v512 = vsel %vm497, %v509, %v511
      %v513 = vrot.slane %v301, 1
      %v514 = vsel %vm497, %v511, %v513
      %v515 = vrot.slane %v302, 1
      %v516 = vsel %vm497, %v513, %v515
      %v517 = vrot.slane %v303, 1
      %v518 = vsel %vm497, %v515, %v517
      %v519 = vrot.slane %v304, 1
      %v520 = vsel %vm497, %v517, %v519
      %v521 = vrot.slane %v305, 1
      %v522 = vsel %vm497, %v519, %v521
      %v523 = vrot.slane %v306, 1
      %v524 = vsel %vm497, %v521, %v523
      %v525 = vrot.slane %v307, 1
      %v526 = vsel %vm497, %v523, %v525
      %v527 = vrot.slane %v308, 1
      %v528 = vsel %vm497, %v525, %v527
      %v529 = vrot.slane %v309, 1
      %v530 = vsel %vm497, %v527, %v529
      %v531 = vrot.slane %v331, 1
      %v532 = vsel %vm497, %v529, %v531
      %v554 = vunpack.c.l.b16 %v210
      %v555 = vunpack.c.l.b16 %v211
      %v556 = vunpack.c.l.b16 %v212
      %v557 = vpack.c.b16 %v260, %v554
      %v558 = vpack.c.b16 %v556, %v555
      %v559 = vrot.slane %v557, 1
      %v560 = vsel %vm497, %v559, %v501
      %v561 = vrot.slane %v558, 1
      %v562 = vsel %vm497, %v531, %v561
      %v567 = vunpack.c.l.b16 %v213
      %v568 = vpack.c.b16 %v567, %v567
      %vm569 = vsmask.f32 6400
      %v571 = vshrl.u32 %v557, 16
      %v573 = vrot.slane %v571, 1
      %v574 = vshll.u32 %v557, 16
      %v576 = vrot.slane %v574, 2
      %v577 = vor.u32 %v573, %v576
      %v578 = vrot.slane %v353, 1
      %v579 = vrot.slane %v349, 2
      %v580 = vor.u32 %v578, %v579
      %v581 = vsel %vm569, %v577, %v580
      %v582 = vrot.slane %v361, 1
      %v583 = vrot.slane %v357, 2
      %v584 = vor.u32 %v582, %v583
      %v585 = vsel %vm569, %v580, %v584
      %v586 = vrot.slane %v369, 1
      %v587 = vrot.slane %v365, 2
      %v588 = vor.u32 %v586, %v587
      %v589 = vsel %vm569, %v584, %v588
      %v590 = vrot.slane %v377, 1
      %v591 = vrot.slane %v373, 2
      %v592 = vor.u32 %v590, %v591
      %v593 = vsel %vm569, %v588, %v592
      %v594 = vrot.slane %v385, 1
      %v595 = vrot.slane %v381, 2
      %v596 = vor.u32 %v594, %v595
      %v597 = vsel %vm569, %v592, %v596
      %v598 = vrot.slane %v393, 1
      %v599 = vrot.slane %v389, 2
      %v600 = vor.u32 %v598, %v599
      %v601 = vsel %vm569, %v596, %v600
      %v602 = vrot.slane %v401, 1
      %v603 = vrot.slane %v397, 2
      %v604 = vor.u32 %v602, %v603
      %v605 = vsel %vm569, %v600, %v604
      %v606 = vrot.slane %v409, 1
      %v607 = vrot.slane %v405, 2
      %v608 = vor.u32 %v606, %v607
      %v609 = vsel %vm569, %v604, %v608
      %v610 = vrot.slane %v417, 1
      %v611 = vrot.slane %v413, 2
      %v612 = vor.u32 %v610, %v611
      %v613 = vsel %vm569, %v608, %v612
      %v614 = vrot.slane %v425, 1
      %v615 = vrot.slane %v421, 2
      %v616 = vor.u32 %v614, %v615
      %v617 = vsel %vm569, %v612, %v616
      %v618 = vrot.slane %v433, 1
      %v619 = vrot.slane %v429, 2
      %v620 = vor.u32 %v618, %v619
      %v621 = vsel %vm569, %v616, %v620
      %v622 = vrot.slane %v441, 1
      %v623 = vrot.slane %v437, 2
      %v624 = vor.u32 %v622, %v623
      %v625 = vsel %vm569, %v620, %v624
      %v626 = vrot.slane %v449, 1
      %v627 = vrot.slane %v445, 2
      %v628 = vor.u32 %v626, %v627
      %v629 = vsel %vm569, %v624, %v628
      %v630 = vrot.slane %v457, 1
      %v631 = vrot.slane %v453, 2
      %v632 = vor.u32 %v630, %v631
      %v633 = vsel %vm569, %v628, %v632
      %v634 = vrot.slane %v465, 1
      %v635 = vrot.slane %v461, 2
      %v636 = vor.u32 %v634, %v635
      %v637 = vsel %vm569, %v632, %v636
      %v638 = vrot.slane %v473, 1
      %v639 = vrot.slane %v469, 2
      %v640 = vor.u32 %v638, %v639
      %v641 = vsel %vm569, %v636, %v640
      %v643 = vshrl.u32 %v558, 16
      %v645 = vrot.slane %v643, 1
      %v646 = vshll.u32 %v558, 16
      %v648 = vrot.slane %v646, 2
      %v649 = vor.u32 %v645, %v648
      %v650 = vsel %vm569, %v640, %v649
      %v652 = vshll.u32 %v568, 16
      %v654 = vrot.slane %v652, 2
      %v655 = vsel %vm569, %v649, %v654
      %v675 = vunpack.c.l.b16 %v214
      %v676 = vpack.c.b16 %v260, %v675
      %vm677 = vcmask 1045504
      %v678 = vrot.slane %v676, 2
      %v679 = vrot.slane %v295, 2
      %v680 = vsel %vm677, %v678, %v679
      %v681 = vrot.slane %v296, 2
      %v682 = vsel %vm677, %v679, %v681
      %v683 = vrot.slane %v297, 2
      %v684 = vsel %vm677, %v681, %v683
      %v685 = vrot.slane %v298, 2
      %v686 = vsel %vm677, %v683, %v685
      %v687 = vrot.slane %v299, 2
      %v688 = vsel %vm677, %v685, %v687
      %v689 = vrot.slane %v300, 2
      %v690 = vsel %vm677, %v687, %v689
      %v691 = vrot.slane %v301, 2
      %v692 = vsel %vm677, %v689, %v691
      %v693 = vrot.slane %v302, 2
      %v694 = vsel %vm677, %v691, %v693
      %v695 = vrot.slane %v303, 2
      %v696 = vsel %vm677, %v693, %v695
      %v697 = vrot.slane %v304, 2
      %v698 = vsel %vm677, %v695, %v697
      %v699 = vrot.slane %v305, 2
      %v700 = vsel %vm677, %v697, %v699
      %v701 = vrot.slane %v306, 2
      %v702 = vsel %vm677, %v699, %v701
      %v703 = vrot.slane %v307, 2
      %v704 = vsel %vm677, %v701, %v703
      %v705 = vrot.slane %v308, 2
      %v706 = vsel %vm677, %v703, %v705
      %v707 = vrot.slane %v309, 2
      %v708 = vsel %vm677, %v705, %v707
      %v709 = vrot.slane %v331, 2
      %v710 = vsel %vm677, %v707, %v709
      %v711 = vrot.slane %v558, 2
      %v712 = vsel %vm677, %v709, %v711
      %v713 = vrot.slane %v568, 2
      %v714 = vsel %vm677, %v711, %v713
      %v737 = vunpack.c.l.b16 %v215
      %v738 = vunpack.c.l.b16 %v216
      %v739 = vunpack.c.l.b16 %v217
      %v740 = vunpack.c.l.b16 %v218
      %v741 = vpack.c.b16 %v262, %v737
      %v742 = vpack.c.b16 %v739, %v738
      %v743 = vpack.c.b16 %v740, %v740
      %v744 = vrot.slane %v741, 2
      %v745 = vsel %vm677, %v744, %v681
      %v746 = vrot.slane %v742, 2
      %v747 = vsel %vm677, %v711, %v746
      %v748 = vrot.slane %v743, 2
      %v749 = vsel %vm677, %v746, %v748
      %v754 = vunpack.c.l.b16 %v219
      %v755 = vpack.c.b16 %v754, %v754
      %vm756 = vsmask.f32 5376
      %v758 = vshrl.u32 %v741, 16
      %v760 = vrot.slane %v758, 2
      %v761 = vshll.u32 %v741, 16
      %v763 = vrot.slane %v761, 3
      %v764 = vor.u32 %v760, %v763
      %v765 = vrot.slane %v361, 2
      %v766 = vrot.slane %v357, 3
      %v767 = vor.u32 %v765, %v766
      %v768 = vsel %vm756, %v764, %v767
      %v769 = vrot.slane %v369, 2
      %v770 = vrot.slane %v365, 3
      %v771 = vor.u32 %v769, %v770
      %v772 = vsel %vm756, %v767, %v771
      %v773 = vrot.slane %v377, 2
      %v774 = vrot.slane %v373, 3
      %v775 = vor.u32 %v773, %v774
      %v776 = vsel %vm756, %v771, %v775
      %v777 = vrot.slane %v385, 2
      %v778 = vrot.slane %v381, 3
      %v779 = vor.u32 %v777, %v778
      %v780 = vsel %vm756, %v775, %v779
      %v781 = vrot.slane %v393, 2
      %v782 = vrot.slane %v389, 3
      %v783 = vor.u32 %v781, %v782
      %v784 = vsel %vm756, %v779, %v783
      %v785 = vrot.slane %v401, 2
      %v786 = vrot.slane %v397, 3
      %v787 = vor.u32 %v785, %v786
      %v788 = vsel %vm756, %v783, %v787
      %v789 = vrot.slane %v409, 2
      %v790 = vrot.slane %v405, 3
      %v791 = vor.u32 %v789, %v790
      %v792 = vsel %vm756, %v787, %v791
      %v793 = vrot.slane %v417, 2
      %v794 = vrot.slane %v413, 3
      %v795 = vor.u32 %v793, %v794
      %v796 = vsel %vm756, %v791, %v795
      %v797 = vrot.slane %v425, 2
      %v798 = vrot.slane %v421, 3
      %v799 = vor.u32 %v797, %v798
      %v800 = vsel %vm756, %v795, %v799
      %v801 = vrot.slane %v433, 2
      %v802 = vrot.slane %v429, 3
      %v803 = vor.u32 %v801, %v802
      %v804 = vsel %vm756, %v799, %v803
      %v805 = vrot.slane %v441, 2
      %v806 = vrot.slane %v437, 3
      %v807 = vor.u32 %v805, %v806
      %v808 = vsel %vm756, %v803, %v807
      %v809 = vrot.slane %v449, 2
      %v810 = vrot.slane %v445, 3
      %v811 = vor.u32 %v809, %v810
      %v812 = vsel %vm756, %v807, %v811
      %v813 = vrot.slane %v457, 2
      %v814 = vrot.slane %v453, 3
      %v815 = vor.u32 %v813, %v814
      %v816 = vsel %vm756, %v811, %v815
      %v817 = vrot.slane %v465, 2
      %v818 = vrot.slane %v461, 3
      %v819 = vor.u32 %v817, %v818
      %v820 = vsel %vm756, %v815, %v819
      %v821 = vrot.slane %v473, 2
      %v822 = vrot.slane %v469, 3
      %v823 = vor.u32 %v821, %v822
      %v824 = vsel %vm756, %v819, %v823
      %v825 = vrot.slane %v643, 2
      %v826 = vrot.slane %v646, 3
      %v827 = vor.u32 %v825, %v826
      %v828 = vsel %vm756, %v823, %v827
      %v830 = vshrl.u32 %v742, 16
      %v832 = vrot.slane %v830, 2
      %v833 = vshll.u32 %v742, 16
      %v835 = vrot.slane %v833, 3
      %v836 = vor.u32 %v832, %v835
      %v837 = vsel %vm756, %v827, %v836
      %v839 = vshrl.u32 %v755, 16
      %v841 = vrot.slane %v839, 2
      %v842 = vshll.u32 %v755, 16
      %v844 = vrot.slane %v842, 3
      %v845 = vor.u32 %v841, %v844
      %v846 = vsel %vm756, %v836, %v845
      %v866 = vunpack.c.l.b16 %v220
      %v867 = vpack.c.b16 %v262, %v866
      %vm868 = vcmask 1044480
      %v869 = vrot.slane %v867, 3
      %v870 = vrot.slane %v296, 3
      %v871 = vsel %vm868, %v869, %v870
      %v872 = vrot.slane %v297, 3
      %v873 = vsel %vm868, %v870, %v872
      %v874 = vrot.slane %v298, 3
      %v875 = vsel %vm868, %v872, %v874
      %v876 = vrot.slane %v299, 3
      %v877 = vsel %vm868, %v874, %v876
      %v878 = vrot.slane %v300, 3
      %v879 = vsel %vm868, %v876, %v878
      %v880 = vrot.slane %v301, 3
      %v881 = vsel %vm868, %v878, %v880
      %v882 = vrot.slane %v302, 3
      %v883 = vsel %vm868, %v880, %v882
      %v884 = vrot.slane %v303, 3
      %v885 = vsel %vm868, %v882, %v884
      %v886 = vrot.slane %v304, 3
      %v887 = vsel %vm868, %v884, %v886
      %v888 = vrot.slane %v305, 3
      %v889 = vsel %vm868, %v886, %v888
      %v890 = vrot.slane %v306, 3
      %v891 = vsel %vm868, %v888, %v890
      %v892 = vrot.slane %v307, 3
      %v893 = vsel %vm868, %v890, %v892
      %v894 = vrot.slane %v308, 3
      %v895 = vsel %vm868, %v892, %v894
      %v896 = vrot.slane %v309, 3
      %v897 = vsel %vm868, %v894, %v896
      %v898 = vrot.slane %v331, 3
      %v899 = vsel %vm868, %v896, %v898
      %v900 = vrot.slane %v558, 3
      %v901 = vsel %vm868, %v898, %v900
      %v902 = vrot.slane %v742, 3
      %v903 = vsel %vm868, %v900, %v902
      %v904 = vrot.slane %v755, 3
      %v905 = vsel %vm868, %v902, %v904
      %v924 = vld [vmem:[%s1] sm:$0xf]
      %v925 = vld [vmem:[%s1 + $0x4] sm:$0xf]
      %v926 = vld [vmem:[%s1 + $0x8] sm:$0xf]
      %v927 = vld [vmem:[%s1 + $0xc] sm:$0xf]
      %v928 = vld [vmem:[%s1 + $0x10] sm:$0xf]
      %v929 = vld [vmem:[%s1 + $0x14] sm:$0xf]
      %v930 = vld [vmem:[%s1 + $0x18] sm:$0xf]
      %v931 = vld [vmem:[%s1 + $0x1c] sm:$0xf]
      %v932 = vld [vmem:[%s1 + $0x20] sm:$0xf]
      %v933 = vld [vmem:[%s1 + $0x24] sm:$0xf]
      %v934 = vld [vmem:[%s1 + $0x28] sm:$0xf]
      %v935 = vld [vmem:[%s1 + $0x2c] sm:$0xf]
      %v936 = vld [vmem:[%s1 + $0x30] sm:$0xf]
      %v937 = vld [vmem:[%s1 + $0x34] sm:$0xf]
      %v938 = vld [vmem:[%s1 + $0x38] sm:$0xf]
      %v939 = vld [vmem:[%s1 + $0x3c] sm:$0xf]
      %v940 = vld [vmem:[%s1 + $0x40] sm:$0xf]
      %v941 = vld [vmem:[%s1 + $0x44] sm:$0xf]
      %v942 = vld [vmem:[%s1 + $0x48] sm:$0xf]
      %v943 = vld [vmem:[%s1 + $0x4c] sm:$0xf]
      %v944 = vld [vmem:[%s1 + $0x50] sm:$0xf]
      %v945 = vld [vmem:[%s1 + $0x54] sm:$0xf]
      %v946 = vld [vmem:[%s1 + $0x58] sm:$0xf]
      %v947 = vld [vmem:[%s1 + $0x5c] sm:$0xf]
      %v948 = vld [vmem:[%s1 + $0x60] sm:$0xf]
      %v949 = vld [vmem:[%s1 + $0x64] sm:$0xf]
      %v950 = vld [vmem:[%s1 + $0x68] sm:$0xf]
      %v951 = vld [vmem:[%s1 + $0x6c] sm:$0xf]
      %v952 = vld [vmem:[%s1 + $0x70] sm:$0xf]
      %v953 = vld [vmem:[%s1 + $0x74] sm:$0xf]
      %v954 = vld [vmem:[%s1 + $0x78] sm:$0xf]
      %v955 = vld [vmem:[%s1 + $0x7c] sm:$0xf]
      %v956 = vld [vmem:[%s1 + $0x80] sm:$0xf]
      %v957 = vld [vmem:[%s1 + $0x84] sm:$0xf]
      %v958 = vld [vmem:[%s1 + $0x88] sm:$0xf]
      %v959 = vld [vmem:[%s1 + $0x8c] sm:$0xf]
      %v960 = vld [vmem:[%s1 + $0x90] sm:$0xf]
      %v961 = vld [vmem:[%s1 + $0x94] sm:$0xf]
      %v962 = vld [vmem:[%s1 + $0x98] sm:$0xf]
      %v963 = vld [vmem:[%s1 + $0x9c] sm:$0xf]
      %v964 = vld [vmem:[%s1 + $0xa0] sm:$0xf]
      %v965 = vld [vmem:[%s1 + $0xa4] sm:$0xf]
      %v966 = vld [vmem:[%s1 + $0xa8] sm:$0xf]
      %v967 = vld [vmem:[%s1 + $0xac] sm:$0xf]
      %v968 = vld [vmem:[%s1 + $0xb0] sm:$0xf]
      %v969 = vld [vmem:[%s1 + $0xb4] sm:$0xf]
      %v970 = vld [vmem:[%s1 + $0xb8] sm:$0xf]
      %v971 = vld [vmem:[%s1 + $0xbc] sm:$0xf]
      %v972 = vld [vmem:[%s1 + $0xc0] sm:$0xf]
      %v973 = vld [vmem:[%s1 + $0xc4] sm:$0xf]
      %v974 = vld [vmem:[%s1 + $0xc8] sm:$0xf]
      %v975 = vld [vmem:[%s1 + $0xcc] sm:$0xf]
      %v976 = vld [vmem:[%s1 + $0xd0] sm:$0xf]
      %v977 = vld [vmem:[%s1 + $0xd4] sm:$0xf]
      %v978 = vld [vmem:[%s1 + $0xd8] sm:$0xf]
      %v979 = vld [vmem:[%s1 + $0xdc] sm:$0xf]
      %v980 = vld [vmem:[%s1 + $0xe0] sm:$0xf]
      %v981 = vld [vmem:[%s1 + $0xe4] sm:$0xf]
      %v982 = vld [vmem:[%s1 + $0xe8] sm:$0xf]
      %v983 = vld [vmem:[%s1 + $0xec] sm:$0xf]
      %v984 = vld [vmem:[%s1 + $0xf0] sm:$0xf]
      %v985 = vld [vmem:[%s1 + $0xf4] sm:$0xf]
      %v986 = vld [vmem:[%s1 + $0xf8] sm:$0xf]
      %v987 = vld [vmem:[%s1 + $0xfc] sm:$0xf]
      %v988 = vld [vmem:[%s1 + $0x100] sm:$0xf]
      %v989 = vld [vmem:[%s1 + $0x104] sm:$0xf]
      %v990 = vld [vmem:[%s1 + $0x108] sm:$0xf]
      %v991 = vld [vmem:[%s1 + $0x10c] sm:$0xf]
      %v992 = vld [vmem:[%s1 + $0x110] sm:$0xf]
      %v993 = vld [vmem:[%s1 + $0x114] sm:$0xf]
      %v994 = vld [vmem:[%s1 + $0x118] sm:$0xf]
      %v995 = vld [vmem:[%s1 + $0x11c] sm:$0xf]
      %v996 = vld [vmem:[%s1 + $0x120] sm:$0xf]
      %v997 = vld [vmem:[%s1 + $0x124] sm:$0xf]
      %v998 = vld [vmem:[%s1 + $0x128] sm:$0xf]
      %v999 = vld [vmem:[%s1 + $0x12c] sm:$0xf]
      %v1000 = vld [vmem:[%s1 + $0x130] sm:$0xf]
      %v1001 = vld [vmem:[%s1 + $0x134] sm:$0xf]
      %v1002 = vld [vmem:[%s1 + $0x138] sm:$0xf]
      %v1003 = vld [vmem:[%s1 + $0x13c] sm:$0xf]
      %v1004 = vld [vmem:[%s1 + $0x140] sm:$0xf]
      %v1005 = vld [vmem:[%s1 + $0x144] sm:$0xf]
      %v1006 = vld [vmem:[%s1 + $0x148] sm:$0xf]
      %v1007 = vld [vmem:[%s1 + $0x14c] sm:$0xf]
      %v1008 = vld [vmem:[%s1 + $0x150] sm:$0xf]
      %v1009 = vld [vmem:[%s1 + $0x154] sm:$0xf]
      %v1010 = vld [vmem:[%s1 + $0x158] sm:$0xf]
      %v1011 = vld [vmem:[%s1 + $0x15c] sm:$0xf]
      %v1012 = vld [vmem:[%s1 + $0x160] sm:$0xf]
      %v1013 = vld [vmem:[%s1 + $0x164] sm:$0xf]
      %v1014 = vld [vmem:[%s1 + $0x168] sm:$0xf]
      %v1015 = vld [vmem:[%s1 + $0x16c] sm:$0xf]
      %v1016 = vld [vmem:[%s1 + $0x170] sm:$0xf]
      %v1017 = vld [vmem:[%s1 + $0x174] sm:$0xf]
      %v1018 = vld [vmem:[%s1 + $0x178] sm:$0xf]
      %v1019 = vld [vmem:[%s1 + $0x17c] sm:$0xf]
      %v1020 = vld [vmem:[%s1 + $0x180] sm:$0xf]
      %v1021 = vld [vmem:[%s1 + $0x184] sm:$0xf]
      %v1022 = vld [vmem:[%s1 + $0x188] sm:$0xf]
      %v1023 = vld [vmem:[%s1 + $0x18c] sm:$0xf]
      %v1024 = vld [vmem:[%s1 + $0x190] sm:$0xf]
      %v1025 = vld [vmem:[%s1 + $0x194] sm:$0xf]
      %v1026 = vld [vmem:[%s1 + $0x198] sm:$0xf]
      %v1027 = vld [vmem:[%s1 + $0x19c] sm:$0xf]
      %v1028 = vld [vmem:[%s1 + $0x1a0] sm:$0xf]
      %v1029 = vld [vmem:[%s1 + $0x1a4] sm:$0xf]
      %v1030 = vld [vmem:[%s1 + $0x1a8] sm:$0xf]
      %v1031 = vld [vmem:[%s1 + $0x1ac] sm:$0xf]
      %v1032 = vld [vmem:[%s1 + $0x1b0] sm:$0xf]
      %v1033 = vld [vmem:[%s1 + $0x1b4] sm:$0xf]
      %v1034 = vld [vmem:[%s1 + $0x1b8] sm:$0xf]
      %v1035 = vld [vmem:[%s1 + $0x1bc] sm:$0xf]
      %v1036 = vld [vmem:[%s1 + $0x1c0] sm:$0xf]
      %v1037 = vld [vmem:[%s1 + $0x1c4] sm:$0xf]
      %v1038 = vld [vmem:[%s1 + $0x1c8] sm:$0xf]
      %v1039 = vld [vmem:[%s1 + $0x1cc] sm:$0xf]
      %v1040 = vld [vmem:[%s1 + $0x1d0] sm:$0xf]
      %v1041 = vld [vmem:[%s1 + $0x1d4] sm:$0xf]
      %v1042 = vld [vmem:[%s1 + $0x1d8] sm:$0xf]
      %v1043 = vld [vmem:[%s1 + $0x1dc] sm:$0xf]
      %v1044 = vld [vmem:[%s1 + $0x1e0] sm:$0xf]
      %v1045 = vld [vmem:[%s1 + $0x1e4] sm:$0xf]
      %v1046 = vld [vmem:[%s1 + $0x1e8] sm:$0xf]
      %v1047 = vld [vmem:[%s1 + $0x1ec] sm:$0xf]
      %v1048 = vld [vmem:[%s1 + $0x1f0] sm:$0xf]
      %v1049 = vld [vmem:[%s1 + $0x1f4] sm:$0xf]
      %v1050 = vld [vmem:[%s1 + $0x1f8] sm:$0xf]
      %v1051 = vld [vmem:[%s1 + $0x1fc] sm:$0xf]
      %v1052 = vld [vmem:[%s1 + $0x200] sm:$0xf]
      %v1053 = vld [vmem:[%s1 + $0x204] sm:$0xf]
      %v1054 = vld [vmem:[%s1 + $0x208] sm:$0xf]
      %v1055 = vld [vmem:[%s1 + $0x20c] sm:$0xf]
      %v1056 = vld [vmem:[%s1 + $0x210] sm:$0xf]
      %v1057 = vld [vmem:[%s1 + $0x214] sm:$0xf]
      %v1058 = vld [vmem:[%s1 + $0x218] sm:$0xf]
      %v1059 = vld [vmem:[%s1 + $0x21c] sm:$0xf]
      %v1060 = vld [vmem:[%s1 + $0x220] sm:$0xf]
      %v1061 = vld [vmem:[%s1 + $0x224] sm:$0xf]
      %v1062 = vld [vmem:[%s1 + $0x228] sm:$0xf]
      %v1063 = vld [vmem:[%s1 + $0x22c] sm:$0xf]
      %v1064 = vld [vmem:[%s1 + $0x230] sm:$0xf]
      %v1065 = vld [vmem:[%s1 + $0x234] sm:$0xf]
      %v1066 = vld [vmem:[%s1 + $0x238] sm:$0xf]
      %v1067 = vld [vmem:[%s1 + $0x23c] sm:$0xf]
      %v1068 = vld [vmem:[%s2] sm:$0x1]
      %v1070 = vlaneseq
      %v1071 = vshrl.u32 %v1070, 7
      %v1072 = vsub.s32 0, %v1071
      %v1073 = vrot.slane %v1068, %v1072
      %v1219 = vunpack.c.l.b16 %v924
      %v1220 = vunpack.c.l.b16 %v925
      %v1221 = vunpack.c.l.b16 %v926
      %v1222 = vunpack.c.l.b16 %v927
      %v1223 = vunpack.c.l.b16 %v928
      %v1224 = vunpack.c.l.b16 %v929
      %v1225 = vunpack.c.l.b16 %v930
      %v1226 = vunpack.c.l.b16 %v931
      %v1227 = vunpack.c.l.b16 %v932
      %v1228 = vunpack.c.l.b16 %v933
      %v1229 = vunpack.c.l.b16 %v934
      %v1230 = vunpack.c.l.b16 %v935
      %v1231 = vunpack.c.l.b16 %v936
      %v1232 = vunpack.c.l.b16 %v937
      %v1233 = vunpack.c.l.b16 %v938
      %v1234 = vunpack.c.l.b16 %v939
      %v1235 = vunpack.c.l.b16 %v940
      %v1236 = vunpack.c.l.b16 %v941
      %v1237 = vunpack.c.l.b16 %v942
      %v1238 = vunpack.c.l.b16 %v943
      %v1239 = vunpack.c.l.b16 %v944
      %v1240 = vunpack.c.l.b16 %v945
      %v1241 = vunpack.c.l.b16 %v946
      %v1242 = vunpack.c.l.b16 %v947
      %v1243 = vunpack.c.l.b16 %v948
      %v1244 = vunpack.c.l.b16 %v949
      %v1245 = vunpack.c.l.b16 %v950
      %v1246 = vunpack.c.l.b16 %v951
      %v1247 = vunpack.c.l.b16 %v952
      %v1248 = vunpack.c.l.b16 %v953
      %v1249 = vunpack.c.l.b16 %v954
      %v1250 = vunpack.c.l.b16 %v955
      %v1251 = vunpack.c.l.b16 %v956
      %v1252 = vunpack.c.l.b16 %v957
      %v1253 = vunpack.c.l.b16 %v958
      %v1254 = vunpack.c.l.b16 %v959
      %v1255 = vunpack.c.l.b16 %v960
      %v1256 = vunpack.c.l.b16 %v961
      %v1257 = vunpack.c.l.b16 %v962
      %v1258 = vunpack.c.l.b16 %v963
      %v1259 = vunpack.c.l.b16 %v964
      %v1260 = vunpack.c.l.b16 %v965
      %v1261 = vunpack.c.l.b16 %v966
      %v1262 = vunpack.c.l.b16 %v967
      %v1263 = vunpack.c.l.b16 %v968
      %v1264 = vunpack.c.l.b16 %v969
      %v1265 = vunpack.c.l.b16 %v970
      %v1266 = vunpack.c.l.b16 %v971
      %v1267 = vunpack.c.l.b16 %v972
      %v1268 = vunpack.c.l.b16 %v973
      %v1269 = vunpack.c.l.b16 %v974
      %v1270 = vunpack.c.l.b16 %v975
      %v1271 = vunpack.c.l.b16 %v976
      %v1272 = vunpack.c.l.b16 %v977
      %v1273 = vunpack.c.l.b16 %v978
      %v1274 = vunpack.c.l.b16 %v979
      %v1275 = vunpack.c.l.b16 %v980
      %v1276 = vunpack.c.l.b16 %v981
      %v1277 = vunpack.c.l.b16 %v982
      %v1278 = vunpack.c.l.b16 %v983
      %v1279 = vunpack.c.l.b16 %v984
      %v1280 = vunpack.c.l.b16 %v985
      %v1281 = vunpack.c.l.b16 %v986
      %v1282 = vunpack.c.l.b16 %v987
      %v1283 = vunpack.c.l.b16 %v988
      %v1284 = vunpack.c.l.b16 %v989
      %v1285 = vunpack.c.l.b16 %v990
      %v1286 = vunpack.c.l.b16 %v991
      %v1287 = vunpack.c.l.b16 %v992
      %v1288 = vunpack.c.l.b16 %v993
      %v1289 = vunpack.c.l.b16 %v994
      %v1290 = vunpack.c.l.b16 %v995
      %v1291 = vunpack.c.l.b16 %v996
      %v1292 = vunpack.c.l.b16 %v997
      %v1293 = vunpack.c.l.b16 %v998
      %v1294 = vunpack.c.l.b16 %v999
      %v1295 = vunpack.c.l.b16 %v1000
      %v1296 = vunpack.c.l.b16 %v1001
      %v1297 = vunpack.c.l.b16 %v1002
      %v1298 = vunpack.c.l.b16 %v1003
      %v1299 = vunpack.c.l.b16 %v1004
      %v1300 = vunpack.c.l.b16 %v1005
      %v1301 = vunpack.c.l.b16 %v1006
      %v1302 = vunpack.c.l.b16 %v1007
      %v1303 = vunpack.c.l.b16 %v1008
      %v1304 = vunpack.c.l.b16 %v1009
      %v1305 = vunpack.c.l.b16 %v1010
      %v1306 = vunpack.c.l.b16 %v1011
      %v1307 = vunpack.c.l.b16 %v1012
      %v1308 = vunpack.c.l.b16 %v1013
      %v1309 = vunpack.c.l.b16 %v1014
      %v1310 = vunpack.c.l.b16 %v1015
      %v1311 = vunpack.c.l.b16 %v1016
      %v1312 = vunpack.c.l.b16 %v1017
      %v1313 = vunpack.c.l.b16 %v1018
      %v1314 = vunpack.c.l.b16 %v1019
      %v1315 = vunpack.c.l.b16 %v1020
      %v1316 = vunpack.c.l.b16 %v1021
      %v1317 = vunpack.c.l.b16 %v1022
      %v1318 = vunpack.c.l.b16 %v1023
      %v1319 = vunpack.c.l.b16 %v1024
      %v1320 = vunpack.c.l.b16 %v1025
      %v1321 = vunpack.c.l.b16 %v1026
      %v1322 = vunpack.c.l.b16 %v1027
      %v1323 = vunpack.c.l.b16 %v1028
      %v1324 = vunpack.c.l.b16 %v1029
      %v1325 = vunpack.c.l.b16 %v1030
      %v1326 = vunpack.c.l.b16 %v1031
      %v1327 = vunpack.c.l.b16 %v1032
      %v1328 = vunpack.c.l.b16 %v1033
      %v1329 = vunpack.c.l.b16 %v1034
      %v1330 = vunpack.c.l.b16 %v1035
      %v1331 = vunpack.c.l.b16 %v1036
      %v1332 = vunpack.c.l.b16 %v1037
      %v1333 = vunpack.c.l.b16 %v1038
      %v1334 = vunpack.c.l.b16 %v1039
      %v1335 = vunpack.c.l.b16 %v1040
      %v1336 = vunpack.c.l.b16 %v1041
      %v1337 = vunpack.c.l.b16 %v1042
      %v1338 = vunpack.c.l.b16 %v1043
      %v1339 = vunpack.c.l.b16 %v1044
      %v1340 = vunpack.c.l.b16 %v1045
      %v1341 = vunpack.c.l.b16 %v1046
      %v1342 = vunpack.c.l.b16 %v1047
      %v1343 = vunpack.c.l.b16 %v1048
      %v1344 = vunpack.c.l.b16 %v1049
      %v1345 = vunpack.c.l.b16 %v1050
      %v1346 = vunpack.c.l.b16 %v1051
      %v1347 = vunpack.c.l.b16 %v1052
      %v1348 = vunpack.c.l.b16 %v1053
      %v1349 = vunpack.c.l.b16 %v1054
      %v1350 = vunpack.c.l.b16 %v1055
      %v1351 = vunpack.c.l.b16 %v1056
      %v1352 = vunpack.c.l.b16 %v1057
      %v1353 = vunpack.c.l.b16 %v1058
      %v1354 = vunpack.c.l.b16 %v1059
      %v1355 = vunpack.c.l.b16 %v1060
      %v1356 = vunpack.c.l.b16 %v1061
      %v1357 = vunpack.c.l.b16 %v1062
      %v1358 = vunpack.c.l.b16 %v1063
      %v1359 = vunpack.c.l.b16 %v1064
      %v1360 = vunpack.c.l.b16 %v1065
      %v1361 = vunpack.c.l.b16 %v1066
      %v1362 = vunpack.c.l.b16 %v1067
      %v1363 = vpack.c.b16 %v1220, %v1219
      %v1364 = vpack.c.b16 %v1222, %v1221
      %v1365 = vpack.c.b16 %v1224, %v1223
      %v1366 = vpack.c.b16 %v1226, %v1225
      %v1367 = vpack.c.b16 %v1228, %v1227
      %v1368 = vpack.c.b16 %v1230, %v1229
      %v1369 = vpack.c.b16 %v1232, %v1231
      %v1370 = vpack.c.b16 %v1234, %v1233
      %v1371 = vpack.c.b16 %v1236, %v1235
      %v1372 = vpack.c.b16 %v1238, %v1237
      %v1373 = vpack.c.b16 %v1240, %v1239
      %v1374 = vpack.c.b16 %v1242, %v1241
      %v1375 = vpack.c.b16 %v1244, %v1243
      %v1376 = vpack.c.b16 %v1246, %v1245
      %v1377 = vpack.c.b16 %v1248, %v1247
      %v1378 = vpack.c.b16 %v1250, %v1249
      %v1379 = vpack.c.b16 %v1252, %v1251
      %v1380 = vpack.c.b16 %v1254, %v1253
      %v1381 = vpack.c.b16 %v1256, %v1255
      %v1382 = vpack.c.b16 %v1258, %v1257
      %v1383 = vpack.c.b16 %v1260, %v1259
      %v1384 = vpack.c.b16 %v1262, %v1261
      %v1385 = vpack.c.b16 %v1264, %v1263
      %v1386 = vpack.c.b16 %v1266, %v1265
      %v1387 = vpack.c.b16 %v1268, %v1267
      %v1388 = vpack.c.b16 %v1270, %v1269
      %v1389 = vpack.c.b16 %v1272, %v1271
      %v1390 = vpack.c.b16 %v1274, %v1273
      %v1391 = vpack.c.b16 %v1276, %v1275
      %v1392 = vpack.c.b16 %v1278, %v1277
      %v1393 = vpack.c.b16 %v1280, %v1279
      %v1394 = vpack.c.b16 %v1282, %v1281
      %v1395 = vpack.c.b16 %v1284, %v1283
      %v1396 = vpack.c.b16 %v1286, %v1285
      %v1397 = vpack.c.b16 %v1288, %v1287
      %v1398 = vpack.c.b16 %v1290, %v1289
      %v1399 = vpack.c.b16 %v1292, %v1291
      %v1400 = vpack.c.b16 %v1294, %v1293
      %v1401 = vpack.c.b16 %v1296, %v1295
      %v1402 = vpack.c.b16 %v1298, %v1297
      %v1403 = vpack.c.b16 %v1300, %v1299
      %v1404 = vpack.c.b16 %v1302, %v1301
      %v1405 = vpack.c.b16 %v1304, %v1303
      %v1406 = vpack.c.b16 %v1306, %v1305
      %v1407 = vpack.c.b16 %v1308, %v1307
      %v1408 = vpack.c.b16 %v1310, %v1309
      %v1409 = vpack.c.b16 %v1312, %v1311
      %v1410 = vpack.c.b16 %v1314, %v1313
      %v1411 = vpack.c.b16 %v1316, %v1315
      %v1412 = vpack.c.b16 %v1318, %v1317
      %v1413 = vpack.c.b16 %v1320, %v1319
      %v1414 = vpack.c.b16 %v1322, %v1321
      %v1415 = vpack.c.b16 %v1324, %v1323
      %v1416 = vpack.c.b16 %v1326, %v1325
      %v1417 = vpack.c.b16 %v1328, %v1327
      %v1418 = vpack.c.b16 %v1330, %v1329
      %v1419 = vpack.c.b16 %v1332, %v1331
      %v1420 = vpack.c.b16 %v1334, %v1333
      %v1421 = vpack.c.b16 %v1336, %v1335
      %v1422 = vpack.c.b16 %v1338, %v1337
      %v1423 = vpack.c.b16 %v1340, %v1339
      %v1424 = vpack.c.b16 %v1342, %v1341
      %v1425 = vpack.c.b16 %v1344, %v1343
      %v1426 = vpack.c.b16 %v1346, %v1345
      %v1427 = vpack.c.b16 %v1348, %v1347
      %v1428 = vpack.c.b16 %v1350, %v1349
      %v1429 = vpack.c.b16 %v1352, %v1351
      %v1430 = vpack.c.b16 %v1354, %v1353
      %v1431 = vpack.c.b16 %v1356, %v1355
      %v1432 = vpack.c.b16 %v1358, %v1357
      %v1433 = vpack.c.b16 %v1360, %v1359
      %v1434 = vpack.c.b16 %v1362, %v1361
      %1507 = vmatprep.subr.bf16.mxu0 0
      %1508 = vmatpush1.bf16.msra.mxu0 %v1363
      %1509 = vmatprep.subr.bf16.mxu0 0
      %1510 = vmatpush1.bf16.msra.mxu0 %v1364
      %1511 = vmatprep.subr.bf16.mxu0 0
      %1512 = vmatpush1.bf16.msra.mxu0 %v1365
      %1513 = vmatprep.subr.bf16.mxu0 0
      %1514 = vmatpush1.bf16.msra.mxu0 %v1366
      %1515 = vmatprep.subr.bf16.mxu0 0
      %1516 = vmatpush1.bf16.msra.mxu0 %v1367
      %1517 = vmatprep.subr.bf16.mxu0 0
      %1518 = vmatpush1.bf16.msra.mxu0 %v1368
      %1519 = vmatprep.subr.bf16.mxu0 0
      %1520 = vmatpush1.bf16.msra.mxu0 %v1369
      %1521 = vmatprep.subr.bf16.mxu0 0
      %1522 = vmatpush1.bf16.msra.mxu0 %v1370
      %1523 = vmatprep.subr.bf16.mxu0 0
      %1524 = vmatpush1.bf16.msra.mxu0 %v1371
      %1525 = vmatprep.subr.bf16.mxu0 0
      %1526 = vmatpush1.bf16.msra.mxu0 %v1372
      %1527 = vmatprep.subr.bf16.mxu0 0
      %1528 = vmatpush1.bf16.msra.mxu0 %v1373
      %1529 = vmatprep.subr.bf16.mxu0 0
      %1530 = vmatpush1.bf16.msra.mxu0 %v1374
      %1531 = vmatprep.subr.bf16.mxu0 0
      %1532 = vmatpush1.bf16.msra.mxu0 %v1375
      %1533 = vmatprep.subr.bf16.mxu0 0
      %1534 = vmatpush1.bf16.msra.mxu0 %v1376
      %1535 = vmatprep.subr.bf16.mxu0 0
      %1536 = vmatpush1.bf16.msra.mxu0 %v1377
      %1537 = vmatprep.subr.bf16.mxu0 0
      %1538 = vmatpush1.bf16.msra.mxu0 %v1378
      %1539 = vmatprep.mubr.bf16.mxu0 %v344
      %1540 = vmatmul.mubr.bf16.gmra.mrb[0].mxu0 %v293
      %v1541 = vpop.f32.mrb[0].mxu0
      %v1542 = vadd.f32 %v1073, %v1541
      %v1543 = vpop.f32.mrb[0].mxu0
      %v1544 = vpop.f32.mrb[0].mxu0
      %v1545 = vadd.f32 %v1073, %v1544
      %v1546 = vpop.f32.mrb[0].mxu0
      %1547 = vmatprep.mubr.bf16.mxu0 %v352
      %1548 = vmatmul.mubr.bf16.gmra.mrb[0].mxu0 %v294
      %v1549 = vpop.f32.mrb[0].mxu0
      %v1550 = vadd.f32 %v1073, %v1549
      %v1551 = vpop.f32.mrb[0].mxu0
      %v1552 = vpop.f32.mrb[0].mxu0
      %v1553 = vadd.f32 %v1073, %v1552
      %v1554 = vpop.f32.mrb[0].mxu0
      %1555 = vmatprep.mubr.bf16.mxu0 %v360
      %1556 = vmatmul.mubr.bf16.gmra.mrb[0].mxu0 %v295
      %v1557 = vpop.f32.mrb[0].mxu0
      %v1558 = vadd.f32 %v1073, %v1557
      %v1559 = vpop.f32.mrb[0].mxu0
      %v1560 = vpop.f32.mrb[0].mxu0
      %v1561 = vadd.f32 %v1073, %v1560
      %v1562 = vpop.f32.mrb[0].mxu0
      %1563 = vmatprep.mubr.bf16.mxu0 %v368
      %1564 = vmatmul.mubr.bf16.gmra.mrb[0].mxu0 %v296
      %v1565 = vpop.f32.mrb[0].mxu0
      %v1566 = vadd.f32 %v1073, %v1565
      %v1567 = vpop.f32.mrb[0].mxu0
      %v1568 = vpop.f32.mrb[0].mxu0
      %v1569 = vadd.f32 %v1073, %v1568
      %v1570 = vpop.f32.mrb[0].mxu0
      %1571 = vmatprep.mubr.bf16.mxu0 %v376
      %1572 = vmatmul.mubr.bf16.gmra.mrb[0].mxu0 %v297
      %v1573 = vpop.f32.mrb[0].mxu0
      %v1574 = vadd.f32 %v1073, %v1573
      %v1575 = vpop.f32.mrb[0].mxu0
      %v1576 = vpop.f32.mrb[0].mxu0
      %v1577 = vadd.f32 %v1073, %v1576
      %v1578 = vpop.f32.mrb[0].mxu0
      %1579 = vmatprep.mubr.bf16.mxu0 %v384
      %1580 = vmatmul.mubr.bf16.gmra.mrb[0].mxu0 %v298
      %v1581 = vpop.f32.mrb[0].mxu0
      %v1582 = vadd.f32 %v1073, %v1581
      %v1583 = vpop.f32.mrb[0].mxu0
      %v1584 = vpop.f32.mrb[0].mxu0
      %v1585 = vadd.f32 %v1073, %v1584
      %v1586 = vpop.f32.mrb[0].mxu0
      %1587 = vmatprep.mubr.bf16.mxu0 %v392
      %1588 = vmatmul.mubr.bf16.gmra.mrb[0].mxu0 %v299
      %v1589 = vpop.f32.mrb[0].mxu0
      %v1590 = vadd.f32 %v1073, %v1589
      %v1591 = vpop.f32.mrb[0].mxu0
      %v1592 = vpop.f32.mrb[0].mxu0
      %v1593 = vadd.f32 %v1073, %v1592
      %v1594 = vpop.f32.mrb[0].mxu0
      %1595 = vmatprep.mubr.bf16.mxu0 %v400
      %1596 = vmatmul.mubr.bf16.gmra.mrb[0].mxu0 %v300
      %v1597 = vpop.f32.mrb[0].mxu0
      %v1598 = vadd.f32 %v1073, %v1597
      %v1599 = vpop.f32.mrb[0].mxu0
      %v1600 = vpop.f32.mrb[0].mxu0
      %v1601 = vadd.f32 %v1073, %v1600
      %v1602 = vpop.f32.mrb[0].mxu0
      %1603 = vmatprep.mubr.bf16.mxu0 %v408
      %1604 = vmatmul.mubr.bf16.gmra.mrb[0].mxu0 %v301
      %v1605 = vpop.f32.mrb[0].mxu0
      %v1606 = vadd.f32 %v1073, %v1605
      %v1607 = vpop.f32.mrb[0].mxu0
      %v1608 = vpop.f32.mrb[0].mxu0
      %v1609 = vadd.f32 %v1073, %v1608
      %v1610 = vpop.f32.mrb[0].mxu0
      %1611 = vmatprep.mubr.bf16.mxu0 %v416
      %1612 = vmatmul.mubr.bf16.gmra.mrb[0].mxu0 %v302
      %v1613 = vpop.f32.mrb[0].mxu0
      %v1614 = vadd.f32 %v1073, %v1613
      %v1615 = vpop.f32.mrb[0].mxu0
      %v1616 = vpop.f32.mrb[0].mxu0
      %v1617 = vadd.f32 %v1073, %v1616
      %v1618 = vpop.f32.mrb[0].mxu0
      %1619 = vmatprep.mubr.bf16.mxu0 %v424
      %1620 = vmatmul.mubr.bf16.gmra.mrb[0].mxu0 %v303
      %v1621 = vpop.f32.mrb[0].mxu0
      %v1622 = vadd.f32 %v1073, %v1621
      %v1623 = vpop.f32.mrb[0].mxu0
      %v1624 = vpop.f32.mrb[0].mxu0
      %v1625 = vadd.f32 %v1073, %v1624
      %v1626 = vpop.f32.mrb[0].mxu0
      %1627 = vmatprep.mubr.bf16.mxu0 %v432
      %1628 = vmatmul.mubr.bf16.gmra.mrb[0].mxu0 %v304
      %v1629 = vpop.f32.mrb[0].mxu0
      %v1630 = vadd.f32 %v1073, %v1629
      %v1631 = vpop.f32.mrb[0].mxu0
      %v1632 = vpop.f32.mrb[0].mxu0
      %v1633 = vadd.f32 %v1073, %v1632
      %v1634 = vpop.f32.mrb[0].mxu0
      %1635 = vmatprep.mubr.bf16.mxu0 %v440
      %1636 = vmatmul.mubr.bf16.gmra.mrb[0].mxu0 %v305
      %v1637 = vpop.f32.mrb[0].mxu0
      %v1638 = vadd.f32 %v1073, %v1637
      %v1639 = vpop.f32.mrb[0].mxu0
      %v1640 = vpop.f32.mrb[0].mxu0
      %v1641 = vadd.f32 %v1073, %v1640
      %v1642 = vpop.f32.mrb[0].mxu0
      %1643 = vmatprep.mubr.bf16.mxu0 %v448
      %1644 = vmatmul.mubr.bf16.gmra.mrb[0].mxu0 %v306
      %v1645 = vpop.f32.mrb[0].mxu0
      %v1646 = vadd.f32 %v1073, %v1645
      %v1647 = vpop.f32.mrb[0].mxu0
      %v1648 = vpop.f32.mrb[0].mxu0
      %v1649 = vadd.f32 %v1073, %v1648
      %v1650 = vpop.f32.mrb[0].mxu0
      %1651 = vmatprep.mubr.bf16.mxu0 %v456
      %1652 = vmatmul.mubr.bf16.gmra.mrb[0].mxu0 %v307
      %v1653 = vpop.f32.mrb[0].mxu0
      %v1654 = vadd.f32 %v1073, %v1653
      %v1655 = vpop.f32.mrb[0].mxu0
      %v1656 = vpop.f32.mrb[0].mxu0
      %v1657 = vadd.f32 %v1073, %v1656
      %v1658 = vpop.f32.mrb[0].mxu0
      %1659 = vmatprep.mubr.bf16.mxu0 %v464
      %1660 = vmatmul.mubr.bf16.gmra.mrb[0].mxu0 %v308
      %v1661 = vpop.f32.mrb[0].mxu0
      %v1662 = vadd.f32 %v1073, %v1661
      %v1663 = vpop.f32.mrb[0].mxu0
      %v1664 = vpop.f32.mrb[0].mxu0
      %v1665 = vadd.f32 %v1073, %v1664
      %v1666 = vpop.f32.mrb[0].mxu0
      %1667 = vmatprep.mubr.bf16.mxu0 %v472
      %1668 = vmatmul.mubr.bf16.gmra.mrb[0].mxu0 %v309
      %v1669 = vpop.f32.mrb[0].mxu0
      %v1670 = vadd.f32 %v1073, %v1669
      %v1671 = vpop.f32.mrb[0].mxu0
      %v1672 = vpop.f32.mrb[0].mxu0
      %v1673 = vadd.f32 %v1073, %v1672
      %v1674 = vpop.f32.mrb[0].mxu0
      %1675 = vmatprep.mubr.bf16.mxu0 %v475
      %1676 = vmatmul.mubr.bf16.gmra.mrb[0].mxu0 %v310
      %v1677 = vpop.f32.mrb[0].mxu0
      %v1678 = vadd.f32 %v1073, %v1677
      %v1679 = vpop.f32.mrb[0].mxu0
      %v1680 = vpop.f32.mrb[0].mxu0
      %v1681 = vadd.f32 %v1073, %v1680
      %v1682 = vpop.f32.mrb[0].mxu0
      %1683 = vdwg.mxu0
      %1684 = vmatprep.subr.bf16.mxu0 0
      %1685 = vmatpush1.bf16.msra.mxu0 %v1379
      %1686 = vmatprep.subr.bf16.mxu0 0
      %1687 = vmatpush1.bf16.msra.mxu0 %v1380
      %1688 = vmatprep.subr.bf16.mxu0 0
      %1689 = vmatpush1.bf16.msra.mxu0 %v1381
      %1690 = vmatprep.subr.bf16.mxu0 0
      %1691 = vmatpush1.bf16.msra.mxu0 %v1382
      %1692 = vmatprep.subr.bf16.mxu0 0
      %1693 = vmatpush1.bf16.msra.mxu0 %v1383
      %1694 = vmatprep.subr.bf16.mxu0 0
      %1695 = vmatpush1.bf16.msra.mxu0 %v1384
      %1696 = vmatprep.subr.bf16.mxu0 0
      %1697 = vmatpush1.bf16.msra.mxu0 %v1385
      %1698 = vmatprep.subr.bf16.mxu0 0
      %1699 = vmatpush1.bf16.msra.mxu0 %v1386
      %1700 = vmatprep.subr.bf16.mxu0 0
      %1701 = vmatpush1.bf16.msra.mxu0 %v1387
      %1702 = vmatprep.subr.bf16.mxu0 0
      %1703 = vmatpush1.bf16.msra.mxu0 %v1388
      %1704 = vmatprep.subr.bf16.mxu0 0
      %1705 = vmatpush1.bf16.msra.mxu0 %v1389
      %1706 = vmatprep.subr.bf16.mxu0 0
      %1707 = vmatpush1.bf16.msra.mxu0 %v1390
      %1708 = vmatprep.subr.bf16.mxu0 0
      %1709 = vmatpush1.bf16.msra.mxu0 %v1391
      %1710 = vmatprep.subr.bf16.mxu0 0
      %1711 = vmatpush1.bf16.msra.mxu0 %v1392
      %1712 = vmatprep.subr.bf16.mxu0 0
      %1713 = vmatpush1.bf16.msra.mxu0 %v1393
      %1714 = vmatprep.subr.bf16.mxu0 0
      %1715 = vmatpush1.bf16.msra.mxu0 %v1394
      %1716 = vmatprep.mubr.bf16.mxu0 %v560
      %1717 = vmatmul.mubr.bf16.gmra.mrb[0].mxu0 %v500
      %v1718 = vpop.f32.mrb[0].mxu0
      %v1719 = vadd.f32 %v1542, %v1718
      %v1720 = vpop.f32.mrb[0].mxu0
      %v1721 = vpop.f32.mrb[0].mxu0
      %v1722 = vadd.f32 %v1545, %v1721
      %v1723 = vpop.f32.mrb[0].mxu0
      %1724 = vmatprep.mubr.bf16.mxu0 %v504
      %1725 = vmatmul.mubr.bf16.gmra.mrb[0].mxu0 %v502
      %v1726 = vpop.f32.mrb[0].mxu0
      %v1727 = vadd.f32 %v1550, %v1726
      %v1728 = vpop.f32.mrb[0].mxu0
      %v1729 = vpop.f32.mrb[0].mxu0
      %v1730 = vadd.f32 %v1553, %v1729
      %v1731 = vpop.f32.mrb[0].mxu0
      %1732 = vmatprep.mubr.bf16.mxu0 %v506
      %1733 = vmatmul.mubr.bf16.gmra.mrb[0].mxu0 %v504
      %v1734 = vpop.f32.mrb[0].mxu0
      %v1735 = vadd.f32 %v1558, %v1734
      %v1736 = vpop.f32.mrb[0].mxu0
      %v1737 = vpop.f32.mrb[0].mxu0
      %v1738 = vadd.f32 %v1561, %v1737
      %v1739 = vpop.f32.mrb[0].mxu0
      %1740 = vmatprep.mubr.bf16.mxu0 %v508
      %1741 = vmatmul.mubr.bf16.gmra.mrb[0].mxu0 %v506
      %v1742 = vpop.f32.mrb[0].mxu0
      %v1743 = vadd.f32 %v1566, %v1742
      %v1744 = vpop.f32.mrb[0].mxu0
      %v1745 = vpop.f32.mrb[0].mxu0
      %v1746 = vadd.f32 %v1569, %v1745
      %v1747 = vpop.f32.mrb[0].mxu0
      %1748 = vmatprep.mubr.bf16.mxu0 %v510
      %1749 = vmatmul.mubr.bf16.gmra.mrb[0].mxu0 %v508
      %v1750 = vpop.f32.mrb[0].mxu0
      %v1751 = vadd.f32 %v1574, %v1750
      %v1752 = vpop.f32.mrb[0].mxu0
      %v1753 = vpop.f32.mrb[0].mxu0
      %v1754 = vadd.f32 %v1577, %v1753
      %v1755 = vpop.f32.mrb[0].mxu0
      %1756 = vmatprep.mubr.bf16.mxu0 %v512
      %1757 = vmatmul.mubr.bf16.gmra.mrb[0].mxu0 %v510
      %v1758 = vpop.f32.mrb[0].mxu0
      %v1759 = vadd.f32 %v1582, %v1758
      %v1760 = vpop.f32.mrb[0].mxu0
      %v1761 = vpop.f32.mrb[0].mxu0
      %v1762 = vadd.f32 %v1585, %v1761
      %v1763 = vpop.f32.mrb[0].mxu0
      %1764 = vmatprep.mubr.bf16.mxu0 %v514
      %1765 = vmatmul.mubr.bf16.gmra.mrb[0].mxu0 %v512
      %v1766 = vpop.f32.mrb[0].mxu0
      %v1767 = vadd.f32 %v1590, %v1766
      %v1768 = vpop.f32.mrb[0].mxu0
      %v1769 = vpop.f32.mrb[0].mxu0
      %v1770 = vadd.f32 %v1593, %v1769
      %v1771 = vpop.f32.mrb[0].mxu0
      %1772 = vmatprep.mubr.bf16.mxu0 %v516
      %1773 = vmatmul.mubr.bf16.gmra.mrb[0].mxu0 %v514
      %v1774 = vpop.f32.mrb[0].mxu0
      %v1775 = vadd.f32 %v1598, %v1774
      %v1776 = vpop.f32.mrb[0].mxu0
      %v1777 = vpop.f32.mrb[0].mxu0
      %v1778 = vadd.f32 %v1601, %v1777
      %v1779 = vpop.f32.mrb[0].mxu0
      %1780 = vmatprep.mubr.bf16.mxu0 %v518
      %1781 = vmatmul.mubr.bf16.gmra.mrb[0].mxu0 %v516
      %v1782 = vpop.f32.mrb[0].mxu0
      %v1783 = vadd.f32 %v1606, %v1782
      %v1784 = vpop.f32.mrb[0].mxu0
      %v1785 = vpop.f32.mrb[0].mxu0
      %v1786 = vadd.f32 %v1609, %v1785
      %v1787 = vpop.f32.mrb[0].mxu0
      %1788 = vmatprep.mubr.bf16.mxu0 %v520
      %1789 = vmatmul.mubr.bf16.gmra.mrb[0].mxu0 %v518
      %v1790 = vpop.f32.mrb[0].mxu0
      %v1791 = vadd.f32 %v1614, %v1790
      %v1792 = vpop.f32.mrb[0].mxu0
      %v1793 = vpop.f32.mrb[0].mxu0
      %v1794 = vadd.f32 %v1617, %v1793
      %v1795 = vpop.f32.mrb[0].mxu0
      %1796 = vmatprep.mubr.bf16.mxu0 %v522
      %1797 = vmatmul.mubr.bf16.gmra.mrb[0].mxu0 %v520
      %v1798 = vpop.f32.mrb[0].mxu0
      %v1799 = vadd.f32 %v1622, %v1798
      %v1800 = vpop.f32.mrb[0].mxu0
      %v1801 = vpop.f32.mrb[0].mxu0
      %v1802 = vadd.f32 %v1625, %v1801
      %v1803 = vpop.f32.mrb[0].mxu0
      %1804 = vmatprep.mubr.bf16.mxu0 %v524
      %1805 = vmatmul.mubr.bf16.gmra.mrb[0].mxu0 %v522
      %v1806 = vpop.f32.mrb[0].mxu0
      %v1807 = vadd.f32 %v1630, %v1806
      %v1808 = vpop.f32.mrb[0].mxu0
      %v1809 = vpop.f32.mrb[0].mxu0
      %v1810 = vadd.f32 %v1633, %v1809
      %v1811 = vpop.f32.mrb[0].mxu0
      %1812 = vmatprep.mubr.bf16.mxu0 %v526
      %1813 = vmatmul.mubr.bf16.gmra.mrb[0].mxu0 %v524
      %v1814 = vpop.f32.mrb[0].mxu0
      %v1815 = vadd.f32 %v1638, %v1814
      %v1816 = vpop.f32.mrb[0].mxu0
      %v1817 = vpop.f32.mrb[0].mxu0
      %v1818 = vadd.f32 %v1641, %v1817
      %v1819 = vpop.f32.mrb[0].mxu0
      %1820 = vmatprep.mubr.bf16.mxu0 %v528
      %1821 = vmatmul.mubr.bf16.gmra.mrb[0].mxu0 %v526
      %v1822 = vpop.f32.mrb[0].mxu0
      %v1823 = vadd.f32 %v1646, %v1822
      %v1824 = vpop.f32.mrb[0].mxu0
      %v1825 = vpop.f32.mrb[0].mxu0
      %v1826 = vadd.f32 %v1649, %v1825
      %v1827 = vpop.f32.mrb[0].mxu0
      %1828 = vmatprep.mubr.bf16.mxu0 %v530
      %1829 = vmatmul.mubr.bf16.gmra.mrb[0].mxu0 %v528
      %v1830 = vpop.f32.mrb[0].mxu0
      %v1831 = vadd.f32 %v1654, %v1830
      %v1832 = vpop.f32.mrb[0].mxu0
      %v1833 = vpop.f32.mrb[0].mxu0
      %v1834 = vadd.f32 %v1657, %v1833
      %v1835 = vpop.f32.mrb[0].mxu0
      %1836 = vmatprep.mubr.bf16.mxu0 %v532
      %1837 = vmatmul.mubr.bf16.gmra.mrb[0].mxu0 %v530
      %v1838 = vpop.f32.mrb[0].mxu0
      %v1839 = vadd.f32 %v1662, %v1838
      %v1840 = vpop.f32.mrb[0].mxu0
      %v1841 = vpop.f32.mrb[0].mxu0
      %v1842 = vadd.f32 %v1665, %v1841
      %v1843 = vpop.f32.mrb[0].mxu0
      %1844 = vmatprep.mubr.bf16.mxu0 %v562
      %1845 = vmatmul.mubr.bf16.gmra.mrb[0].mxu0 %v532
      %v1846 = vpop.f32.mrb[0].mxu0
      %v1847 = vadd.f32 %v1670, %v1846
      %v1848 = vpop.f32.mrb[0].mxu0
      %v1849 = vpop.f32.mrb[0].mxu0
      %v1850 = vadd.f32 %v1673, %v1849
      %v1851 = vpop.f32.mrb[0].mxu0
      %1852 = vmatprep.mubr.bf16.mxu0 %v561
      %1853 = vmatmul.mubr.bf16.gmra.mrb[0].mxu0 %v531
      %v1854 = vpop.f32.mrb[0].mxu0
      %v1855 = vadd.f32 %v1678, %v1854
      %v1856 = vpop.f32.mrb[0].mxu0
      %v1857 = vpop.f32.mrb[0].mxu0
      %v1858 = vadd.f32 %v1681, %v1857
      %v1859 = vpop.f32.mrb[0].mxu0
      %1860 = vdwg.mxu0
      %1861 = vmatprep.subr.bf16.mxu0 0
      %1862 = vmatpush1.bf16.msra.mxu0 %v1395
      %1863 = vmatprep.subr.bf16.mxu0 0
      %1864 = vmatpush1.bf16.msra.mxu0 %v1396
      %1865 = vmatprep.subr.bf16.mxu0 0
      %1866 = vmatpush1.bf16.msra.mxu0 %v1397
      %1867 = vmatprep.subr.bf16.mxu0 0
      %1868 = vmatpush1.bf16.msra.mxu0 %v1398
      %1869 = vmatprep.subr.bf16.mxu0 0
      %1870 = vmatpush1.bf16.msra.mxu0 %v1399
      %1871 = vmatprep.subr.bf16.mxu0 0
      %1872 = vmatpush1.bf16.msra.mxu0 %v1400
      %1873 = vmatprep.subr.bf16.mxu0 0
      %1874 = vmatpush1.bf16.msra.mxu0 %v1401
      %1875 = vmatprep.subr.bf16.mxu0 0
      %1876 = vmatpush1.bf16.msra.mxu0 %v1402
      %1877 = vmatprep.subr.bf16.mxu0 0
      %1878 = vmatpush1.bf16.msra.mxu0 %v1403
      %1879 = vmatprep.subr.bf16.mxu0 0
      %1880 = vmatpush1.bf16.msra.mxu0 %v1404
      %1881 = vmatprep.subr.bf16.mxu0 0
      %1882 = vmatpush1.bf16.msra.mxu0 %v1405
      %1883 = vmatprep.subr.bf16.mxu0 0
      %1884 = vmatpush1.bf16.msra.mxu0 %v1406
      %1885 = vmatprep.subr.bf16.mxu0 0
      %1886 = vmatpush1.bf16.msra.mxu0 %v1407
      %1887 = vmatprep.subr.bf16.mxu0 0
      %1888 = vmatpush1.bf16.msra.mxu0 %v1408
      %1889 = vmatprep.subr.bf16.mxu0 0
      %1890 = vmatpush1.bf16.msra.mxu0 %v1409
      %1891 = vmatprep.subr.bf16.mxu0 0
      %1892 = vmatpush1.bf16.msra.mxu0 %v1410
      %1893 = vmatprep.mubr.bf16.mxu0 %v680
      %1894 = vmatmul.mubr.bf16.gmra.mrb[0].mxu0 %v581
      %v1895 = vpop.f32.mrb[0].mxu0
      %v1896 = vadd.f32 %v1719, %v1895
      %v1897 = vpop.f32.mrb[0].mxu0
      %v1898 = vpop.f32.mrb[0].mxu0
      %v1899 = vadd.f32 %v1722, %v1898
      %v1900 = vpop.f32.mrb[0].mxu0
      %1901 = vmatprep.mubr.bf16.mxu0 %v682
      %1902 = vmatmul.mubr.bf16.gmra.mrb[0].mxu0 %v585
      %v1903 = vpop.f32.mrb[0].mxu0
      %v1904 = vadd.f32 %v1727, %v1903
      %v1905 = vpop.f32.mrb[0].mxu0
      %v1906 = vpop.f32.mrb[0].mxu0
      %v1907 = vadd.f32 %v1730, %v1906
      %v1908 = vpop.f32.mrb[0].mxu0
      %1909 = vmatprep.mubr.bf16.mxu0 %v684
      %1910 = vmatmul.mubr.bf16.gmra.mrb[0].mxu0 %v589
      %v1911 = vpop.f32.mrb[0].mxu0
      %v1912 = vadd.f32 %v1735, %v1911
      %v1913 = vpop.f32.mrb[0].mxu0
      %v1914 = vpop.f32.mrb[0].mxu0
      %v1915 = vadd.f32 %v1738, %v1914
      %v1916 = vpop.f32.mrb[0].mxu0
      %1917 = vmatprep.mubr.bf16.mxu0 %v686
      %1918 = vmatmul.mubr.bf16.gmra.mrb[0].mxu0 %v593
      %v1919 = vpop.f32.mrb[0].mxu0
      %v1920 = vadd.f32 %v1743, %v1919
      %v1921 = vpop.f32.mrb[0].mxu0
      %v1922 = vpop.f32.mrb[0].mxu0
      %v1923 = vadd.f32 %v1746, %v1922
      %v1924 = vpop.f32.mrb[0].mxu0
      %1925 = vmatprep.mubr.bf16.mxu0 %v688
      %1926 = vmatmul.mubr.bf16.gmra.mrb[0].mxu0 %v597
      %v1927 = vpop.f32.mrb[0].mxu0
      %v1928 = vadd.f32 %v1751, %v1927
      %v1929 = vpop.f32.mrb[0].mxu0
      %v1930 = vpop.f32.mrb[0].mxu0
      %v1931 = vadd.f32 %v1754, %v1930
      %v1932 = vpop.f32.mrb[0].mxu0
      %1933 = vmatprep.mubr.bf16.mxu0 %v690
      %1934 = vmatmul.mubr.bf16.gmra.mrb[0].mxu0 %v601
      %v1935 = vpop.f32.mrb[0].mxu0
      %v1936 = vadd.f32 %v1759, %v1935
      %v1937 = vpop.f32.mrb[0].mxu0
      %v1938 = vpop.f32.mrb[0].mxu0
      %v1939 = vadd.f32 %v1762, %v1938
      %v1940 = vpop.f32.mrb[0].mxu0
      %1941 = vmatprep.mubr.bf16.mxu0 %v692
      %1942 = vmatmul.mubr.bf16.gmra.mrb[0].mxu0 %v605
      %v1943 = vpop.f32.mrb[0].mxu0
      %v1944 = vadd.f32 %v1767, %v1943
      %v1945 = vpop.f32.mrb[0].mxu0
      %v1946 = vpop.f32.mrb[0].mxu0
      %v1947 = vadd.f32 %v1770, %v1946
      %v1948 = vpop.f32.mrb[0].mxu0
      %1949 = vmatprep.mubr.bf16.mxu0 %v694
      %1950 = vmatmul.mubr.bf16.gmra.mrb[0].mxu0 %v609
      %v1951 = vpop.f32.mrb[0].mxu0
      %v1952 = vadd.f32 %v1775, %v1951
      %v1953 = vpop.f32.mrb[0].mxu0
      %v1954 = vpop.f32.mrb[0].mxu0
      %v1955 = vadd.f32 %v1778, %v1954
      %v1956 = vpop.f32.mrb[0].mxu0
      %1957 = vmatprep.mubr.bf16.mxu0 %v696
      %1958 = vmatmul.mubr.bf16.gmra.mrb[0].mxu0 %v613
      %v1959 = vpop.f32.mrb[0].mxu0
      %v1960 = vadd.f32 %v1783, %v1959
      %v1961 = vpop.f32.mrb[0].mxu0
      %v1962 = vpop.f32.mrb[0].mxu0
      %v1963 = vadd.f32 %v1786, %v1962
      %v1964 = vpop.f32.mrb[0].mxu0
      %1965 = vmatprep.mubr.bf16.mxu0 %v698
      %1966 = vmatmul.mubr.bf16.gmra.mrb[0].mxu0 %v617
      %v1967 = vpop.f32.mrb[0].mxu0
      %v1968 = vadd.f32 %v1791, %v1967
      %v1969 = vpop.f32.mrb[0].mxu0
      %v1970 = vpop.f32.mrb[0].mxu0
      %v1971 = vadd.f32 %v1794, %v1970
      %v1972 = vpop.f32.mrb[0].mxu0
      %1973 = vmatprep.mubr.bf16.mxu0 %v700
      %1974 = vmatmul.mubr.bf16.gmra.mrb[0].mxu0 %v621
      %v1975 = vpop.f32.mrb[0].mxu0
      %v1976 = vadd.f32 %v1799, %v1975
      %v1977 = vpop.f32.mrb[0].mxu0
      %v1978 = vpop.f32.mrb[0].mxu0
      %v1979 = vadd.f32 %v1802, %v1978
      %v1980 = vpop.f32.mrb[0].mxu0
      %1981 = vmatprep.mubr.bf16.mxu0 %v702
      %1982 = vmatmul.mubr.bf16.gmra.mrb[0].mxu0 %v625
      %v1983 = vpop.f32.mrb[0].mxu0
      %v1984 = vadd.f32 %v1807, %v1983
      %v1985 = vpop.f32.mrb[0].mxu0
      %v1986 = vpop.f32.mrb[0].mxu0
      %v1987 = vadd.f32 %v1810, %v1986
      %v1988 = vpop.f32.mrb[0].mxu0
      %1989 = vmatprep.mubr.bf16.mxu0 %v704
      %1990 = vmatmul.mubr.bf16.gmra.mrb[0].mxu0 %v629
      %v1991 = vpop.f32.mrb[0].mxu0
      %v1992 = vadd.f32 %v1815, %v1991
      %v1993 = vpop.f32.mrb[0].mxu0
      %v1994 = vpop.f32.mrb[0].mxu0
      %v1995 = vadd.f32 %v1818, %v1994
      %v1996 = vpop.f32.mrb[0].mxu0
      %1997 = vmatprep.mubr.bf16.mxu0 %v706
      %1998 = vmatmul.mubr.bf16.gmra.mrb[0].mxu0 %v633
      %v1999 = vpop.f32.mrb[0].mxu0
      %v2000 = vadd.f32 %v1823, %v1999
      %v2001 = vpop.f32.mrb[0].mxu0
      %v2002 = vpop.f32.mrb[0].mxu0
      %v2003 = vadd.f32 %v1826, %v2002
      %v2004 = vpop.f32.mrb[0].mxu0
      %2005 = vmatprep.mubr.bf16.mxu0 %v708
      %2006 = vmatmul.mubr.bf16.gmra.mrb[0].mxu0 %v637
      %v2007 = vpop.f32.mrb[0].mxu0
      %v2008 = vadd.f32 %v1831, %v2007
      %v2009 = vpop.f32.mrb[0].mxu0
      %v2010 = vpop.f32.mrb[0].mxu0
      %v2011 = vadd.f32 %v1834, %v2010
      %v2012 = vpop.f32.mrb[0].mxu0
      %2013 = vmatprep.mubr.bf16.mxu0 %v710
      %2014 = vmatmul.mubr.bf16.gmra.mrb[0].mxu0 %v641
      %v2015 = vpop.f32.mrb[0].mxu0
      %v2016 = vadd.f32 %v1839, %v2015
      %v2017 = vpop.f32.mrb[0].mxu0
      %v2018 = vpop.f32.mrb[0].mxu0
      %v2019 = vadd.f32 %v1842, %v2018
      %v2020 = vpop.f32.mrb[0].mxu0
      %2021 = vmatprep.mubr.bf16.mxu0 %v712
      %2022 = vmatmul.mubr.bf16.gmra.mrb[0].mxu0 %v650
      %v2023 = vpop.f32.mrb[0].mxu0
      %v2024 = vadd.f32 %v1847, %v2023
      %v2025 = vpop.f32.mrb[0].mxu0
      %v2026 = vpop.f32.mrb[0].mxu0
      %v2027 = vadd.f32 %v1850, %v2026
      %v2028 = vpop.f32.mrb[0].mxu0
      %2029 = vmatprep.mubr.bf16.mxu0 %v714
      %2030 = vmatmul.mubr.bf16.gmra.mrb[0].mxu0 %v655
      %v2031 = vpop.f32.mrb[0].mxu0
      %v2032 = vadd.f32 %v1855, %v2031
      %v2033 = vpop.f32.mrb[0].mxu0
      %v2034 = vpop.f32.mrb[0].mxu0
      %v2035 = vadd.f32 %v1858, %v2034
      %v2036 = vpop.f32.mrb[0].mxu0
      %2037 = vdwg.mxu0
      %2038 = vmatprep.subr.bf16.mxu0 0
      %2039 = vmatpush1.bf16.msra.mxu0 %v1411
      %2040 = vmatprep.subr.bf16.mxu0 0
      %2041 = vmatpush1.bf16.msra.mxu0 %v1412
      %2042 = vmatprep.subr.bf16.mxu0 0
      %2043 = vmatpush1.bf16.msra.mxu0 %v1413
      %2044 = vmatprep.subr.bf16.mxu0 0
      %2045 = vmatpush1.bf16.msra.mxu0 %v1414
      %2046 = vmatprep.subr.bf16.mxu0 0
      %2047 = vmatpush1.bf16.msra.mxu0 %v1415
      %2048 = vmatprep.subr.bf16.mxu0 0
      %2049 = vmatpush1.bf16.msra.mxu0 %v1416
      %2050 = vmatprep.subr.bf16.mxu0 0
      %2051 = vmatpush1.bf16.msra.mxu0 %v1417
      %2052 = vmatprep.subr.bf16.mxu0 0
      %2053 = vmatpush1.bf16.msra.mxu0 %v1418
      %2054 = vmatprep.subr.bf16.mxu0 0
      %2055 = vmatpush1.bf16.msra.mxu0 %v1419
      %2056 = vmatprep.subr.bf16.mxu0 0
      %2057 = vmatpush1.bf16.msra.mxu0 %v1420
      %2058 = vmatprep.subr.bf16.mxu0 0
      %2059 = vmatpush1.bf16.msra.mxu0 %v1421
      %2060 = vmatprep.subr.bf16.mxu0 0
      %2061 = vmatpush1.bf16.msra.mxu0 %v1422
      %2062 = vmatprep.subr.bf16.mxu0 0
      %2063 = vmatpush1.bf16.msra.mxu0 %v1423
      %2064 = vmatprep.subr.bf16.mxu0 0
      %2065 = vmatpush1.bf16.msra.mxu0 %v1424
      %2066 = vmatprep.subr.bf16.mxu0 0
      %2067 = vmatpush1.bf16.msra.mxu0 %v1425
      %2068 = vmatprep.subr.bf16.mxu0 0
      %2069 = vmatpush1.bf16.msra.mxu0 %v1426
      %2070 = vmatprep.mubr.bf16.mxu0 %v768
      %2071 = vmatmul.mubr.bf16.gmra.mrb[0].mxu0 %v745
      %v2072 = vpop.f32.mrb[0].mxu0
      %v2073 = vadd.f32 %v1896, %v2072
      %v2074 = vpop.f32.mrb[0].mxu0
      %v2075 = vpop.f32.mrb[0].mxu0
      %v2076 = vadd.f32 %v1899, %v2075
      %v2077 = vpop.f32.mrb[0].mxu0
      %2078 = vmatprep.mubr.bf16.mxu0 %v772
      %2079 = vmatmul.mubr.bf16.gmra.mrb[0].mxu0 %v684
      %v2080 = vpop.f32.mrb[0].mxu0
      %v2081 = vadd.f32 %v1904, %v2080
      %v2082 = vpop.f32.mrb[0].mxu0
      %v2083 = vpop.f32.mrb[0].mxu0
      %v2084 = vadd.f32 %v1907, %v2083
      %v2085 = vpop.f32.mrb[0].mxu0
      %2086 = vmatprep.mubr.bf16.mxu0 %v776
      %2087 = vmatmul.mubr.bf16.gmra.mrb[0].mxu0 %v686
      %v2088 = vpop.f32.mrb[0].mxu0
      %v2089 = vadd.f32 %v1912, %v2088
      %v2090 = vpop.f32.mrb[0].mxu0
      %v2091 = vpop.f32.mrb[0].mxu0
      %v2092 = vadd.f32 %v1915, %v2091
      %v2093 = vpop.f32.mrb[0].mxu0
      %2094 = vmatprep.mubr.bf16.mxu0 %v780
      %2095 = vmatmul.mubr.bf16.gmra.mrb[0].mxu0 %v688
      %v2096 = vpop.f32.mrb[0].mxu0
      %v2097 = vadd.f32 %v1920, %v2096
      %v2098 = vpop.f32.mrb[0].mxu0
      %v2099 = vpop.f32.mrb[0].mxu0
      %v2100 = vadd.f32 %v1923, %v2099
      %v2101 = vpop.f32.mrb[0].mxu0
      %2102 = vmatprep.mubr.bf16.mxu0 %v784
      %2103 = vmatmul.mubr.bf16.gmra.mrb[0].mxu0 %v690
      %v2104 = vpop.f32.mrb[0].mxu0
      %v2105 = vadd.f32 %v1928, %v2104
      %v2106 = vpop.f32.mrb[0].mxu0
      %v2107 = vpop.f32.mrb[0].mxu0
      %v2108 = vadd.f32 %v1931, %v2107
      %v2109 = vpop.f32.mrb[0].mxu0
      %2110 = vmatprep.mubr.bf16.mxu0 %v788
      %2111 = vmatmul.mubr.bf16.gmra.mrb[0].mxu0 %v692
      %v2112 = vpop.f32.mrb[0].mxu0
      %v2113 = vadd.f32 %v1936, %v2112
      %v2114 = vpop.f32.mrb[0].mxu0
      %v2115 = vpop.f32.mrb[0].mxu0
      %v2116 = vadd.f32 %v1939, %v2115
      %v2117 = vpop.f32.mrb[0].mxu0
      %2118 = vmatprep.mubr.bf16.mxu0 %v792
      %2119 = vmatmul.mubr.bf16.gmra.mrb[0].mxu0 %v694
      %v2120 = vpop.f32.mrb[0].mxu0
      %v2121 = vadd.f32 %v1944, %v2120
      %v2122 = vpop.f32.mrb[0].mxu0
      %v2123 = vpop.f32.mrb[0].mxu0
      %v2124 = vadd.f32 %v1947, %v2123
      %v2125 = vpop.f32.mrb[0].mxu0
      %2126 = vmatprep.mubr.bf16.mxu0 %v796
      %2127 = vmatmul.mubr.bf16.gmra.mrb[0].mxu0 %v696
      %v2128 = vpop.f32.mrb[0].mxu0
      %v2129 = vadd.f32 %v1952, %v2128
      %v2130 = vpop.f32.mrb[0].mxu0
      %v2131 = vpop.f32.mrb[0].mxu0
      %v2132 = vadd.f32 %v1955, %v2131
      %v2133 = vpop.f32.mrb[0].mxu0
      %2134 = vmatprep.mubr.bf16.mxu0 %v800
      %2135 = vmatmul.mubr.bf16.gmra.mrb[0].mxu0 %v698
      %v2136 = vpop.f32.mrb[0].mxu0
      %v2137 = vadd.f32 %v1960, %v2136
      %v2138 = vpop.f32.mrb[0].mxu0
      %v2139 = vpop.f32.mrb[0].mxu0
      %v2140 = vadd.f32 %v1963, %v2139
      %v2141 = vpop.f32.mrb[0].mxu0
      %2142 = vmatprep.mubr.bf16.mxu0 %v804
      %2143 = vmatmul.mubr.bf16.gmra.mrb[0].mxu0 %v700
      %v2144 = vpop.f32.mrb[0].mxu0
      %v2145 = vadd.f32 %v1968, %v2144
      %v2146 = vpop.f32.mrb[0].mxu0
      %v2147 = vpop.f32.mrb[0].mxu0
      %v2148 = vadd.f32 %v1971, %v2147
      %v2149 = vpop.f32.mrb[0].mxu0
      %2150 = vmatprep.mubr.bf16.mxu0 %v808
      %2151 = vmatmul.mubr.bf16.gmra.mrb[0].mxu0 %v702
      %v2152 = vpop.f32.mrb[0].mxu0
      %v2153 = vadd.f32 %v1976, %v2152
      %v2154 = vpop.f32.mrb[0].mxu0
      %v2155 = vpop.f32.mrb[0].mxu0
      %v2156 = vadd.f32 %v1979, %v2155
      %v2157 = vpop.f32.mrb[0].mxu0
      %2158 = vmatprep.mubr.bf16.mxu0 %v812
      %2159 = vmatmul.mubr.bf16.gmra.mrb[0].mxu0 %v704
      %v2160 = vpop.f32.mrb[0].mxu0
      %v2161 = vadd.f32 %v1984, %v2160
      %v2162 = vpop.f32.mrb[0].mxu0
      %v2163 = vpop.f32.mrb[0].mxu0
      %v2164 = vadd.f32 %v1987, %v2163
      %v2165 = vpop.f32.mrb[0].mxu0
      %2166 = vmatprep.mubr.bf16.mxu0 %v816
      %2167 = vmatmul.mubr.bf16.gmra.mrb[0].mxu0 %v706
      %v2168 = vpop.f32.mrb[0].mxu0
      %v2169 = vadd.f32 %v1992, %v2168
      %v2170 = vpop.f32.mrb[0].mxu0
      %v2171 = vpop.f32.mrb[0].mxu0
      %v2172 = vadd.f32 %v1995, %v2171
      %v2173 = vpop.f32.mrb[0].mxu0
      %2174 = vmatprep.mubr.bf16.mxu0 %v820
      %2175 = vmatmul.mubr.bf16.gmra.mrb[0].mxu0 %v708
      %v2176 = vpop.f32.mrb[0].mxu0
      %v2177 = vadd.f32 %v2000, %v2176
      %v2178 = vpop.f32.mrb[0].mxu0
      %v2179 = vpop.f32.mrb[0].mxu0
      %v2180 = vadd.f32 %v2003, %v2179
      %v2181 = vpop.f32.mrb[0].mxu0
      %2182 = vmatprep.mubr.bf16.mxu0 %v824
      %2183 = vmatmul.mubr.bf16.gmra.mrb[0].mxu0 %v710
      %v2184 = vpop.f32.mrb[0].mxu0
      %v2185 = vadd.f32 %v2008, %v2184
      %v2186 = vpop.f32.mrb[0].mxu0
      %v2187 = vpop.f32.mrb[0].mxu0
      %v2188 = vadd.f32 %v2011, %v2187
      %v2189 = vpop.f32.mrb[0].mxu0
      %2190 = vmatprep.mubr.bf16.mxu0 %v828
      %2191 = vmatmul.mubr.bf16.gmra.mrb[0].mxu0 %v712
      %v2192 = vpop.f32.mrb[0].mxu0
      %v2193 = vadd.f32 %v2016, %v2192
      %v2194 = vpop.f32.mrb[0].mxu0
      %v2195 = vpop.f32.mrb[0].mxu0
      %v2196 = vadd.f32 %v2019, %v2195
      %v2197 = vpop.f32.mrb[0].mxu0
      %2198 = vmatprep.mubr.bf16.mxu0 %v837
      %2199 = vmatmul.mubr.bf16.gmra.mrb[0].mxu0 %v747
      %v2200 = vpop.f32.mrb[0].mxu0
      %v2201 = vadd.f32 %v2024, %v2200
      %v2202 = vpop.f32.mrb[0].mxu0
      %v2203 = vpop.f32.mrb[0].mxu0
      %v2204 = vadd.f32 %v2027, %v2203
      %v2205 = vpop.f32.mrb[0].mxu0
      %2206 = vmatprep.mubr.bf16.mxu0 %v846
      %2207 = vmatmul.mubr.bf16.gmra.mrb[0].mxu0 %v749
      %v2208 = vpop.f32.mrb[0].mxu0
      %v2209 = vadd.f32 %v2032, %v2208
      %v2210 = vpop.f32.mrb[0].mxu0
      %v2211 = vpop.f32.mrb[0].mxu0
      %v2212 = vadd.f32 %v2035, %v2211
      %v2213 = vpop.f32.mrb[0].mxu0
      %2214 = vdwg.mxu0
      %2215 = vmatprep.subr.bf16.mxu0 0
      %2216 = vmatpush1.bf16.msra.mxu0 %v1427
      %2217 = vmatprep.subr.bf16.mxu0 0
      %2218 = vmatpush1.bf16.msra.mxu0 %v1428
      %2219 = vmatprep.subr.bf16.mxu0 0
      %2220 = vmatpush1.bf16.msra.mxu0 %v1429
      %2221 = vmatprep.subr.bf16.mxu0 0
      %2222 = vmatpush1.bf16.msra.mxu0 %v1430
      %2223 = vmatprep.subr.bf16.mxu0 0
      %2224 = vmatpush1.bf16.msra.mxu0 %v1431
      %2225 = vmatprep.subr.bf16.mxu0 0
      %2226 = vmatpush1.bf16.msra.mxu0 %v1432
      %2227 = vmatprep.subr.bf16.mxu0 0
      %2228 = vmatpush1.bf16.msra.mxu0 %v1433
      %2229 = vmatprep.subr.bf16.mxu0 0
      %2230 = vmatpush1.bf16.msra.mxu0 %v1434
      %2231 = vmatprep.subr.bf16.mxu0 0
      %2232 = vmatpush1.bf16.msra.mxu0 0
      %2233 = vmatprep.subr.bf16.mxu0 0
      %2234 = vmatpush1.bf16.msra.mxu0 0
      %2235 = vmatprep.subr.bf16.mxu0 0
      %2236 = vmatpush1.bf16.msra.mxu0 0
      %2237 = vmatprep.subr.bf16.mxu0 0
      %2238 = vmatpush1.bf16.msra.mxu0 0
      %2239 = vmatprep.subr.bf16.mxu0 0
      %2240 = vmatpush1.bf16.msra.mxu0 0
      %2241 = vmatprep.subr.bf16.mxu0 0
      %2242 = vmatpush1.bf16.msra.mxu0 0
      %2243 = vmatprep.subr.bf16.mxu0 0
      %2244 = vmatpush1.bf16.msra.mxu0 0
      %2245 = vmatprep.subr.bf16.mxu0 0
      %2246 = vmatpush1.bf16.msra.mxu0 0
      %2247 = vmatprep.mubr.bf16.mxu0 0
      %2248 = vmatmul.mubr.bf16.gmra.mrb[0].mxu0 %v871
      %v2249 = vpop.f32.mrb[0].mxu0
      %v2250 = vadd.f32 %v2073, %v2249
      %v2251 = vpop.f32.mrb[0].mxu0
      %v2252 = vpop.f32.mrb[0].mxu0
      %v2253 = vadd.f32 %v2076, %v2252
      %v2254 = vpop.f32.mrb[0].mxu0
      %2255 = vmatprep.mubr.bf16.mxu0 0
      %2256 = vmatmul.mubr.bf16.gmra.mrb[0].mxu0 %v873
      %v2257 = vpop.f32.mrb[0].mxu0
      %v2258 = vadd.f32 %v2081, %v2257
      %v2259 = vpop.f32.mrb[0].mxu0
      %v2260 = vpop.f32.mrb[0].mxu0
      %v2261 = vadd.f32 %v2084, %v2260
      %v2262 = vpop.f32.mrb[0].mxu0
      %2263 = vmatprep.mubr.bf16.mxu0 0
      %2264 = vmatmul.mubr.bf16.gmra.mrb[0].mxu0 %v875
      %v2265 = vpop.f32.mrb[0].mxu0
      %v2266 = vadd.f32 %v2089, %v2265
      %v2267 = vpop.f32.mrb[0].mxu0
      %v2268 = vpop.f32.mrb[0].mxu0
      %v2269 = vadd.f32 %v2092, %v2268
      %v2270 = vpop.f32.mrb[0].mxu0
      %2271 = vmatprep.mubr.bf16.mxu0 0
      %2272 = vmatmul.mubr.bf16.gmra.mrb[0].mxu0 %v877
      %v2273 = vpop.f32.mrb[0].mxu0
      %v2274 = vadd.f32 %v2097, %v2273
      %v2275 = vpop.f32.mrb[0].mxu0
      %v2276 = vpop.f32.mrb[0].mxu0
      %v2277 = vadd.f32 %v2100, %v2276
      %v2278 = vpop.f32.mrb[0].mxu0
      %2279 = vmatprep.mubr.bf16.mxu0 0
      %2280 = vmatmul.mubr.bf16.gmra.mrb[0].mxu0 %v879
      %v2281 = vpop.f32.mrb[0].mxu0
      %v2282 = vadd.f32 %v2105, %v2281
      %v2283 = vpop.f32.mrb[0].mxu0
      %v2284 = vpop.f32.mrb[0].mxu0
      %v2285 = vadd.f32 %v2108, %v2284
      %v2286 = vpop.f32.mrb[0].mxu0
      %2287 = vmatprep.mubr.bf16.mxu0 0
      %2288 = vmatmul.mubr.bf16.gmra.mrb[0].mxu0 %v881
      %v2289 = vpop.f32.mrb[0].mxu0
      %v2290 = vadd.f32 %v2113, %v2289
      %v2291 = vpop.f32.mrb[0].mxu0
      %v2292 = vpop.f32.mrb[0].mxu0
      %v2293 = vadd.f32 %v2116, %v2292
      %v2294 = vpop.f32.mrb[0].mxu0
      %2295 = vmatprep.mubr.bf16.mxu0 0
      %2296 = vmatmul.mubr.bf16.gmra.mrb[0].mxu0 %v883
      %v2297 = vpop.f32.mrb[0].mxu0
      %v2298 = vadd.f32 %v2121, %v2297
      %v2299 = vpop.f32.mrb[0].mxu0
      %v2300 = vpop.f32.mrb[0].mxu0
      %v2301 = vadd.f32 %v2124, %v2300
      %v2302 = vpop.f32.mrb[0].mxu0
      %2303 = vmatprep.mubr.bf16.mxu0 0
      %2304 = vmatmul.mubr.bf16.gmra.mrb[0].mxu0 %v885
      %v2305 = vpop.f32.mrb[0].mxu0
      %v2306 = vadd.f32 %v2129, %v2305
      %v2307 = vpop.f32.mrb[0].mxu0
      %v2308 = vpop.f32.mrb[0].mxu0
      %v2309 = vadd.f32 %v2132, %v2308
      %v2310 = vpop.f32.mrb[0].mxu0
      %2311 = vmatprep.mubr.bf16.mxu0 0
      %2312 = vmatmul.mubr.bf16.gmra.mrb[0].mxu0 %v887
      %v2313 = vpop.f32.mrb[0].mxu0
      %v2314 = vadd.f32 %v2137, %v2313
      %v2315 = vpop.f32.mrb[0].mxu0
      %v2316 = vpop.f32.mrb[0].mxu0
      %v2317 = vadd.f32 %v2140, %v2316
      %v2318 = vpop.f32.mrb[0].mxu0
      %2319 = vmatprep.mubr.bf16.mxu0 0
      %2320 = vmatmul.mubr.bf16.gmra.mrb[0].mxu0 %v889
      %v2321 = vpop.f32.mrb[0].mxu0
      %v2322 = vadd.f32 %v2145, %v2321
      %v2323 = vpop.f32.mrb[0].mxu0
      %v2324 = vpop.f32.mrb[0].mxu0
      %v2325 = vadd.f32 %v2148, %v2324
      %v2326 = vpop.f32.mrb[0].mxu0
      %2327 = vmatprep.mubr.bf16.mxu0 0
      %2328 = vmatmul.mubr.bf16.gmra.mrb[0].mxu0 %v891
      %v2329 = vpop.f32.mrb[0].mxu0
      %v2330 = vadd.f32 %v2153, %v2329
      %v2331 = vpop.f32.mrb[0].mxu0
      %v2332 = vpop.f32.mrb[0].mxu0
      %v2333 = vadd.f32 %v2156, %v2332
      %v2334 = vpop.f32.mrb[0].mxu0
      %2335 = vmatprep.mubr.bf16.mxu0 0
      %2336 = vmatmul.mubr.bf16.gmra.mrb[0].mxu0 %v893
      %v2337 = vpop.f32.mrb[0].mxu0
      %v2338 = vadd.f32 %v2161, %v2337
      %v2339 = vpop.f32.mrb[0].mxu0
      %v2340 = vpop.f32.mrb[0].mxu0
      %v2341 = vadd.f32 %v2164, %v2340
      %v2342 = vpop.f32.mrb[0].mxu0
      %2343 = vmatprep.mubr.bf16.mxu0 0
      %2344 = vmatmul.mubr.bf16.gmra.mrb[0].mxu0 %v895
      %v2345 = vpop.f32.mrb[0].mxu0
      %v2346 = vadd.f32 %v2169, %v2345
      %v2347 = vpop.f32.mrb[0].mxu0
      %v2348 = vpop.f32.mrb[0].mxu0
      %v2349 = vadd.f32 %v2172, %v2348
      %v2350 = vpop.f32.mrb[0].mxu0
      %2351 = vmatprep.mubr.bf16.mxu0 0
      %2352 = vmatmul.mubr.bf16.gmra.mrb[0].mxu0 %v897
      %v2353 = vpop.f32.mrb[0].mxu0
      %v2354 = vadd.f32 %v2177, %v2353
      %v2355 = vpop.f32.mrb[0].mxu0
      %v2356 = vpop.f32.mrb[0].mxu0
      %v2357 = vadd.f32 %v2180, %v2356
      %v2358 = vpop.f32.mrb[0].mxu0
      %2359 = vmatprep.mubr.bf16.mxu0 0
      %2360 = vmatmul.mubr.bf16.gmra.mrb[0].mxu0 %v899
      %v2361 = vpop.f32.mrb[0].mxu0
      %v2362 = vadd.f32 %v2185, %v2361
      %v2363 = vpop.f32.mrb[0].mxu0
      %v2364 = vpop.f32.mrb[0].mxu0
      %v2365 = vadd.f32 %v2188, %v2364
      %v2366 = vpop.f32.mrb[0].mxu0
      %2367 = vmatprep.mubr.bf16.mxu0 0
      %2368 = vmatmul.mubr.bf16.gmra.mrb[0].mxu0 %v901
      %v2369 = vpop.f32.mrb[0].mxu0
      %v2370 = vadd.f32 %v2193, %v2369
      %v2371 = vpop.f32.mrb[0].mxu0
      %v2372 = vpop.f32.mrb[0].mxu0
      %v2373 = vadd.f32 %v2196, %v2372
      %v2374 = vpop.f32.mrb[0].mxu0
      %2375 = vmatprep.mubr.bf16.mxu0 0
      %2376 = vmatmul.mubr.bf16.gmra.mrb[0].mxu0 %v903
      %v2377 = vpop.f32.mrb[0].mxu0
      %v2378 = vadd.f32 %v2201, %v2377
      %v2379 = vpop.f32.mrb[0].mxu0
      %v2380 = vpop.f32.mrb[0].mxu0
      %v2381 = vadd.f32 %v2204, %v2380
      %v2382 = vpop.f32.mrb[0].mxu0
      %2383 = vmatprep.mubr.bf16.mxu0 0
      %2384 = vmatmul.mubr.bf16.gmra.mrb[0].mxu0 %v905
      %v2385 = vpop.f32.mrb[0].mxu0
      %v2386 = vadd.f32 %v2209, %v2385
      %v2387 = vpop.f32.mrb[0].mxu0
      %v2388 = vpop.f32.mrb[0].mxu0
      %v2389 = vadd.f32 %v2212, %v2388
      %v2390 = vpop.f32.mrb[0].mxu0
      %2391 = vdwg.mxu0
      %v2392 = vmul.f32 %v2250, 0.70710677
      %v2393 = vmul.f32 %v2253, 0.70710677
      %v2394 = vmul.f32 %v2258, 0.70710677
      %v2395 = vmul.f32 %v2261, 0.70710677
      %v2396 = vmul.f32 %v2266, 0.70710677
      %v2397 = vmul.f32 %v2269, 0.70710677
      %v2398 = vmul.f32 %v2274, 0.70710677
      %v2399 = vmul.f32 %v2277, 0.70710677
      %v2400 = vmul.f32 %v2282, 0.70710677
      %v2401 = vmul.f32 %v2285, 0.70710677
      %v2402 = vmul.f32 %v2290, 0.70710677
      %v2403 = vmul.f32 %v2293, 0.70710677
      %v2404 = vmul.f32 %v2298, 0.70710677
      %v2405 = vmul.f32 %v2301, 0.70710677
      %v2406 = vmul.f32 %v2306, 0.70710677
      %v2407 = vmul.f32 %v2309, 0.70710677
      %v2408 = vmul.f32 %v2314, 0.70710677
      %v2409 = vmul.f32 %v2317, 0.70710677
      %v2410 = vmul.f32 %v2322, 0.70710677
      %v2411 = vmul.f32 %v2325, 0.70710677
      %v2412 = vmul.f32 %v2330, 0.70710677
      %v2413 = vmul.f32 %v2333, 0.70710677
      %v2414 = vmul.f32 %v2338, 0.70710677
      %v2415 = vmul.f32 %v2341, 0.70710677
      %v2416 = vmul.f32 %v2346, 0.70710677
      %v2417 = vmul.f32 %v2349, 0.70710677
      %v2418 = vmul.f32 %v2354, 0.70710677
      %v2419 = vmul.f32 %v2357, 0.70710677
      %v2420 = vmul.f32 %v2362, 0.70710677
      %v2421 = vmul.f32 %v2365, 0.70710677
      %v2422 = vmul.f32 %v2370, 0.70710677
      %v2423 = vmul.f32 %v2373, 0.70710677
      %v2424 = vmul.f32 %v2378, 0.70710677
      %v2425 = vmul.f32 %v2381, 0.70710677
      %v2426 = vmul.f32 %v2386, 0.70710677
      %v2427 = vmul.f32 %v2389, 0.70710677
      %v2428 = vand.u32 2147483647, %v2392
      %v2429 = vand.u32 2147483647, %v2393
      %v2430 = vand.u32 2147483647, %v2394
      %v2431 = vand.u32 2147483647, %v2395
      %v2432 = vand.u32 2147483647, %v2396
      %v2433 = vand.u32 2147483647, %v2397
      %v2434 = vand.u32 2147483647, %v2398
      %v2435 = vand.u32 2147483647, %v2399
      %v2436 = vand.u32 2147483647, %v2400
      %v2437 = vand.u32 2147483647, %v2401
      %v2438 = vand.u32 2147483647, %v2402
      %v2439 = vand.u32 2147483647, %v2403
      %v2440 = vand.u32 2147483647, %v2404
      %v2441 = vand.u32 2147483647, %v2405
      %v2442 = vand.u32 2147483647, %v2406
      %v2443 = vand.u32 2147483647, %v2407
      %v2444 = vand.u32 2147483647, %v2408
      %v2445 = vand.u32 2147483647, %v2409
      %v2446 = vand.u32 2147483647, %v2410
      %v2447 = vand.u32 2147483647, %v2411
      %v2448 = vand.u32 2147483647, %v2412
      %v2449 = vand.u32 2147483647, %v2413
      %v2450 = vand.u32 2147483647, %v2414
      %v2451 = vand.u32 2147483647, %v2415
      %v2452 = vand.u32 2147483647, %v2416
      %v2453 = vand.u32 2147483647, %v2417
      %v2454 = vand.u32 2147483647, %v2418
      %v2455 = vand.u32 2147483647, %v2419
      %v2456 = vand.u32 2147483647, %v2420
      %v2457 = vand.u32 2147483647, %v2421
      %v2458 = vand.u32 2147483647, %v2422
      %v2459 = vand.u32 2147483647, %v2423
      %v2460 = vand.u32 2147483647, %v2424
      %v2461 = vand.u32 2147483647, %v2425
      %v2462 = vand.u32 2147483647, %v2426
      %v2463 = vand.u32 2147483647, %v2427
      %v2464 = vmul.f32 %v2428, 0.3275911
      %v2465 = vmul.f32 %v2429, 0.3275911
      %v2466 = vmul.f32 %v2430, 0.3275911
      %v2467 = vmul.f32 %v2431, 0.3275911
      %v2468 = vmul.f32 %v2432, 0.3275911
      %v2469 = vmul.f32 %v2433, 0.3275911
      %v2470 = vmul.f32 %v2434, 0.3275911
      %v2471 = vmul.f32 %v2435, 0.3275911
      %v2472 = vmul.f32 %v2436, 0.3275911
      %v2473 = vmul.f32 %v2437, 0.3275911
      %v2474 = vmul.f32 %v2438, 0.3275911
      %v2475 = vmul.f32 %v2439, 0.3275911
      %v2476 = vmul.f32 %v2440, 0.3275911
      %v2477 = vmul.f32 %v2441, 0.3275911
      %v2478 = vmul.f32 %v2442, 0.3275911
      %v2479 = vmul.f32 %v2443, 0.3275911
      %v2480 = vmul.f32 %v2444, 0.3275911
      %v2481 = vmul.f32 %v2445, 0.3275911
      %v2482 = vmul.f32 %v2446, 0.3275911
      %v2483 = vmul.f32 %v2447, 0.3275911
      %v2484 = vmul.f32 %v2448, 0.3275911
      %v2485 = vmul.f32 %v2449, 0.3275911
      %v2486 = vmul.f32 %v2450, 0.3275911
      %v2487 = vmul.f32 %v2451, 0.3275911
      %v2488 = vmul.f32 %v2452, 0.3275911
      %v2489 = vmul.f32 %v2453, 0.3275911
      %v2490 = vmul.f32 %v2454, 0.3275911
      %v2491 = vmul.f32 %v2455, 0.3275911
      %v2492 = vmul.f32 %v2456, 0.3275911
      %v2493 = vmul.f32 %v2457, 0.3275911
      %v2494 = vmul.f32 %v2458, 0.3275911
      %v2495 = vmul.f32 %v2459, 0.3275911
      %v2496 = vmul.f32 %v2460, 0.3275911
      %v2497 = vmul.f32 %v2461, 0.3275911
      %v2498 = vmul.f32 %v2462, 0.3275911
      %v2499 = vmul.f32 %v2463, 0.3275911
      %v2500 = vadd.f32 %v2464, 1.0
      %v2501 = vadd.f32 %v2465, 1.0
      %v2502 = vadd.f32 %v2466, 1.0
      %v2503 = vadd.f32 %v2467, 1.0
      %v2504 = vadd.f32 %v2468, 1.0
      %v2505 = vadd.f32 %v2469, 1.0
      %v2506 = vadd.f32 %v2470, 1.0
      %v2507 = vadd.f32 %v2471, 1.0
      %v2508 = vadd.f32 %v2472, 1.0
      %v2509 = vadd.f32 %v2473, 1.0
      %v2510 = vadd.f32 %v2474, 1.0
      %v2511 = vadd.f32 %v2475, 1.0
      %v2512 = vadd.f32 %v2476, 1.0
      %v2513 = vadd.f32 %v2477, 1.0
      %v2514 = vadd.f32 %v2478, 1.0
      %v2515 = vadd.f32 %v2479, 1.0
      %v2516 = vadd.f32 %v2480, 1.0
      %v2517 = vadd.f32 %v2481, 1.0
      %v2518 = vadd.f32 %v2482, 1.0
      %v2519 = vadd.f32 %v2483, 1.0
      %v2520 = vadd.f32 %v2484, 1.0
      %v2521 = vadd.f32 %v2485, 1.0
      %v2522 = vadd.f32 %v2486, 1.0
      %v2523 = vadd.f32 %v2487, 1.0
      %v2524 = vadd.f32 %v2488, 1.0
      %v2525 = vadd.f32 %v2489, 1.0
      %v2526 = vadd.f32 %v2490, 1.0
      %v2527 = vadd.f32 %v2491, 1.0
      %v2528 = vadd.f32 %v2492, 1.0
      %v2529 = vadd.f32 %v2493, 1.0
      %v2530 = vadd.f32 %v2494, 1.0
      %v2531 = vadd.f32 %v2495, 1.0
      %v2532 = vadd.f32 %v2496, 1.0
      %v2533 = vadd.f32 %v2497, 1.0
      %v2534 = vadd.f32 %v2498, 1.0
      %v2535 = vadd.f32 %v2499, 1.0
      %v2536 = vrcp.pop %v2500
      %v2537 = vmul.f32 1.0, %v2536
      %v2538 = vrcp.pop %v2501
      %v2539 = vmul.f32 1.0, %v2538
      %v2540 = vrcp.pop %v2502
      %v2541 = vmul.f32 1.0, %v2540
      %v2542 = vrcp.pop %v2503
      %v2543 = vmul.f32 1.0, %v2542
      %v2544 = vrcp.pop %v2504
      %v2545 = vmul.f32 1.0, %v2544
      %v2546 = vrcp.pop %v2505
      %v2547 = vmul.f32 1.0, %v2546
      %v2548 = vrcp.pop %v2506
      %v2549 = vmul.f32 1.0, %v2548
      %v2550 = vrcp.pop %v2507
      %v2551 = vmul.f32 1.0, %v2550
      %v2552 = vrcp.pop %v2508
      %v2553 = vmul.f32 1.0, %v2552
      %v2554 = vrcp.pop %v2509
      %v2555 = vmul.f32 1.0, %v2554
      %v2556 = vrcp.pop %v2510
      %v2557 = vmul.f32 1.0, %v2556
      %v2558 = vrcp.pop %v2511
      %v2559 = vmul.f32 1.0, %v2558
      %v2560 = vrcp.pop %v2512
      %v2561 = vmul.f32 1.0, %v2560
      %v2562 = vrcp.pop %v2513
      %v2563 = vmul.f32 1.0, %v2562
      %v2564 = vrcp.pop %v2514
      %v2565 = vmul.f32 1.0, %v2564
      %v2566 = vrcp.pop %v2515
      %v2567 = vmul.f32 1.0, %v2566
      %v2568 = vrcp.pop %v2516
      %v2569 = vmul.f32 1.0, %v2568
      %v2570 = vrcp.pop %v2517
      %v2571 = vmul.f32 1.0, %v2570
      %v2572 = vrcp.pop %v2518
      %v2573 = vmul.f32 1.0, %v2572
      %v2574 = vrcp.pop %v2519
      %v2575 = vmul.f32 1.0, %v2574
      %v2576 = vrcp.pop %v2520
      %v2577 = vmul.f32 1.0, %v2576
      %v2578 = vrcp.pop %v2521
      %v2579 = vmul.f32 1.0, %v2578
      %v2580 = vrcp.pop %v2522
      %v2581 = vmul.f32 1.0, %v2580
      %v2582 = vrcp.pop %v2523
      %v2583 = vmul.f32 1.0, %v2582
      %v2584 = vrcp.pop %v2524
      %v2585 = vmul.f32 1.0, %v2584
      %v2586 = vrcp.pop %v2525
      %v2587 = vmul.f32 1.0, %v2586
      %v2588 = vrcp.pop %v2526
      %v2589 = vmul.f32 1.0, %v2588
      %v2590 = vrcp.pop %v2527
      %v2591 = vmul.f32 1.0, %v2590
      %v2592 = vrcp.pop %v2528
      %v2593 = vmul.f32 1.0, %v2592
      %v2594 = vrcp.pop %v2529
      %v2595 = vmul.f32 1.0, %v2594
      %v2596 = vrcp.pop %v2530
      %v2597 = vmul.f32 1.0, %v2596
      %v2598 = vrcp.pop %v2531
      %v2599 = vmul.f32 1.0, %v2598
      %v2600 = vrcp.pop %v2532
      %v2601 = vmul.f32 1.0, %v2600
      %v2602 = vrcp.pop %v2533
      %v2603 = vmul.f32 1.0, %v2602
      %v2604 = vrcp.pop %v2534
      %v2605 = vmul.f32 1.0, %v2604
      %v2606 = vrcp.pop %v2535
      %v2607 = vmul.f32 1.0, %v2606
      %v2608 = vmul.f32 %v2537, 1.0614054
      %v2609 = vmul.f32 %v2539, 1.0614054
      %v2610 = vmul.f32 %v2541, 1.0614054
      %v2611 = vmul.f32 %v2543, 1.0614054
      %v2612 = vmul.f32 %v2545, 1.0614054
      %v2613 = vmul.f32 %v2547, 1.0614054
      %v2614 = vmul.f32 %v2549, 1.0614054
      %v2615 = vmul.f32 %v2551, 1.0614054
      %v2616 = vmul.f32 %v2553, 1.0614054
      %v2617 = vmul.f32 %v2555, 1.0614054
      %v2618 = vmul.f32 %v2557, 1.0614054
      %v2619 = vmul.f32 %v2559, 1.0614054
      %v2620 = vmul.f32 %v2561, 1.0614054
      %v2621 = vmul.f32 %v2563, 1.0614054
      %v2622 = vmul.f32 %v2565, 1.0614054
      %v2623 = vmul.f32 %v2567, 1.0614054
      %v2624 = vmul.f32 %v2569, 1.0614054
      %v2625 = vmul.f32 %v2571, 1.0614054
      %v2626 = vmul.f32 %v2573, 1.0614054
      %v2627 = vmul.f32 %v2575, 1.0614054
      %v2628 = vmul.f32 %v2577, 1.0614054
      %v2629 = vmul.f32 %v2579, 1.0614054
      %v2630 = vmul.f32 %v2581, 1.0614054
      %v2631 = vmul.f32 %v2583, 1.0614054
      %v2632 = vmul.f32 %v2585, 1.0614054
      %v2633 = vmul.f32 %v2587, 1.0614054
      %v2634 = vmul.f32 %v2589, 1.0614054
      %v2635 = vmul.f32 %v2591, 1.0614054
      %v2636 = vmul.f32 %v2593, 1.0614054
      %v2637 = vmul.f32 %v2595, 1.0614054
      %v2638 = vmul.f32 %v2597, 1.0614054
      %v2639 = vmul.f32 %v2599, 1.0614054
      %v2640 = vmul.f32 %v2601, 1.0614054
      %v2641 = vmul.f32 %v2603, 1.0614054
      %v2642 = vmul.f32 %v2605, 1.0614054
      %v2643 = vmul.f32 %v2607, 1.0614054
      %v2644 = vadd.f32 %v2608, -1.4531521
      %v2645 = vadd.f32 %v2609, -1.4531521
      %v2646 = vadd.f32 %v2610, -1.4531521
      %v2647 = vadd.f32 %v2611, -1.4531521
      %v2648 = vadd.f32 %v2612, -1.4531521
      %v2649 = vadd.f32 %v2613, -1.4531521
      %v2650 = vadd.f32 %v2614, -1.4531521
      %v2651 = vadd.f32 %v2615, -1.4531521
      %v2652 = vadd.f32 %v2616, -1.4531521
      %v2653 = vadd.f32 %v2617, -1.4531521
      %v2654 = vadd.f32 %v2618, -1.4531521
      %v2655 = vadd.f32 %v2619, -1.4531521
      %v2656 = vadd.f32 %v2620, -1.4531521
      %v2657 = vadd.f32 %v2621, -1.4531521
      %v2658 = vadd.f32 %v2622, -1.4531521
      %v2659 = vadd.f32 %v2623, -1.4531521
      %v2660 = vadd.f32 %v2624, -1.4531521
      %v2661 = vadd.f32 %v2625, -1.4531521
      %v2662 = vadd.f32 %v2626, -1.4531521
      %v2663 = vadd.f32 %v2627, -1.4531521
      %v2664 = vadd.f32 %v2628, -1.4531521
      %v2665 = vadd.f32 %v2629, -1.4531521
      %v2666 = vadd.f32 %v2630, -1.4531521
      %v2667 = vadd.f32 %v2631, -1.4531521
      %v2668 = vadd.f32 %v2632, -1.4531521
      %v2669 = vadd.f32 %v2633, -1.4531521
      %v2670 = vadd.f32 %v2634, -1.4531521
      %v2671 = vadd.f32 %v2635, -1.4531521
      %v2672 = vadd.f32 %v2636, -1.4531521
      %v2673 = vadd.f32 %v2637, -1.4531521
      %v2674 = vadd.f32 %v2638, -1.4531521
      %v2675 = vadd.f32 %v2639, -1.4531521
      %v2676 = vadd.f32 %v2640, -1.4531521
      %v2677 = vadd.f32 %v2641, -1.4531521
      %v2678 = vadd.f32 %v2642, -1.4531521
      %v2679 = vadd.f32 %v2643, -1.4531521
      %v2680 = vmul.f32 %v2537, %v2644
      %v2681 = vmul.f32 %v2539, %v2645
      %v2682 = vmul.f32 %v2541, %v2646
      %v2683 = vmul.f32 %v2543, %v2647
      %v2684 = vmul.f32 %v2545, %v2648
      %v2685 = vmul.f32 %v2547, %v2649
      %v2686 = vmul.f32 %v2549, %v2650
      %v2687 = vmul.f32 %v2551, %v2651
      %v2688 = vmul.f32 %v2553, %v2652
      %v2689 = vmul.f32 %v2555, %v2653
      %v2690 = vmul.f32 %v2557, %v2654
      %v2691 = vmul.f32 %v2559, %v2655
      %v2692 = vmul.f32 %v2561, %v2656
      %v2693 = vmul.f32 %v2563, %v2657
      %v2694 = vmul.f32 %v2565, %v2658
      %v2695 = vmul.f32 %v2567, %v2659
      %v2696 = vmul.f32 %v2569, %v2660
      %v2697 = vmul.f32 %v2571, %v2661
      %v2698 = vmul.f32 %v2573, %v2662
      %v2699 = vmul.f32 %v2575, %v2663
      %v2700 = vmul.f32 %v2577, %v2664
      %v2701 = vmul.f32 %v2579, %v2665
      %v2702 = vmul.f32 %v2581, %v2666
      %v2703 = vmul.f32 %v2583, %v2667
      %v2704 = vmul.f32 %v2585, %v2668
      %v2705 = vmul.f32 %v2587, %v2669
      %v2706 = vmul.f32 %v2589, %v2670
      %v2707 = vmul.f32 %v2591, %v2671
      %v2708 = vmul.f32 %v2593, %v2672
      %v2709 = vmul.f32 %v2595, %v2673
      %v2710 = vmul.f32 %v2597, %v2674
      %v2711 = vmul.f32 %v2599, %v2675
      %v2712 = vmul.f32 %v2601, %v2676
      %v2713 = vmul.f32 %v2603, %v2677
      %v2714 = vmul.f32 %v2605, %v2678
      %v2715 = vmul.f32 %v2607, %v2679
      %v2716 = vadd.f32 %v2680, 1.4214138
      %v2717 = vadd.f32 %v2681, 1.4214138
      %v2718 = vadd.f32 %v2682, 1.4214138
      %v2719 = vadd.f32 %v2683, 1.4214138
      %v2720 = vadd.f32 %v2684, 1.4214138
      %v2721 = vadd.f32 %v2685, 1.4214138
      %v2722 = vadd.f32 %v2686, 1.4214138
      %v2723 = vadd.f32 %v2687, 1.4214138
      %v2724 = vadd.f32 %v2688, 1.4214138
      %v2725 = vadd.f32 %v2689, 1.4214138
      %v2726 = vadd.f32 %v2690, 1.4214138
      %v2727 = vadd.f32 %v2691, 1.4214138
      %v2728 = vadd.f32 %v2692, 1.4214138
      %v2729 = vadd.f32 %v2693, 1.4214138
      %v2730 = vadd.f32 %v2694, 1.4214138
      %v2731 = vadd.f32 %v2695, 1.4214138
      %v2732 = vadd.f32 %v2696, 1.4214138
      %v2733 = vadd.f32 %v2697, 1.4214138
      %v2734 = vadd.f32 %v2698, 1.4214138
      %v2735 = vadd.f32 %v2699, 1.4214138
      %v2736 = vadd.f32 %v2700, 1.4214138
      %v2737 = vadd.f32 %v2701, 1.4214138
      %v2738 = vadd.f32 %v2702, 1.4214138
      %v2739 = vadd.f32 %v2703, 1.4214138
      %v2740 = vadd.f32 %v2704, 1.4214138
      %v2741 = vadd.f32 %v2705, 1.4214138
      %v2742 = vadd.f32 %v2706, 1.4214138
      %v2743 = vadd.f32 %v2707, 1.4214138
      %v2744 = vadd.f32 %v2708, 1.4214138
      %v2745 = vadd.f32 %v2709, 1.4214138
      %v2746 = vadd.f32 %v2710, 1.4214138
      %v2747 = vadd.f32 %v2711, 1.4214138
      %v2748 = vadd.f32 %v2712, 1.4214138
      %v2749 = vadd.f32 %v2713, 1.4214138
      %v2750 = vadd.f32 %v2714, 1.4214138
      %v2751 = vadd.f32 %v2715, 1.4214138
      %v2752 = vmul.f32 %v2537, %v2716
      %v2753 = vmul.f32 %v2539, %v2717
      %v2754 = vmul.f32 %v2541, %v2718
      %v2755 = vmul.f32 %v2543, %v2719
      %v2756 = vmul.f32 %v2545, %v2720
      %v2757 = vmul.f32 %v2547, %v2721
      %v2758 = vmul.f32 %v2549, %v2722
      %v2759 = vmul.f32 %v2551, %v2723
      %v2760 = vmul.f32 %v2553, %v2724
      %v2761 = vmul.f32 %v2555, %v2725
      %v2762 = vmul.f32 %v2557, %v2726
      %v2763 = vmul.f32 %v2559, %v2727
      %v2764 = vmul.f32 %v2561, %v2728
      %v2765 = vmul.f32 %v2563, %v2729
      %v2766 = vmul.f32 %v2565, %v2730
      %v2767 = vmul.f32 %v2567, %v2731
      %v2768 = vmul.f32 %v2569, %v2732
      %v2769 = vmul.f32 %v2571, %v2733
      %v2770 = vmul.f32 %v2573, %v2734
      %v2771 = vmul.f32 %v2575, %v2735
      %v2772 = vmul.f32 %v2577, %v2736
      %v2773 = vmul.f32 %v2579, %v2737
      %v2774 = vmul.f32 %v2581, %v2738
      %v2775 = vmul.f32 %v2583, %v2739
      %v2776 = vmul.f32 %v2585, %v2740
      %v2777 = vmul.f32 %v2587, %v2741
      %v2778 = vmul.f32 %v2589, %v2742
      %v2779 = vmul.f32 %v2591, %v2743
      %v2780 = vmul.f32 %v2593, %v2744
      %v2781 = vmul.f32 %v2595, %v2745
      %v2782 = vmul.f32 %v2597, %v2746
      %v2783 = vmul.f32 %v2599, %v2747
      %v2784 = vmul.f32 %v2601, %v2748
      %v2785 = vmul.f32 %v2603, %v2749
      %v2786 = vmul.f32 %v2605, %v2750
      %v2787 = vmul.f32 %v2607, %v2751
      %v2788 = vadd.f32 %v2752, -0.28449672
      %v2789 = vadd.f32 %v2753, -0.28449672
      %v2790 = vadd.f32 %v2754, -0.28449672
      %v2791 = vadd.f32 %v2755, -0.28449672
      %v2792 = vadd.f32 %v2756, -0.28449672
      %v2793 = vadd.f32 %v2757, -0.28449672
      %v2794 = vadd.f32 %v2758, -0.28449672
      %v2795 = vadd.f32 %v2759, -0.28449672
      %v2796 = vadd.f32 %v2760, -0.28449672
      %v2797 = vadd.f32 %v2761, -0.28449672
      %v2798 = vadd.f32 %v2762, -0.28449672
      %v2799 = vadd.f32 %v2763, -0.28449672
      %v2800 = vadd.f32 %v2764, -0.28449672
      %v2801 = vadd.f32 %v2765, -0.28449672
      %v2802 = vadd.f32 %v2766, -0.28449672
      %v2803 = vadd.f32 %v2767, -0.28449672
      %v2804 = vadd.f32 %v2768, -0.28449672
      %v2805 = vadd.f32 %v2769, -0.28449672
      %v2806 = vadd.f32 %v2770, -0.28449672
      %v2807 = vadd.f32 %v2771, -0.28449672
      %v2808 = vadd.f32 %v2772, -0.28449672
      %v2809 = vadd.f32 %v2773, -0.28449672
      %v2810 = vadd.f32 %v2774, -0.28449672
      %v2811 = vadd.f32 %v2775, -0.28449672
      %v2812 = vadd.f32 %v2776, -0.28449672
      %v2813 = vadd.f32 %v2777, -0.28449672
      %v2814 = vadd.f32 %v2778, -0.28449672
      %v2815 = vadd.f32 %v2779, -0.28449672
      %v2816 = vadd.f32 %v2780, -0.28449672
      %v2817 = vadd.f32 %v2781, -0.28449672
      %v2818 = vadd.f32 %v2782, -0.28449672
      %v2819 = vadd.f32 %v2783, -0.28449672
      %v2820 = vadd.f32 %v2784, -0.28449672
      %v2821 = vadd.f32 %v2785, -0.28449672
      %v2822 = vadd.f32 %v2786, -0.28449672
      %v2823 = vadd.f32 %v2787, -0.28449672
      %v2824 = vmul.f32 %v2537, %v2788
      %v2825 = vmul.f32 %v2539, %v2789
      %v2826 = vmul.f32 %v2541, %v2790
      %v2827 = vmul.f32 %v2543, %v2791
      %v2828 = vmul.f32 %v2545, %v2792
      %v2829 = vmul.f32 %v2547, %v2793
      %v2830 = vmul.f32 %v2549, %v2794
      %v2831 = vmul.f32 %v2551, %v2795
      %v2832 = vmul.f32 %v2553, %v2796
      %v2833 = vmul.f32 %v2555, %v2797
      %v2834 = vmul.f32 %v2557, %v2798
      %v2835 = vmul.f32 %v2559, %v2799
      %v2836 = vmul.f32 %v2561, %v2800
      %v2837 = vmul.f32 %v2563, %v2801
      %v2838 = vmul.f32 %v2565, %v2802
      %v2839 = vmul.f32 %v2567, %v2803
      %v2840 = vmul.f32 %v2569, %v2804
      %v2841 = vmul.f32 %v2571, %v2805
      %v2842 = vmul.f32 %v2573, %v2806
      %v2843 = vmul.f32 %v2575, %v2807
      %v2844 = vmul.f32 %v2577, %v2808
      %v2845 = vmul.f32 %v2579, %v2809
      %v2846 = vmul.f32 %v2581, %v2810
      %v2847 = vmul.f32 %v2583, %v2811
      %v2848 = vmul.f32 %v2585, %v2812
      %v2849 = vmul.f32 %v2587, %v2813
      %v2850 = vmul.f32 %v2589, %v2814
      %v2851 = vmul.f32 %v2591, %v2815
      %v2852 = vmul.f32 %v2593, %v2816
      %v2853 = vmul.f32 %v2595, %v2817
      %v2854 = vmul.f32 %v2597, %v2818
      %v2855 = vmul.f32 %v2599, %v2819
      %v2856 = vmul.f32 %v2601, %v2820
      %v2857 = vmul.f32 %v2603, %v2821
      %v2858 = vmul.f32 %v2605, %v2822
      %v2859 = vmul.f32 %v2607, %v2823
      %v2860 = vadd.f32 %v2824, 0.2548296
      %v2861 = vadd.f32 %v2825, 0.2548296
      %v2862 = vadd.f32 %v2826, 0.2548296
      %v2863 = vadd.f32 %v2827, 0.2548296
      %v2864 = vadd.f32 %v2828, 0.2548296
      %v2865 = vadd.f32 %v2829, 0.2548296
      %v2866 = vadd.f32 %v2830, 0.2548296
      %v2867 = vadd.f32 %v2831, 0.2548296
      %v2868 = vadd.f32 %v2832, 0.2548296
      %v2869 = vadd.f32 %v2833, 0.2548296
      %v2870 = vadd.f32 %v2834, 0.2548296
      %v2871 = vadd.f32 %v2835, 0.2548296
      %v2872 = vadd.f32 %v2836, 0.2548296
      %v2873 = vadd.f32 %v2837, 0.2548296
      %v2874 = vadd.f32 %v2838, 0.2548296
      %v2875 = vadd.f32 %v2839, 0.2548296
      %v2876 = vadd.f32 %v2840, 0.2548296
      %v2877 = vadd.f32 %v2841, 0.2548296
      %v2878 = vadd.f32 %v2842, 0.2548296
      %v2879 = vadd.f32 %v2843, 0.2548296
      %v2880 = vadd.f32 %v2844, 0.2548296
      %v2881 = vadd.f32 %v2845, 0.2548296
      %v2882 = vadd.f32 %v2846, 0.2548296
      %v2883 = vadd.f32 %v2847, 0.2548296
      %v2884 = vadd.f32 %v2848, 0.2548296
      %v2885 = vadd.f32 %v2849, 0.2548296
      %v2886 = vadd.f32 %v2850, 0.2548296
      %v2887 = vadd.f32 %v2851, 0.2548296
      %v2888 = vadd.f32 %v2852, 0.2548296
      %v2889 = vadd.f32 %v2853, 0.2548296
      %v2890 = vadd.f32 %v2854, 0.2548296
      %v2891 = vadd.f32 %v2855, 0.2548296
      %v2892 = vadd.f32 %v2856, 0.2548296
      %v2893 = vadd.f32 %v2857, 0.2548296
      %v2894 = vadd.f32 %v2858, 0.2548296
      %v2895 = vadd.f32 %v2859, 0.2548296
      %v2896 = vmul.f32 %v2537, %v2860
      %v2897 = vmul.f32 %v2539, %v2861
      %v2898 = vmul.f32 %v2541, %v2862
      %v2899 = vmul.f32 %v2543, %v2863
      %v2900 = vmul.f32 %v2545, %v2864
      %v2901 = vmul.f32 %v2547, %v2865
      %v2902 = vmul.f32 %v2549, %v2866
      %v2903 = vmul.f32 %v2551, %v2867
      %v2904 = vmul.f32 %v2553, %v2868
      %v2905 = vmul.f32 %v2555, %v2869
      %v2906 = vmul.f32 %v2557, %v2870
      %v2907 = vmul.f32 %v2559, %v2871
      %v2908 = vmul.f32 %v2561, %v2872
      %v2909 = vmul.f32 %v2563, %v2873
      %v2910 = vmul.f32 %v2565, %v2874
      %v2911 = vmul.f32 %v2567, %v2875
      %v2912 = vmul.f32 %v2569, %v2876
      %v2913 = vmul.f32 %v2571, %v2877
      %v2914 = vmul.f32 %v2573, %v2878
      %v2915 = vmul.f32 %v2575, %v2879
      %v2916 = vmul.f32 %v2577, %v2880
      %v2917 = vmul.f32 %v2579, %v2881
      %v2918 = vmul.f32 %v2581, %v2882
      %v2919 = vmul.f32 %v2583, %v2883
      %v2920 = vmul.f32 %v2585, %v2884
      %v2921 = vmul.f32 %v2587, %v2885
      %v2922 = vmul.f32 %v2589, %v2886
      %v2923 = vmul.f32 %v2591, %v2887
      %v2924 = vmul.f32 %v2593, %v2888
      %v2925 = vmul.f32 %v2595, %v2889
      %v2926 = vmul.f32 %v2597, %v2890
      %v2927 = vmul.f32 %v2599, %v2891
      %v2928 = vmul.f32 %v2601, %v2892
      %v2929 = vmul.f32 %v2603, %v2893
      %v2930 = vmul.f32 %v2605, %v2894
      %v2931 = vmul.f32 %v2607, %v2895
      %v2932 = vsub.f32 0.0, %v2428
      %v2933 = vsub.f32 0.0, %v2429
      %v2934 = vsub.f32 0.0, %v2430
      %v2935 = vsub.f32 0.0, %v2431
      %v2936 = vsub.f32 0.0, %v2432
      %v2937 = vsub.f32 0.0, %v2433
      %v2938 = vsub.f32 0.0, %v2434
      %v2939 = vsub.f32 0.0, %v2435
      %v2940 = vsub.f32 0.0, %v2436
      %v2941 = vsub.f32 0.0, %v2437
      %v2942 = vsub.f32 0.0, %v2438
      %v2943 = vsub.f32 0.0, %v2439
      %v2944 = vsub.f32 0.0, %v2440
      %v2945 = vsub.f32 0.0, %v2441
      %v2946 = vsub.f32 0.0, %v2442
      %v2947 = vsub.f32 0.0, %v2443
      %v2948 = vsub.f32 0.0, %v2444
      %v2949 = vsub.f32 0.0, %v2445
      %v2950 = vsub.f32 0.0, %v2446
      %v2951 = vsub.f32 0.0, %v2447
      %v2952 = vsub.f32 0.0, %v2448
      %v2953 = vsub.f32 0.0, %v2449
      %v2954 = vsub.f32 0.0, %v2450
      %v2955 = vsub.f32 0.0, %v2451
      %v2956 = vsub.f32 0.0, %v2452
      %v2957 = vsub.f32 0.0, %v2453
      %v2958 = vsub.f32 0.0, %v2454
      %v2959 = vsub.f32 0.0, %v2455
      %v2960 = vsub.f32 0.0, %v2456
      %v2961 = vsub.f32 0.0, %v2457
      %v2962 = vsub.f32 0.0, %v2458
      %v2963 = vsub.f32 0.0, %v2459
      %v2964 = vsub.f32 0.0, %v2460
      %v2965 = vsub.f32 0.0, %v2461
      %v2966 = vsub.f32 0.0, %v2462
      %v2967 = vsub.f32 0.0, %v2463
      %v2968 = vmul.f32 %v2932, %v2428
      %v2969 = vmul.f32 %v2933, %v2429
      %v2970 = vmul.f32 %v2934, %v2430
      %v2971 = vmul.f32 %v2935, %v2431
      %v2972 = vmul.f32 %v2936, %v2432
      %v2973 = vmul.f32 %v2937, %v2433
      %v2974 = vmul.f32 %v2938, %v2434
      %v2975 = vmul.f32 %v2939, %v2435
      %v2976 = vmul.f32 %v2940, %v2436
      %v2977 = vmul.f32 %v2941, %v2437
      %v2978 = vmul.f32 %v2942, %v2438
      %v2979 = vmul.f32 %v2943, %v2439
      %v2980 = vmul.f32 %v2944, %v2440
      %v2981 = vmul.f32 %v2945, %v2441
      %v2982 = vmul.f32 %v2946, %v2442
      %v2983 = vmul.f32 %v2947, %v2443
      %v2984 = vmul.f32 %v2948, %v2444
      %v2985 = vmul.f32 %v2949, %v2445
      %v2986 = vmul.f32 %v2950, %v2446
      %v2987 = vmul.f32 %v2951, %v2447
      %v2988 = vmul.f32 %v2952, %v2448
      %v2989 = vmul.f32 %v2953, %v2449
      %v2990 = vmul.f32 %v2954, %v2450
      %v2991 = vmul.f32 %v2955, %v2451
      %v2992 = vmul.f32 %v2956, %v2452
      %v2993 = vmul.f32 %v2957, %v2453
      %v2994 = vmul.f32 %v2958, %v2454
      %v2995 = vmul.f32 %v2959, %v2455
      %v2996 = vmul.f32 %v2960, %v2456
      %v2997 = vmul.f32 %v2961, %v2457
      %v2998 = vmul.f32 %v2962, %v2458
      %v2999 = vmul.f32 %v2963, %v2459
      %v3000 = vmul.f32 %v2964, %v2460
      %v3001 = vmul.f32 %v2965, %v2461
      %v3002 = vmul.f32 %v2966, %v2462
      %v3003 = vmul.f32 %v2967, %v2463
      %v3004 = vmul.f32 %v2968, 1.442695
      %v3005 = vpow.pop %v3004
      %v3006 = vmul.f32 %v2969, 1.442695
      %v3007 = vpow.pop %v3006
      %v3008 = vmul.f32 %v2970, 1.442695
      %v3009 = vpow.pop %v3008
      %v3010 = vmul.f32 %v2971, 1.442695
      %v3011 = vpow.pop %v3010
      %v3012 = vmul.f32 %v2972, 1.442695
      %v3013 = vpow.pop %v3012
      %v3014 = vmul.f32 %v2973, 1.442695
      %v3015 = vpow.pop %v3014
      %v3016 = vmul.f32 %v2974, 1.442695
      %v3017 = vpow.pop %v3016
      %v3018 = vmul.f32 %v2975, 1.442695
      %v3019 = vpow.pop %v3018
      %v3020 = vmul.f32 %v2976, 1.442695
      %v3021 = vpow.pop %v3020
      %v3022 = vmul.f32 %v2977, 1.442695
      %v3023 = vpow.pop %v3022
      %v3024 = vmul.f32 %v2978, 1.442695
      %v3025 = vpow.pop %v3024
      %v3026 = vmul.f32 %v2979, 1.442695
      %v3027 = vpow.pop %v3026
      %v3028 = vmul.f32 %v2980, 1.442695
      %v3029 = vpow.pop %v3028
      %v3030 = vmul.f32 %v2981, 1.442695
      %v3031 = vpow.pop %v3030
      %v3032 = vmul.f32 %v2982, 1.442695
      %v3033 = vpow.pop %v3032
      %v3034 = vmul.f32 %v2983, 1.442695
      %v3035 = vpow.pop %v3034
      %v3036 = vmul.f32 %v2984, 1.442695
      %v3037 = vpow.pop %v3036
      %v3038 = vmul.f32 %v2985, 1.442695
      %v3039 = vpow.pop %v3038
      %v3040 = vmul.f32 %v2986, 1.442695
      %v3041 = vpow.pop %v3040
      %v3042 = vmul.f32 %v2987, 1.442695
      %v3043 = vpow.pop %v3042
      %v3044 = vmul.f32 %v2988, 1.442695
      %v3045 = vpow.pop %v3044
      %v3046 = vmul.f32 %v2989, 1.442695
      %v3047 = vpow.pop %v3046
      %v3048 = vmul.f32 %v2990, 1.442695
      %v3049 = vpow.pop %v3048
      %v3050 = vmul.f32 %v2991, 1.442695
      %v3051 = vpow.pop %v3050
      %v3052 = vmul.f32 %v2992, 1.442695
      %v3053 = vpow.pop %v3052
      %v3054 = vmul.f32 %v2993, 1.442695
      %v3055 = vpow.pop %v3054
      %v3056 = vmul.f32 %v2994, 1.442695
      %v3057 = vpow.pop %v3056
      %v3058 = vmul.f32 %v2995, 1.442695
      %v3059 = vpow.pop %v3058
      %v3060 = vmul.f32 %v2996, 1.442695
      %v3061 = vpow.pop %v3060
      %v3062 = vmul.f32 %v2997, 1.442695
      %v3063 = vpow.pop %v3062
      %v3064 = vmul.f32 %v2998, 1.442695
      %v3065 = vpow.pop %v3064
      %v3066 = vmul.f32 %v2999, 1.442695
      %v3067 = vpow.pop %v3066
      %v3068 = vmul.f32 %v3000, 1.442695
      %v3069 = vpow.pop %v3068
      %v3070 = vmul.f32 %v3001, 1.442695
      %v3071 = vpow.pop %v3070
      %v3072 = vmul.f32 %v3002, 1.442695
      %v3073 = vpow.pop %v3072
      %v3074 = vmul.f32 %v3003, 1.442695
      %v3075 = vpow.pop %v3074
      %v3076 = vmul.f32 %v2896, %v3005
      %v3077 = vmul.f32 %v2897, %v3007
      %v3078 = vmul.f32 %v2898, %v3009
      %v3079 = vmul.f32 %v2899, %v3011
      %v3080 = vmul.f32 %v2900, %v3013
      %v3081 = vmul.f32 %v2901, %v3015
      %v3082 = vmul.f32 %v2902, %v3017
      %v3083 = vmul.f32 %v2903, %v3019
      %v3084 = vmul.f32 %v2904, %v3021
      %v3085 = vmul.f32 %v2905, %v3023
      %v3086 = vmul.f32 %v2906, %v3025
      %v3087 = vmul.f32 %v2907, %v3027
      %v3088 = vmul.f32 %v2908, %v3029
      %v3089 = vmul.f32 %v2909, %v3031
      %v3090 = vmul.f32 %v2910, %v3033
      %v3091 = vmul.f32 %v2911, %v3035
      %v3092 = vmul.f32 %v2912, %v3037
      %v3093 = vmul.f32 %v2913, %v3039
      %v3094 = vmul.f32 %v2914, %v3041
      %v3095 = vmul.f32 %v2915, %v3043
      %v3096 = vmul.f32 %v2916, %v3045
      %v3097 = vmul.f32 %v2917, %v3047
      %v3098 = vmul.f32 %v2918, %v3049
      %v3099 = vmul.f32 %v2919, %v3051
      %v3100 = vmul.f32 %v2920, %v3053
      %v3101 = vmul.f32 %v2921, %v3055
      %v3102 = vmul.f32 %v2922, %v3057
      %v3103 = vmul.f32 %v2923, %v3059
      %v3104 = vmul.f32 %v2924, %v3061
      %v3105 = vmul.f32 %v2925, %v3063
      %v3106 = vmul.f32 %v2926, %v3065
      %v3107 = vmul.f32 %v2927, %v3067
      %v3108 = vmul.f32 %v2928, %v3069
      %v3109 = vmul.f32 %v2929, %v3071
      %v3110 = vmul.f32 %v2930, %v3073
      %v3111 = vmul.f32 %v2931, %v3075
      %v3112 = vsub.f32 1.0, %v3076
      %v3113 = vsub.f32 1.0, %v3077
      %v3114 = vsub.f32 1.0, %v3078
      %v3115 = vsub.f32 1.0, %v3079
      %v3116 = vsub.f32 1.0, %v3080
      %v3117 = vsub.f32 1.0, %v3081
      %v3118 = vsub.f32 1.0, %v3082
      %v3119 = vsub.f32 1.0, %v3083
      %v3120 = vsub.f32 1.0, %v3084
      %v3121 = vsub.f32 1.0, %v3085
      %v3122 = vsub.f32 1.0, %v3086
      %v3123 = vsub.f32 1.0, %v3087
      %v3124 = vsub.f32 1.0, %v3088
      %v3125 = vsub.f32 1.0, %v3089
      %v3126 = vsub.f32 1.0, %v3090
      %v3127 = vsub.f32 1.0, %v3091
      %v3128 = vsub.f32 1.0, %v3092
      %v3129 = vsub.f32 1.0, %v3093
      %v3130 = vsub.f32 1.0, %v3094
      %v3131 = vsub.f32 1.0, %v3095
      %v3132 = vsub.f32 1.0, %v3096
      %v3133 = vsub.f32 1.0, %v3097
      %v3134 = vsub.f32 1.0, %v3098
      %v3135 = vsub.f32 1.0, %v3099
      %v3136 = vsub.f32 1.0, %v3100
      %v3137 = vsub.f32 1.0, %v3101
      %v3138 = vsub.f32 1.0, %v3102
      %v3139 = vsub.f32 1.0, %v3103
      %v3140 = vsub.f32 1.0, %v3104
      %v3141 = vsub.f32 1.0, %v3105
      %v3142 = vsub.f32 1.0, %v3106
      %v3143 = vsub.f32 1.0, %v3107
      %v3144 = vsub.f32 1.0, %v3108
      %v3145 = vsub.f32 1.0, %v3109
      %v3146 = vsub.f32 1.0, %v3110
      %v3147 = vsub.f32 1.0, %v3111
      %vm3148 = vcmp.lt.f32.partialorder %v2392, 0.0
      %vm3149 = vcmp.lt.f32.partialorder %v2393, 0.0
      %vm3150 = vcmp.lt.f32.partialorder %v2394, 0.0
      %vm3151 = vcmp.lt.f32.partialorder %v2395, 0.0
      %vm3152 = vcmp.lt.f32.partialorder %v2396, 0.0
      %vm3153 = vcmp.lt.f32.partialorder %v2397, 0.0
      %vm3154 = vcmp.lt.f32.partialorder %v2398, 0.0
      %vm3155 = vcmp.lt.f32.partialorder %v2399, 0.0
      %vm3156 = vcmp.lt.f32.partialorder %v2400, 0.0
      %vm3157 = vcmp.lt.f32.partialorder %v2401, 0.0
      %vm3158 = vcmp.lt.f32.partialorder %v2402, 0.0
      %vm3159 = vcmp.lt.f32.partialorder %v2403, 0.0
      %vm3160 = vcmp.lt.f32.partialorder %v2404, 0.0
      %vm3161 = vcmp.lt.f32.partialorder %v2405, 0.0
      %vm3162 = vcmp.lt.f32.partialorder %v2406, 0.0
      %vm3163 = vcmp.lt.f32.partialorder %v2407, 0.0
      %vm3164 = vcmp.lt.f32.partialorder %v2408, 0.0
      %vm3165 = vcmp.lt.f32.partialorder %v2409, 0.0
      %vm3166 = vcmp.lt.f32.partialorder %v2410, 0.0
      %vm3167 = vcmp.lt.f32.partialorder %v2411, 0.0
      %vm3168 = vcmp.lt.f32.partialorder %v2412, 0.0
      %vm3169 = vcmp.lt.f32.partialorder %v2413, 0.0
      %vm3170 = vcmp.lt.f32.partialorder %v2414, 0.0
      %vm3171 = vcmp.lt.f32.partialorder %v2415, 0.0
      %vm3172 = vcmp.lt.f32.partialorder %v2416, 0.0
      %vm3173 = vcmp.lt.f32.partialorder %v2417, 0.0
      %vm3174 = vcmp.lt.f32.partialorder %v2418, 0.0
      %vm3175 = vcmp.lt.f32.partialorder %v2419, 0.0
      %vm3176 = vcmp.lt.f32.partialorder %v2420, 0.0
      %vm3177 = vcmp.lt.f32.partialorder %v2421, 0.0
      %vm3178 = vcmp.lt.f32.partialorder %v2422, 0.0
      %vm3179 = vcmp.lt.f32.partialorder %v2423, 0.0
      %vm3180 = vcmp.lt.f32.partialorder %v2424, 0.0
      %vm3181 = vcmp.lt.f32.partialorder %v2425, 0.0
      %vm3182 = vcmp.lt.f32.partialorder %v2426, 0.0
      %vm3183 = vcmp.lt.f32.partialorder %v2427, 0.0
      %v3184 = vsub.f32 0.0, %v3112
      %v3185 = vsub.f32 0.0, %v3113
      %v3186 = vsub.f32 0.0, %v3114
      %v3187 = vsub.f32 0.0, %v3115
      %v3188 = vsub.f32 0.0, %v3116
      %v3189 = vsub.f32 0.0, %v3117
      %v3190 = vsub.f32 0.0, %v3118
      %v3191 = vsub.f32 0.0, %v3119
      %v3192 = vsub.f32 0.0, %v3120
      %v3193 = vsub.f32 0.0, %v3121
      %v3194 = vsub.f32 0.0, %v3122
      %v3195 = vsub.f32 0.0, %v3123
      %v3196 = vsub.f32 0.0, %v3124
      %v3197 = vsub.f32 0.0, %v3125
      %v3198 = vsub.f32 0.0, %v3126
      %v3199 = vsub.f32 0.0, %v3127
      %v3200 = vsub.f32 0.0, %v3128
      %v3201 = vsub.f32 0.0, %v3129
      %v3202 = vsub.f32 0.0, %v3130
      %v3203 = vsub.f32 0.0, %v3131
      %v3204 = vsub.f32 0.0, %v3132
      %v3205 = vsub.f32 0.0, %v3133
      %v3206 = vsub.f32 0.0, %v3134
      %v3207 = vsub.f32 0.0, %v3135
      %v3208 = vsub.f32 0.0, %v3136
      %v3209 = vsub.f32 0.0, %v3137
      %v3210 = vsub.f32 0.0, %v3138
      %v3211 = vsub.f32 0.0, %v3139
      %v3212 = vsub.f32 0.0, %v3140
      %v3213 = vsub.f32 0.0, %v3141
      %v3214 = vsub.f32 0.0, %v3142
      %v3215 = vsub.f32 0.0, %v3143
      %v3216 = vsub.f32 0.0, %v3144
      %v3217 = vsub.f32 0.0, %v3145
      %v3218 = vsub.f32 0.0, %v3146
      %v3219 = vsub.f32 0.0, %v3147
      %v3220 = vsel %vm3148, %v3184, %v3112
      %v3221 = vsel %vm3149, %v3185, %v3113
      %v3222 = vsel %vm3150, %v3186, %v3114
      %v3223 = vsel %vm3151, %v3187, %v3115
      %v3224 = vsel %vm3152, %v3188, %v3116
      %v3225 = vsel %vm3153, %v3189, %v3117
      %v3226 = vsel %vm3154, %v3190, %v3118
      %v3227 = vsel %vm3155, %v3191, %v3119
      %v3228 = vsel %vm3156, %v3192, %v3120
      %v3229 = vsel %vm3157, %v3193, %v3121
      %v3230 = vsel %vm3158, %v3194, %v3122
      %v3231 = vsel %vm3159, %v3195, %v3123
      %v3232 = vsel %vm3160, %v3196, %v3124
      %v3233 = vsel %vm3161, %v3197, %v3125
      %v3234 = vsel %vm3162, %v3198, %v3126
      %v3235 = vsel %vm3163, %v3199, %v3127
      %v3236 = vsel %vm3164, %v3200, %v3128
      %v3237 = vsel %vm3165, %v3201, %v3129
      %v3238 = vsel %vm3166, %v3202, %v3130
      %v3239 = vsel %vm3167, %v3203, %v3131
      %v3240 = vsel %vm3168, %v3204, %v3132
      %v3241 = vsel %vm3169, %v3205, %v3133
      %v3242 = vsel %vm3170, %v3206, %v3134
      %v3243 = vsel %vm3171, %v3207, %v3135
      %v3244 = vsel %vm3172, %v3208, %v3136
      %v3245 = vsel %vm3173, %v3209, %v3137
      %v3246 = vsel %vm3174, %v3210, %v3138
      %v3247 = vsel %vm3175, %v3211, %v3139
      %v3248 = vsel %vm3176, %v3212, %v3140
      %v3249 = vsel %vm3177, %v3213, %v3141
      %v3250 = vsel %vm3178, %v3214, %v3142
      %v3251 = vsel %vm3179, %v3215, %v3143
      %v3252 = vsel %vm3180, %v3216, %v3144
      %v3253 = vsel %vm3181, %v3217, %v3145
      %v3254 = vsel %vm3182, %v3218, %v3146
      %v3255 = vsel %vm3183, %v3219, %v3147
      %v3256 = vmul.f32 %v2250, 0.5
      %v3257 = vmul.f32 %v2253, 0.5
      %v3258 = vmul.f32 %v2258, 0.5
      %v3259 = vmul.f32 %v2261, 0.5
      %v3260 = vmul.f32 %v2266, 0.5
      %v3261 = vmul.f32 %v2269, 0.5
      %v3262 = vmul.f32 %v2274, 0.5
      %v3263 = vmul.f32 %v2277, 0.5
      %v3264 = vmul.f32 %v2282, 0.5
      %v3265 = vmul.f32 %v2285, 0.5
      %v3266 = vmul.f32 %v2290, 0.5
      %v3267 = vmul.f32 %v2293, 0.5
      %v3268 = vmul.f32 %v2298, 0.5
      %v3269 = vmul.f32 %v2301, 0.5
      %v3270 = vmul.f32 %v2306, 0.5
      %v3271 = vmul.f32 %v2309, 0.5
      %v3272 = vmul.f32 %v2314, 0.5
      %v3273 = vmul.f32 %v2317, 0.5
      %v3274 = vmul.f32 %v2322, 0.5
      %v3275 = vmul.f32 %v2325, 0.5
      %v3276 = vmul.f32 %v2330, 0.5
      %v3277 = vmul.f32 %v2333, 0.5
      %v3278 = vmul.f32 %v2338, 0.5
      %v3279 = vmul.f32 %v2341, 0.5
      %v3280 = vmul.f32 %v2346, 0.5
      %v3281 = vmul.f32 %v2349, 0.5
      %v3282 = vmul.f32 %v2354, 0.5
      %v3283 = vmul.f32 %v2357, 0.5
      %v3284 = vmul.f32 %v2362, 0.5
      %v3285 = vmul.f32 %v2365, 0.5
      %v3286 = vmul.f32 %v2370, 0.5
      %v3287 = vmul.f32 %v2373, 0.5
      %v3288 = vmul.f32 %v2378, 0.5
      %v3289 = vmul.f32 %v2381, 0.5
      %v3290 = vmul.f32 %v2386, 0.5
      %v3291 = vmul.f32 %v2389, 0.5
      %v3292 = vadd.f32 %v3220, 1.0
      %v3293 = vadd.f32 %v3221, 1.0
      %v3294 = vadd.f32 %v3222, 1.0
      %v3295 = vadd.f32 %v3223, 1.0
      %v3296 = vadd.f32 %v3224, 1.0
      %v3297 = vadd.f32 %v3225, 1.0
      %v3298 = vadd.f32 %v3226, 1.0
      %v3299 = vadd.f32 %v3227, 1.0
      %v3300 = vadd.f32 %v3228, 1.0
      %v3301 = vadd.f32 %v3229, 1.0
      %v3302 = vadd.f32 %v3230, 1.0
      %v3303 = vadd.f32 %v3231, 1.0
      %v3304 = vadd.f32 %v3232, 1.0
      %v3305 = vadd.f32 %v3233, 1.0
      %v3306 = vadd.f32 %v3234, 1.0
      %v3307 = vadd.f32 %v3235, 1.0
      %v3308 = vadd.f32 %v3236, 1.0
      %v3309 = vadd.f32 %v3237, 1.0
      %v3310 = vadd.f32 %v3238, 1.0
      %v3311 = vadd.f32 %v3239, 1.0
      %v3312 = vadd.f32 %v3240, 1.0
      %v3313 = vadd.f32 %v3241, 1.0
      %v3314 = vadd.f32 %v3242, 1.0
      %v3315 = vadd.f32 %v3243, 1.0
      %v3316 = vadd.f32 %v3244, 1.0
      %v3317 = vadd.f32 %v3245, 1.0
      %v3318 = vadd.f32 %v3246, 1.0
      %v3319 = vadd.f32 %v3247, 1.0
      %v3320 = vadd.f32 %v3248, 1.0
      %v3321 = vadd.f32 %v3249, 1.0
      %v3322 = vadd.f32 %v3250, 1.0
      %v3323 = vadd.f32 %v3251, 1.0
      %v3324 = vadd.f32 %v3252, 1.0
      %v3325 = vadd.f32 %v3253, 1.0
      %v3326 = vadd.f32 %v3254, 1.0
      %v3327 = vadd.f32 %v3255, 1.0
      %v3328 = vmul.f32 %v3256, %v3292
      %v3329 = vmul.f32 %v3257, %v3293
      %v3330 = vmul.f32 %v3258, %v3294
      %v3331 = vmul.f32 %v3259, %v3295
      %v3332 = vmul.f32 %v3260, %v3296
      %v3333 = vmul.f32 %v3261, %v3297
      %v3334 = vmul.f32 %v3262, %v3298
      %v3335 = vmul.f32 %v3263, %v3299
      %v3336 = vmul.f32 %v3264, %v3300
      %v3337 = vmul.f32 %v3265, %v3301
      %v3338 = vmul.f32 %v3266, %v3302
      %v3339 = vmul.f32 %v3267, %v3303
      %v3340 = vmul.f32 %v3268, %v3304
      %v3341 = vmul.f32 %v3269, %v3305
      %v3342 = vmul.f32 %v3270, %v3306
      %v3343 = vmul.f32 %v3271, %v3307
      %v3344 = vmul.f32 %v3272, %v3308
      %v3345 = vmul.f32 %v3273, %v3309
      %v3346 = vmul.f32 %v3274, %v3310
      %v3347 = vmul.f32 %v3275, %v3311
      %v3348 = vmul.f32 %v3276, %v3312
      %v3349 = vmul.f32 %v3277, %v3313
      %v3350 = vmul.f32 %v3278, %v3314
      %v3351 = vmul.f32 %v3279, %v3315
      %v3352 = vmul.f32 %v3280, %v3316
      %v3353 = vmul.f32 %v3281, %v3317
      %v3354 = vmul.f32 %v3282, %v3318
      %v3355 = vmul.f32 %v3283, %v3319
      %v3356 = vmul.f32 %v3284, %v3320
      %v3357 = vmul.f32 %v3285, %v3321
      %v3358 = vmul.f32 %v3286, %v3322
      %v3359 = vmul.f32 %v3287, %v3323
      %v3360 = vmul.f32 %v3288, %v3324
      %v3361 = vmul.f32 %v3289, %v3325
      %v3362 = vmul.f32 %v3290, %v3326
      %v3363 = vmul.f32 %v3291, %v3327
      %v3364 = vlaneseq
      %v3365 = vshrl.u32 %v3364, 7
      %v3366 = vadd.s32 %v3365, 8
      %v3367 = vadd.s32 %v3365, 16
      %v3368 = vadd.s32 %v3365, 24
      %v3369 = vadd.s32 %v3365, 32
      %v3370 = vadd.s32 %v3365, 40
      %v3371 = vadd.s32 %v3365, 48
      %v3372 = vadd.s32 %v3365, 56
      %v3373 = vadd.s32 %v3365, 64
      %v3374 = vadd.s32 %v3365, 72
      %v3375 = vadd.s32 %v3365, 80
      %v3376 = vadd.s32 %v3365, 88
      %v3377 = vadd.s32 %v3365, 96
      %v3378 = vadd.s32 %v3365, 104
      %v3379 = vadd.s32 %v3365, 112
      %v3380 = vadd.s32 %v3365, 120
      %v3381 = vadd.s32 %v3365, 128
      %v3382 = vadd.s32 %v3365, 136
      %v3383 = vadd.s32 %v3365, 144
      %v3384 = vadd.s32 %v3365, 152
      %v3385 = vadd.s32 %v3365, 160
      %v3386 = vadd.s32 %v3365, 168
      %v3387 = vadd.s32 %v3365, 176
      %v3388 = vadd.s32 %v3365, 184
      %v3389 = vadd.s32 %v3365, 192
      %v3390 = vadd.s32 %v3365, 200
      %v3391 = vadd.s32 %v3365, 208
      %v3392 = vadd.s32 %v3365, 216
      %v3393 = vadd.s32 %v3365, 224
      %v3394 = vadd.s32 %v3365, 232
      %v3395 = vadd.s32 %v3365, 240
      %v3396 = vadd.s32 %v3365, 248
      %v3397 = vadd.s32 %v3365, 256
      %v3398 = vadd.s32 %v3365, 264
      %v3399 = vadd.s32 %v3365, 272
      %v3400 = vadd.s32 %v3365, 280
      %vm3401 = vcmp.lt.s32.totalorder %v3365, 0
      %v3402 = vsub.s32 0, %v3365
      %v3403 = vsel %vm3401, %v3402, %v3365
      %v3404 = vmul.u32.u64.compose %v3403, 3817748708
      %v3405 = vextract.low.u32 %v3404
      %v3406 = vextract.high.u32 %v3404
      %v3407 = vshrl.u32 %v3406, 4
      %v3408 = vmul.u32 %v3407, 18
      %v3409 = vsub.s32 %v3403, %v3408
      %v3410 = vsub.s32 0, %v3409
      %v3411 = vsel %vm3401, %v3410, %v3409
      %vm3412 = vcmp.lt.s32.totalorder %v3366, 0
      %v3413 = vsub.s32 0, %v3366
      %v3414 = vsel %vm3412, %v3413, %v3366
      %v3415 = vmul.u32.u64.compose %v3414, 3817748708
      %v3416 = vextract.low.u32 %v3415
      %v3417 = vextract.high.u32 %v3415
      %v3418 = vshrl.u32 %v3417, 4
      %v3419 = vmul.u32 %v3418, 18
      %v3420 = vsub.s32 %v3414, %v3419
      %v3421 = vsub.s32 0, %v3420
      %v3422 = vsel %vm3412, %v3421, %v3420
      %vm3423 = vcmp.lt.s32.totalorder %v3367, 0
      %v3424 = vsub.s32 0, %v3367
      %v3425 = vsel %vm3423, %v3424, %v3367
      %v3426 = vmul.u32.u64.compose %v3425, 3817748708
      %v3427 = vextract.low.u32 %v3426
      %v3428 = vextract.high.u32 %v3426
      %v3429 = vshrl.u32 %v3428, 4
      %v3430 = vmul.u32 %v3429, 18
      %v3431 = vsub.s32 %v3425, %v3430
      %v3432 = vsub.s32 0, %v3431
      %v3433 = vsel %vm3423, %v3432, %v3431
      %vm3434 = vcmp.lt.s32.totalorder %v3368, 0
      %v3435 = vsub.s32 0, %v3368
      %v3436 = vsel %vm3434, %v3435, %v3368
      %v3437 = vmul.u32.u64.compose %v3436, 3817748708
      %v3438 = vextract.low.u32 %v3437
      %v3439 = vextract.high.u32 %v3437
      %v3440 = vshrl.u32 %v3439, 4
      %v3441 = vmul.u32 %v3440, 18
      %v3442 = vsub.s32 %v3436, %v3441
      %v3443 = vsub.s32 0, %v3442
      %v3444 = vsel %vm3434, %v3443, %v3442
      %vm3445 = vcmp.lt.s32.totalorder %v3369, 0
      %v3446 = vsub.s32 0, %v3369
      %v3447 = vsel %vm3445, %v3446, %v3369
      %v3448 = vmul.u32.u64.compose %v3447, 3817748708
      %v3449 = vextract.low.u32 %v3448
      %v3450 = vextract.high.u32 %v3448
      %v3451 = vshrl.u32 %v3450, 4
      %v3452 = vmul.u32 %v3451, 18
      %v3453 = vsub.s32 %v3447, %v3452
      %v3454 = vsub.s32 0, %v3453
      %v3455 = vsel %vm3445, %v3454, %v3453
      %vm3456 = vcmp.lt.s32.totalorder %v3370, 0
      %v3457 = vsub.s32 0, %v3370
      %v3458 = vsel %vm3456, %v3457, %v3370
      %v3459 = vmul.u32.u64.compose %v3458, 3817748708
      %v3460 = vextract.low.u32 %v3459
      %v3461 = vextract.high.u32 %v3459
      %v3462 = vshrl.u32 %v3461, 4
      %v3463 = vmul.u32 %v3462, 18
      %v3464 = vsub.s32 %v3458, %v3463
      %v3465 = vsub.s32 0, %v3464
      %v3466 = vsel %vm3456, %v3465, %v3464
      %vm3467 = vcmp.lt.s32.totalorder %v3371, 0
      %v3468 = vsub.s32 0, %v3371
      %v3469 = vsel %vm3467, %v3468, %v3371
      %v3470 = vmul.u32.u64.compose %v3469, 3817748708
      %v3471 = vextract.low.u32 %v3470
      %v3472 = vextract.high.u32 %v3470
      %v3473 = vshrl.u32 %v3472, 4
      %v3474 = vmul.u32 %v3473, 18
      %v3475 = vsub.s32 %v3469, %v3474
      %v3476 = vsub.s32 0, %v3475
      %v3477 = vsel %vm3467, %v3476, %v3475
      %vm3478 = vcmp.lt.s32.totalorder %v3372, 0
      %v3479 = vsub.s32 0, %v3372
      %v3480 = vsel %vm3478, %v3479, %v3372
      %v3481 = vmul.u32.u64.compose %v3480, 3817748708
      %v3482 = vextract.low.u32 %v3481
      %v3483 = vextract.high.u32 %v3481
      %v3484 = vshrl.u32 %v3483, 4
      %v3485 = vmul.u32 %v3484, 18
      %v3486 = vsub.s32 %v3480, %v3485
      %v3487 = vsub.s32 0, %v3486
      %v3488 = vsel %vm3478, %v3487, %v3486
      %vm3489 = vcmp.lt.s32.totalorder %v3373, 0
      %v3490 = vsub.s32 0, %v3373
      %v3491 = vsel %vm3489, %v3490, %v3373
      %v3492 = vmul.u32.u64.compose %v3491, 3817748708
      %v3493 = vextract.low.u32 %v3492
      %v3494 = vextract.high.u32 %v3492
      %v3495 = vshrl.u32 %v3494, 4
      %v3496 = vmul.u32 %v3495, 18
      %v3497 = vsub.s32 %v3491, %v3496
      %v3498 = vsub.s32 0, %v3497
      %v3499 = vsel %vm3489, %v3498, %v3497
      %vm3500 = vcmp.lt.s32.totalorder %v3374, 0
      %v3501 = vsub.s32 0, %v3374
      %v3502 = vsel %vm3500, %v3501, %v3374
      %v3503 = vmul.u32.u64.compose %v3502, 3817748708
      %v3504 = vextract.low.u32 %v3503
      %v3505 = vextract.high.u32 %v3503
      %v3506 = vshrl.u32 %v3505, 4
      %v3507 = vmul.u32 %v3506, 18
      %v3508 = vsub.s32 %v3502, %v3507
      %v3509 = vsub.s32 0, %v3508
      %v3510 = vsel %vm3500, %v3509, %v3508
      %vm3511 = vcmp.lt.s32.totalorder %v3375, 0
      %v3512 = vsub.s32 0, %v3375
      %v3513 = vsel %vm3511, %v3512, %v3375
      %v3514 = vmul.u32.u64.compose %v3513, 3817748708
      %v3515 = vextract.low.u32 %v3514
      %v3516 = vextract.high.u32 %v3514
      %v3517 = vshrl.u32 %v3516, 4
      %v3518 = vmul.u32 %v3517, 18
      %v3519 = vsub.s32 %v3513, %v3518
      %v3520 = vsub.s32 0, %v3519
      %v3521 = vsel %vm3511, %v3520, %v3519
      %vm3522 = vcmp.lt.s32.totalorder %v3376, 0
      %v3523 = vsub.s32 0, %v3376
      %v3524 = vsel %vm3522, %v3523, %v3376
      %v3525 = vmul.u32.u64.compose %v3524, 3817748708
      %v3526 = vextract.low.u32 %v3525
      %v3527 = vextract.high.u32 %v3525
      %v3528 = vshrl.u32 %v3527, 4
      %v3529 = vmul.u32 %v3528, 18
      %v3530 = vsub.s32 %v3524, %v3529
      %v3531 = vsub.s32 0, %v3530
      %v3532 = vsel %vm3522, %v3531, %v3530
      %vm3533 = vcmp.lt.s32.totalorder %v3377, 0
      %v3534 = vsub.s32 0, %v3377
      %v3535 = vsel %vm3533, %v3534, %v3377
      %v3536 = vmul.u32.u64.compose %v3535, 3817748708
      %v3537 = vextract.low.u32 %v3536
      %v3538 = vextract.high.u32 %v3536
      %v3539 = vshrl.u32 %v3538, 4
      %v3540 = vmul.u32 %v3539, 18
      %v3541 = vsub.s32 %v3535, %v3540
      %v3542 = vsub.s32 0, %v3541
      %v3543 = vsel %vm3533, %v3542, %v3541
      %vm3544 = vcmp.lt.s32.totalorder %v3378, 0
      %v3545 = vsub.s32 0, %v3378
      %v3546 = vsel %vm3544, %v3545, %v3378
      %v3547 = vmul.u32.u64.compose %v3546, 3817748708
      %v3548 = vextract.low.u32 %v3547
      %v3549 = vextract.high.u32 %v3547
      %v3550 = vshrl.u32 %v3549, 4
      %v3551 = vmul.u32 %v3550, 18
      %v3552 = vsub.s32 %v3546, %v3551
      %v3553 = vsub.s32 0, %v3552
      %v3554 = vsel %vm3544, %v3553, %v3552
      %vm3555 = vcmp.lt.s32.totalorder %v3379, 0
      %v3556 = vsub.s32 0, %v3379
      %v3557 = vsel %vm3555, %v3556, %v3379
      %v3558 = vmul.u32.u64.compose %v3557, 3817748708
      %v3559 = vextract.low.u32 %v3558
      %v3560 = vextract.high.u32 %v3558
      %v3561 = vshrl.u32 %v3560, 4
      %v3562 = vmul.u32 %v3561, 18
      %v3563 = vsub.s32 %v3557, %v3562
      %v3564 = vsub.s32 0, %v3563
      %v3565 = vsel %vm3555, %v3564, %v3563
      %vm3566 = vcmp.lt.s32.totalorder %v3380, 0
      %v3567 = vsub.s32 0, %v3380
      %v3568 = vsel %vm3566, %v3567, %v3380
      %v3569 = vmul.u32.u64.compose %v3568, 3817748708
      %v3570 = vextract.low.u32 %v3569
      %v3571 = vextract.high.u32 %v3569
      %v3572 = vshrl.u32 %v3571, 4
      %v3573 = vmul.u32 %v3572, 18
      %v3574 = vsub.s32 %v3568, %v3573
      %v3575 = vsub.s32 0, %v3574
      %v3576 = vsel %vm3566, %v3575, %v3574
      %vm3577 = vcmp.lt.s32.totalorder %v3381, 0
      %v3578 = vsub.s32 0, %v3381
      %v3579 = vsel %vm3577, %v3578, %v3381
      %v3580 = vmul.u32.u64.compose %v3579, 3817748708
      %v3581 = vextract.low.u32 %v3580
      %v3582 = vextract.high.u32 %v3580
      %v3583 = vshrl.u32 %v3582, 4
      %v3584 = vmul.u32 %v3583, 18
      %v3585 = vsub.s32 %v3579, %v3584
      %v3586 = vsub.s32 0, %v3585
      %v3587 = vsel %vm3577, %v3586, %v3585
      %vm3588 = vcmp.lt.s32.totalorder %v3382, 0
      %v3589 = vsub.s32 0, %v3382
      %v3590 = vsel %vm3588, %v3589, %v3382
      %v3591 = vmul.u32.u64.compose %v3590, 3817748708
      %v3592 = vextract.low.u32 %v3591
      %v3593 = vextract.high.u32 %v3591
      %v3594 = vshrl.u32 %v3593, 4
      %v3595 = vmul.u32 %v3594, 18
      %v3596 = vsub.s32 %v3590, %v3595
      %v3597 = vsub.s32 0, %v3596
      %v3598 = vsel %vm3588, %v3597, %v3596
      %vm3599 = vcmp.lt.s32.totalorder %v3383, 0
      %v3600 = vsub.s32 0, %v3383
      %v3601 = vsel %vm3599, %v3600, %v3383
      %v3602 = vmul.u32.u64.compose %v3601, 3817748708
      %v3603 = vextract.low.u32 %v3602
      %v3604 = vextract.high.u32 %v3602
      %v3605 = vshrl.u32 %v3604, 4
      %v3606 = vmul.u32 %v3605, 18
      %v3607 = vsub.s32 %v3601, %v3606
      %v3608 = vsub.s32 0, %v3607
      %v3609 = vsel %vm3599, %v3608, %v3607
      %vm3610 = vcmp.lt.s32.totalorder %v3384, 0
      %v3611 = vsub.s32 0, %v3384
      %v3612 = vsel %vm3610, %v3611, %v3384
      %v3613 = vmul.u32.u64.compose %v3612, 3817748708
      %v3614 = vextract.low.u32 %v3613
      %v3615 = vextract.high.u32 %v3613
      %v3616 = vshrl.u32 %v3615, 4
      %v3617 = vmul.u32 %v3616, 18
      %v3618 = vsub.s32 %v3612, %v3617
      %v3619 = vsub.s32 0, %v3618
      %v3620 = vsel %vm3610, %v3619, %v3618
      %vm3621 = vcmp.lt.s32.totalorder %v3385, 0
      %v3622 = vsub.s32 0, %v3385
      %v3623 = vsel %vm3621, %v3622, %v3385
      %v3624 = vmul.u32.u64.compose %v3623, 3817748708
      %v3625 = vextract.low.u32 %v3624
      %v3626 = vextract.high.u32 %v3624
      %v3627 = vshrl.u32 %v3626, 4
      %v3628 = vmul.u32 %v3627, 18
      %v3629 = vsub.s32 %v3623, %v3628
      %v3630 = vsub.s32 0, %v3629
      %v3631 = vsel %vm3621, %v3630, %v3629
      %vm3632 = vcmp.lt.s32.totalorder %v3386, 0
      %v3633 = vsub.s32 0, %v3386
      %v3634 = vsel %vm3632, %v3633, %v3386
      %v3635 = vmul.u32.u64.compose %v3634, 3817748708
      %v3636 = vextract.low.u32 %v3635
      %v3637 = vextract.high.u32 %v3635
      %v3638 = vshrl.u32 %v3637, 4
      %v3639 = vmul.u32 %v3638, 18
      %v3640 = vsub.s32 %v3634, %v3639
      %v3641 = vsub.s32 0, %v3640
      %v3642 = vsel %vm3632, %v3641, %v3640
      %vm3643 = vcmp.lt.s32.totalorder %v3387, 0
      %v3644 = vsub.s32 0, %v3387
      %v3645 = vsel %vm3643, %v3644, %v3387
      %v3646 = vmul.u32.u64.compose %v3645, 3817748708
      %v3647 = vextract.low.u32 %v3646
      %v3648 = vextract.high.u32 %v3646
      %v3649 = vshrl.u32 %v3648, 4
      %v3650 = vmul.u32 %v3649, 18
      %v3651 = vsub.s32 %v3645, %v3650
      %v3652 = vsub.s32 0, %v3651
      %v3653 = vsel %vm3643, %v3652, %v3651
      %vm3654 = vcmp.lt.s32.totalorder %v3388, 0
      %v3655 = vsub.s32 0, %v3388
      %v3656 = vsel %vm3654, %v3655, %v3388
      %v3657 = vmul.u32.u64.compose %v3656, 3817748708
      %v3658 = vextract.low.u32 %v3657
      %v3659 = vextract.high.u32 %v3657
      %v3660 = vshrl.u32 %v3659, 4
      %v3661 = vmul.u32 %v3660, 18
      %v3662 = vsub.s32 %v3656, %v3661
      %v3663 = vsub.s32 0, %v3662
      %v3664 = vsel %vm3654, %v3663, %v3662
      %vm3665 = vcmp.lt.s32.totalorder %v3389, 0
      %v3666 = vsub.s32 0, %v3389
      %v3667 = vsel %vm3665, %v3666, %v3389
      %v3668 = vmul.u32.u64.compose %v3667, 3817748708
      %v3669 = vextract.low.u32 %v3668
      %v3670 = vextract.high.u32 %v3668
      %v3671 = vshrl.u32 %v3670, 4
      %v3672 = vmul.u32 %v3671, 18
      %v3673 = vsub.s32 %v3667, %v3672
      %v3674 = vsub.s32 0, %v3673
      %v3675 = vsel %vm3665, %v3674, %v3673
      %vm3676 = vcmp.lt.s32.totalorder %v3390, 0
      %v3677 = vsub.s32 0, %v3390
      %v3678 = vsel %vm3676, %v3677, %v3390
      %v3679 = vmul.u32.u64.compose %v3678, 3817748708
      %v3680 = vextract.low.u32 %v3679
      %v3681 = vextract.high.u32 %v3679
      %v3682 = vshrl.u32 %v3681, 4
      %v3683 = vmul.u32 %v3682, 18
      %v3684 = vsub.s32 %v3678, %v3683
      %v3685 = vsub.s32 0, %v3684
      %v3686 = vsel %vm3676, %v3685, %v3684
      %vm3687 = vcmp.lt.s32.totalorder %v3391, 0
      %v3688 = vsub.s32 0, %v3391
      %v3689 = vsel %vm3687, %v3688, %v3391
      %v3690 = vmul.u32.u64.compose %v3689, 3817748708
      %v3691 = vextract.low.u32 %v3690
      %v3692 = vextract.high.u32 %v3690
      %v3693 = vshrl.u32 %v3692, 4
      %v3694 = vmul.u32 %v3693, 18
      %v3695 = vsub.s32 %v3689, %v3694
      %v3696 = vsub.s32 0, %v3695
      %v3697 = vsel %vm3687, %v3696, %v3695
      %vm3698 = vcmp.lt.s32.totalorder %v3392, 0
      %v3699 = vsub.s32 0, %v3392
      %v3700 = vsel %vm3698, %v3699, %v3392
      %v3701 = vmul.u32.u64.compose %v3700, 3817748708
      %v3702 = vextract.low.u32 %v3701
      %v3703 = vextract.high.u32 %v3701
      %v3704 = vshrl.u32 %v3703, 4
      %v3705 = vmul.u32 %v3704, 18
      %v3706 = vsub.s32 %v3700, %v3705
      %v3707 = vsub.s32 0, %v3706
      %v3708 = vsel %vm3698, %v3707, %v3706
      %vm3709 = vcmp.lt.s32.totalorder %v3393, 0
      %v3710 = vsub.s32 0, %v3393
      %v3711 = vsel %vm3709, %v3710, %v3393
      %v3712 = vmul.u32.u64.compose %v3711, 3817748708
      %v3713 = vextract.low.u32 %v3712
      %v3714 = vextract.high.u32 %v3712
      %v3715 = vshrl.u32 %v3714, 4
      %v3716 = vmul.u32 %v3715, 18
      %v3717 = vsub.s32 %v3711, %v3716
      %v3718 = vsub.s32 0, %v3717
      %v3719 = vsel %vm3709, %v3718, %v3717
      %vm3720 = vcmp.lt.s32.totalorder %v3394, 0
      %v3721 = vsub.s32 0, %v3394
      %v3722 = vsel %vm3720, %v3721, %v3394
      %v3723 = vmul.u32.u64.compose %v3722, 3817748708
      %v3724 = vextract.low.u32 %v3723
      %v3725 = vextract.high.u32 %v3723
      %v3726 = vshrl.u32 %v3725, 4
      %v3727 = vmul.u32 %v3726, 18
      %v3728 = vsub.s32 %v3722, %v3727
      %v3729 = vsub.s32 0, %v3728
      %v3730 = vsel %vm3720, %v3729, %v3728
      %vm3731 = vcmp.lt.s32.totalorder %v3395, 0
      %v3732 = vsub.s32 0, %v3395
      %v3733 = vsel %vm3731, %v3732, %v3395
      %v3734 = vmul.u32.u64.compose %v3733, 3817748708
      %v3735 = vextract.low.u32 %v3734
      %v3736 = vextract.high.u32 %v3734
      %v3737 = vshrl.u32 %v3736, 4
      %v3738 = vmul.u32 %v3737, 18
      %v3739 = vsub.s32 %v3733, %v3738
      %v3740 = vsub.s32 0, %v3739
      %v3741 = vsel %vm3731, %v3740, %v3739
      %vm3742 = vcmp.lt.s32.totalorder %v3396, 0
      %v3743 = vsub.s32 0, %v3396
      %v3744 = vsel %vm3742, %v3743, %v3396
      %v3745 = vmul.u32.u64.compose %v3744, 3817748708
      %v3746 = vextract.low.u32 %v3745
      %v3747 = vextract.high.u32 %v3745
      %v3748 = vshrl.u32 %v3747, 4
      %v3749 = vmul.u32 %v3748, 18
      %v3750 = vsub.s32 %v3744, %v3749
      %v3751 = vsub.s32 0, %v3750
      %v3752 = vsel %vm3742, %v3751, %v3750
      %vm3753 = vcmp.lt.s32.totalorder %v3397, 0
      %v3754 = vsub.s32 0, %v3397
      %v3755 = vsel %vm3753, %v3754, %v3397
      %v3756 = vmul.u32.u64.compose %v3755, 3817748708
      %v3757 = vextract.low.u32 %v3756
      %v3758 = vextract.high.u32 %v3756
      %v3759 = vshrl.u32 %v3758, 4
      %v3760 = vmul.u32 %v3759, 18
      %v3761 = vsub.s32 %v3755, %v3760
      %v3762 = vsub.s32 0, %v3761
      %v3763 = vsel %vm3753, %v3762, %v3761
      %vm3764 = vcmp.lt.s32.totalorder %v3398, 0
      %v3765 = vsub.s32 0, %v3398
      %v3766 = vsel %vm3764, %v3765, %v3398
      %v3767 = vmul.u32.u64.compose %v3766, 3817748708
      %v3768 = vextract.low.u32 %v3767
      %v3769 = vextract.high.u32 %v3767
      %v3770 = vshrl.u32 %v3769, 4
      %v3771 = vmul.u32 %v3770, 18
      %v3772 = vsub.s32 %v3766, %v3771
      %v3773 = vsub.s32 0, %v3772
      %v3774 = vsel %vm3764, %v3773, %v3772
      %vm3775 = vcmp.lt.s32.totalorder %v3399, 0
      %v3776 = vsub.s32 0, %v3399
      %v3777 = vsel %vm3775, %v3776, %v3399
      %v3778 = vmul.u32.u64.compose %v3777, 3817748708
      %v3779 = vextract.low.u32 %v3778
      %v3780 = vextract.high.u32 %v3778
      %v3781 = vshrl.u32 %v3780, 4
      %v3782 = vmul.u32 %v3781, 18
      %v3783 = vsub.s32 %v3777, %v3782
      %v3784 = vsub.s32 0, %v3783
      %v3785 = vsel %vm3775, %v3784, %v3783
      %vm3786 = vcmp.lt.s32.totalorder %v3400, 0
      %v3787 = vsub.s32 0, %v3400
      %v3788 = vsel %vm3786, %v3787, %v3400
      %v3789 = vmul.u32.u64.compose %v3788, 3817748708
      %v3790 = vextract.low.u32 %v3789
      %v3791 = vextract.high.u32 %v3789
      %v3792 = vshrl.u32 %v3791, 4
      %v3793 = vmul.u32 %v3792, 18
      %v3794 = vsub.s32 %v3788, %v3793
      %v3795 = vsub.s32 0, %v3794
      %v3796 = vsel %vm3786, %v3795, %v3794
      %vm3797 = vcmp.ne.s32.totalorder %v3411, 0
      %vm3798 = vcmp.ne.s32.totalorder %v3422, 0
      %vm3799 = vcmp.ne.s32.totalorder %v3433, 0
      %vm3800 = vcmp.ne.s32.totalorder %v3444, 0
      %vm3801 = vcmp.ne.s32.totalorder %v3455, 0
      %vm3802 = vcmp.ne.s32.totalorder %v3466, 0
      %vm3803 = vcmp.ne.s32.totalorder %v3477, 0
      %vm3804 = vcmp.ne.s32.totalorder %v3488, 0
      %vm3805 = vcmp.ne.s32.totalorder %v3499, 0
      %vm3806 = vcmp.ne.s32.totalorder %v3510, 0
      %vm3807 = vcmp.ne.s32.totalorder %v3521, 0
      %vm3808 = vcmp.ne.s32.totalorder %v3532, 0
      %vm3809 = vcmp.ne.s32.totalorder %v3543, 0
      %vm3810 = vcmp.ne.s32.totalorder %v3554, 0
      %vm3811 = vcmp.ne.s32.totalorder %v3565, 0
      %vm3812 = vcmp.ne.s32.totalorder %v3576, 0
      %vm3813 = vcmp.ne.s32.totalorder %v3587, 0
      %vm3814 = vcmp.ne.s32.totalorder %v3598, 0
      %vm3815 = vcmp.ne.s32.totalorder %v3609, 0
      %vm3816 = vcmp.ne.s32.totalorder %v3620, 0
      %vm3817 = vcmp.ne.s32.totalorder %v3631, 0
      %vm3818 = vcmp.ne.s32.totalorder %v3642, 0
      %vm3819 = vcmp.ne.s32.totalorder %v3653, 0
      %vm3820 = vcmp.ne.s32.totalorder %v3664, 0
      %vm3821 = vcmp.ne.s32.totalorder %v3675, 0
      %vm3822 = vcmp.ne.s32.totalorder %v3686, 0
      %vm3823 = vcmp.ne.s32.totalorder %v3697, 0
      %vm3824 = vcmp.ne.s32.totalorder %v3708, 0
      %vm3825 = vcmp.ne.s32.totalorder %v3719, 0
      %vm3826 = vcmp.ne.s32.totalorder %v3730, 0
      %vm3827 = vcmp.ne.s32.totalorder %v3741, 0
      %vm3828 = vcmp.ne.s32.totalorder %v3752, 0
      %vm3829 = vcmp.ne.s32.totalorder %v3763, 0
      %vm3830 = vcmp.ne.s32.totalorder %v3774, 0
      %vm3831 = vcmp.ne.s32.totalorder %v3785, 0
      %vm3832 = vcmp.ne.s32.totalorder %v3796, 0
      %vm3833 = vcmp.lt.s32.totalorder %v3411, 0
      %vm3834 = vcmp.lt.s32.totalorder %v3422, 0
      %vm3835 = vcmp.lt.s32.totalorder %v3433, 0
      %vm3836 = vcmp.lt.s32.totalorder %v3444, 0
      %vm3837 = vcmp.lt.s32.totalorder %v3455, 0
      %vm3838 = vcmp.lt.s32.totalorder %v3466, 0
      %vm3839 = vcmp.lt.s32.totalorder %v3477, 0
      %vm3840 = vcmp.lt.s32.totalorder %v3488, 0
      %vm3841 = vcmp.lt.s32.totalorder %v3499, 0
      %vm3842 = vcmp.lt.s32.totalorder %v3510, 0
      %vm3843 = vcmp.lt.s32.totalorder %v3521, 0
      %vm3844 = vcmp.lt.s32.totalorder %v3532, 0
      %vm3845 = vcmp.lt.s32.totalorder %v3543, 0
      %vm3846 = vcmp.lt.s32.totalorder %v3554, 0
      %vm3847 = vcmp.lt.s32.totalorder %v3565, 0
      %vm3848 = vcmp.lt.s32.totalorder %v3576, 0
      %vm3849 = vcmp.lt.s32.totalorder %v3587, 0
      %vm3850 = vcmp.lt.s32.totalorder %v3598, 0
      %vm3851 = vcmp.lt.s32.totalorder %v3609, 0
      %vm3852 = vcmp.lt.s32.totalorder %v3620, 0
      %vm3853 = vcmp.lt.s32.totalorder %v3631, 0
      %vm3854 = vcmp.lt.s32.totalorder %v3642, 0
      %vm3855 = vcmp.lt.s32.totalorder %v3653, 0
      %vm3856 = vcmp.lt.s32.totalorder %v3664, 0
      %vm3857 = vcmp.lt.s32.totalorder %v3675, 0
      %vm3858 = vcmp.lt.s32.totalorder %v3686, 0
      %vm3859 = vcmp.lt.s32.totalorder %v3697, 0
      %vm3860 = vcmp.lt.s32.totalorder %v3708, 0
      %vm3861 = vcmp.lt.s32.totalorder %v3719, 0
      %vm3862 = vcmp.lt.s32.totalorder %v3730, 0
      %vm3863 = vcmp.lt.s32.totalorder %v3741, 0
      %vm3864 = vcmp.lt.s32.totalorder %v3752, 0
      %vm3865 = vcmp.lt.s32.totalorder %v3763, 0
      %vm3866 = vcmp.lt.s32.totalorder %v3774, 0
      %vm3867 = vcmp.lt.s32.totalorder %v3785, 0
      %vm3868 = vcmp.lt.s32.totalorder %v3796, 0
      %vm3869 = vmand %vm3833, %vm3797
      %vm3870 = vmand %vm3834, %vm3798
      %vm3871 = vmand %vm3835, %vm3799
      %vm3872 = vmand %vm3836, %vm3800
      %vm3873 = vmand %vm3837, %vm3801
      %vm3874 = vmand %vm3838, %vm3802
      %vm3875 = vmand %vm3839, %vm3803
      %vm3876 = vmand %vm3840, %vm3804
      %vm3877 = vmand %vm3841, %vm3805
      %vm3878 = vmand %vm3842, %vm3806
      %vm3879 = vmand %vm3843, %vm3807
      %vm3880 = vmand %vm3844, %vm3808
      %vm3881 = vmand %vm3845, %vm3809
      %vm3882 = vmand %vm3846, %vm3810
      %vm3883 = vmand %vm3847, %vm3811
      %vm3884 = vmand %vm3848, %vm3812
      %vm3885 = vmand %vm3849, %vm3813
      %vm3886 = vmand %vm3850, %vm3814
      %vm3887 = vmand %vm3851, %vm3815
      %vm3888 = vmand %vm3852, %vm3816
      %vm3889 = vmand %vm3853, %vm3817
      %vm3890 = vmand %vm3854, %vm3818
      %vm3891 = vmand %vm3855, %vm3819
      %vm3892 = vmand %vm3856, %vm3820
      %vm3893 = vmand %vm3857, %vm3821
      %vm3894 = vmand %vm3858, %vm3822
      %vm3895 = vmand %vm3859, %vm3823
      %vm3896 = vmand %vm3860, %vm3824
      %vm3897 = vmand %vm3861, %vm3825
      %vm3898 = vmand %vm3862, %vm3826
      %vm3899 = vmand %vm3863, %vm3827
      %vm3900 = vmand %vm3864, %vm3828
      %vm3901 = vmand %vm3865, %vm3829
      %vm3902 = vmand %vm3866, %vm3830
      %vm3903 = vmand %vm3867, %vm3831
      %vm3904 = vmand %vm3868, %vm3832
      %v3905 = vadd.s32 %v3411, 18
      %v3906 = vadd.s32 %v3422, 18
      %v3907 = vadd.s32 %v3433, 18
      %v3908 = vadd.s32 %v3444, 18
      %v3909 = vadd.s32 %v3455, 18
      %v3910 = vadd.s32 %v3466, 18
      %v3911 = vadd.s32 %v3477, 18
      %v3912 = vadd.s32 %v3488, 18
      %v3913 = vadd.s32 %v3499, 18
      %v3914 = vadd.s32 %v3510, 18
      %v3915 = vadd.s32 %v3521, 18
      %v3916 = vadd.s32 %v3532, 18
      %v3917 = vadd.s32 %v3543, 18
      %v3918 = vadd.s32 %v3554, 18
      %v3919 = vadd.s32 %v3565, 18
      %v3920 = vadd.s32 %v3576, 18
      %v3921 = vadd.s32 %v3587, 18
      %v3922 = vadd.s32 %v3598, 18
      %v3923 = vadd.s32 %v3609, 18
      %v3924 = vadd.s32 %v3620, 18
      %v3925 = vadd.s32 %v3631, 18
      %v3926 = vadd.s32 %v3642, 18
      %v3927 = vadd.s32 %v3653, 18
      %v3928 = vadd.s32 %v3664, 18
      %v3929 = vadd.s32 %v3675, 18
      %v3930 = vadd.s32 %v3686, 18
      %v3931 = vadd.s32 %v3697, 18
      %v3932 = vadd.s32 %v3708, 18
      %v3933 = vadd.s32 %v3719, 18
      %v3934 = vadd.s32 %v3730, 18
      %v3935 = vadd.s32 %v3741, 18
      %v3936 = vadd.s32 %v3752, 18
      %v3937 = vadd.s32 %v3763, 18
      %v3938 = vadd.s32 %v3774, 18
      %v3939 = vadd.s32 %v3785, 18
      %v3940 = vadd.s32 %v3796, 18
      %v3941 = vsel %vm3869, %v3905, %v3411
      %v3942 = vsel %vm3870, %v3906, %v3422
      %v3943 = vsel %vm3871, %v3907, %v3433
      %v3944 = vsel %vm3872, %v3908, %v3444
      %v3945 = vsel %vm3873, %v3909, %v3455
      %v3946 = vsel %vm3874, %v3910, %v3466
      %v3947 = vsel %vm3875, %v3911, %v3477
      %v3948 = vsel %vm3876, %v3912, %v3488
      %v3949 = vsel %vm3877, %v3913, %v3499
      %v3950 = vsel %vm3878, %v3914, %v3510
      %v3951 = vsel %vm3879, %v3915, %v3521
      %v3952 = vsel %vm3880, %v3916, %v3532
      %v3953 = vsel %vm3881, %v3917, %v3543
      %v3954 = vsel %vm3882, %v3918, %v3554
      %v3955 = vsel %vm3883, %v3919, %v3565
      %v3956 = vsel %vm3884, %v3920, %v3576
      %v3957 = vsel %vm3885, %v3921, %v3587
      %v3958 = vsel %vm3886, %v3922, %v3598
      %v3959 = vsel %vm3887, %v3923, %v3609
      %v3960 = vsel %vm3888, %v3924, %v3620
      %v3961 = vsel %vm3889, %v3925, %v3631
      %v3962 = vsel %vm3890, %v3926, %v3642
      %v3963 = vsel %vm3891, %v3927, %v3653
      %v3964 = vsel %vm3892, %v3928, %v3664
      %v3965 = vsel %vm3893, %v3929, %v3675
      %v3966 = vsel %vm3894, %v3930, %v3686
      %v3967 = vsel %vm3895, %v3931, %v3697
      %v3968 = vsel %vm3896, %v3932, %v3708
      %v3969 = vsel %vm3897, %v3933, %v3719
      %v3970 = vsel %vm3898, %v3934, %v3730
      %v3971 = vsel %vm3899, %v3935, %v3741
      %v3972 = vsel %vm3900, %v3936, %v3752
      %v3973 = vsel %vm3901, %v3937, %v3763
      %v3974 = vsel %vm3902, %v3938, %v3774
      %v3975 = vsel %vm3903, %v3939, %v3785
      %v3976 = vsel %vm3904, %v3940, %v3796
      %vm3977 = vcmp.lt.s32.totalorder %v3941, 16
      %vm3978 = vcmp.lt.s32.totalorder %v3942, 16
      %vm3979 = vcmp.lt.s32.totalorder %v3943, 16
      %vm3980 = vcmp.lt.s32.totalorder %v3944, 16
      %vm3981 = vcmp.lt.s32.totalorder %v3945, 16
      %vm3982 = vcmp.lt.s32.totalorder %v3946, 16
      %vm3983 = vcmp.lt.s32.totalorder %v3947, 16
      %vm3984 = vcmp.lt.s32.totalorder %v3948, 16
      %vm3985 = vcmp.lt.s32.totalorder %v3949, 16
      %vm3986 = vcmp.lt.s32.totalorder %v3950, 16
      %vm3987 = vcmp.lt.s32.totalorder %v3951, 16
      %vm3988 = vcmp.lt.s32.totalorder %v3952, 16
      %vm3989 = vcmp.lt.s32.totalorder %v3953, 16
      %vm3990 = vcmp.lt.s32.totalorder %v3954, 16
      %vm3991 = vcmp.lt.s32.totalorder %v3955, 16
      %vm3992 = vcmp.lt.s32.totalorder %v3956, 16
      %vm3993 = vcmp.lt.s32.totalorder %v3957, 16
      %vm3994 = vcmp.lt.s32.totalorder %v3958, 16
      %vm3995 = vcmp.lt.s32.totalorder %v3959, 16
      %vm3996 = vcmp.lt.s32.totalorder %v3960, 16
      %vm3997 = vcmp.lt.s32.totalorder %v3961, 16
      %vm3998 = vcmp.lt.s32.totalorder %v3962, 16
      %vm3999 = vcmp.lt.s32.totalorder %v3963, 16
      %vm4000 = vcmp.lt.s32.totalorder %v3964, 16
      %vm4001 = vcmp.lt.s32.totalorder %v3965, 16
      %vm4002 = vcmp.lt.s32.totalorder %v3966, 16
      %vm4003 = vcmp.lt.s32.totalorder %v3967, 16
      %vm4004 = vcmp.lt.s32.totalorder %v3968, 16
      %vm4005 = vcmp.lt.s32.totalorder %v3969, 16
      %vm4006 = vcmp.lt.s32.totalorder %v3970, 16
      %vm4007 = vcmp.lt.s32.totalorder %v3971, 16
      %vm4008 = vcmp.lt.s32.totalorder %v3972, 16
      %vm4009 = vcmp.lt.s32.totalorder %v3973, 16
      %vm4010 = vcmp.lt.s32.totalorder %v3974, 16
      %vm4011 = vcmp.lt.s32.totalorder %v3975, 16
      %vm4012 = vcmp.lt.s32.totalorder %v3976, 16
      %v4013 = vsel %vm3977, 1, 0
      %v4014 = vsel %vm3978, 1, 0
      %v4015 = vsel %vm3979, 1, 0
      %v4016 = vsel %vm3980, 1, 0
      %v4017 = vsel %vm3981, 1, 0
      %v4018 = vsel %vm3982, 1, 0
      %v4019 = vsel %vm3983, 1, 0
      %v4020 = vsel %vm3984, 1, 0
      %v4021 = vsel %vm3985, 1, 0
      %v4022 = vsel %vm3986, 1, 0
      %v4023 = vsel %vm3987, 1, 0
      %v4024 = vsel %vm3988, 1, 0
      %v4025 = vsel %vm3989, 1, 0
      %v4026 = vsel %vm3990, 1, 0
      %v4027 = vsel %vm3991, 1, 0
      %v4028 = vsel %vm3992, 1, 0
      %v4029 = vsel %vm3993, 1, 0
      %v4030 = vsel %vm3994, 1, 0
      %v4031 = vsel %vm3995, 1, 0
      %v4032 = vsel %vm3996, 1, 0
      %v4033 = vsel %vm3997, 1, 0
      %v4034 = vsel %vm3998, 1, 0
      %v4035 = vsel %vm3999, 1, 0
      %v4036 = vsel %vm4000, 1, 0
      %v4037 = vsel %vm4001, 1, 0
      %v4038 = vsel %vm4002, 1, 0
      %v4039 = vsel %vm4003, 1, 0
      %v4040 = vsel %vm4004, 1, 0
      %v4041 = vsel %vm4005, 1, 0
      %v4042 = vsel %vm4006, 1, 0
      %v4043 = vsel %vm4007, 1, 0
      %v4044 = vsel %vm4008, 1, 0
      %v4045 = vsel %vm4009, 1, 0
      %v4046 = vsel %vm4010, 1, 0
      %v4047 = vsel %vm4011, 1, 0
      %v4048 = vsel %vm4012, 1, 0
      %vm4049 = vcmp.eq.s32.totalorder %v4013, 1
      %vm4050 = vcmp.eq.s32.totalorder %v4014, 1
      %vm4051 = vcmp.eq.s32.totalorder %v4015, 1
      %vm4052 = vcmp.eq.s32.totalorder %v4016, 1
      %vm4053 = vcmp.eq.s32.totalorder %v4017, 1
      %vm4054 = vcmp.eq.s32.totalorder %v4018, 1
      %vm4055 = vcmp.eq.s32.totalorder %v4019, 1
      %vm4056 = vcmp.eq.s32.totalorder %v4020, 1
      %vm4057 = vcmp.eq.s32.totalorder %v4021, 1
      %vm4058 = vcmp.eq.s32.totalorder %v4022, 1
      %vm4059 = vcmp.eq.s32.totalorder %v4023, 1
      %vm4060 = vcmp.eq.s32.totalorder %v4024, 1
      %vm4061 = vcmp.eq.s32.totalorder %v4025, 1
      %vm4062 = vcmp.eq.s32.totalorder %v4026, 1
      %vm4063 = vcmp.eq.s32.totalorder %v4027, 1
      %vm4064 = vcmp.eq.s32.totalorder %v4028, 1
      %vm4065 = vcmp.eq.s32.totalorder %v4029, 1
      %vm4066 = vcmp.eq.s32.totalorder %v4030, 1
      %vm4067 = vcmp.eq.s32.totalorder %v4031, 1
      %vm4068 = vcmp.eq.s32.totalorder %v4032, 1
      %vm4069 = vcmp.eq.s32.totalorder %v4033, 1
      %vm4070 = vcmp.eq.s32.totalorder %v4034, 1
      %vm4071 = vcmp.eq.s32.totalorder %v4035, 1
      %vm4072 = vcmp.eq.s32.totalorder %v4036, 1
      %vm4073 = vcmp.eq.s32.totalorder %v4037, 1
      %vm4074 = vcmp.eq.s32.totalorder %v4038, 1
      %vm4075 = vcmp.eq.s32.totalorder %v4039, 1
      %vm4076 = vcmp.eq.s32.totalorder %v4040, 1
      %vm4077 = vcmp.eq.s32.totalorder %v4041, 1
      %vm4078 = vcmp.eq.s32.totalorder %v4042, 1
      %vm4079 = vcmp.eq.s32.totalorder %v4043, 1
      %vm4080 = vcmp.eq.s32.totalorder %v4044, 1
      %vm4081 = vcmp.eq.s32.totalorder %v4045, 1
      %vm4082 = vcmp.eq.s32.totalorder %v4046, 1
      %vm4083 = vcmp.eq.s32.totalorder %v4047, 1
      %vm4084 = vcmp.eq.s32.totalorder %v4048, 1
      %v4085 = vsel %vm4049, %v3328, 0.0
      %v4086 = vsel %vm4050, %v3329, 0.0
      %v4087 = vsel %vm4051, %v3330, 0.0
      %v4088 = vsel %vm4052, %v3331, 0.0
      %v4089 = vsel %vm4053, %v3332, 0.0
      %v4090 = vsel %vm4054, %v3333, 0.0
      %v4091 = vsel %vm4055, %v3334, 0.0
      %v4092 = vsel %vm4056, %v3335, 0.0
      %v4093 = vsel %vm4057, %v3336, 0.0
      %v4094 = vsel %vm4058, %v3337, 0.0
      %v4095 = vsel %vm4059, %v3338, 0.0
      %v4096 = vsel %vm4060, %v3339, 0.0
      %v4097 = vsel %vm4061, %v3340, 0.0
      %v4098 = vsel %vm4062, %v3341, 0.0
      %v4099 = vsel %vm4063, %v3342, 0.0
      %v4100 = vsel %vm4064, %v3343, 0.0
      %v4101 = vsel %vm4065, %v3344, 0.0
      %v4102 = vsel %vm4066, %v3345, 0.0
      %v4103 = vsel %vm4067, %v3346, 0.0
      %v4104 = vsel %vm4068, %v3347, 0.0
      %v4105 = vsel %vm4069, %v3348, 0.0
      %v4106 = vsel %vm4070, %v3349, 0.0
      %v4107 = vsel %vm4071, %v3350, 0.0
      %v4108 = vsel %vm4072, %v3351, 0.0
      %v4109 = vsel %vm4073, %v3352, 0.0
      %v4110 = vsel %vm4074, %v3353, 0.0
      %v4111 = vsel %vm4075, %v3354, 0.0
      %v4112 = vsel %vm4076, %v3355, 0.0
      %v4113 = vsel %vm4077, %v3356, 0.0
      %v4114 = vsel %vm4078, %v3357, 0.0
      %v4115 = vsel %vm4079, %v3358, 0.0
      %v4116 = vsel %vm4080, %v3359, 0.0
      %v4117 = vsel %vm4081, %v3360, 0.0
      %v4118 = vsel %vm4082, %v3361, 0.0
      %v4119 = vsel %vm4083, %v3362, 0.0
      %v4120 = vsel %vm4084, %v3363, 0.0
      %vm4157 = vcmask 1042432
      %v4158 = vrot.slane %v4085, 5
      %v4159 = vrot.slane %v4086, 5
      %v4160 = vsel %vm4157, %v4158, %v4159
      %v4161 = vrot.slane %v4087, 5
      %v4162 = vsel %vm4157, %v4159, %v4161
      %v4163 = vrot.slane %v4088, 5
      %v4164 = vsel %vm4157, %v4161, %v4163
      %v4165 = vrot.slane %v4089, 5
      %v4166 = vsel %vm4157, %v4163, %v4165
      %v4167 = vrot.slane %v4090, 5
      %v4168 = vsel %vm4157, %v4165, %v4167
      %v4169 = vrot.slane %v4091, 5
      %v4170 = vsel %vm4157, %v4167, %v4169
      %v4171 = vrot.slane %v4092, 5
      %v4172 = vsel %vm4157, %v4169, %v4171
      %v4173 = vrot.slane %v4093, 5
      %v4174 = vsel %vm4157, %v4171, %v4173
      %v4175 = vrot.slane %v4094, 5
      %v4176 = vsel %vm4157, %v4173, %v4175
      %v4177 = vrot.slane %v4095, 5
      %v4178 = vsel %vm4157, %v4175, %v4177
      %v4179 = vrot.slane %v4096, 5
      %v4180 = vsel %vm4157, %v4177, %v4179
      %v4181 = vrot.slane %v4097, 5
      %v4182 = vsel %vm4157, %v4179, %v4181
      %v4183 = vrot.slane %v4098, 5
      %v4184 = vsel %vm4157, %v4181, %v4183
      %v4185 = vrot.slane %v4099, 5
      %v4186 = vsel %vm4157, %v4183, %v4185
      %v4187 = vrot.slane %v4100, 5
      %v4188 = vsel %vm4157, %v4185, %v4187
      %v4189 = vrot.slane %v4101, 5
      %v4190 = vsel %vm4157, %v4187, %v4189
      %v4191 = vrot.slane %v4102, 5
      %v4192 = vsel %vm4157, %v4189, %v4191
      %v4193 = vrot.slane %v4103, 5
      %v4194 = vsel %vm4157, %v4191, %v4193
      %v4195 = vrot.slane %v4104, 5
      %v4196 = vsel %vm4157, %v4193, %v4195
      %v4197 = vrot.slane %v4105, 5
      %v4198 = vsel %vm4157, %v4195, %v4197
      %v4199 = vrot.slane %v4106, 5
      %v4200 = vsel %vm4157, %v4197, %v4199
      %v4201 = vrot.slane %v4107, 5
      %v4202 = vsel %vm4157, %v4199, %v4201
      %v4203 = vrot.slane %v4108, 5
      %v4204 = vsel %vm4157, %v4201, %v4203
      %v4205 = vrot.slane %v4109, 5
      %v4206 = vsel %vm4157, %v4203, %v4205
      %v4207 = vrot.slane %v4110, 5
      %v4208 = vsel %vm4157, %v4205, %v4207
      %v4209 = vrot.slane %v4111, 5
      %v4210 = vsel %vm4157, %v4207, %v4209
      %v4211 = vrot.slane %v4112, 5
      %v4212 = vsel %vm4157, %v4209, %v4211
      %v4213 = vrot.slane %v4113, 5
      %v4214 = vsel %vm4157, %v4211, %v4213
      %v4215 = vrot.slane %v4114, 5
      %v4216 = vsel %vm4157, %v4213, %v4215
      %v4217 = vrot.slane %v4115, 5
      %v4218 = vsel %vm4157, %v4215, %v4217
      %v4219 = vrot.slane %v4116, 5
      %v4220 = vsel %vm4157, %v4217, %v4219
      %v4221 = vrot.slane %v4117, 5
      %v4222 = vsel %vm4157, %v4219, %v4221
      %v4223 = vrot.slane %v4118, 5
      %v4224 = vsel %vm4157, %v4221, %v4223
      %v4225 = vrot.slane %v4119, 5
      %v4226 = vsel %vm4157, %v4223, %v4225
      %v4227 = vrot.slane %v4120, 5
      %v4228 = vsel %vm4157, %v4225, %v4227
      %v4266 = vsel %vm4157, 0.0, %v4158
      %vm4267 = vcmask 1040384
      %v4268 = vsel %vm4267, %v4227, 0.0
      %v4269 = vpack.c.bf16 0.0, 0.0
      %v4270 = vpack.c.bf16 %v4160, %v4266
      %v4271 = vpack.c.bf16 %v4164, %v4162
      %v4272 = vpack.c.bf16 %v4168, %v4166
      %v4273 = vpack.c.bf16 %v4172, %v4170
      %v4274 = vpack.c.bf16 %v4176, %v4174
      %v4275 = vpack.c.bf16 %v4180, %v4178
      %v4276 = vpack.c.bf16 %v4184, %v4182
      %v4277 = vpack.c.bf16 %v4188, %v4186
      %v4278 = vpack.c.bf16 %v4192, %v4190
      %v4279 = vpack.c.bf16 %v4196, %v4194
      %v4280 = vpack.c.bf16 %v4200, %v4198
      %v4281 = vpack.c.bf16 %v4204, %v4202
      %v4282 = vpack.c.bf16 %v4208, %v4206
      %v4283 = vpack.c.bf16 %v4212, %v4210
      %v4284 = vpack.c.bf16 %v4216, %v4214
      %v4285 = vpack.c.bf16 %v4220, %v4218
      %v4286 = vpack.c.bf16 %v4224, %v4222
      %v4287 = vpack.c.bf16 %v4228, %v4226
      %v4288 = vpack.c.bf16 0.0, %v4268
      %v4309 = vunpack.c.l.b16 %v4269
      %v4310 = vunpack.c.h.b16 %v4269
      %v4311 = vunpack.c.l.b16 %v4270
      %v4312 = vunpack.c.h.b16 %v4270
      %v4313 = vunpack.c.l.b16 %v4271
      %v4314 = vunpack.c.h.b16 %v4271
      %v4315 = vunpack.c.l.b16 %v4272
      %v4316 = vunpack.c.h.b16 %v4272
      %v4317 = vunpack.c.l.b16 %v4273
      %v4318 = vunpack.c.h.b16 %v4273
      %v4319 = vunpack.c.l.b16 %v4274
      %v4320 = vunpack.c.h.b16 %v4274
      %v4321 = vunpack.c.l.b16 %v4275
      %v4322 = vunpack.c.h.b16 %v4275
      %v4323 = vunpack.c.l.b16 %v4276
      %v4324 = vunpack.c.h.b16 %v4276
      %v4325 = vunpack.c.l.b16 %v4277
      %v4326 = vunpack.c.h.b16 %v4277
      %v4327 = vunpack.c.l.b16 %v4278
      %v4328 = vunpack.c.h.b16 %v4278
      %v4329 = vunpack.c.l.b16 %v4279
      %v4330 = vunpack.c.h.b16 %v4279
      %v4331 = vunpack.c.l.b16 %v4280
      %v4332 = vunpack.c.h.b16 %v4280
      %v4333 = vunpack.c.l.b16 %v4281
      %v4334 = vunpack.c.h.b16 %v4281
      %v4335 = vunpack.c.l.b16 %v4282
      %v4336 = vunpack.c.h.b16 %v4282
      %v4337 = vunpack.c.l.b16 %v4283
      %v4338 = vunpack.c.h.b16 %v4283
      %v4339 = vunpack.c.l.b16 %v4284
      %v4340 = vunpack.c.h.b16 %v4284
      %v4341 = vunpack.c.l.b16 %v4285
      %v4342 = vunpack.c.h.b16 %v4285
      %v4343 = vunpack.c.l.b16 %v4286
      %v4344 = vunpack.c.h.b16 %v4286
      %v4345 = vunpack.c.l.b16 %v4287
      %v4346 = vunpack.c.h.b16 %v4287
      %v4347 = vunpack.c.l.b16 %v4288
      %v4348 = vunpack.c.h.b16 %v4288
      %v4349 = vpack.c.b16 %v4309, %v4309
      %v4350 = vpack.c.b16 %v4310, %v4310
      %v4351 = vpack.c.b16 %v4311, %v4311
      %v4352 = vpack.c.b16 %v4312, %v4312
      %v4353 = vpack.c.b16 %v4313, %v4313
      %v4354 = vpack.c.b16 %v4314, %v4314
      %v4355 = vpack.c.b16 %v4315, %v4315
      %v4356 = vpack.c.b16 %v4316, %v4316
      %v4357 = vpack.c.b16 %v4317, %v4317
      %v4358 = vpack.c.b16 %v4318, %v4318
      %v4359 = vpack.c.b16 %v4319, %v4319
      %v4360 = vpack.c.b16 %v4320, %v4320
      %v4361 = vpack.c.b16 %v4321, %v4321
      %v4362 = vpack.c.b16 %v4322, %v4322
      %v4363 = vpack.c.b16 %v4323, %v4323
      %v4364 = vpack.c.b16 %v4324, %v4324
      %v4365 = vpack.c.b16 %v4325, %v4325
      %v4366 = vpack.c.b16 %v4326, %v4326
      %v4367 = vpack.c.b16 %v4327, %v4327
      %v4368 = vpack.c.b16 %v4328, %v4328
      %v4369 = vpack.c.b16 %v4329, %v4329
      %v4370 = vpack.c.b16 %v4330, %v4330
      %v4371 = vpack.c.b16 %v4331, %v4331
      %v4372 = vpack.c.b16 %v4332, %v4332
      %v4373 = vpack.c.b16 %v4333, %v4333
      %v4374 = vpack.c.b16 %v4334, %v4334
      %v4375 = vpack.c.b16 %v4335, %v4335
      %v4376 = vpack.c.b16 %v4336, %v4336
      %v4377 = vpack.c.b16 %v4337, %v4337
      %v4378 = vpack.c.b16 %v4338, %v4338
      %v4379 = vpack.c.b16 %v4339, %v4339
      %v4380 = vpack.c.b16 %v4340, %v4340
      %v4381 = vpack.c.b16 %v4341, %v4341
      %v4382 = vpack.c.b16 %v4342, %v4342
      %v4383 = vpack.c.b16 %v4343, %v4343
      %v4384 = vpack.c.b16 %v4344, %v4344
      %v4385 = vpack.c.b16 %v4345, %v4345
      %v4386 = vpack.c.b16 %v4346, %v4346
      %v4387 = vpack.c.b16 %v4347, %v4347
      %v4388 = vpack.c.b16 %v4348, %v4348
      %4429 = vst [vmem:[%s170] sm:$0xf] %v4349
      %4430 = vst [vmem:[%s170 + $0x4] sm:$0xf] %v4350
      %4431 = vst [vmem:[%s170 + $0x8] sm:$0xf] %v4351
      %4432 = vst [vmem:[%s170 + $0xc] sm:$0xf] %v4352
      %4433 = vst [vmem:[%s170 + $0x10] sm:$0xf] %v4353
      %4434 = vst [vmem:[%s170 + $0x14] sm:$0xf] %v4354
      %4435 = vst [vmem:[%s170 + $0x18] sm:$0xf] %v4355
      %4436 = vst [vmem:[%s170 + $0x1c] sm:$0xf] %v4356
      %4437 = vst [vmem:[%s170 + $0x20] sm:$0xf] %v4357
      %4438 = vst [vmem:[%s170 + $0x24] sm:$0xf] %v4358
      %4439 = vst [vmem:[%s170 + $0x28] sm:$0xf] %v4359
      %4440 = vst [vmem:[%s170 + $0x2c] sm:$0xf] %v4360
      %4441 = vst [vmem:[%s170 + $0x30] sm:$0xf] %v4361
      %4442 = vst [vmem:[%s170 + $0x34] sm:$0xf] %v4362
      %4443 = vst [vmem:[%s170 + $0x38] sm:$0xf] %v4363
      %4444 = vst [vmem:[%s170 + $0x3c] sm:$0xf] %v4364
      %4445 = vst [vmem:[%s170 + $0x40] sm:$0xf] %v4365
      %4446 = vst [vmem:[%s170 + $0x44] sm:$0xf] %v4366
      %4447 = vst [vmem:[%s170 + $0x48] sm:$0xf] %v4367
      %4448 = vst [vmem:[%s170 + $0x4c] sm:$0xf] %v4368
      %4449 = vst [vmem:[%s170 + $0x50] sm:$0xf] %v4369
      %4450 = vst [vmem:[%s170 + $0x54] sm:$0xf] %v4370
      %4451 = vst [vmem:[%s170 + $0x58] sm:$0xf] %v4371
      %4452 = vst [vmem:[%s170 + $0x5c] sm:$0xf] %v4372
      %4453 = vst [vmem:[%s170 + $0x60] sm:$0xf] %v4373
      %4454 = vst [vmem:[%s170 + $0x64] sm:$0xf] %v4374
      %4455 = vst [vmem:[%s170 + $0x68] sm:$0xf] %v4375
      %4456 = vst [vmem:[%s170 + $0x6c] sm:$0xf] %v4376
      %4457 = vst [vmem:[%s170 + $0x70] sm:$0xf] %v4377
      %4458 = vst [vmem:[%s170 + $0x74] sm:$0xf] %v4378
      %4459 = vst [vmem:[%s170 + $0x78] sm:$0xf] %v4379
      %4460 = vst [vmem:[%s170 + $0x7c] sm:$0xf] %v4380
      %4461 = vst [vmem:[%s170 + $0x80] sm:$0xf] %v4381
      %4462 = vst [vmem:[%s170 + $0x84] sm:$0xf] %v4382
      %4463 = vst [vmem:[%s170 + $0x88] sm:$0xf] %v4383
      %4464 = vst [vmem:[%s170 + $0x8c] sm:$0xf] %v4384
      %4465 = vst [vmem:[%s170 + $0x90] sm:$0xf] %v4385
      %4466 = vst [vmem:[%s170 + $0x94] sm:$0xf] %v4386
      %4467 = vst [vmem:[%s170 + $0x98] sm:$0xf] %v4387
      %4468 = vst [vmem:[%s170 + $0x9c] sm:$0xf] %v4388
      %4469 = vst [vmem:[%s170 + $0xa0] sm:$0x3] %v4349
      %p4470 = scmp.lt.s32.totalorder %s14, 1
      %s4471 = scalar_select %p4470, %s14, 1
      %s4472 = smul.addr %s4471, 41
      %s4473 = smul.addr %s4472, 4
      %s4474 = scalar_lea.vmem %s3, %s4473
      // Predicated region
      $region33: #{conv_basin_block.4} parent=31 // pred_check
        %p4475 = pneg %p100
      $region34: #{conv_basin_block.4} parent=31 // pred_check_branch
        %4477 = sbr.rel (%p4475) target = $region36
      $region35: #{conv_basin_block.4} parent=31 // pred_region
        _
      $region36: #{conv_basin_block.4} parent=31 // pred_fallthru
        _
    $region32: #{conv_basin_block.4} parent=5 // pred_fallthru
      _
    %p4478 = scmp.le.s32.totalorder 2, %s9
    // Predicated region
    $region37: #{conv_basin_block.4} parent=5 // pred_check
      %p4479 = pneg %p4478
    $region38: #{conv_basin_block.4} parent=5 // pred_check_branch
      %4481 = sbr.rel (%p4479) target = $region40
    $region39: #{conv_basin_block.4} parent=5 // pred_region
      %s4482 = ssub.s32 %s9, 2
      // Predicated region
      $region41: #{conv_basin_block.4} parent=39 // pred_check
        %p4483 = pneg %p106
      $region42: #{conv_basin_block.4} parent=39 // pred_check_branch
        %4485 = sbr.rel (%p4483) target = $region44
      $region43: #{conv_basin_block.4} parent=39 // pred_region
        %p4486 = scmp.lt.s32.totalorder %s15, 1
        %s4487 = scalar_select %p4486, %s15, 1
        %s4488 = smul.addr %s4487, 41
        %s4489 = smul.addr %s4488, 4
        %s4490 = scalar_lea.vmem %s3, %s4489
      $region44: #{conv_basin_block.4} parent=39 // pred_fallthru
        _
    $region40: #{conv_basin_block.4} parent=5 // pred_fallthru
      _
  $region6: #{conv_basin_block.4} parent=0 // loop_footer
    %s13 = sadd.s32 1, %s9
  $region7: #{conv_basin_block.4} parent=0 // loop_footer_branch
    %8 = sbr.rel target = $region3
  $region8: #{conv_basin_block.4} parent=0 // loop_exit
    _

</llo_original>
